<compile_context>
chip_gen: v6e
topology: v6e:2x2x1
jax: 0.10.0
libtpu: 0.0.40
codegen_flags: <defaults>
</compile_context>

<pallas_src>
import jax
import jax.numpy as jnp
import numpy as np
from jax.experimental import pallas as pl
from jax.experimental.pallas import tpu as pltpu


def _basic_block_kernel(x_ref, w1_ref, b1_ref, w2_ref, b2_ref,
                        out_ref, xbf_ref, mid_ref):
    """Fused BasicBlock forward for one batch element (NHWC, lane-dense C).

    x_ref  : (1, H+2, W+2, C) f32   zero-padded input (interior = identity)
    w1_ref : (9*C, C)         bf16  conv1 weights, im2col layout, BN1 scale folded
    b1_ref : (1, C)           f32   folded BN1 bias
    w2_ref : (9*C, C)         bf16  conv2 weights, BN2 scale folded
    b2_ref : (1, C)           f32   folded BN2 bias
    out_ref: (1, H, W, C)     f32   output
    xbf_ref: (H+2, W+2, C)    bf16  VMEM scratch: bf16 copy of padded input
    mid_ref: (H+2, W+2, C)    bf16  VMEM scratch: padded intermediate (conv2 in)
    """
    _, H, W, C = out_ref.shape
    HW = H * W

    # Single f32 -> bf16 cast of the whole padded input (MXU operand precision).
    xbf_ref[...] = x_ref[0].astype(jnp.bfloat16)

    # ---- conv1: im2col (9 shifted taps concatenated on the lane axis) ----
    taps1 = [
        xbf_ref[kh:kh + H, kw:kw + W, :].reshape(HW, C)
        for kh in range(3) for kw in range(3)
    ]
    patches1 = jnp.concatenate(taps1, axis=-1)             # (HW, 9C) bf16
    acc1 = jnp.dot(patches1, w1_ref[...],
                   preferred_element_type=jnp.float32)     # single MXU matmul

    # ---- BN1 (scale folded into w1) + ReLU ----
    h1 = jnp.maximum(acc1 + b1_ref[...], 0.0)              # (HW, C) f32

    # ---- stage padded intermediate (bf16); zero only the 1-px border ring ----
    zrow = jnp.zeros((1, W + 2, C), jnp.bfloat16)
    zcol = jnp.zeros((H + 2, 1, C), jnp.bfloat16)
    mid_ref[0:1, :, :] = zrow
    mid_ref[H + 1:H + 2, :, :] = zrow
    mid_ref[:, 0:1, :] = zcol
    mid_ref[:, W + 1:W + 2, :] = zcol
    mid_ref[1:1 + H, 1:1 + W, :] = h1.reshape(H, W, C).astype(jnp.bfloat16)

    # ---- conv2: same im2col + single matmul ----
    taps2 = [
        mid_ref[kh:kh + H, kw:kw + W, :].reshape(HW, C)
        for kh in range(3) for kw in range(3)
    ]
    patches2 = jnp.concatenate(taps2, axis=-1)              # (HW, 9C) bf16
    acc2 = jnp.dot(patches2, w2_ref[...],
                   preferred_element_type=jnp.float32)

    # ---- BN2 bias + residual (identity = f32 interior of padded input) + ReLU ----
    out = (acc2 + b2_ref[...]).reshape(H, W, C)
    out = out + x_ref[0, 1:1 + H, 1:1 + W, :]               # exact f32 identity
    out_ref[0] = jnp.maximum(out, 0.0).astype(out_ref.dtype)


def basic_block_forward(x_nchw, params):
    """BasicBlock forward pass. x_nchw: (N, C, H, W) float32, NCHW like PyTorch."""
    w1, g1, be1, m1, v1, w2, g2, be2, m2, v2 = (
        params["w1"], params["bn1_gamma"], params["bn1_beta"],
        params["bn1_mean"], params["bn1_var"],
        params["w2"], params["bn2_gamma"], params["bn2_beta"],
        params["bn2_mean"], params["bn2_var"])
    eps = 1e-5

    N, Cin, H, W = x_nchw.shape
    Cout = w1.shape[0]
    assert Cin == Cout, "stride=1 / no-downsample config requires Cin == Cout"
    # Lane-dense channel count (multiple of 128).
    Cpad = max(128, ((Cout + 127) // 128) * 128)

    # NCHW -> NHWC, zero-pad spatial (for conv1) and channels (lane density).
    # TODO(synk): in a full NHWC network this transpose/pad glue disappears
    # (keep activations NHWC channel-padded end to end).
    x_nhwc = jnp.transpose(x_nchw, (0, 2, 3, 1)).astype(jnp.float32)
    x_pad = jnp.pad(x_nhwc, ((0, 0), (1, 1), (1, 1), (0, Cpad - Cin)))

    # Fold eval-mode BN into per-channel scale/bias.
    def fold_bn(g, b, m, v):
        s = g / jnp.sqrt(v + eps)
        return s, b - m * s

    s1, bb1 = fold_bn(g1, be1, m1, v1)
    s2, bb2 = fold_bn(g2, be2, m2, v2)

    # Conv weights OIHW -> im2col layout (9*Cpad, Cpad), tap-major, BN scale
    # folded into the output-channel columns, bf16.
    def pack_weight(w_oihw, scale):
        w_hwio = jnp.transpose(w_oihw, (2, 3, 1, 0)) * scale[None, None, None, :]
        w_p = jnp.zeros((3, 3, Cpad, Cpad), jnp.float32)
        w_p = w_p.at[:, :, :Cin, :Cout].set(w_hwio)
        return w_p.reshape(9 * Cpad, Cpad).astype(jnp.bfloat16)

    w1_k = pack_weight(w1, s1)
    w2_k = pack_weight(w2, s2)

    def pack_bias(b):
        return jnp.zeros((1, Cpad), jnp.float32).at[0, :Cout].set(b)

    b1_p = pack_bias(bb1)
    b2_p = pack_bias(bb2)

    flops = 2 * 2 * N * (H * W) * (9 * Cpad) * Cpad           # 2 convs, 2 flop/MAC
    bytes_accessed = (x_pad.size * 4 + N * H * W * Cpad * 4
                      + w1_k.size * 2 + w2_k.size * 2 + 2 * Cpad * 4)

    out_nhwc = pl.pallas_call(
        _basic_block_kernel,
        out_shape=jax.ShapeDtypeStruct((N, H, W, Cpad), jnp.float32),
        grid_spec=pltpu.PrefetchScalarGridSpec(
            num_scalar_prefetch=0,
            grid=(N,),
            in_specs=[
                pl.BlockSpec((1, H + 2, W + 2, Cpad), lambda n: (n, 0, 0, 0)),
                pl.BlockSpec((9 * Cpad, Cpad), lambda n: (0, 0)),
                pl.BlockSpec((1, Cpad), lambda n: (0, 0)),
                pl.BlockSpec((9 * Cpad, Cpad), lambda n: (0, 0)),
                pl.BlockSpec((1, Cpad), lambda n: (0, 0)),
            ],
            out_specs=pl.BlockSpec((1, H, W, Cpad), lambda n: (n, 0, 0, 0)),
            scratch_shapes=[
                pltpu.VMEM((H + 2, W + 2, Cpad), jnp.bfloat16),   # bf16 input copy
                pltpu.VMEM((H + 2, W + 2, Cpad), jnp.bfloat16),   # padded intermediate
            ],
        ),
        compiler_params=pltpu.CompilerParams(
            dimension_semantics=("parallel",)),
        cost_estimate=pl.CostEstimate(
            flops=flops, transcendentals=0, bytes_accessed=bytes_accessed),
    )(x_pad, w1_k, b1_p, w2_k, b2_p)

    # Drop channel padding, NHWC -> NCHW to match the PyTorch convention.
    return jnp.transpose(out_nhwc[..., :Cout], (0, 3, 1, 2))


def _reference(x_nchw, params):
    """Pure-JAX reference (XLA f32 convs), same folded-BN eval semantics."""
    eps = 1e-5
    x = jnp.transpose(x_nchw, (0, 2, 3, 1))

    def conv3x3(h, w_oihw):
        w = jnp.transpose(w_oihw, (2, 3, 1, 0))  # HWIO
        return jax.lax.conv_general_dilated(
            h, w, window_strides=(1, 1), padding=((1, 1), (1, 1)),
            dimension_numbers=("NHWC", "HWIO", "NHWC"))

    def bn(h, g, b, m, v):
        return (h - m) / jnp.sqrt(v + eps) * g + b

    out = conv3x3(x, params["w1"])
    out = bn(out, params["bn1_gamma"], params["bn1_beta"],
             params["bn1_mean"], params["bn1_var"])
    out = jnp.maximum(out, 0.0)
    out = conv3x3(out, params["w2"])
    out = bn(out, params["bn2_gamma"], params["bn2_beta"],
             params["bn2_mean"], params["bn2_var"])
    out = jnp.maximum(out + x, 0.0)
    return jnp.transpose(out, (0, 3, 1, 2))


if __name__ == "__main__":
    # Small shapes: BasicBlock(inplanes=8, planes=8, stride=1), input NCHW.
    N, C, H, W = 2, 8, 16, 16
    key = jax.random.PRNGKey(0)
    keys = jax.random.split(key, 8)

    x = jax.random.normal(keys[0], (N, C, H, W), jnp.float32)

    params = {
        "w1": 0.1 * jax.random.normal(keys[1], (C, C, 3, 3), jnp.float32),
        "bn1_gamma": 1.0 + 0.1 * jax.random.normal(keys[2], (C,), jnp.float32),
        "bn1_beta": 0.1 * jax.random.normal(keys[3], (C,), jnp.float32),
        "bn1_mean": 0.05 * jax.random.normal(keys[4], (C,), jnp.float32),
        "bn1_var": 1.0 + 0.1 * jnp.abs(jax.random.normal(keys[5], (C,), jnp.float32)),
        "w2": 0.1 * jax.random.normal(keys[6], (C, C, 3, 3), jnp.float32),
        "bn2_gamma": 1.0 + 0.1 * jax.random.normal(keys[7], (C,), jnp.float32),
        "bn2_beta": jnp.zeros((C,), jnp.float32),
        "bn2_mean": jnp.zeros((C,), jnp.float32),
        "bn2_var": jnp.ones((C,), jnp.float32),
    }

    out = jax.block_until_ready(basic_block_forward(x, params))
    ref = jax.block_until_ready(_reference(x, params))

    assert out.shape == (N, C, H, W)
    # bf16 MXU operands (f32 accumulation) vs. f32 reference -> looser tolerance.
    np.testing.assert_allclose(np.asarray(out), np.asarray(ref),
                               rtol=2e-2, atol=5e-2)
    print("KERNEL_OK")
</pallas_src>

<mosaic_0001>
module attributes {stable_mosaic.version = 11 : i64} {
  func.func @_basic_block_kernel(%arg0: i32, %arg1: memref<1x18x18x128xf32, #tpu.memory_space<vmem>>, %arg2: memref<1152x128xbf16, #tpu.memory_space<vmem>>, %arg3: memref<1x128xf32, #tpu.memory_space<vmem>>, %arg4: memref<1152x128xbf16, #tpu.memory_space<vmem>>, %arg5: memref<1x128xf32, #tpu.memory_space<vmem>>, %arg6: memref<1x16x16x128xf32, #tpu.memory_space<vmem>>, %arg7: memref<18x18x128xbf16, #tpu.memory_space<vmem>>, %arg8: memref<18x18x128xbf16, #tpu.memory_space<vmem>>) attributes {dimension_semantics = [#tpu.dimension_semantics<parallel>], iteration_bounds = array<i64: 2>, scalar_prefetch = 0 : i64, scratch_operands = 2 : i64, tpu.core_type = #tpu.core_type<tc>, window_params = [{transform_indices = @transform_0, window_bounds = array<i64: 1, 18, 18, 128>}, {pipeline_mode = #tpu.pipeline_mode<synchronous>, transform_indices = @transform_1, window_bounds = array<i64: 1152, 128>}, {pipeline_mode = #tpu.pipeline_mode<synchronous>, transform_indices = @transform_2, window_bounds = array<i64: 1, 128>}, {pipeline_mode = #tpu.pipeline_mode<synchronous>, transform_indices = @transform_3, window_bounds = array<i64: 1152, 128>}, {pipeline_mode = #tpu.pipeline_mode<synchronous>, transform_indices = @transform_4, window_bounds = array<i64: 1, 128>}, {transform_indices = @transform_5, window_bounds = array<i64: 1, 16, 16, 128>}]} {
    %c0 = arith.constant 0 : index
    %c0_0 = arith.constant 0 : index
    %c0_1 = arith.constant 0 : index
    %c0_2 = arith.constant 0 : index
    %0 = vector.load %arg1[%c0, %c0_0, %c0_1, %c0_2] : memref<1x18x18x128xf32, #tpu.memory_space<vmem>>, vector<1x18x18x128xf32>
    %1 = vector.shape_cast %0 : vector<1x18x18x128xf32> to vector<18x18x128xf32>
    %2 = arith.truncf %1 : vector<18x18x128xf32> to vector<18x18x128xbf16>
    %c0_3 = arith.constant 0 : index
    %c0_4 = arith.constant 0 : index
    %c0_5 = arith.constant 0 : index
    %3 = vector.load %arg7[%c0_3, %c0_4, %c0_5] : memref<18x18x128xbf16, #tpu.memory_space<vmem>>, vector<18x18x128xbf16>
    tpu.vector_store %arg7[%c0_3, %c0_4, %c0_5], %2 {strides = array<i32>} : memref<18x18x128xbf16, #tpu.memory_space<vmem>>, vector<18x18x128xbf16>,
    %c0_6 = arith.constant 0 : index
    %c0_7 = arith.constant 0 : index
    %c0_8 = arith.constant 0 : index
    %4 = vector.load %arg7[%c0_6, %c0_7, %c0_8] : memref<18x18x128xbf16, #tpu.memory_space<vmem>>, vector<16x16x128xbf16>
    %5 = vector.shape_cast %4 : vector<16x16x128xbf16> to vector<256x128xbf16>
    %c0_9 = arith.constant 0 : index
    %c1 = arith.constant 1 : index
    %c0_10 = arith.constant 0 : index
    %6 = vector.load %arg7[%c0_9, %c1, %c0_10] : memref<18x18x128xbf16, #tpu.memory_space<vmem>>, vector<16x16x128xbf16>
    %7 = vector.shape_cast %6 : vector<16x16x128xbf16> to vector<256x128xbf16>
    %c0_11 = arith.constant 0 : index
    %c2 = arith.constant 2 : index
    %c0_12 = arith.constant 0 : index
    %8 = vector.load %arg7[%c0_11, %c2, %c0_12] : memref<18x18x128xbf16, #tpu.memory_space<vmem>>, vector<16x16x128xbf16>
    %9 = vector.shape_cast %8 : vector<16x16x128xbf16> to vector<256x128xbf16>
    %c1_13 = arith.constant 1 : index
    %c0_14 = arith.constant 0 : index
    %c0_15 = arith.constant 0 : index
    %10 = vector.load %arg7[%c1_13, %c0_14, %c0_15] : memref<18x18x128xbf16, #tpu.memory_space<vmem>>, vector<16x16x128xbf16>
    %11 = vector.shape_cast %10 : vector<16x16x128xbf16> to vector<256x128xbf16>
    %c1_16 = arith.constant 1 : index
    %c1_17 = arith.constant 1 : index
    %c0_18 = arith.constant 0 : index
    %12 = vector.load %arg7[%c1_16, %c1_17, %c0_18] : memref<18x18x128xbf16, #tpu.memory_space<vmem>>, vector<16x16x128xbf16>
    %13 = vector.shape_cast %12 : vector<16x16x128xbf16> to vector<256x128xbf16>
    %c1_19 = arith.constant 1 : index
    %c2_20 = arith.constant 2 : index
    %c0_21 = arith.constant 0 : index
    %14 = vector.load %arg7[%c1_19, %c2_20, %c0_21] : memref<18x18x128xbf16, #tpu.memory_space<vmem>>, vector<16x16x128xbf16>
    %15 = vector.shape_cast %14 : vector<16x16x128xbf16> to vector<256x128xbf16>
    %c2_22 = arith.constant 2 : index
    %c0_23 = arith.constant 0 : index
    %c0_24 = arith.constant 0 : index
    %16 = vector.load %arg7[%c2_22, %c0_23, %c0_24] : memref<18x18x128xbf16, #tpu.memory_space<vmem>>, vector<16x16x128xbf16>
    %17 = vector.shape_cast %16 : vector<16x16x128xbf16> to vector<256x128xbf16>
    %c2_25 = arith.constant 2 : index
    %c1_26 = arith.constant 1 : index
    %c0_27 = arith.constant 0 : index
    %18 = vector.load %arg7[%c2_25, %c1_26, %c0_27] : memref<18x18x128xbf16, #tpu.memory_space<vmem>>, vector<16x16x128xbf16>
    %19 = vector.shape_cast %18 : vector<16x16x128xbf16> to vector<256x128xbf16>
    %c2_28 = arith.constant 2 : index
    %c2_29 = arith.constant 2 : index
    %c0_30 = arith.constant 0 : index
    %20 = vector.load %arg7[%c2_28, %c2_29, %c0_30] : memref<18x18x128xbf16, #tpu.memory_space<vmem>>, vector<16x16x128xbf16>
    %21 = vector.shape_cast %20 : vector<16x16x128xbf16> to vector<256x128xbf16>
    %22 = tpu.concatenate %5, %7, %9, %11, %13, %15, %17, %19, %21 in 1 : vector<256x128xbf16>, vector<256x128xbf16>, vector<256x128xbf16>, vector<256x128xbf16>, vector<256x128xbf16>, vector<256x128xbf16>, vector<256x128xbf16>, vector<256x128xbf16>, vector<256x128xbf16> -> vector<256x1152xbf16>
    %c0_31 = arith.constant 0 : index
    %c0_32 = arith.constant 0 : index
    %23 = vector.load %arg2[%c0_31, %c0_32] : memref<1152x128xbf16, #tpu.memory_space<vmem>>, vector<1152x128xbf16>
    %cst = arith.constant dense<0.000000e+00> : vector<256x128xf32>
    %24 = tpu.matmul %22, %23, %cst {dimension_numbers = #tpu.dot_dimension_numbers<[1], [0], [0], [1], [0, 0, 1, 1], [], []>} : vector<256x1152xbf16>, vector<1152x128xbf16>, vector<256x128xf32> -> vector<256x128xf32>
    %c0_33 = arith.constant 0 : index
    %c0_34 = arith.constant 0 : index
    %25 = vector.load %arg3[%c0_33, %c0_34] : memref<1x128xf32, #tpu.memory_space<vmem>>, vector<1x128xf32>
    %26 = vector.broadcast %25 : vector<1x128xf32> to vector<256x128xf32>
    %27 = arith.addf %24, %26 : vector<256x128xf32>
    %cst_35 = arith.constant 0.000000e+00 : f32
    %28 = vector.broadcast %cst_35 : f32 to vector<256x128xf32>
    %29 = arith.maximumf %27, %28 : vector<256x128xf32>
    %cst_36 = arith.constant 0.000000e+00 : bf16
    %30 = vector.broadcast %cst_36 : bf16 to vector<1x18x128xbf16>
    %cst_37 = arith.constant 0.000000e+00 : bf16
    %31 = vector.broadcast %cst_37 : bf16 to vector<18x1x128xbf16>
    %c0_38 = arith.constant 0 : index
    %c0_39 = arith.constant 0 : index
    %c0_40 = arith.constant 0 : index
    %32 = vector.load %arg8[%c0_38, %c0_39, %c0_40] : memref<18x18x128xbf16, #tpu.memory_space<vmem>>, vector<1x18x128xbf16>
    tpu.vector_store %arg8[%c0_38, %c0_39, %c0_40], %30 {strides = array<i32>} : memref<18x18x128xbf16, #tpu.memory_space<vmem>>, vector<1x18x128xbf16>,
    %c17 = arith.constant 17 : index
    %c0_41 = arith.constant 0 : index
    %c0_42 = arith.constant 0 : index
    %33 = vector.load %arg8[%c17, %c0_41, %c0_42] : memref<18x18x128xbf16, #tpu.memory_space<vmem>>, vector<1x18x128xbf16>
    tpu.vector_store %arg8[%c17, %c0_41, %c0_42], %30 {strides = array<i32>} : memref<18x18x128xbf16, #tpu.memory_space<vmem>>, vector<1x18x128xbf16>,
    %c0_43 = arith.constant 0 : index
    %c0_44 = arith.constant 0 : index
    %c0_45 = arith.constant 0 : index
    %34 = vector.load %arg8[%c0_43, %c0_44, %c0_45] : memref<18x18x128xbf16, #tpu.memory_space<vmem>>, vector<18x1x128xbf16>
    tpu.vector_store %arg8[%c0_43, %c0_44, %c0_45], %31 {strides = array<i32>} : memref<18x18x128xbf16, #tpu.memory_space<vmem>>, vector<18x1x128xbf16>,
    %c0_46 = arith.constant 0 : index
    %c17_47 = arith.constant 17 : index
    %c0_48 = arith.constant 0 : index
    %35 = vector.load %arg8[%c0_46, %c17_47, %c0_48] : memref<18x18x128xbf16, #tpu.memory_space<vmem>>, vector<18x1x128xbf16>
    tpu.vector_store %arg8[%c0_46, %c17_47, %c0_48], %31 {strides = array<i32>} : memref<18x18x128xbf16, #tpu.memory_space<vmem>>, vector<18x1x128xbf16>,
    %36 = vector.shape_cast %29 : vector<256x128xf32> to vector<16x16x128xf32>
    %37 = arith.truncf %36 : vector<16x16x128xf32> to vector<16x16x128xbf16>
    %c1_49 = arith.constant 1 : index
    %c1_50 = arith.constant 1 : index
    %c0_51 = arith.constant 0 : index
    %38 = vector.load %arg8[%c1_49, %c1_50, %c0_51] : memref<18x18x128xbf16, #tpu.memory_space<vmem>>, vector<16x16x128xbf16>
    tpu.vector_store %arg8[%c1_49, %c1_50, %c0_51], %37 {strides = array<i32>} : memref<18x18x128xbf16, #tpu.memory_space<vmem>>, vector<16x16x128xbf16>,
    %c0_52 = arith.constant 0 : index
    %c0_53 = arith.constant 0 : index
    %c0_54 = arith.constant 0 : index
    %39 = vector.load %arg8[%c0_52, %c0_53, %c0_54] : memref<18x18x128xbf16, #tpu.memory_space<vmem>>, vector<16x16x128xbf16>
    %40 = vector.shape_cast %39 : vector<16x16x128xbf16> to vector<256x128xbf16>
    %c0_55 = arith.constant 0 : index
    %c1_56 = arith.constant 1 : index
    %c0_57 = arith.constant 0 : index
    %41 = vector.load %arg8[%c0_55, %c1_56, %c0_57] : memref<18x18x128xbf16, #tpu.memory_space<vmem>>, vector<16x16x128xbf16>
    %42 = vector.shape_cast %41 : vector<16x16x128xbf16> to vector<256x128xbf16>
    %c0_58 = arith.constant 0 : index
    %c2_59 = arith.constant 2 : index
    %c0_60 = arith.constant 0 : index
    %43 = vector.load %arg8[%c0_58, %c2_59, %c0_60] : memref<18x18x128xbf16, #tpu.memory_space<vmem>>, vector<16x16x128xbf16>
    %44 = vector.shape_cast %43 : vector<16x16x128xbf16> to vector<256x128xbf16>
    %c1_61 = arith.constant 1 : index
    %c0_62 = arith.constant 0 : index
    %c0_63 = arith.constant 0 : index
    %45 = vector.load %arg8[%c1_61, %c0_62, %c0_63] : memref<18x18x128xbf16, #tpu.memory_space<vmem>>, vector<16x16x128xbf16>
    %46 = vector.shape_cast %45 : vector<16x16x128xbf16> to vector<256x128xbf16>
    %c1_64 = arith.constant 1 : index
    %c1_65 = arith.constant 1 : index
    %c0_66 = arith.constant 0 : index
    %47 = vector.load %arg8[%c1_64, %c1_65, %c0_66] : memref<18x18x128xbf16, #tpu.memory_space<vmem>>, vector<16x16x128xbf16>
    %48 = vector.shape_cast %47 : vector<16x16x128xbf16> to vector<256x128xbf16>
    %c1_67 = arith.constant 1 : index
    %c2_68 = arith.constant 2 : index
    %c0_69 = arith.constant 0 : index
    %49 = vector.load %arg8[%c1_67, %c2_68, %c0_69] : memref<18x18x128xbf16, #tpu.memory_space<vmem>>, vector<16x16x128xbf16>
    %50 = vector.shape_cast %49 : vector<16x16x128xbf16> to vector<256x128xbf16>
    %c2_70 = arith.constant 2 : index
    %c0_71 = arith.constant 0 : index
    %c0_72 = arith.constant 0 : index
    %51 = vector.load %arg8[%c2_70, %c0_71, %c0_72] : memref<18x18x128xbf16, #tpu.memory_space<vmem>>, vector<16x16x128xbf16>
    %52 = vector.shape_cast %51 : vector<16x16x128xbf16> to vector<256x128xbf16>
    %c2_73 = arith.constant 2 : index
    %c1_74 = arith.constant 1 : index
    %c0_75 = arith.constant 0 : index
    %53 = vector.load %arg8[%c2_73, %c1_74, %c0_75] : memref<18x18x128xbf16, #tpu.memory_space<vmem>>, vector<16x16x128xbf16>
    %54 = vector.shape_cast %53 : vector<16x16x128xbf16> to vector<256x128xbf16>
    %c2_76 = arith.constant 2 : index
    %c2_77 = arith.constant 2 : index
    %c0_78 = arith.constant 0 : index
    %55 = vector.load %arg8[%c2_76, %c2_77, %c0_78] : memref<18x18x128xbf16, #tpu.memory_space<vmem>>, vector<16x16x128xbf16>
    %56 = vector.shape_cast %55 : vector<16x16x128xbf16> to vector<256x128xbf16>
    %57 = tpu.concatenate %40, %42, %44, %46, %48, %50, %52, %54, %56 in 1 : vector<256x128xbf16>, vector<256x128xbf16>, vector<256x128xbf16>, vector<256x128xbf16>, vector<256x128xbf16>, vector<256x128xbf16>, vector<256x128xbf16>, vector<256x128xbf16>, vector<256x128xbf16> -> vector<256x1152xbf16>
    %c0_79 = arith.constant 0 : index
    %c0_80 = arith.constant 0 : index
    %58 = vector.load %arg4[%c0_79, %c0_80] : memref<1152x128xbf16, #tpu.memory_space<vmem>>, vector<1152x128xbf16>
    %cst_81 = arith.constant dense<0.000000e+00> : vector<256x128xf32>
    %59 = tpu.matmul %57, %58, %cst_81 {dimension_numbers = #tpu.dot_dimension_numbers<[1], [0], [0], [1], [0, 0, 1, 1], [], []>} : vector<256x1152xbf16>, vector<1152x128xbf16>, vector<256x128xf32> -> vector<256x128xf32>
    %c0_82 = arith.constant 0 : index
    %c0_83 = arith.constant 0 : index
    %60 = vector.load %arg5[%c0_82, %c0_83] : memref<1x128xf32, #tpu.memory_space<vmem>>, vector<1x128xf32>
    %61 = vector.broadcast %60 : vector<1x128xf32> to vector<256x128xf32>
    %62 = arith.addf %59, %61 : vector<256x128xf32>
    %63 = vector.shape_cast %62 : vector<256x128xf32> to vector<16x16x128xf32>
    %c0_84 = arith.constant 0 : index
    %c1_85 = arith.constant 1 : index
    %c1_86 = arith.constant 1 : index
    %c0_87 = arith.constant 0 : index
    %64 = vector.load %arg1[%c0_84, %c1_85, %c1_86, %c0_87] : memref<1x18x18x128xf32, #tpu.memory_space<vmem>>, vector<1x16x16x128xf32>
    %65 = vector.shape_cast %64 : vector<1x16x16x128xf32> to vector<16x16x128xf32>
    %66 = arith.addf %63, %65 : vector<16x16x128xf32>
    %cst_88 = arith.constant 0.000000e+00 : f32
    %67 = vector.broadcast %cst_88 : f32 to vector<16x16x128xf32>
    %68 = arith.maximumf %66, %67 : vector<16x16x128xf32>
    %c0_89 = arith.constant 0 : index
    %c0_90 = arith.constant 0 : index
    %c0_91 = arith.constant 0 : index
    %c0_92 = arith.constant 0 : index
    %69 = vector.load %arg6[%c0_89, %c0_90, %c0_91, %c0_92] : memref<1x16x16x128xf32, #tpu.memory_space<vmem>>, vector<1x16x16x128xf32>
    %70 = vector.shape_cast %69 : vector<1x16x16x128xf32> to vector<16x16x128xf32>
    %71 = vector.shape_cast %68 : vector<16x16x128xf32> to vector<1x16x16x128xf32>
    tpu.vector_store %arg6[%c0_89, %c0_90, %c0_91, %c0_92], %71 {strides = array<i32>} : memref<1x16x16x128xf32, #tpu.memory_space<vmem>>, vector<1x16x16x128xf32>,
    return
  }
  func.func @transform_0(%arg0: i32) -> (i32, i32, i32, i32) {
    %c0_i32 = arith.constant 0 : i32
    %c0_i32_0 = arith.constant 0 : i32
    %c0_i32_1 = arith.constant 0 : i32
    %c0_i32_2 = arith.constant 0 : i32
    return %arg0, %c0_i32, %c0_i32_0, %c0_i32_1 : i32, i32, i32, i32
  }
  func.func @transform_1(%arg0: i32) -> (i32, i32) {
    %c0_i32 = arith.constant 0 : i32
    %c0_i32_0 = arith.constant 0 : i32
    %c0_i32_1 = arith.constant 0 : i32
    return %c0_i32, %c0_i32_0 : i32, i32
  }
  func.func @transform_2(%arg0: i32) -> (i32, i32) {
    %c0_i32 = arith.constant 0 : i32
    %c0_i32_0 = arith.constant 0 : i32
    %c0_i32_1 = arith.constant 0 : i32
    return %c0_i32, %c0_i32_0 : i32, i32
  }
  func.func @transform_3(%arg0: i32) -> (i32, i32) {
    %c0_i32 = arith.constant 0 : i32
    %c0_i32_0 = arith.constant 0 : i32
    %c0_i32_1 = arith.constant 0 : i32
    return %c0_i32, %c0_i32_0 : i32, i32
  }
  func.func @transform_4(%arg0: i32) -> (i32, i32) {
    %c0_i32 = arith.constant 0 : i32
    %c0_i32_0 = arith.constant 0 : i32
    %c0_i32_1 = arith.constant 0 : i32
    return %c0_i32, %c0_i32_0 : i32, i32
  }
  func.func @transform_5(%arg0: i32) -> (i32, i32, i32, i32) {
    %c0_i32 = arith.constant 0 : i32
    %c0_i32_0 = arith.constant 0 : i32
    %c0_i32_1 = arith.constant 0 : i32
    %c0_i32_2 = arith.constant 0 : i32
    return %arg0, %c0_i32, %c0_i32_0, %c0_i32_1 : i32, i32, i32, i32
  }
}

</mosaic_0001>

<llo_original>
// kernel: tpu_custom_call.1
$region0: #{tpu_custom_call.1}
  #allocation0 [shape = 'u32[]', space=smem, size = 0x4, offset = 0x4, fixed_abs, tag = 'smem constant byte address 0x4 - core index']
  #allocation1 [shape = 'u32[144,128]{1,0:T(1,128)}', space=vmem, size = 0x12000, scoped, tag = 'internal scratch']
  #allocation2 [shape = 'bf16[18,18,128]{2,1,0:T(8,128)(2,1)}', space=vmem, size = 0x1b000, scoped, tag = 'scratch operand']
  #allocation3 [shape = 'bf16[18,18,128]{2,1,0:T(8,128)(2,1)}', space=vmem, size = 0x1b000, scoped, tag = 'scratch operand']
  %s0 = inlined_call_operand.vmem [shape: f32[2,18,18,128], index: 0, kind: input, shape index: {}]
  %s1 = inlined_call_operand.vmem [shape: bf16[1152,128], index: 1, kind: input, shape index: {}]
  %s2 = inlined_call_operand.vmem [shape: f32[1,128], index: 2, kind: input, shape index: {}]
  %s3 = inlined_call_operand.vmem [shape: bf16[1152,128], index: 3, kind: input, shape index: {}]
  %s4 = inlined_call_operand.vmem [shape: f32[1,128], index: 4, kind: input, shape index: {}]
  %s5 = inlined_call_operand.hbm [shape: f32[2,16,16,128], index: 5, kind: output, shape index: {}]
  %s6 = sld [smem:[#allocation0]]
  $region53: #{tpu_custom_call.1} parent=0
    _
  %s8 = ssub.s32 1, %s6
  %s9 = scalar_select 0, %s8, %s6
  $region1: #{tpu_custom_call.1} parent=0
    #allocation4 [shape = 'u8[262144]{0}', space=vmem, size = 0x40000, scoped, tag = 'output window, operand 0']
    #allocation5 [shape = 's32[2]{0}', space=sflag, size = 0x8, scoped, tag = 'scoped memory for tpu_custom_call.1']
    %10 = vsyncpa [#allocation5], 0
    %s11 = scalar_lea.sflag [#allocation5], 1
    %12 = vsyncpa %s11, 0
    loop: start=0, step=1, limit=4
    $region2: #{tpu_custom_call.1} parent=1 // loop_pre_header
      _
    $region3: #{tpu_custom_call.1} parent=1 // loop_header
      %s14 = sphi 0, %s18
      %p15 = scmp.ge.s32.totalorder %s14, 4
      %s24 = sphi 0, %s26
      %s27 = sphi 0, %s24
      %s28 = sphi 0, %s27
      %s44 = sphi 0, %s28
      %s48 = sphi 0, %s48
      %s50 = sphi 0, %s48
      %s51 = sphi 0, %s50
      %s65 = sphi 0, %s51
      %s69 = sphi 0, %s69
      %s71 = sphi 0, %s69
      %s72 = sphi 0, %s71
      %s86 = sphi 0, %s72
      %s90 = sphi 0, %s90
      %s92 = sphi 0, %s90
      %s93 = sphi 0, %s92
      %s107 = sphi 0, %s93
      %s111 = sphi 0, %s111
      %s113 = sphi 0, %s111
      %s114 = sphi 0, %s113
      %s128 = sphi 0, %s114
      %s134 = sphi 0, %s136
      %s137 = sphi 0, %s134
      %s138 = sphi 0, %s137
      %s154 = sphi 0, %s138
    $region4: #{tpu_custom_call.1} parent=1 // loop_header_branch
      %17 = sbr.rel (%p15) target = $region8
    $region5: #{tpu_custom_call.1} parent=1 // loop_body
      %s19 = ssub.s32 %s14, 1
      %s20 = ssub.s32 %s14, 2
      %s21 = sadd.s32 %s14, 1
      %s22 = ssub.s32 %s14, %s21
      %p23 = scmp.eq.s32.totalorder %s22, 0
      %s25 = sadd.s32 %s24, 1
      %s26 = scalar_select %p23, %s24, %s25
      %p29 = pneg %p23
      %p30 = scmp.eq.s32.totalorder %s14, 1
      %p31 = por %p29, %p30
      %p32 = scmp.ne.s32.totalorder %s24, %s27
      %p33 = scmp.eq.s32.totalorder %s14, 0
      %p34 = por %p32, %p33
      %p35 = scmp.ne.s32.totalorder %s24, %s27
      %p36 = scmp.eq.s32.totalorder %s19, 1
      %p37 = por %p35, %p36
      %p38 = scmp.ne.s32.totalorder %s27, %s28
      %p39 = scmp.eq.s32.totalorder %s19, 0
      %p40 = por %p38, %p39
      %p41 = scmp.ne.s32.totalorder %s27, %s28
      %p42 = scmp.eq.s32.totalorder %s20, 1
      %p43 = por %p41, %p42
      %p45 = scmp.ne.s32.totalorder %s28, %s44
      %p46 = scmp.eq.s32.totalorder %s20, 0
      %p47 = por %p45, %p46
      %s49 = sadd.s32 %s48, 1
      %p52 = scmp.eq.s32.totalorder %s14, 1
      %p53 = scmp.ne.s32.totalorder %s48, %s50
      %p54 = scmp.eq.s32.totalorder %s14, 0
      %p55 = por %p53, %p54
      %p56 = scmp.ne.s32.totalorder %s48, %s50
      %p57 = scmp.eq.s32.totalorder %s19, 1
      %p58 = por %p56, %p57
      %p59 = scmp.ne.s32.totalorder %s50, %s51
      %p60 = scmp.eq.s32.totalorder %s19, 0
      %p61 = por %p59, %p60
      %p62 = scmp.ne.s32.totalorder %s50, %s51
      %p63 = scmp.eq.s32.totalorder %s20, 1
      %p64 = por %p62, %p63
      %p66 = scmp.ne.s32.totalorder %s51, %s65
      %p67 = scmp.eq.s32.totalorder %s20, 0
      %p68 = por %p66, %p67
      %s70 = sadd.s32 %s69, 1
      %p73 = scmp.eq.s32.totalorder %s14, 1
      %p74 = scmp.ne.s32.totalorder %s69, %s71
      %p75 = scmp.eq.s32.totalorder %s14, 0
      %p76 = por %p74, %p75
      %p77 = scmp.ne.s32.totalorder %s69, %s71
      %p78 = scmp.eq.s32.totalorder %s19, 1
      %p79 = por %p77, %p78
      %p80 = scmp.ne.s32.totalorder %s71, %s72
      %p81 = scmp.eq.s32.totalorder %s19, 0
      %p82 = por %p80, %p81
      %p83 = scmp.ne.s32.totalorder %s71, %s72
      %p84 = scmp.eq.s32.totalorder %s20, 1
      %p85 = por %p83, %p84
      %p87 = scmp.ne.s32.totalorder %s72, %s86
      %p88 = scmp.eq.s32.totalorder %s20, 0
      %p89 = por %p87, %p88
      %s91 = sadd.s32 %s90, 1
      %p94 = scmp.eq.s32.totalorder %s14, 1
      %p95 = scmp.ne.s32.totalorder %s90, %s92
      %p96 = scmp.eq.s32.totalorder %s14, 0
      %p97 = por %p95, %p96
      %p98 = scmp.ne.s32.totalorder %s90, %s92
      %p99 = scmp.eq.s32.totalorder %s19, 1
      %p100 = por %p98, %p99
      %p101 = scmp.ne.s32.totalorder %s92, %s93
      %p102 = scmp.eq.s32.totalorder %s19, 0
      %p103 = por %p101, %p102
      %p104 = scmp.ne.s32.totalorder %s92, %s93
      %p105 = scmp.eq.s32.totalorder %s20, 1
      %p106 = por %p104, %p105
      %p108 = scmp.ne.s32.totalorder %s93, %s107
      %p109 = scmp.eq.s32.totalorder %s20, 0
      %p110 = por %p108, %p109
      %s112 = sadd.s32 %s111, 1
      %p115 = scmp.eq.s32.totalorder %s14, 1
      %p116 = scmp.ne.s32.totalorder %s111, %s113
      %p117 = scmp.eq.s32.totalorder %s14, 0
      %p118 = por %p116, %p117
      %p119 = scmp.ne.s32.totalorder %s111, %s113
      %p120 = scmp.eq.s32.totalorder %s19, 1
      %p121 = por %p119, %p120
      %p122 = scmp.ne.s32.totalorder %s113, %s114
      %p123 = scmp.eq.s32.totalorder %s19, 0
      %p124 = por %p122, %p123
      %p125 = scmp.ne.s32.totalorder %s113, %s114
      %p126 = scmp.eq.s32.totalorder %s20, 1
      %p127 = por %p125, %p126
      %p129 = scmp.ne.s32.totalorder %s114, %s128
      %p130 = scmp.eq.s32.totalorder %s20, 0
      %p131 = por %p129, %p130
      %s132 = ssub.s32 %s14, %s21
      %p133 = scmp.eq.s32.totalorder %s132, 0
      %s135 = sadd.s32 %s134, 1
      %s136 = scalar_select %p133, %s134, %s135
      %p139 = pneg %p133
      %p140 = scmp.eq.s32.totalorder %s14, 1
      %p141 = por %p139, %p140
      %p142 = scmp.ne.s32.totalorder %s134, %s137
      %p143 = scmp.eq.s32.totalorder %s14, 0
      %p144 = por %p142, %p143
      %p145 = scmp.ne.s32.totalorder %s134, %s137
      %p146 = scmp.eq.s32.totalorder %s19, 1
      %p147 = por %p145, %p146
      %p148 = scmp.ne.s32.totalorder %s137, %s138
      %p149 = scmp.eq.s32.totalorder %s19, 0
      %p150 = por %p148, %p149
      %p151 = scmp.ne.s32.totalorder %s137, %s138
      %p152 = scmp.eq.s32.totalorder %s20, 1
      %p153 = por %p151, %p152
      %p155 = scmp.ne.s32.totalorder %s138, %s154
      %p156 = scmp.eq.s32.totalorder %s20, 0
      %p157 = por %p155, %p156
      %p158 = scmp.le.s32.totalorder 1, %s14
      %p159 = scmp.lt.s32.totalorder %s14, 3
      %p160 = pnand %p158, %p159
      %p161 = pneg %p160
      // Predicated region
      $region9: #{tpu_custom_call.1} parent=5 // pred_check
        _
      $region10: #{tpu_custom_call.1} parent=5 // pred_check_branch
        %163 = sbr.rel (%p160) target = $region12
      $region11: #{tpu_custom_call.1} parent=5 // pred_region
        %s164 = ssub.s32 %s14, 1
        // Predicated region
        $region13: #{tpu_custom_call.1} parent=11 // pred_check
          %p165 = pneg %p61
        $region14: #{tpu_custom_call.1} parent=11 // pred_check_branch
          %167 = sbr.rel (%p165) target = $region16
        $region15: #{tpu_custom_call.1} parent=11 // pred_region
          _
        $region16: #{tpu_custom_call.1} parent=11 // pred_fallthru
          _
        // Predicated region
        $region17: #{tpu_custom_call.1} parent=11 // pred_check
          %p168 = pneg %p82
        $region18: #{tpu_custom_call.1} parent=11 // pred_check_branch
          %170 = sbr.rel (%p168) target = $region20
        $region19: #{tpu_custom_call.1} parent=11 // pred_region
          _
        $region20: #{tpu_custom_call.1} parent=11 // pred_fallthru
          _
        // Predicated region
        $region21: #{tpu_custom_call.1} parent=11 // pred_check
          %p171 = pneg %p103
        $region22: #{tpu_custom_call.1} parent=11 // pred_check_branch
          %173 = sbr.rel (%p171) target = $region24
        $region23: #{tpu_custom_call.1} parent=11 // pred_region
          _
        $region24: #{tpu_custom_call.1} parent=11 // pred_fallthru
          _
        // Predicated region
        $region25: #{tpu_custom_call.1} parent=11 // pred_check
          %p174 = pneg %p124
        $region26: #{tpu_custom_call.1} parent=11 // pred_check_branch
          %176 = sbr.rel (%p174) target = $region28
        $region27: #{tpu_custom_call.1} parent=11 // pred_region
          _
        $region28: #{tpu_custom_call.1} parent=11 // pred_fallthru
          _
      $region12: #{tpu_custom_call.1} parent=5 // pred_fallthru
        _
      %p177 = scmp.lt.s32.totalorder %s14, 2
      // Predicated region
      $region29: #{tpu_custom_call.1} parent=5 // pred_check
        %p178 = pneg %p177
      $region30: #{tpu_custom_call.1} parent=5 // pred_check_branch
        %180 = sbr.rel (%p178) target = $region32
      $region31: #{tpu_custom_call.1} parent=5 // pred_region
        // Predicated region
        $region33: #{tpu_custom_call.1} parent=31 // pred_check
          %p181 = pneg %p34
        $region34: #{tpu_custom_call.1} parent=31 // pred_check_branch
          %183 = sbr.rel (%p181) target = $region36
        $region35: #{tpu_custom_call.1} parent=31 // pred_region
          %p184 = scmp.lt.s32.totalorder %s14, 1
          %s185 = scalar_select %p184, %s14, 1
          %s186 = smul.addr %s185, 54
          %s187 = smul.addr %s186, 8
          %s188 = scalar_lea.vmem %s0, %s187
        $region36: #{tpu_custom_call.1} parent=31 // pred_fallthru
          _
      $region32: #{tpu_custom_call.1} parent=5 // pred_fallthru
        _
      %p189 = scmp.le.s32.totalorder 1, %s14
      %p190 = scmp.lt.s32.totalorder %s14, 3
      %p191 = pnand %p189, %p190
      %p192 = pneg %p191
      // Predicated region
      $region37: #{tpu_custom_call.1} parent=5 // pred_check
        _
      $region38: #{tpu_custom_call.1} parent=5 // pred_check_branch
        %194 = sbr.rel (%p191) target = $region40
      $region39: #{tpu_custom_call.1} parent=5 // pred_region
        %s195 = ssub.s32 %s14, 1
        %p196 = scmp.lt.s32.totalorder %s19, 1
        %s197 = scalar_select %p196, %s19, 1
        %s198 = smul.addr %s197, 54
        %s199 = smul.addr %s198, 8
        %s200 = scalar_lea.vmem %s0, %s199
        %p201 = pneg %p40
        %p202 = pneg %p37
        %p203 = pneg %p61
        %p204 = pneg %p58
        %p205 = pneg %p82
        %p206 = pneg %p79
        %p207 = pneg %p103
        %p208 = pneg %p100
        %p209 = pneg %p124
        %p210 = pneg %p121
        %p211 = pneg %p150
        %p212 = pneg %p147
        %s213 = sand.u32 %s137, 1
        %s214 = scalar_lea.sflag [#allocation5], %s213
        %s215 = sand.u32 %s137, 1
        %s216 = smul.addr %s215, 256
        %s217 = scalar_lea.vmem [#allocation4], %s216
        %p218 = scmp.lt.s32.totalorder %s19, 1
        %s219 = scalar_select %p218, %s19, 1
        %s220 = smul.addr %s219, 54
        %s221 = smul.addr %s220, 8
        %s222 = scalar_lea.vmem %s0, %s221
        %v224 = vld [vmem:[%s222] sm:$0xff]
        %v225 = vld [vmem:[%s222 + $0x8] sm:$0xff]
        %v226 = vld [vmem:[%s222 + $0x10] sm:$0x3]
        %v227 = vld [vmem:[%s222 + $0x18] sm:$0xff]
        %v228 = vld [vmem:[%s222 + $0x20] sm:$0xff]
        %v229 = vld [vmem:[%s222 + $0x28] sm:$0x3]
        %v230 = vld [vmem:[%s222 + $0x30] sm:$0xff]
        %v231 = vld [vmem:[%s222 + $0x38] sm:$0xff]
        %v232 = vld [vmem:[%s222 + $0x40] sm:$0x3]
        %v233 = vld [vmem:[%s222 + $0x48] sm:$0xff]
        %v234 = vld [vmem:[%s222 + $0x50] sm:$0xff]
        %v235 = vld [vmem:[%s222 + $0x58] sm:$0x3]
        %v236 = vld [vmem:[%s222 + $0x60] sm:$0xff]
        %v237 = vld [vmem:[%s222 + $0x68] sm:$0xff]
        %v238 = vld [vmem:[%s222 + $0x70] sm:$0x3]
        %v239 = vld [vmem:[%s222 + $0x78] sm:$0xff]
        %v240 = vld [vmem:[%s222 + $0x80] sm:$0xff]
        %v241 = vld [vmem:[%s222 + $0x88] sm:$0x3]
        %v242 = vld [vmem:[%s222 + $0x90] sm:$0xff]
        %v243 = vld [vmem:[%s222 + $0x98] sm:$0xff]
        %v244 = vld [vmem:[%s222 + $0xa0] sm:$0x3]
        %v245 = vld [vmem:[%s222 + $0xa8] sm:$0xff]
        %v246 = vld [vmem:[%s222 + $0xb0] sm:$0xff]
        %v247 = vld [vmem:[%s222 + $0xb8] sm:$0x3]
        %v248 = vld [vmem:[%s222 + $0xc0] sm:$0xff]
        %v249 = vld [vmem:[%s222 + $0xc8] sm:$0xff]
        %v250 = vld [vmem:[%s222 + $0xd0] sm:$0x3]
        %v251 = vld [vmem:[%s222 + $0xd8] sm:$0xff]
        %v252 = vld [vmem:[%s222 + $0xe0] sm:$0xff]
        %v253 = vld [vmem:[%s222 + $0xe8] sm:$0x3]
        %v254 = vld [vmem:[%s222 + $0xf0] sm:$0xff]
        %v255 = vld [vmem:[%s222 + $0xf8] sm:$0xff]
        %v256 = vld [vmem:[%s222 + $0x100] sm:$0x3]
        %v257 = vld [vmem:[%s222 + $0x108] sm:$0xff]
        %v258 = vld [vmem:[%s222 + $0x110] sm:$0xff]
        %v259 = vld [vmem:[%s222 + $0x118] sm:$0x3]
        %v260 = vld [vmem:[%s222 + $0x120] sm:$0xff]
        %v261 = vld [vmem:[%s222 + $0x128] sm:$0xff]
        %v262 = vld [vmem:[%s222 + $0x130] sm:$0x3]
        %v263 = vld [vmem:[%s222 + $0x138] sm:$0xff]
        %v264 = vld [vmem:[%s222 + $0x140] sm:$0xff]
        %v265 = vld [vmem:[%s222 + $0x148] sm:$0x3]
        %v266 = vld [vmem:[%s222 + $0x150] sm:$0xff]
        %v267 = vld [vmem:[%s222 + $0x158] sm:$0xff]
        %v268 = vld [vmem:[%s222 + $0x160] sm:$0x3]
        %v269 = vld [vmem:[%s222 + $0x168] sm:$0xff]
        %v270 = vld [vmem:[%s222 + $0x170] sm:$0xff]
        %v271 = vld [vmem:[%s222 + $0x178] sm:$0x3]
        %v272 = vld [vmem:[%s222 + $0x180] sm:$0xff]
        %v273 = vld [vmem:[%s222 + $0x188] sm:$0xff]
        %v274 = vld [vmem:[%s222 + $0x190] sm:$0x3]
        %v275 = vld [vmem:[%s222 + $0x198] sm:$0xff]
        %v276 = vld [vmem:[%s222 + $0x1a0] sm:$0xff]
        %v277 = vld [vmem:[%s222 + $0x1a8] sm:$0x3]
        %v278 = vpack.c.bf16 %v225, %v224
        %v279 = vpack.c.bf16 %v226, %v226
        %v280 = vpack.c.bf16 %v228, %v227
        %v281 = vpack.c.bf16 %v229, %v229
        %v282 = vpack.c.bf16 %v231, %v230
        %v283 = vpack.c.bf16 %v232, %v232
        %v284 = vpack.c.bf16 %v234, %v233
        %v285 = vpack.c.bf16 %v235, %v235
        %v286 = vpack.c.bf16 %v237, %v236
        %v287 = vpack.c.bf16 %v238, %v238
        %v288 = vpack.c.bf16 %v240, %v239
        %v289 = vpack.c.bf16 %v241, %v241
        %v290 = vpack.c.bf16 %v243, %v242
        %v291 = vpack.c.bf16 %v244, %v244
        %v292 = vpack.c.bf16 %v246, %v245
        %v293 = vpack.c.bf16 %v247, %v247
        %v294 = vpack.c.bf16 %v249, %v248
        %v295 = vpack.c.bf16 %v250, %v250
        %v296 = vpack.c.bf16 %v252, %v251
        %v297 = vpack.c.bf16 %v253, %v253
        %v298 = vpack.c.bf16 %v255, %v254
        %v299 = vpack.c.bf16 %v256, %v256
        %v300 = vpack.c.bf16 %v258, %v257
        %v301 = vpack.c.bf16 %v259, %v259
        %v302 = vpack.c.bf16 %v261, %v260
        %v303 = vpack.c.bf16 %v262, %v262
        %v304 = vpack.c.bf16 %v264, %v263
        %v305 = vpack.c.bf16 %v265, %v265
        %v306 = vpack.c.bf16 %v267, %v266
        %v307 = vpack.c.bf16 %v268, %v268
        %v308 = vpack.c.bf16 %v270, %v269
        %v309 = vpack.c.bf16 %v271, %v271
        %v310 = vpack.c.bf16 %v273, %v272
        %v311 = vpack.c.bf16 %v274, %v274
        %v312 = vpack.c.bf16 %v276, %v275
        %v313 = vpack.c.bf16 %v277, %v277
        %v350 = vunpack.c.l.b16 %v278
        %v351 = vunpack.c.h.b16 %v278
        %v352 = vunpack.c.l.b16 %v279
        %v353 = vunpack.c.l.b16 %v280
        %v354 = vunpack.c.h.b16 %v280
        %v355 = vunpack.c.l.b16 %v281
        %v356 = vunpack.c.l.b16 %v282
        %v357 = vunpack.c.h.b16 %v282
        %v358 = vunpack.c.l.b16 %v283
        %v359 = vunpack.c.l.b16 %v284
        %v360 = vunpack.c.h.b16 %v284
        %v361 = vunpack.c.l.b16 %v285
        %v362 = vunpack.c.l.b16 %v286
        %v363 = vunpack.c.h.b16 %v286
        %v364 = vunpack.c.l.b16 %v287
        %v365 = vunpack.c.l.b16 %v288
        %v366 = vunpack.c.h.b16 %v288
        %v367 = vunpack.c.l.b16 %v289
        %v368 = vunpack.c.l.b16 %v290
        %v369 = vunpack.c.h.b16 %v290
        %v370 = vunpack.c.l.b16 %v291
        %v371 = vunpack.c.l.b16 %v292
        %v372 = vunpack.c.h.b16 %v292
        %v373 = vunpack.c.l.b16 %v293
        %v374 = vunpack.c.l.b16 %v294
        %v375 = vunpack.c.h.b16 %v294
        %v376 = vunpack.c.l.b16 %v295
        %v377 = vunpack.c.l.b16 %v296
        %v378 = vunpack.c.h.b16 %v296
        %v379 = vunpack.c.l.b16 %v297
        %v380 = vunpack.c.l.b16 %v298
        %v381 = vunpack.c.h.b16 %v298
        %v382 = vunpack.c.l.b16 %v299
        %v383 = vunpack.c.l.b16 %v300
        %v384 = vunpack.c.h.b16 %v300
        %v385 = vunpack.c.l.b16 %v301
        %v386 = vunpack.c.l.b16 %v302
        %v387 = vunpack.c.h.b16 %v302
        %v388 = vunpack.c.l.b16 %v303
        %v389 = vunpack.c.l.b16 %v304
        %v390 = vunpack.c.h.b16 %v304
        %v391 = vunpack.c.l.b16 %v305
        %v392 = vunpack.c.l.b16 %v306
        %v393 = vunpack.c.h.b16 %v306
        %v394 = vunpack.c.l.b16 %v307
        %v395 = vunpack.c.l.b16 %v308
        %v396 = vunpack.c.h.b16 %v308
        %v397 = vunpack.c.l.b16 %v309
        %v398 = vunpack.c.l.b16 %v310
        %v399 = vunpack.c.h.b16 %v310
        %v400 = vunpack.c.l.b16 %v311
        %v401 = vunpack.c.l.b16 %v312
        %v402 = vunpack.c.h.b16 %v312
        %v403 = vunpack.c.l.b16 %v313
        %v404 = vpack.c.b16 %v350, %v350
        %v405 = vpack.c.b16 %v351, %v351
        %v406 = vpack.c.b16 %v352, %v352
        %v407 = vpack.c.b16 %v353, %v353
        %v408 = vpack.c.b16 %v354, %v354
        %v409 = vpack.c.b16 %v355, %v355
        %v410 = vpack.c.b16 %v356, %v356
        %v411 = vpack.c.b16 %v357, %v357
        %v412 = vpack.c.b16 %v358, %v358
        %v413 = vpack.c.b16 %v359, %v359
        %v414 = vpack.c.b16 %v360, %v360
        %v415 = vpack.c.b16 %v361, %v361
        %v416 = vpack.c.b16 %v362, %v362
        %v417 = vpack.c.b16 %v363, %v363
        %v418 = vpack.c.b16 %v364, %v364
        %v419 = vpack.c.b16 %v365, %v365
        %v420 = vpack.c.b16 %v366, %v366
        %v421 = vpack.c.b16 %v367, %v367
        %v422 = vpack.c.b16 %v368, %v368
        %v423 = vpack.c.b16 %v369, %v369
        %v424 = vpack.c.b16 %v370, %v370
        %v425 = vpack.c.b16 %v371, %v371
        %v426 = vpack.c.b16 %v372, %v372
        %v427 = vpack.c.b16 %v373, %v373
        %v428 = vpack.c.b16 %v374, %v374
        %v429 = vpack.c.b16 %v375, %v375
        %v430 = vpack.c.b16 %v376, %v376
        %v431 = vpack.c.b16 %v377, %v377
        %v432 = vpack.c.b16 %v378, %v378
        %v433 = vpack.c.b16 %v379, %v379
        %v434 = vpack.c.b16 %v380, %v380
        %v435 = vpack.c.b16 %v381, %v381
        %v436 = vpack.c.b16 %v382, %v382
        %v437 = vpack.c.b16 %v383, %v383
        %v438 = vpack.c.b16 %v384, %v384
        %v439 = vpack.c.b16 %v385, %v385
        %v440 = vpack.c.b16 %v386, %v386
        %v441 = vpack.c.b16 %v387, %v387
        %v442 = vpack.c.b16 %v388, %v388
        %v443 = vpack.c.b16 %v389, %v389
        %v444 = vpack.c.b16 %v390, %v390
        %v445 = vpack.c.b16 %v391, %v391
        %v446 = vpack.c.b16 %v392, %v392
        %v447 = vpack.c.b16 %v393, %v393
        %v448 = vpack.c.b16 %v394, %v394
        %v449 = vpack.c.b16 %v395, %v395
        %v450 = vpack.c.b16 %v396, %v396
        %v451 = vpack.c.b16 %v397, %v397
        %v452 = vpack.c.b16 %v398, %v398
        %v453 = vpack.c.b16 %v399, %v399
        %v454 = vpack.c.b16 %v400, %v400
        %v455 = vpack.c.b16 %v401, %v401
        %v456 = vpack.c.b16 %v402, %v402
        %v457 = vpack.c.b16 %v403, %v403
        %512 = vst [vmem:[#allocation2] sm:$0xf] %v404
        %513 = vst [vmem:[#allocation2 + $0x4] sm:$0xf] %v405
        %514 = vst [vmem:[#allocation2 + $0x8] sm:$0x1] %v406
        %515 = vst [vmem:[#allocation2 + $0xc] sm:$0xf] %v407
        %516 = vst [vmem:[#allocation2 + $0x10] sm:$0xf] %v408
        %517 = vst [vmem:[#allocation2 + $0x14] sm:$0x1] %v409
        %518 = vst [vmem:[#allocation2 + $0x18] sm:$0xf] %v410
        %519 = vst [vmem:[#allocation2 + $0x1c] sm:$0xf] %v411
        %520 = vst [vmem:[#allocation2 + $0x20] sm:$0x1] %v412
        %521 = vst [vmem:[#allocation2 + $0x24] sm:$0xf] %v413
        %522 = vst [vmem:[#allocation2 + $0x28] sm:$0xf] %v414
        %523 = vst [vmem:[#allocation2 + $0x2c] sm:$0x1] %v415
        %524 = vst [vmem:[#allocation2 + $0x30] sm:$0xf] %v416
        %525 = vst [vmem:[#allocation2 + $0x34] sm:$0xf] %v417
        %526 = vst [vmem:[#allocation2 + $0x38] sm:$0x1] %v418
        %527 = vst [vmem:[#allocation2 + $0x3c] sm:$0xf] %v419
        %528 = vst [vmem:[#allocation2 + $0x40] sm:$0xf] %v420
        %529 = vst [vmem:[#allocation2 + $0x44] sm:$0x1] %v421
        %530 = vst [vmem:[#allocation2 + $0x48] sm:$0xf] %v422
        %531 = vst [vmem:[#allocation2 + $0x4c] sm:$0xf] %v423
        %532 = vst [vmem:[#allocation2 + $0x50] sm:$0x1] %v424
        %533 = vst [vmem:[#allocation2 + $0x54] sm:$0xf] %v425
        %534 = vst [vmem:[#allocation2 + $0x58] sm:$0xf] %v426
        %535 = vst [vmem:[#allocation2 + $0x5c] sm:$0x1] %v427
        %536 = vst [vmem:[#allocation2 + $0x60] sm:$0xf] %v428
        %537 = vst [vmem:[#allocation2 + $0x64] sm:$0xf] %v429
        %538 = vst [vmem:[#allocation2 + $0x68] sm:$0x1] %v430
        %539 = vst [vmem:[#allocation2 + $0x6c] sm:$0xf] %v431
        %540 = vst [vmem:[#allocation2 + $0x70] sm:$0xf] %v432
        %541 = vst [vmem:[#allocation2 + $0x74] sm:$0x1] %v433
        %542 = vst [vmem:[#allocation2 + $0x78] sm:$0xf] %v434
        %543 = vst [vmem:[#allocation2 + $0x7c] sm:$0xf] %v435
        %544 = vst [vmem:[#allocation2 + $0x80] sm:$0x1] %v436
        %545 = vst [vmem:[#allocation2 + $0x84] sm:$0xf] %v437
        %546 = vst [vmem:[#allocation2 + $0x88] sm:$0xf] %v438
        %547 = vst [vmem:[#allocation2 + $0x8c] sm:$0x1] %v439
        %548 = vst [vmem:[#allocation2 + $0x90] sm:$0xf] %v440
        %549 = vst [vmem:[#allocation2 + $0x94] sm:$0xf] %v441
        %550 = vst [vmem:[#allocation2 + $0x98] sm:$0x1] %v442
        %551 = vst [vmem:[#allocation2 + $0x9c] sm:$0xf] %v443
        %552 = vst [vmem:[#allocation2 + $0xa0] sm:$0xf] %v444
        %553 = vst [vmem:[#allocation2 + $0xa4] sm:$0x1] %v445
        %554 = vst [vmem:[#allocation2 + $0xa8] sm:$0xf] %v446
        %555 = vst [vmem:[#allocation2 + $0xac] sm:$0xf] %v447
        %556 = vst [vmem:[#allocation2 + $0xb0] sm:$0x1] %v448
        %557 = vst [vmem:[#allocation2 + $0xb4] sm:$0xf] %v449
        %558 = vst [vmem:[#allocation2 + $0xb8] sm:$0xf] %v450
        %559 = vst [vmem:[#allocation2 + $0xbc] sm:$0x1] %v451
        %560 = vst [vmem:[#allocation2 + $0xc0] sm:$0xf] %v452
        %561 = vst [vmem:[#allocation2 + $0xc4] sm:$0xf] %v453
        %562 = vst [vmem:[#allocation2 + $0xc8] sm:$0x1] %v454
        %563 = vst [vmem:[#allocation2 + $0xcc] sm:$0xf] %v455
        %564 = vst [vmem:[#allocation2 + $0xd0] sm:$0xf] %v456
        %565 = vst [vmem:[#allocation2 + $0xd4] sm:$0x1] %v457
        %v566 = vld [vmem:[#allocation2] sm:$0xf]
        %v567 = vld [vmem:[#allocation2 + $0x4] sm:$0xf]
        %v568 = vld [vmem:[#allocation2 + $0xc] sm:$0xf]
        %v569 = vld [vmem:[#allocation2 + $0x10] sm:$0xf]
        %v570 = vld [vmem:[#allocation2 + $0x18] sm:$0xf]
        %v571 = vld [vmem:[#allocation2 + $0x1c] sm:$0xf]
        %v572 = vld [vmem:[#allocation2 + $0x24] sm:$0xf]
        %v573 = vld [vmem:[#allocation2 + $0x28] sm:$0xf]
        %v574 = vld [vmem:[#allocation2 + $0x30] sm:$0xf]
        %v575 = vld [vmem:[#allocation2 + $0x34] sm:$0xf]
        %v576 = vld [vmem:[#allocation2 + $0x3c] sm:$0xf]
        %v577 = vld [vmem:[#allocation2 + $0x40] sm:$0xf]
        %v578 = vld [vmem:[#allocation2 + $0x48] sm:$0xf]
        %v579 = vld [vmem:[#allocation2 + $0x4c] sm:$0xf]
        %v580 = vld [vmem:[#allocation2 + $0x54] sm:$0xf]
        %v581 = vld [vmem:[#allocation2 + $0x58] sm:$0xf]
        %v582 = vld [vmem:[#allocation2 + $0x60] sm:$0xf]
        %v583 = vld [vmem:[#allocation2 + $0x64] sm:$0xf]
        %v584 = vld [vmem:[#allocation2 + $0x6c] sm:$0xf]
        %v585 = vld [vmem:[#allocation2 + $0x70] sm:$0xf]
        %v586 = vld [vmem:[#allocation2 + $0x78] sm:$0xf]
        %v587 = vld [vmem:[#allocation2 + $0x7c] sm:$0xf]
        %v588 = vld [vmem:[#allocation2 + $0x84] sm:$0xf]
        %v589 = vld [vmem:[#allocation2 + $0x88] sm:$0xf]
        %v590 = vld [vmem:[#allocation2 + $0x90] sm:$0xf]
        %v591 = vld [vmem:[#allocation2 + $0x94] sm:$0xf]
        %v592 = vld [vmem:[#allocation2 + $0x9c] sm:$0xf]
        %v593 = vld [vmem:[#allocation2 + $0xa0] sm:$0xf]
        %v594 = vld [vmem:[#allocation2 + $0xa8] sm:$0xf]
        %v595 = vld [vmem:[#allocation2 + $0xac] sm:$0xf]
        %v596 = vld [vmem:[#allocation2 + $0xb4] sm:$0xf]
        %v597 = vld [vmem:[#allocation2 + $0xb8] sm:$0xf]
        %v598 = vld [vmem:[#allocation2 + $0x8] sm:$0x1]
        %v599 = vld [vmem:[#allocation2 + $0x14] sm:$0x1]
        %v600 = vld [vmem:[#allocation2 + $0x20] sm:$0x1]
        %v601 = vld [vmem:[#allocation2 + $0x2c] sm:$0x1]
        %v602 = vld [vmem:[#allocation2 + $0x38] sm:$0x1]
        %v603 = vld [vmem:[#allocation2 + $0x44] sm:$0x1]
        %v604 = vld [vmem:[#allocation2 + $0x50] sm:$0x1]
        %v605 = vld [vmem:[#allocation2 + $0x5c] sm:$0x1]
        %v606 = vld [vmem:[#allocation2 + $0x68] sm:$0x1]
        %v607 = vld [vmem:[#allocation2 + $0x74] sm:$0x1]
        %v608 = vld [vmem:[#allocation2 + $0x80] sm:$0x1]
        %v609 = vld [vmem:[#allocation2 + $0x8c] sm:$0x1]
        %v610 = vld [vmem:[#allocation2 + $0x98] sm:$0x1]
        %v611 = vld [vmem:[#allocation2 + $0xa4] sm:$0x1]
        %v612 = vld [vmem:[#allocation2 + $0xb0] sm:$0x1]
        %v613 = vld [vmem:[#allocation2 + $0xbc] sm:$0x1]
        %vm614 = vsmask.f32 3328
        %vm615 = vsmask.f32 7440
        %vm616 = vmor %vm614, %vm615
        %v618 = vshrl.u32 %v566, 16
        %v620 = vrot.slane %v618, 4
        %v621 = vshll.u32 %v566, 16
        %v623 = vrot.slane %v621, 5
        %v624 = vor.u32 %v620, %v623
        %v625 = vrot.slane %v624, 4
        %v627 = vshll.u32 %v567, 16
        %v629 = vrot.slane %v627, 5
        %v630 = vsel %vm616, %v625, %v629
        %v631 = vshrl.u32 %v567, 16
        %v633 = vrot.slane %v631, 4
        %v634 = vor.u32 %v633, %v629
        %v635 = vrot.slane %v634, 4
        %v637 = vshll.u32 %v598, 16
        %v639 = vrot.slane %v637, 5
        %v640 = vsel %vm616, %v635, %v639
        %v642 = vshrl.u32 %v568, 16
        %v644 = vrot.slane %v642, 4
        %v645 = vshll.u32 %v568, 16
        %v647 = vrot.slane %v645, 5
        %v648 = vor.u32 %v644, %v647
        %v649 = vrot.slane %v648, 4
        %v651 = vshll.u32 %v569, 16
        %v653 = vrot.slane %v651, 5
        %v654 = vsel %vm616, %v649, %v653
        %v655 = vshrl.u32 %v569, 16
        %v657 = vrot.slane %v655, 4
        %v658 = vor.u32 %v657, %v653
        %v659 = vrot.slane %v658, 4
        %v661 = vshll.u32 %v599, 16
        %v663 = vrot.slane %v661, 5
        %v664 = vsel %vm616, %v659, %v663
        %v666 = vshrl.u32 %v570, 16
        %v668 = vrot.slane %v666, 4
        %v669 = vshll.u32 %v570, 16
        %v671 = vrot.slane %v669, 5
        %v672 = vor.u32 %v668, %v671
        %v673 = vrot.slane %v672, 4
        %v675 = vshll.u32 %v571, 16
        %v677 = vrot.slane %v675, 5
        %v678 = vsel %vm616, %v673, %v677
        %v679 = vshrl.u32 %v571, 16
        %v681 = vrot.slane %v679, 4
        %v682 = vor.u32 %v681, %v677
        %v683 = vrot.slane %v682, 4
        %v685 = vshll.u32 %v600, 16
        %v687 = vrot.slane %v685, 5
        %v688 = vsel %vm616, %v683, %v687
        %v690 = vshrl.u32 %v572, 16
        %v692 = vrot.slane %v690, 4
        %v693 = vshll.u32 %v572, 16
        %v695 = vrot.slane %v693, 5
        %v696 = vor.u32 %v692, %v695
        %v697 = vrot.slane %v696, 4
        %v699 = vshll.u32 %v573, 16
        %v701 = vrot.slane %v699, 5
        %v702 = vsel %vm616, %v697, %v701
        %v703 = vshrl.u32 %v573, 16
        %v705 = vrot.slane %v703, 4
        %v706 = vor.u32 %v705, %v701
        %v707 = vrot.slane %v706, 4
        %v709 = vshll.u32 %v601, 16
        %v711 = vrot.slane %v709, 5
        %v712 = vsel %vm616, %v707, %v711
        %v714 = vshrl.u32 %v574, 16
        %v716 = vrot.slane %v714, 4
        %v717 = vshll.u32 %v574, 16
        %v719 = vrot.slane %v717, 5
        %v720 = vor.u32 %v716, %v719
        %v721 = vrot.slane %v720, 4
        %v723 = vshll.u32 %v575, 16
        %v725 = vrot.slane %v723, 5
        %v726 = vsel %vm616, %v721, %v725
        %v727 = vshrl.u32 %v575, 16
        %v729 = vrot.slane %v727, 4
        %v730 = vor.u32 %v729, %v725
        %v731 = vrot.slane %v730, 4
        %v733 = vshll.u32 %v602, 16
        %v735 = vrot.slane %v733, 5
        %v736 = vsel %vm616, %v731, %v735
        %v738 = vshrl.u32 %v576, 16
        %v740 = vrot.slane %v738, 4
        %v741 = vshll.u32 %v576, 16
        %v743 = vrot.slane %v741, 5
        %v744 = vor.u32 %v740, %v743
        %v745 = vrot.slane %v744, 4
        %v747 = vshll.u32 %v577, 16
        %v749 = vrot.slane %v747, 5
        %v750 = vsel %vm616, %v745, %v749
        %v751 = vshrl.u32 %v577, 16
        %v753 = vrot.slane %v751, 4
        %v754 = vor.u32 %v753, %v749
        %v755 = vrot.slane %v754, 4
        %v757 = vshll.u32 %v603, 16
        %v759 = vrot.slane %v757, 5
        %v760 = vsel %vm616, %v755, %v759
        %v762 = vshrl.u32 %v578, 16
        %v764 = vrot.slane %v762, 4
        %v765 = vshll.u32 %v578, 16
        %v767 = vrot.slane %v765, 5
        %v768 = vor.u32 %v764, %v767
        %v769 = vrot.slane %v768, 4
        %v771 = vshll.u32 %v579, 16
        %v773 = vrot.slane %v771, 5
        %v774 = vsel %vm616, %v769, %v773
        %v775 = vshrl.u32 %v579, 16
        %v777 = vrot.slane %v775, 4
        %v778 = vor.u32 %v777, %v773
        %v779 = vrot.slane %v778, 4
        %v781 = vshll.u32 %v604, 16
        %v783 = vrot.slane %v781, 5
        %v784 = vsel %vm616, %v779, %v783
        %v786 = vshrl.u32 %v580, 16
        %v788 = vrot.slane %v786, 4
        %v789 = vshll.u32 %v580, 16
        %v791 = vrot.slane %v789, 5
        %v792 = vor.u32 %v788, %v791
        %v793 = vrot.slane %v792, 4
        %v795 = vshll.u32 %v581, 16
        %v797 = vrot.slane %v795, 5
        %v798 = vsel %vm616, %v793, %v797
        %v799 = vshrl.u32 %v581, 16
        %v801 = vrot.slane %v799, 4
        %v802 = vor.u32 %v801, %v797
        %v803 = vrot.slane %v802, 4
        %v805 = vshll.u32 %v605, 16
        %v807 = vrot.slane %v805, 5
        %v808 = vsel %vm616, %v803, %v807
        %v810 = vshrl.u32 %v582, 16
        %v812 = vrot.slane %v810, 4
        %v813 = vshll.u32 %v582, 16
        %v815 = vrot.slane %v813, 5
        %v816 = vor.u32 %v812, %v815
        %v817 = vrot.slane %v816, 4
        %v819 = vshll.u32 %v583, 16
        %v821 = vrot.slane %v819, 5
        %v822 = vsel %vm616, %v817, %v821
        %v823 = vshrl.u32 %v583, 16
        %v825 = vrot.slane %v823, 4
        %v826 = vor.u32 %v825, %v821
        %v827 = vrot.slane %v826, 4
        %v829 = vshll.u32 %v606, 16
        %v831 = vrot.slane %v829, 5
        %v832 = vsel %vm616, %v827, %v831
        %v834 = vshrl.u32 %v584, 16
        %v836 = vrot.slane %v834, 4
        %v837 = vshll.u32 %v584, 16
        %v839 = vrot.slane %v837, 5
        %v840 = vor.u32 %v836, %v839
        %v841 = vrot.slane %v840, 4
        %v843 = vshll.u32 %v585, 16
        %v845 = vrot.slane %v843, 5
        %v846 = vsel %vm616, %v841, %v845
        %v847 = vshrl.u32 %v585, 16
        %v849 = vrot.slane %v847, 4
        %v850 = vor.u32 %v849, %v845
        %v851 = vrot.slane %v850, 4
        %v853 = vshll.u32 %v607, 16
        %v855 = vrot.slane %v853, 5
        %v856 = vsel %vm616, %v851, %v855
        %v858 = vshrl.u32 %v586, 16
        %v860 = vrot.slane %v858, 4
        %v861 = vshll.u32 %v586, 16
        %v863 = vrot.slane %v861, 5
        %v864 = vor.u32 %v860, %v863
        %v865 = vrot.slane %v864, 4
        %v867 = vshll.u32 %v587, 16
        %v869 = vrot.slane %v867, 5
        %v870 = vsel %vm616, %v865, %v869
        %v871 = vshrl.u32 %v587, 16
        %v873 = vrot.slane %v871, 4
        %v874 = vor.u32 %v873, %v869
        %v875 = vrot.slane %v874, 4
        %v877 = vshll.u32 %v608, 16
        %v879 = vrot.slane %v877, 5
        %v880 = vsel %vm616, %v875, %v879
        %v882 = vshrl.u32 %v588, 16
        %v884 = vrot.slane %v882, 4
        %v885 = vshll.u32 %v588, 16
        %v887 = vrot.slane %v885, 5
        %v888 = vor.u32 %v884, %v887
        %v889 = vrot.slane %v888, 4
        %v891 = vshll.u32 %v589, 16
        %v893 = vrot.slane %v891, 5
        %v894 = vsel %vm616, %v889, %v893
        %v895 = vshrl.u32 %v589, 16
        %v897 = vrot.slane %v895, 4
        %v898 = vor.u32 %v897, %v893
        %v899 = vrot.slane %v898, 4
        %v901 = vshll.u32 %v609, 16
        %v903 = vrot.slane %v901, 5
        %v904 = vsel %vm616, %v899, %v903
        %v906 = vshrl.u32 %v590, 16
        %v908 = vrot.slane %v906, 4
        %v909 = vshll.u32 %v590, 16
        %v911 = vrot.slane %v909, 5
        %v912 = vor.u32 %v908, %v911
        %v913 = vrot.slane %v912, 4
        %v915 = vshll.u32 %v591, 16
        %v917 = vrot.slane %v915, 5
        %v918 = vsel %vm616, %v913, %v917
        %v919 = vshrl.u32 %v591, 16
        %v921 = vrot.slane %v919, 4
        %v922 = vor.u32 %v921, %v917
        %v923 = vrot.slane %v922, 4
        %v925 = vshll.u32 %v610, 16
        %v927 = vrot.slane %v925, 5
        %v928 = vsel %vm616, %v923, %v927
        %v930 = vshrl.u32 %v592, 16
        %v932 = vrot.slane %v930, 4
        %v933 = vshll.u32 %v592, 16
        %v935 = vrot.slane %v933, 5
        %v936 = vor.u32 %v932, %v935
        %v937 = vrot.slane %v936, 4
        %v939 = vshll.u32 %v593, 16
        %v941 = vrot.slane %v939, 5
        %v942 = vsel %vm616, %v937, %v941
        %v943 = vshrl.u32 %v593, 16
        %v945 = vrot.slane %v943, 4
        %v946 = vor.u32 %v945, %v941
        %v947 = vrot.slane %v946, 4
        %v949 = vshll.u32 %v611, 16
        %v951 = vrot.slane %v949, 5
        %v952 = vsel %vm616, %v947, %v951
        %v954 = vshrl.u32 %v594, 16
        %v956 = vrot.slane %v954, 4
        %v957 = vshll.u32 %v594, 16
        %v959 = vrot.slane %v957, 5
        %v960 = vor.u32 %v956, %v959
        %v961 = vrot.slane %v960, 4
        %v963 = vshll.u32 %v595, 16
        %v965 = vrot.slane %v963, 5
        %v966 = vsel %vm616, %v961, %v965
        %v967 = vshrl.u32 %v595, 16
        %v969 = vrot.slane %v967, 4
        %v970 = vor.u32 %v969, %v965
        %v971 = vrot.slane %v970, 4
        %v973 = vshll.u32 %v612, 16
        %v975 = vrot.slane %v973, 5
        %v976 = vsel %vm616, %v971, %v975
        %v978 = vshrl.u32 %v596, 16
        %v980 = vrot.slane %v978, 4
        %v981 = vshll.u32 %v596, 16
        %v983 = vrot.slane %v981, 5
        %v984 = vor.u32 %v980, %v983
        %v985 = vrot.slane %v984, 4
        %v987 = vshll.u32 %v597, 16
        %v989 = vrot.slane %v987, 5
        %v990 = vsel %vm616, %v985, %v989
        %v991 = vshrl.u32 %v597, 16
        %v993 = vrot.slane %v991, 4
        %v994 = vor.u32 %v993, %v989
        %v995 = vrot.slane %v994, 4
        %v997 = vshll.u32 %v613, 16
        %v999 = vrot.slane %v997, 5
        %v1000 = vsel %vm616, %v995, %v999
        %v1001 = vld [vmem:[#allocation2] sm:$0xe]
        %v1002 = vld [vmem:[#allocation2 + $0xc] sm:$0xe]
        %v1003 = vld [vmem:[#allocation2 + $0x18] sm:$0xe]
        %v1004 = vld [vmem:[#allocation2 + $0x24] sm:$0xe]
        %v1005 = vld [vmem:[#allocation2 + $0x30] sm:$0xe]
        %v1006 = vld [vmem:[#allocation2 + $0x3c] sm:$0xe]
        %v1007 = vld [vmem:[#allocation2 + $0x48] sm:$0xe]
        %v1008 = vld [vmem:[#allocation2 + $0x54] sm:$0xe]
        %v1009 = vld [vmem:[#allocation2 + $0x60] sm:$0xe]
        %v1010 = vld [vmem:[#allocation2 + $0x6c] sm:$0xe]
        %v1011 = vld [vmem:[#allocation2 + $0x78] sm:$0xe]
        %v1012 = vld [vmem:[#allocation2 + $0x84] sm:$0xe]
        %v1013 = vld [vmem:[#allocation2 + $0x90] sm:$0xe]
        %v1014 = vld [vmem:[#allocation2 + $0x9c] sm:$0xe]
        %v1015 = vld [vmem:[#allocation2 + $0xa8] sm:$0xe]
        %v1016 = vld [vmem:[#allocation2 + $0xb4] sm:$0xe]
        %vm1065 = vcmask 1042432
        %vm1066 = vcmask 1046532
        %vm1067 = vmor %vm1065, %vm1066
        %v1068 = vrot.slane %v1001, 5
        %v1069 = vrot.slane %v1068, 4
        %v1070 = vrot.slane %v567, 5
        %v1071 = vsel %vm1067, %v1069, %v1070
        %v1072 = vrot.slane %v1070, 4
        %v1073 = vrot.slane %v598, 5
        %v1074 = vsel %vm1067, %v1072, %v1073
        %v1075 = vrot.slane %v1002, 5
        %v1076 = vrot.slane %v1075, 4
        %v1077 = vrot.slane %v569, 5
        %v1078 = vsel %vm1067, %v1076, %v1077
        %v1079 = vrot.slane %v1077, 4
        %v1080 = vrot.slane %v599, 5
        %v1081 = vsel %vm1067, %v1079, %v1080
        %v1082 = vrot.slane %v1003, 5
        %v1083 = vrot.slane %v1082, 4
        %v1084 = vrot.slane %v571, 5
        %v1085 = vsel %vm1067, %v1083, %v1084
        %v1086 = vrot.slane %v1084, 4
        %v1087 = vrot.slane %v600, 5
        %v1088 = vsel %vm1067, %v1086, %v1087
        %v1089 = vrot.slane %v1004, 5
        %v1090 = vrot.slane %v1089, 4
        %v1091 = vrot.slane %v573, 5
        %v1092 = vsel %vm1067, %v1090, %v1091
        %v1093 = vrot.slane %v1091, 4
        %v1094 = vrot.slane %v601, 5
        %v1095 = vsel %vm1067, %v1093, %v1094
        %v1096 = vrot.slane %v1005, 5
        %v1097 = vrot.slane %v1096, 4
        %v1098 = vrot.slane %v575, 5
        %v1099 = vsel %vm1067, %v1097, %v1098
        %v1100 = vrot.slane %v1098, 4
        %v1101 = vrot.slane %v602, 5
        %v1102 = vsel %vm1067, %v1100, %v1101
        %v1103 = vrot.slane %v1006, 5
        %v1104 = vrot.slane %v1103, 4
        %v1105 = vrot.slane %v577, 5
        %v1106 = vsel %vm1067, %v1104, %v1105
        %v1107 = vrot.slane %v1105, 4
        %v1108 = vrot.slane %v603, 5
        %v1109 = vsel %vm1067, %v1107, %v1108
        %v1110 = vrot.slane %v1007, 5
        %v1111 = vrot.slane %v1110, 4
        %v1112 = vrot.slane %v579, 5
        %v1113 = vsel %vm1067, %v1111, %v1112
        %v1114 = vrot.slane %v1112, 4
        %v1115 = vrot.slane %v604, 5
        %v1116 = vsel %vm1067, %v1114, %v1115
        %v1117 = vrot.slane %v1008, 5
        %v1118 = vrot.slane %v1117, 4
        %v1119 = vrot.slane %v581, 5
        %v1120 = vsel %vm1067, %v1118, %v1119
        %v1121 = vrot.slane %v1119, 4
        %v1122 = vrot.slane %v605, 5
        %v1123 = vsel %vm1067, %v1121, %v1122
        %v1124 = vrot.slane %v1009, 5
        %v1125 = vrot.slane %v1124, 4
        %v1126 = vrot.slane %v583, 5
        %v1127 = vsel %vm1067, %v1125, %v1126
        %v1128 = vrot.slane %v1126, 4
        %v1129 = vrot.slane %v606, 5
        %v1130 = vsel %vm1067, %v1128, %v1129
        %v1131 = vrot.slane %v1010, 5
        %v1132 = vrot.slane %v1131, 4
        %v1133 = vrot.slane %v585, 5
        %v1134 = vsel %vm1067, %v1132, %v1133
        %v1135 = vrot.slane %v1133, 4
        %v1136 = vrot.slane %v607, 5
        %v1137 = vsel %vm1067, %v1135, %v1136
        %v1138 = vrot.slane %v1011, 5
        %v1139 = vrot.slane %v1138, 4
        %v1140 = vrot.slane %v587, 5
        %v1141 = vsel %vm1067, %v1139, %v1140
        %v1142 = vrot.slane %v1140, 4
        %v1143 = vrot.slane %v608, 5
        %v1144 = vsel %vm1067, %v1142, %v1143
        %v1145 = vrot.slane %v1012, 5
        %v1146 = vrot.slane %v1145, 4
        %v1147 = vrot.slane %v589, 5
        %v1148 = vsel %vm1067, %v1146, %v1147
        %v1149 = vrot.slane %v1147, 4
        %v1150 = vrot.slane %v609, 5
        %v1151 = vsel %vm1067, %v1149, %v1150
        %v1152 = vrot.slane %v1013, 5
        %v1153 = vrot.slane %v1152, 4
        %v1154 = vrot.slane %v591, 5
        %v1155 = vsel %vm1067, %v1153, %v1154
        %v1156 = vrot.slane %v1154, 4
        %v1157 = vrot.slane %v610, 5
        %v1158 = vsel %vm1067, %v1156, %v1157
        %v1159 = vrot.slane %v1014, 5
        %v1160 = vrot.slane %v1159, 4
        %v1161 = vrot.slane %v593, 5
        %v1162 = vsel %vm1067, %v1160, %v1161
        %v1163 = vrot.slane %v1161, 4
        %v1164 = vrot.slane %v611, 5
        %v1165 = vsel %vm1067, %v1163, %v1164
        %v1166 = vrot.slane %v1015, 5
        %v1167 = vrot.slane %v1166, 4
        %v1168 = vrot.slane %v595, 5
        %v1169 = vsel %vm1067, %v1167, %v1168
        %v1170 = vrot.slane %v1168, 4
        %v1171 = vrot.slane %v612, 5
        %v1172 = vsel %vm1067, %v1170, %v1171
        %v1173 = vrot.slane %v1016, 5
        %v1174 = vrot.slane %v1173, 4
        %v1175 = vrot.slane %v597, 5
        %v1176 = vsel %vm1067, %v1174, %v1175
        %v1177 = vrot.slane %v1175, 4
        %v1178 = vrot.slane %v613, 5
        %v1179 = vsel %vm1067, %v1177, %v1178
        %s1180 = scalar_lea.vmem [#allocation2], 12
        %v1181 = vld [vmem:[%s1180] sm:$0xf]
        %v1182 = vld [vmem:[%s1180 + $0x4] sm:$0xf]
        %v1183 = vld [vmem:[%s1180 + $0xc] sm:$0xf]
        %v1184 = vld [vmem:[%s1180 + $0x10] sm:$0xf]
        %v1185 = vld [vmem:[%s1180 + $0x18] sm:$0xf]
        %v1186 = vld [vmem:[%s1180 + $0x1c] sm:$0xf]
        %v1187 = vld [vmem:[%s1180 + $0x24] sm:$0xf]
        %v1188 = vld [vmem:[%s1180 + $0x28] sm:$0xf]
        %v1189 = vld [vmem:[%s1180 + $0x30] sm:$0xf]
        %v1190 = vld [vmem:[%s1180 + $0x34] sm:$0xf]
        %v1191 = vld [vmem:[%s1180 + $0x3c] sm:$0xf]
        %v1192 = vld [vmem:[%s1180 + $0x40] sm:$0xf]
        %v1193 = vld [vmem:[%s1180 + $0x48] sm:$0xf]
        %v1194 = vld [vmem:[%s1180 + $0x4c] sm:$0xf]
        %v1195 = vld [vmem:[%s1180 + $0x54] sm:$0xf]
        %v1196 = vld [vmem:[%s1180 + $0x58] sm:$0xf]
        %v1197 = vld [vmem:[%s1180 + $0x60] sm:$0xf]
        %v1198 = vld [vmem:[%s1180 + $0x64] sm:$0xf]
        %v1199 = vld [vmem:[%s1180 + $0x6c] sm:$0xf]
        %v1200 = vld [vmem:[%s1180 + $0x70] sm:$0xf]
        %v1201 = vld [vmem:[%s1180 + $0x78] sm:$0xf]
        %v1202 = vld [vmem:[%s1180 + $0x7c] sm:$0xf]
        %v1203 = vld [vmem:[%s1180 + $0x84] sm:$0xf]
        %v1204 = vld [vmem:[%s1180 + $0x88] sm:$0xf]
        %v1205 = vld [vmem:[%s1180 + $0x90] sm:$0xf]
        %v1206 = vld [vmem:[%s1180 + $0x94] sm:$0xf]
        %v1207 = vld [vmem:[%s1180 + $0x9c] sm:$0xf]
        %v1208 = vld [vmem:[%s1180 + $0xa0] sm:$0xf]
        %v1209 = vld [vmem:[%s1180 + $0xa8] sm:$0xf]
        %v1210 = vld [vmem:[%s1180 + $0xac] sm:$0xf]
        %v1211 = vld [vmem:[%s1180 + $0xb4] sm:$0xf]
        %v1212 = vld [vmem:[%s1180 + $0xb8] sm:$0xf]
        %v1213 = vld [vmem:[%s1180 + $0x8] sm:$0x1]
        %v1214 = vld [vmem:[%s1180 + $0x14] sm:$0x1]
        %v1215 = vld [vmem:[%s1180 + $0x20] sm:$0x1]
        %v1216 = vld [vmem:[%s1180 + $0x2c] sm:$0x1]
        %v1217 = vld [vmem:[%s1180 + $0x38] sm:$0x1]
        %v1218 = vld [vmem:[%s1180 + $0x44] sm:$0x1]
        %v1219 = vld [vmem:[%s1180 + $0x50] sm:$0x1]
        %v1220 = vld [vmem:[%s1180 + $0x5c] sm:$0x1]
        %v1221 = vld [vmem:[%s1180 + $0x68] sm:$0x1]
        %v1222 = vld [vmem:[%s1180 + $0x74] sm:$0x1]
        %v1223 = vld [vmem:[%s1180 + $0x80] sm:$0x1]
        %v1224 = vld [vmem:[%s1180 + $0x8c] sm:$0x1]
        %v1225 = vld [vmem:[%s1180 + $0x98] sm:$0x1]
        %v1226 = vld [vmem:[%s1180 + $0xa4] sm:$0x1]
        %v1227 = vld [vmem:[%s1180 + $0xb0] sm:$0x1]
        %v1228 = vld [vmem:[%s1180 + $0xbc] sm:$0x1]
        %v1230 = vshrl.u32 %v1181, 16
        %v1232 = vrot.slane %v1230, 4
        %v1233 = vshll.u32 %v1181, 16
        %v1235 = vrot.slane %v1233, 5
        %v1236 = vor.u32 %v1232, %v1235
        %v1237 = vrot.slane %v1236, 4
        %v1239 = vshll.u32 %v1182, 16
        %v1241 = vrot.slane %v1239, 5
        %v1242 = vsel %vm616, %v1237, %v1241
        %v1243 = vshrl.u32 %v1182, 16
        %v1245 = vrot.slane %v1243, 4
        %v1246 = vor.u32 %v1245, %v1241
        %v1247 = vrot.slane %v1246, 4
        %v1249 = vshll.u32 %v1213, 16
        %v1251 = vrot.slane %v1249, 5
        %v1252 = vsel %vm616, %v1247, %v1251
        %v1254 = vshrl.u32 %v1183, 16
        %v1256 = vrot.slane %v1254, 4
        %v1257 = vshll.u32 %v1183, 16
        %v1259 = vrot.slane %v1257, 5
        %v1260 = vor.u32 %v1256, %v1259
        %v1261 = vrot.slane %v1260, 4
        %v1263 = vshll.u32 %v1184, 16
        %v1265 = vrot.slane %v1263, 5
        %v1266 = vsel %vm616, %v1261, %v1265
        %v1267 = vshrl.u32 %v1184, 16
        %v1269 = vrot.slane %v1267, 4
        %v1270 = vor.u32 %v1269, %v1265
        %v1271 = vrot.slane %v1270, 4
        %v1273 = vshll.u32 %v1214, 16
        %v1275 = vrot.slane %v1273, 5
        %v1276 = vsel %vm616, %v1271, %v1275
        %v1278 = vshrl.u32 %v1185, 16
        %v1280 = vrot.slane %v1278, 4
        %v1281 = vshll.u32 %v1185, 16
        %v1283 = vrot.slane %v1281, 5
        %v1284 = vor.u32 %v1280, %v1283
        %v1285 = vrot.slane %v1284, 4
        %v1287 = vshll.u32 %v1186, 16
        %v1289 = vrot.slane %v1287, 5
        %v1290 = vsel %vm616, %v1285, %v1289
        %v1291 = vshrl.u32 %v1186, 16
        %v1293 = vrot.slane %v1291, 4
        %v1294 = vor.u32 %v1293, %v1289
        %v1295 = vrot.slane %v1294, 4
        %v1297 = vshll.u32 %v1215, 16
        %v1299 = vrot.slane %v1297, 5
        %v1300 = vsel %vm616, %v1295, %v1299
        %v1302 = vshrl.u32 %v1187, 16
        %v1304 = vrot.slane %v1302, 4
        %v1305 = vshll.u32 %v1187, 16
        %v1307 = vrot.slane %v1305, 5
        %v1308 = vor.u32 %v1304, %v1307
        %v1309 = vrot.slane %v1308, 4
        %v1311 = vshll.u32 %v1188, 16
        %v1313 = vrot.slane %v1311, 5
        %v1314 = vsel %vm616, %v1309, %v1313
        %v1315 = vshrl.u32 %v1188, 16
        %v1317 = vrot.slane %v1315, 4
        %v1318 = vor.u32 %v1317, %v1313
        %v1319 = vrot.slane %v1318, 4
        %v1321 = vshll.u32 %v1216, 16
        %v1323 = vrot.slane %v1321, 5
        %v1324 = vsel %vm616, %v1319, %v1323
        %v1326 = vshrl.u32 %v1189, 16
        %v1328 = vrot.slane %v1326, 4
        %v1329 = vshll.u32 %v1189, 16
        %v1331 = vrot.slane %v1329, 5
        %v1332 = vor.u32 %v1328, %v1331
        %v1333 = vrot.slane %v1332, 4
        %v1335 = vshll.u32 %v1190, 16
        %v1337 = vrot.slane %v1335, 5
        %v1338 = vsel %vm616, %v1333, %v1337
        %v1339 = vshrl.u32 %v1190, 16
        %v1341 = vrot.slane %v1339, 4
        %v1342 = vor.u32 %v1341, %v1337
        %v1343 = vrot.slane %v1342, 4
        %v1345 = vshll.u32 %v1217, 16
        %v1347 = vrot.slane %v1345, 5
        %v1348 = vsel %vm616, %v1343, %v1347
        %v1350 = vshrl.u32 %v1191, 16
        %v1352 = vrot.slane %v1350, 4
        %v1353 = vshll.u32 %v1191, 16
        %v1355 = vrot.slane %v1353, 5
        %v1356 = vor.u32 %v1352, %v1355
        %v1357 = vrot.slane %v1356, 4
        %v1359 = vshll.u32 %v1192, 16
        %v1361 = vrot.slane %v1359, 5
        %v1362 = vsel %vm616, %v1357, %v1361
        %v1363 = vshrl.u32 %v1192, 16
        %v1365 = vrot.slane %v1363, 4
        %v1366 = vor.u32 %v1365, %v1361
        %v1367 = vrot.slane %v1366, 4
        %v1369 = vshll.u32 %v1218, 16
        %v1371 = vrot.slane %v1369, 5
        %v1372 = vsel %vm616, %v1367, %v1371
        %v1374 = vshrl.u32 %v1193, 16
        %v1376 = vrot.slane %v1374, 4
        %v1377 = vshll.u32 %v1193, 16
        %v1379 = vrot.slane %v1377, 5
        %v1380 = vor.u32 %v1376, %v1379
        %v1381 = vrot.slane %v1380, 4
        %v1383 = vshll.u32 %v1194, 16
        %v1385 = vrot.slane %v1383, 5
        %v1386 = vsel %vm616, %v1381, %v1385
        %v1387 = vshrl.u32 %v1194, 16
        %v1389 = vrot.slane %v1387, 4
        %v1390 = vor.u32 %v1389, %v1385
        %v1391 = vrot.slane %v1390, 4
        %v1393 = vshll.u32 %v1219, 16
        %v1395 = vrot.slane %v1393, 5
        %v1396 = vsel %vm616, %v1391, %v1395
        %v1398 = vshrl.u32 %v1195, 16
        %v1400 = vrot.slane %v1398, 4
        %v1401 = vshll.u32 %v1195, 16
        %v1403 = vrot.slane %v1401, 5
        %v1404 = vor.u32 %v1400, %v1403
        %v1405 = vrot.slane %v1404, 4
        %v1407 = vshll.u32 %v1196, 16
        %v1409 = vrot.slane %v1407, 5
        %v1410 = vsel %vm616, %v1405, %v1409
        %v1411 = vshrl.u32 %v1196, 16
        %v1413 = vrot.slane %v1411, 4
        %v1414 = vor.u32 %v1413, %v1409
        %v1415 = vrot.slane %v1414, 4
        %v1417 = vshll.u32 %v1220, 16
        %v1419 = vrot.slane %v1417, 5
        %v1420 = vsel %vm616, %v1415, %v1419
        %v1422 = vshrl.u32 %v1197, 16
        %v1424 = vrot.slane %v1422, 4
        %v1425 = vshll.u32 %v1197, 16
        %v1427 = vrot.slane %v1425, 5
        %v1428 = vor.u32 %v1424, %v1427
        %v1429 = vrot.slane %v1428, 4
        %v1431 = vshll.u32 %v1198, 16
        %v1433 = vrot.slane %v1431, 5
        %v1434 = vsel %vm616, %v1429, %v1433
        %v1435 = vshrl.u32 %v1198, 16
        %v1437 = vrot.slane %v1435, 4
        %v1438 = vor.u32 %v1437, %v1433
        %v1439 = vrot.slane %v1438, 4
        %v1441 = vshll.u32 %v1221, 16
        %v1443 = vrot.slane %v1441, 5
        %v1444 = vsel %vm616, %v1439, %v1443
        %v1446 = vshrl.u32 %v1199, 16
        %v1448 = vrot.slane %v1446, 4
        %v1449 = vshll.u32 %v1199, 16
        %v1451 = vrot.slane %v1449, 5
        %v1452 = vor.u32 %v1448, %v1451
        %v1453 = vrot.slane %v1452, 4
        %v1455 = vshll.u32 %v1200, 16
        %v1457 = vrot.slane %v1455, 5
        %v1458 = vsel %vm616, %v1453, %v1457
        %v1459 = vshrl.u32 %v1200, 16
        %v1461 = vrot.slane %v1459, 4
        %v1462 = vor.u32 %v1461, %v1457
        %v1463 = vrot.slane %v1462, 4
        %v1465 = vshll.u32 %v1222, 16
        %v1467 = vrot.slane %v1465, 5
        %v1468 = vsel %vm616, %v1463, %v1467
        %v1470 = vshrl.u32 %v1201, 16
        %v1472 = vrot.slane %v1470, 4
        %v1473 = vshll.u32 %v1201, 16
        %v1475 = vrot.slane %v1473, 5
        %v1476 = vor.u32 %v1472, %v1475
        %v1477 = vrot.slane %v1476, 4
        %v1479 = vshll.u32 %v1202, 16
        %v1481 = vrot.slane %v1479, 5
        %v1482 = vsel %vm616, %v1477, %v1481
        %v1483 = vshrl.u32 %v1202, 16
        %v1485 = vrot.slane %v1483, 4
        %v1486 = vor.u32 %v1485, %v1481
        %v1487 = vrot.slane %v1486, 4
        %v1489 = vshll.u32 %v1223, 16
        %v1491 = vrot.slane %v1489, 5
        %v1492 = vsel %vm616, %v1487, %v1491
        %v1494 = vshrl.u32 %v1203, 16
        %v1496 = vrot.slane %v1494, 4
        %v1497 = vshll.u32 %v1203, 16
        %v1499 = vrot.slane %v1497, 5
        %v1500 = vor.u32 %v1496, %v1499
        %v1501 = vrot.slane %v1500, 4
        %v1503 = vshll.u32 %v1204, 16
        %v1505 = vrot.slane %v1503, 5
        %v1506 = vsel %vm616, %v1501, %v1505
        %v1507 = vshrl.u32 %v1204, 16
        %v1509 = vrot.slane %v1507, 4
        %v1510 = vor.u32 %v1509, %v1505
        %v1511 = vrot.slane %v1510, 4
        %v1513 = vshll.u32 %v1224, 16
        %v1515 = vrot.slane %v1513, 5
        %v1516 = vsel %vm616, %v1511, %v1515
        %v1518 = vshrl.u32 %v1205, 16
        %v1520 = vrot.slane %v1518, 4
        %v1521 = vshll.u32 %v1205, 16
        %v1523 = vrot.slane %v1521, 5
        %v1524 = vor.u32 %v1520, %v1523
        %v1525 = vrot.slane %v1524, 4
        %v1527 = vshll.u32 %v1206, 16
        %v1529 = vrot.slane %v1527, 5
        %v1530 = vsel %vm616, %v1525, %v1529
        %v1531 = vshrl.u32 %v1206, 16
        %v1533 = vrot.slane %v1531, 4
        %v1534 = vor.u32 %v1533, %v1529
        %v1535 = vrot.slane %v1534, 4
        %v1537 = vshll.u32 %v1225, 16
        %v1539 = vrot.slane %v1537, 5
        %v1540 = vsel %vm616, %v1535, %v1539
        %v1542 = vshrl.u32 %v1207, 16
        %v1544 = vrot.slane %v1542, 4
        %v1545 = vshll.u32 %v1207, 16
        %v1547 = vrot.slane %v1545, 5
        %v1548 = vor.u32 %v1544, %v1547
        %v1549 = vrot.slane %v1548, 4
        %v1551 = vshll.u32 %v1208, 16
        %v1553 = vrot.slane %v1551, 5
        %v1554 = vsel %vm616, %v1549, %v1553
        %v1555 = vshrl.u32 %v1208, 16
        %v1557 = vrot.slane %v1555, 4
        %v1558 = vor.u32 %v1557, %v1553
        %v1559 = vrot.slane %v1558, 4
        %v1561 = vshll.u32 %v1226, 16
        %v1563 = vrot.slane %v1561, 5
        %v1564 = vsel %vm616, %v1559, %v1563
        %v1566 = vshrl.u32 %v1209, 16
        %v1568 = vrot.slane %v1566, 4
        %v1569 = vshll.u32 %v1209, 16
        %v1571 = vrot.slane %v1569, 5
        %v1572 = vor.u32 %v1568, %v1571
        %v1573 = vrot.slane %v1572, 4
        %v1575 = vshll.u32 %v1210, 16
        %v1577 = vrot.slane %v1575, 5
        %v1578 = vsel %vm616, %v1573, %v1577
        %v1579 = vshrl.u32 %v1210, 16
        %v1581 = vrot.slane %v1579, 4
        %v1582 = vor.u32 %v1581, %v1577
        %v1583 = vrot.slane %v1582, 4
        %v1585 = vshll.u32 %v1227, 16
        %v1587 = vrot.slane %v1585, 5
        %v1588 = vsel %vm616, %v1583, %v1587
        %v1590 = vshrl.u32 %v1211, 16
        %v1592 = vrot.slane %v1590, 4
        %v1593 = vshll.u32 %v1211, 16
        %v1595 = vrot.slane %v1593, 5
        %v1596 = vor.u32 %v1592, %v1595
        %v1597 = vrot.slane %v1596, 4
        %v1599 = vshll.u32 %v1212, 16
        %v1601 = vrot.slane %v1599, 5
        %v1602 = vsel %vm616, %v1597, %v1601
        %v1603 = vshrl.u32 %v1212, 16
        %v1605 = vrot.slane %v1603, 4
        %v1606 = vor.u32 %v1605, %v1601
        %v1607 = vrot.slane %v1606, 4
        %v1609 = vshll.u32 %v1228, 16
        %v1611 = vrot.slane %v1609, 5
        %v1612 = vsel %vm616, %v1607, %v1611
        %v1613 = vld [vmem:[%s1180] sm:$0xe]
        %v1614 = vld [vmem:[%s1180 + $0xc] sm:$0xe]
        %v1615 = vld [vmem:[%s1180 + $0x18] sm:$0xe]
        %v1616 = vld [vmem:[%s1180 + $0x24] sm:$0xe]
        %v1617 = vld [vmem:[%s1180 + $0x30] sm:$0xe]
        %v1618 = vld [vmem:[%s1180 + $0x3c] sm:$0xe]
        %v1619 = vld [vmem:[%s1180 + $0x48] sm:$0xe]
        %v1620 = vld [vmem:[%s1180 + $0x54] sm:$0xe]
        %v1621 = vld [vmem:[%s1180 + $0x60] sm:$0xe]
        %v1622 = vld [vmem:[%s1180 + $0x6c] sm:$0xe]
        %v1623 = vld [vmem:[%s1180 + $0x78] sm:$0xe]
        %v1624 = vld [vmem:[%s1180 + $0x84] sm:$0xe]
        %v1625 = vld [vmem:[%s1180 + $0x90] sm:$0xe]
        %v1626 = vld [vmem:[%s1180 + $0x9c] sm:$0xe]
        %v1627 = vld [vmem:[%s1180 + $0xa8] sm:$0xe]
        %v1628 = vld [vmem:[%s1180 + $0xb4] sm:$0xe]
        %v1677 = vrot.slane %v1613, 5
        %v1678 = vrot.slane %v1677, 4
        %v1679 = vrot.slane %v1182, 5
        %v1680 = vsel %vm1067, %v1678, %v1679
        %v1681 = vrot.slane %v1679, 4
        %v1682 = vrot.slane %v1213, 5
        %v1683 = vsel %vm1067, %v1681, %v1682
        %v1684 = vrot.slane %v1614, 5
        %v1685 = vrot.slane %v1684, 4
        %v1686 = vrot.slane %v1184, 5
        %v1687 = vsel %vm1067, %v1685, %v1686
        %v1688 = vrot.slane %v1686, 4
        %v1689 = vrot.slane %v1214, 5
        %v1690 = vsel %vm1067, %v1688, %v1689
        %v1691 = vrot.slane %v1615, 5
        %v1692 = vrot.slane %v1691, 4
        %v1693 = vrot.slane %v1186, 5
        %v1694 = vsel %vm1067, %v1692, %v1693
        %v1695 = vrot.slane %v1693, 4
        %v1696 = vrot.slane %v1215, 5
        %v1697 = vsel %vm1067, %v1695, %v1696
        %v1698 = vrot.slane %v1616, 5
        %v1699 = vrot.slane %v1698, 4
        %v1700 = vrot.slane %v1188, 5
        %v1701 = vsel %vm1067, %v1699, %v1700
        %v1702 = vrot.slane %v1700, 4
        %v1703 = vrot.slane %v1216, 5
        %v1704 = vsel %vm1067, %v1702, %v1703
        %v1705 = vrot.slane %v1617, 5
        %v1706 = vrot.slane %v1705, 4
        %v1707 = vrot.slane %v1190, 5
        %v1708 = vsel %vm1067, %v1706, %v1707
        %v1709 = vrot.slane %v1707, 4
        %v1710 = vrot.slane %v1217, 5
        %v1711 = vsel %vm1067, %v1709, %v1710
        %v1712 = vrot.slane %v1618, 5
        %v1713 = vrot.slane %v1712, 4
        %v1714 = vrot.slane %v1192, 5
        %v1715 = vsel %vm1067, %v1713, %v1714
        %v1716 = vrot.slane %v1714, 4
        %v1717 = vrot.slane %v1218, 5
        %v1718 = vsel %vm1067, %v1716, %v1717
        %v1719 = vrot.slane %v1619, 5
        %v1720 = vrot.slane %v1719, 4
        %v1721 = vrot.slane %v1194, 5
        %v1722 = vsel %vm1067, %v1720, %v1721
        %v1723 = vrot.slane %v1721, 4
        %v1724 = vrot.slane %v1219, 5
        %v1725 = vsel %vm1067, %v1723, %v1724
        %v1726 = vrot.slane %v1620, 5
        %v1727 = vrot.slane %v1726, 4
        %v1728 = vrot.slane %v1196, 5
        %v1729 = vsel %vm1067, %v1727, %v1728
        %v1730 = vrot.slane %v1728, 4
        %v1731 = vrot.slane %v1220, 5
        %v1732 = vsel %vm1067, %v1730, %v1731
        %v1733 = vrot.slane %v1621, 5
        %v1734 = vrot.slane %v1733, 4
        %v1735 = vrot.slane %v1198, 5
        %v1736 = vsel %vm1067, %v1734, %v1735
        %v1737 = vrot.slane %v1735, 4
        %v1738 = vrot.slane %v1221, 5
        %v1739 = vsel %vm1067, %v1737, %v1738
        %v1740 = vrot.slane %v1622, 5
        %v1741 = vrot.slane %v1740, 4
        %v1742 = vrot.slane %v1200, 5
        %v1743 = vsel %vm1067, %v1741, %v1742
        %v1744 = vrot.slane %v1742, 4
        %v1745 = vrot.slane %v1222, 5
        %v1746 = vsel %vm1067, %v1744, %v1745
        %v1747 = vrot.slane %v1623, 5
        %v1748 = vrot.slane %v1747, 4
        %v1749 = vrot.slane %v1202, 5
        %v1750 = vsel %vm1067, %v1748, %v1749
        %v1751 = vrot.slane %v1749, 4
        %v1752 = vrot.slane %v1223, 5
        %v1753 = vsel %vm1067, %v1751, %v1752
        %v1754 = vrot.slane %v1624, 5
        %v1755 = vrot.slane %v1754, 4
        %v1756 = vrot.slane %v1204, 5
        %v1757 = vsel %vm1067, %v1755, %v1756
        %v1758 = vrot.slane %v1756, 4
        %v1759 = vrot.slane %v1224, 5
        %v1760 = vsel %vm1067, %v1758, %v1759
        %v1761 = vrot.slane %v1625, 5
        %v1762 = vrot.slane %v1761, 4
        %v1763 = vrot.slane %v1206, 5
        %v1764 = vsel %vm1067, %v1762, %v1763
        %v1765 = vrot.slane %v1763, 4
        %v1766 = vrot.slane %v1225, 5
        %v1767 = vsel %vm1067, %v1765, %v1766
        %v1768 = vrot.slane %v1626, 5
        %v1769 = vrot.slane %v1768, 4
        %v1770 = vrot.slane %v1208, 5
        %v1771 = vsel %vm1067, %v1769, %v1770
        %v1772 = vrot.slane %v1770, 4
        %v1773 = vrot.slane %v1226, 5
        %v1774 = vsel %vm1067, %v1772, %v1773
        %v1775 = vrot.slane %v1627, 5
        %v1776 = vrot.slane %v1775, 4
        %v1777 = vrot.slane %v1210, 5
        %v1778 = vsel %vm1067, %v1776, %v1777
        %v1779 = vrot.slane %v1777, 4
        %v1780 = vrot.slane %v1227, 5
        %v1781 = vsel %vm1067, %v1779, %v1780
        %v1782 = vrot.slane %v1628, 5
        %v1783 = vrot.slane %v1782, 4
        %v1784 = vrot.slane %v1212, 5
        %v1785 = vsel %vm1067, %v1783, %v1784
        %v1786 = vrot.slane %v1784, 4
        %v1787 = vrot.slane %v1228, 5
        %v1788 = vsel %vm1067, %v1786, %v1787
        %s1789 = scalar_lea.vmem [#allocation2], 24
        %v1790 = vld [vmem:[%s1789] sm:$0xf]
        %v1791 = vld [vmem:[%s1789 + $0x4] sm:$0xf]
        %v1792 = vld [vmem:[%s1789 + $0xc] sm:$0xf]
        %v1793 = vld [vmem:[%s1789 + $0x10] sm:$0xf]
        %v1794 = vld [vmem:[%s1789 + $0x18] sm:$0xf]
        %v1795 = vld [vmem:[%s1789 + $0x1c] sm:$0xf]
        %v1796 = vld [vmem:[%s1789 + $0x24] sm:$0xf]
        %v1797 = vld [vmem:[%s1789 + $0x28] sm:$0xf]
        %v1798 = vld [vmem:[%s1789 + $0x30] sm:$0xf]
        %v1799 = vld [vmem:[%s1789 + $0x34] sm:$0xf]
        %v1800 = vld [vmem:[%s1789 + $0x3c] sm:$0xf]
        %v1801 = vld [vmem:[%s1789 + $0x40] sm:$0xf]
        %v1802 = vld [vmem:[%s1789 + $0x48] sm:$0xf]
        %v1803 = vld [vmem:[%s1789 + $0x4c] sm:$0xf]
        %v1804 = vld [vmem:[%s1789 + $0x54] sm:$0xf]
        %v1805 = vld [vmem:[%s1789 + $0x58] sm:$0xf]
        %v1806 = vld [vmem:[%s1789 + $0x60] sm:$0xf]
        %v1807 = vld [vmem:[%s1789 + $0x64] sm:$0xf]
        %v1808 = vld [vmem:[%s1789 + $0x6c] sm:$0xf]
        %v1809 = vld [vmem:[%s1789 + $0x70] sm:$0xf]
        %v1810 = vld [vmem:[%s1789 + $0x78] sm:$0xf]
        %v1811 = vld [vmem:[%s1789 + $0x7c] sm:$0xf]
        %v1812 = vld [vmem:[%s1789 + $0x84] sm:$0xf]
        %v1813 = vld [vmem:[%s1789 + $0x88] sm:$0xf]
        %v1814 = vld [vmem:[%s1789 + $0x90] sm:$0xf]
        %v1815 = vld [vmem:[%s1789 + $0x94] sm:$0xf]
        %v1816 = vld [vmem:[%s1789 + $0x9c] sm:$0xf]
        %v1817 = vld [vmem:[%s1789 + $0xa0] sm:$0xf]
        %v1818 = vld [vmem:[%s1789 + $0xa8] sm:$0xf]
        %v1819 = vld [vmem:[%s1789 + $0xac] sm:$0xf]
        %v1820 = vld [vmem:[%s1789 + $0xb4] sm:$0xf]
        %v1821 = vld [vmem:[%s1789 + $0xb8] sm:$0xf]
        %v1822 = vld [vmem:[%s1789 + $0x8] sm:$0x1]
        %v1823 = vld [vmem:[%s1789 + $0x14] sm:$0x1]
        %v1824 = vld [vmem:[%s1789 + $0x20] sm:$0x1]
        %v1825 = vld [vmem:[%s1789 + $0x2c] sm:$0x1]
        %v1826 = vld [vmem:[%s1789 + $0x38] sm:$0x1]
        %v1827 = vld [vmem:[%s1789 + $0x44] sm:$0x1]
        %v1828 = vld [vmem:[%s1789 + $0x50] sm:$0x1]
        %v1829 = vld [vmem:[%s1789 + $0x5c] sm:$0x1]
        %v1830 = vld [vmem:[%s1789 + $0x68] sm:$0x1]
        %v1831 = vld [vmem:[%s1789 + $0x74] sm:$0x1]
        %v1832 = vld [vmem:[%s1789 + $0x80] sm:$0x1]
        %v1833 = vld [vmem:[%s1789 + $0x8c] sm:$0x1]
        %v1834 = vld [vmem:[%s1789 + $0x98] sm:$0x1]
        %v1835 = vld [vmem:[%s1789 + $0xa4] sm:$0x1]
        %v1836 = vld [vmem:[%s1789 + $0xb0] sm:$0x1]
        %v1837 = vld [vmem:[%s1789 + $0xbc] sm:$0x1]
        %v1839 = vshrl.u32 %v1790, 16
        %v1841 = vrot.slane %v1839, 4
        %v1842 = vshll.u32 %v1790, 16
        %v1844 = vrot.slane %v1842, 5
        %v1845 = vor.u32 %v1841, %v1844
        %v1846 = vrot.slane %v1845, 4
        %v1848 = vshll.u32 %v1791, 16
        %v1850 = vrot.slane %v1848, 5
        %v1851 = vsel %vm616, %v1846, %v1850
        %v1852 = vshrl.u32 %v1791, 16
        %v1854 = vrot.slane %v1852, 4
        %v1855 = vor.u32 %v1854, %v1850
        %v1856 = vrot.slane %v1855, 4
        %v1858 = vshll.u32 %v1822, 16
        %v1860 = vrot.slane %v1858, 5
        %v1861 = vsel %vm616, %v1856, %v1860
        %v1863 = vshrl.u32 %v1792, 16
        %v1865 = vrot.slane %v1863, 4
        %v1866 = vshll.u32 %v1792, 16
        %v1868 = vrot.slane %v1866, 5
        %v1869 = vor.u32 %v1865, %v1868
        %v1870 = vrot.slane %v1869, 4
        %v1872 = vshll.u32 %v1793, 16
        %v1874 = vrot.slane %v1872, 5
        %v1875 = vsel %vm616, %v1870, %v1874
        %v1876 = vshrl.u32 %v1793, 16
        %v1878 = vrot.slane %v1876, 4
        %v1879 = vor.u32 %v1878, %v1874
        %v1880 = vrot.slane %v1879, 4
        %v1882 = vshll.u32 %v1823, 16
        %v1884 = vrot.slane %v1882, 5
        %v1885 = vsel %vm616, %v1880, %v1884
        %v1887 = vshrl.u32 %v1794, 16
        %v1889 = vrot.slane %v1887, 4
        %v1890 = vshll.u32 %v1794, 16
        %v1892 = vrot.slane %v1890, 5
        %v1893 = vor.u32 %v1889, %v1892
        %v1894 = vrot.slane %v1893, 4
        %v1896 = vshll.u32 %v1795, 16
        %v1898 = vrot.slane %v1896, 5
        %v1899 = vsel %vm616, %v1894, %v1898
        %v1900 = vshrl.u32 %v1795, 16
        %v1902 = vrot.slane %v1900, 4
        %v1903 = vor.u32 %v1902, %v1898
        %v1904 = vrot.slane %v1903, 4
        %v1906 = vshll.u32 %v1824, 16
        %v1908 = vrot.slane %v1906, 5
        %v1909 = vsel %vm616, %v1904, %v1908
        %v1911 = vshrl.u32 %v1796, 16
        %v1913 = vrot.slane %v1911, 4
        %v1914 = vshll.u32 %v1796, 16
        %v1916 = vrot.slane %v1914, 5
        %v1917 = vor.u32 %v1913, %v1916
        %v1918 = vrot.slane %v1917, 4
        %v1920 = vshll.u32 %v1797, 16
        %v1922 = vrot.slane %v1920, 5
        %v1923 = vsel %vm616, %v1918, %v1922
        %v1924 = vshrl.u32 %v1797, 16
        %v1926 = vrot.slane %v1924, 4
        %v1927 = vor.u32 %v1926, %v1922
        %v1928 = vrot.slane %v1927, 4
        %v1930 = vshll.u32 %v1825, 16
        %v1932 = vrot.slane %v1930, 5
        %v1933 = vsel %vm616, %v1928, %v1932
        %v1935 = vshrl.u32 %v1798, 16
        %v1937 = vrot.slane %v1935, 4
        %v1938 = vshll.u32 %v1798, 16
        %v1940 = vrot.slane %v1938, 5
        %v1941 = vor.u32 %v1937, %v1940
        %v1942 = vrot.slane %v1941, 4
        %v1944 = vshll.u32 %v1799, 16
        %v1946 = vrot.slane %v1944, 5
        %v1947 = vsel %vm616, %v1942, %v1946
        %v1948 = vshrl.u32 %v1799, 16
        %v1950 = vrot.slane %v1948, 4
        %v1951 = vor.u32 %v1950, %v1946
        %v1952 = vrot.slane %v1951, 4
        %v1954 = vshll.u32 %v1826, 16
        %v1956 = vrot.slane %v1954, 5
        %v1957 = vsel %vm616, %v1952, %v1956
        %v1959 = vshrl.u32 %v1800, 16
        %v1961 = vrot.slane %v1959, 4
        %v1962 = vshll.u32 %v1800, 16
        %v1964 = vrot.slane %v1962, 5
        %v1965 = vor.u32 %v1961, %v1964
        %v1966 = vrot.slane %v1965, 4
        %v1968 = vshll.u32 %v1801, 16
        %v1970 = vrot.slane %v1968, 5
        %v1971 = vsel %vm616, %v1966, %v1970
        %v1972 = vshrl.u32 %v1801, 16
        %v1974 = vrot.slane %v1972, 4
        %v1975 = vor.u32 %v1974, %v1970
        %v1976 = vrot.slane %v1975, 4
        %v1978 = vshll.u32 %v1827, 16
        %v1980 = vrot.slane %v1978, 5
        %v1981 = vsel %vm616, %v1976, %v1980
        %v1983 = vshrl.u32 %v1802, 16
        %v1985 = vrot.slane %v1983, 4
        %v1986 = vshll.u32 %v1802, 16
        %v1988 = vrot.slane %v1986, 5
        %v1989 = vor.u32 %v1985, %v1988
        %v1990 = vrot.slane %v1989, 4
        %v1992 = vshll.u32 %v1803, 16
        %v1994 = vrot.slane %v1992, 5
        %v1995 = vsel %vm616, %v1990, %v1994
        %v1996 = vshrl.u32 %v1803, 16
        %v1998 = vrot.slane %v1996, 4
        %v1999 = vor.u32 %v1998, %v1994
        %v2000 = vrot.slane %v1999, 4
        %v2002 = vshll.u32 %v1828, 16
        %v2004 = vrot.slane %v2002, 5
        %v2005 = vsel %vm616, %v2000, %v2004
        %v2007 = vshrl.u32 %v1804, 16
        %v2009 = vrot.slane %v2007, 4
        %v2010 = vshll.u32 %v1804, 16
        %v2012 = vrot.slane %v2010, 5
        %v2013 = vor.u32 %v2009, %v2012
        %v2014 = vrot.slane %v2013, 4
        %v2016 = vshll.u32 %v1805, 16
        %v2018 = vrot.slane %v2016, 5
        %v2019 = vsel %vm616, %v2014, %v2018
        %v2020 = vshrl.u32 %v1805, 16
        %v2022 = vrot.slane %v2020, 4
        %v2023 = vor.u32 %v2022, %v2018
        %v2024 = vrot.slane %v2023, 4
        %v2026 = vshll.u32 %v1829, 16
        %v2028 = vrot.slane %v2026, 5
        %v2029 = vsel %vm616, %v2024, %v2028
        %v2031 = vshrl.u32 %v1806, 16
        %v2033 = vrot.slane %v2031, 4
        %v2034 = vshll.u32 %v1806, 16
        %v2036 = vrot.slane %v2034, 5
        %v2037 = vor.u32 %v2033, %v2036
        %v2038 = vrot.slane %v2037, 4
        %v2040 = vshll.u32 %v1807, 16
        %v2042 = vrot.slane %v2040, 5
        %v2043 = vsel %vm616, %v2038, %v2042
        %v2044 = vshrl.u32 %v1807, 16
        %v2046 = vrot.slane %v2044, 4
        %v2047 = vor.u32 %v2046, %v2042
        %v2048 = vrot.slane %v2047, 4
        %v2050 = vshll.u32 %v1830, 16
        %v2052 = vrot.slane %v2050, 5
        %v2053 = vsel %vm616, %v2048, %v2052
        %v2055 = vshrl.u32 %v1808, 16
        %v2057 = vrot.slane %v2055, 4
        %v2058 = vshll.u32 %v1808, 16
        %v2060 = vrot.slane %v2058, 5
        %v2061 = vor.u32 %v2057, %v2060
        %v2062 = vrot.slane %v2061, 4
        %v2064 = vshll.u32 %v1809, 16
        %v2066 = vrot.slane %v2064, 5
        %v2067 = vsel %vm616, %v2062, %v2066
        %v2068 = vshrl.u32 %v1809, 16
        %v2070 = vrot.slane %v2068, 4
        %v2071 = vor.u32 %v2070, %v2066
        %v2072 = vrot.slane %v2071, 4
        %v2074 = vshll.u32 %v1831, 16
        %v2076 = vrot.slane %v2074, 5
        %v2077 = vsel %vm616, %v2072, %v2076
        %v2079 = vshrl.u32 %v1810, 16
        %v2081 = vrot.slane %v2079, 4
        %v2082 = vshll.u32 %v1810, 16
        %v2084 = vrot.slane %v2082, 5
        %v2085 = vor.u32 %v2081, %v2084
        %v2086 = vrot.slane %v2085, 4
        %v2088 = vshll.u32 %v1811, 16
        %v2090 = vrot.slane %v2088, 5
        %v2091 = vsel %vm616, %v2086, %v2090
        %v2092 = vshrl.u32 %v1811, 16
        %v2094 = vrot.slane %v2092, 4
        %v2095 = vor.u32 %v2094, %v2090
        %v2096 = vrot.slane %v2095, 4
        %v2098 = vshll.u32 %v1832, 16
        %v2100 = vrot.slane %v2098, 5
        %v2101 = vsel %vm616, %v2096, %v2100
        %v2103 = vshrl.u32 %v1812, 16
        %v2105 = vrot.slane %v2103, 4
        %v2106 = vshll.u32 %v1812, 16
        %v2108 = vrot.slane %v2106, 5
        %v2109 = vor.u32 %v2105, %v2108
        %v2110 = vrot.slane %v2109, 4
        %v2112 = vshll.u32 %v1813, 16
        %v2114 = vrot.slane %v2112, 5
        %v2115 = vsel %vm616, %v2110, %v2114
        %v2116 = vshrl.u32 %v1813, 16
        %v2118 = vrot.slane %v2116, 4
        %v2119 = vor.u32 %v2118, %v2114
        %v2120 = vrot.slane %v2119, 4
        %v2122 = vshll.u32 %v1833, 16
        %v2124 = vrot.slane %v2122, 5
        %v2125 = vsel %vm616, %v2120, %v2124
        %v2127 = vshrl.u32 %v1814, 16
        %v2129 = vrot.slane %v2127, 4
        %v2130 = vshll.u32 %v1814, 16
        %v2132 = vrot.slane %v2130, 5
        %v2133 = vor.u32 %v2129, %v2132
        %v2134 = vrot.slane %v2133, 4
        %v2136 = vshll.u32 %v1815, 16
        %v2138 = vrot.slane %v2136, 5
        %v2139 = vsel %vm616, %v2134, %v2138
        %v2140 = vshrl.u32 %v1815, 16
        %v2142 = vrot.slane %v2140, 4
        %v2143 = vor.u32 %v2142, %v2138
        %v2144 = vrot.slane %v2143, 4
        %v2146 = vshll.u32 %v1834, 16
        %v2148 = vrot.slane %v2146, 5
        %v2149 = vsel %vm616, %v2144, %v2148
        %v2151 = vshrl.u32 %v1816, 16
        %v2153 = vrot.slane %v2151, 4
        %v2154 = vshll.u32 %v1816, 16
        %v2156 = vrot.slane %v2154, 5
        %v2157 = vor.u32 %v2153, %v2156
        %v2158 = vrot.slane %v2157, 4
        %v2160 = vshll.u32 %v1817, 16
        %v2162 = vrot.slane %v2160, 5
        %v2163 = vsel %vm616, %v2158, %v2162
        %v2164 = vshrl.u32 %v1817, 16
        %v2166 = vrot.slane %v2164, 4
        %v2167 = vor.u32 %v2166, %v2162
        %v2168 = vrot.slane %v2167, 4
        %v2170 = vshll.u32 %v1835, 16
        %v2172 = vrot.slane %v2170, 5
        %v2173 = vsel %vm616, %v2168, %v2172
        %v2175 = vshrl.u32 %v1818, 16
        %v2177 = vrot.slane %v2175, 4
        %v2178 = vshll.u32 %v1818, 16
        %v2180 = vrot.slane %v2178, 5
        %v2181 = vor.u32 %v2177, %v2180
        %v2182 = vrot.slane %v2181, 4
        %v2184 = vshll.u32 %v1819, 16
        %v2186 = vrot.slane %v2184, 5
        %v2187 = vsel %vm616, %v2182, %v2186
        %v2188 = vshrl.u32 %v1819, 16
        %v2190 = vrot.slane %v2188, 4
        %v2191 = vor.u32 %v2190, %v2186
        %v2192 = vrot.slane %v2191, 4
        %v2194 = vshll.u32 %v1836, 16
        %v2196 = vrot.slane %v2194, 5
        %v2197 = vsel %vm616, %v2192, %v2196
        %v2199 = vshrl.u32 %v1820, 16
        %v2201 = vrot.slane %v2199, 4
        %v2202 = vshll.u32 %v1820, 16
        %v2204 = vrot.slane %v2202, 5
        %v2205 = vor.u32 %v2201, %v2204
        %v2206 = vrot.slane %v2205, 4
        %v2208 = vshll.u32 %v1821, 16
        %v2210 = vrot.slane %v2208, 5
        %v2211 = vsel %vm616, %v2206, %v2210
        %v2212 = vshrl.u32 %v1821, 16
        %v2214 = vrot.slane %v2212, 4
        %v2215 = vor.u32 %v2214, %v2210
        %v2216 = vrot.slane %v2215, 4
        %v2218 = vshll.u32 %v1837, 16
        %v2220 = vrot.slane %v2218, 5
        %v2221 = vsel %vm616, %v2216, %v2220
        %v2222 = vld [vmem:[%s1789] sm:$0xe]
        %v2223 = vld [vmem:[%s1789 + $0xc] sm:$0xe]
        %v2224 = vld [vmem:[%s1789 + $0x18] sm:$0xe]
        %v2225 = vld [vmem:[%s1789 + $0x24] sm:$0xe]
        %v2226 = vld [vmem:[%s1789 + $0x30] sm:$0xe]
        %v2227 = vld [vmem:[%s1789 + $0x3c] sm:$0xe]
        %v2228 = vld [vmem:[%s1789 + $0x48] sm:$0xe]
        %v2229 = vld [vmem:[%s1789 + $0x54] sm:$0xe]
        %v2230 = vld [vmem:[%s1789 + $0x60] sm:$0xe]
        %v2231 = vld [vmem:[%s1789 + $0x6c] sm:$0xe]
        %v2232 = vld [vmem:[%s1789 + $0x78] sm:$0xe]
        %v2233 = vld [vmem:[%s1789 + $0x84] sm:$0xe]
        %v2234 = vld [vmem:[%s1789 + $0x90] sm:$0xe]
        %v2235 = vld [vmem:[%s1789 + $0x9c] sm:$0xe]
        %v2236 = vld [vmem:[%s1789 + $0xa8] sm:$0xe]
        %v2237 = vld [vmem:[%s1789 + $0xb4] sm:$0xe]
        %v2286 = vrot.slane %v2222, 5
        %v2287 = vrot.slane %v2286, 4
        %v2288 = vrot.slane %v1791, 5
        %v2289 = vsel %vm1067, %v2287, %v2288
        %v2290 = vrot.slane %v2288, 4
        %v2291 = vrot.slane %v1822, 5
        %v2292 = vsel %vm1067, %v2290, %v2291
        %v2293 = vrot.slane %v2223, 5
        %v2294 = vrot.slane %v2293, 4
        %v2295 = vrot.slane %v1793, 5
        %v2296 = vsel %vm1067, %v2294, %v2295
        %v2297 = vrot.slane %v2295, 4
        %v2298 = vrot.slane %v1823, 5
        %v2299 = vsel %vm1067, %v2297, %v2298
        %v2300 = vrot.slane %v2224, 5
        %v2301 = vrot.slane %v2300, 4
        %v2302 = vrot.slane %v1795, 5
        %v2303 = vsel %vm1067, %v2301, %v2302
        %v2304 = vrot.slane %v2302, 4
        %v2305 = vrot.slane %v1824, 5
        %v2306 = vsel %vm1067, %v2304, %v2305
        %v2307 = vrot.slane %v2225, 5
        %v2308 = vrot.slane %v2307, 4
        %v2309 = vrot.slane %v1797, 5
        %v2310 = vsel %vm1067, %v2308, %v2309
        %v2311 = vrot.slane %v2309, 4
        %v2312 = vrot.slane %v1825, 5
        %v2313 = vsel %vm1067, %v2311, %v2312
        %v2314 = vrot.slane %v2226, 5
        %v2315 = vrot.slane %v2314, 4
        %v2316 = vrot.slane %v1799, 5
        %v2317 = vsel %vm1067, %v2315, %v2316
        %v2318 = vrot.slane %v2316, 4
        %v2319 = vrot.slane %v1826, 5
        %v2320 = vsel %vm1067, %v2318, %v2319
        %v2321 = vrot.slane %v2227, 5
        %v2322 = vrot.slane %v2321, 4
        %v2323 = vrot.slane %v1801, 5
        %v2324 = vsel %vm1067, %v2322, %v2323
        %v2325 = vrot.slane %v2323, 4
        %v2326 = vrot.slane %v1827, 5
        %v2327 = vsel %vm1067, %v2325, %v2326
        %v2328 = vrot.slane %v2228, 5
        %v2329 = vrot.slane %v2328, 4
        %v2330 = vrot.slane %v1803, 5
        %v2331 = vsel %vm1067, %v2329, %v2330
        %v2332 = vrot.slane %v2330, 4
        %v2333 = vrot.slane %v1828, 5
        %v2334 = vsel %vm1067, %v2332, %v2333
        %v2335 = vrot.slane %v2229, 5
        %v2336 = vrot.slane %v2335, 4
        %v2337 = vrot.slane %v1805, 5
        %v2338 = vsel %vm1067, %v2336, %v2337
        %v2339 = vrot.slane %v2337, 4
        %v2340 = vrot.slane %v1829, 5
        %v2341 = vsel %vm1067, %v2339, %v2340
        %v2342 = vrot.slane %v2230, 5
        %v2343 = vrot.slane %v2342, 4
        %v2344 = vrot.slane %v1807, 5
        %v2345 = vsel %vm1067, %v2343, %v2344
        %v2346 = vrot.slane %v2344, 4
        %v2347 = vrot.slane %v1830, 5
        %v2348 = vsel %vm1067, %v2346, %v2347
        %v2349 = vrot.slane %v2231, 5
        %v2350 = vrot.slane %v2349, 4
        %v2351 = vrot.slane %v1809, 5
        %v2352 = vsel %vm1067, %v2350, %v2351
        %v2353 = vrot.slane %v2351, 4
        %v2354 = vrot.slane %v1831, 5
        %v2355 = vsel %vm1067, %v2353, %v2354
        %v2356 = vrot.slane %v2232, 5
        %v2357 = vrot.slane %v2356, 4
        %v2358 = vrot.slane %v1811, 5
        %v2359 = vsel %vm1067, %v2357, %v2358
        %v2360 = vrot.slane %v2358, 4
        %v2361 = vrot.slane %v1832, 5
        %v2362 = vsel %vm1067, %v2360, %v2361
        %v2363 = vrot.slane %v2233, 5
        %v2364 = vrot.slane %v2363, 4
        %v2365 = vrot.slane %v1813, 5
        %v2366 = vsel %vm1067, %v2364, %v2365
        %v2367 = vrot.slane %v2365, 4
        %v2368 = vrot.slane %v1833, 5
        %v2369 = vsel %vm1067, %v2367, %v2368
        %v2370 = vrot.slane %v2234, 5
        %v2371 = vrot.slane %v2370, 4
        %v2372 = vrot.slane %v1815, 5
        %v2373 = vsel %vm1067, %v2371, %v2372
        %v2374 = vrot.slane %v2372, 4
        %v2375 = vrot.slane %v1834, 5
        %v2376 = vsel %vm1067, %v2374, %v2375
        %v2377 = vrot.slane %v2235, 5
        %v2378 = vrot.slane %v2377, 4
        %v2379 = vrot.slane %v1817, 5
        %v2380 = vsel %vm1067, %v2378, %v2379
        %v2381 = vrot.slane %v2379, 4
        %v2382 = vrot.slane %v1835, 5
        %v2383 = vsel %vm1067, %v2381, %v2382
        %v2384 = vrot.slane %v2236, 5
        %v2385 = vrot.slane %v2384, 4
        %v2386 = vrot.slane %v1819, 5
        %v2387 = vsel %vm1067, %v2385, %v2386
        %v2388 = vrot.slane %v2386, 4
        %v2389 = vrot.slane %v1836, 5
        %v2390 = vsel %vm1067, %v2388, %v2389
        %v2391 = vrot.slane %v2237, 5
        %v2392 = vrot.slane %v2391, 4
        %v2393 = vrot.slane %v1821, 5
        %v2394 = vsel %vm1067, %v2392, %v2393
        %v2395 = vrot.slane %v2393, 4
        %v2396 = vrot.slane %v1837, 5
        %v2397 = vsel %vm1067, %v2395, %v2396
        %v2414 = vunpack.c.l.b16 %v566
        %v2415 = vunpack.c.l.b16 %v567
        %v2416 = vunpack.c.l.b16 %v568
        %v2417 = vunpack.c.l.b16 %v569
        %v2418 = vunpack.c.l.b16 %v570
        %v2419 = vunpack.c.l.b16 %v571
        %v2420 = vunpack.c.l.b16 %v572
        %v2421 = vunpack.c.l.b16 %v573
        %v2422 = vunpack.c.l.b16 %v574
        %v2423 = vunpack.c.l.b16 %v575
        %v2424 = vunpack.c.l.b16 %v576
        %v2425 = vunpack.c.l.b16 %v577
        %v2426 = vunpack.c.l.b16 %v578
        %v2427 = vunpack.c.l.b16 %v579
        %v2428 = vunpack.c.l.b16 %v580
        %v2429 = vunpack.c.l.b16 %v581
        %v2430 = vunpack.c.l.b16 %v582
        %v2431 = vunpack.c.l.b16 %v583
        %v2432 = vunpack.c.l.b16 %v584
        %v2433 = vunpack.c.l.b16 %v585
        %v2434 = vunpack.c.l.b16 %v586
        %v2435 = vunpack.c.l.b16 %v587
        %v2436 = vunpack.c.l.b16 %v588
        %v2437 = vunpack.c.l.b16 %v589
        %v2438 = vunpack.c.l.b16 %v590
        %v2439 = vunpack.c.l.b16 %v591
        %v2440 = vunpack.c.l.b16 %v592
        %v2441 = vunpack.c.l.b16 %v593
        %v2442 = vunpack.c.l.b16 %v594
        %v2443 = vunpack.c.l.b16 %v595
        %v2444 = vunpack.c.l.b16 %v596
        %v2445 = vunpack.c.l.b16 %v597
        %v2446 = vpack.c.b16 %v2415, %v2414
        %v2447 = vpack.c.b16 %v2417, %v2416
        %v2448 = vpack.c.b16 %v2419, %v2418
        %v2449 = vpack.c.b16 %v2421, %v2420
        %v2450 = vpack.c.b16 %v2423, %v2422
        %v2451 = vpack.c.b16 %v2425, %v2424
        %v2452 = vpack.c.b16 %v2427, %v2426
        %v2453 = vpack.c.b16 %v2429, %v2428
        %v2454 = vpack.c.b16 %v2431, %v2430
        %v2455 = vpack.c.b16 %v2433, %v2432
        %v2456 = vpack.c.b16 %v2435, %v2434
        %v2457 = vpack.c.b16 %v2437, %v2436
        %v2458 = vpack.c.b16 %v2439, %v2438
        %v2459 = vpack.c.b16 %v2441, %v2440
        %v2460 = vpack.c.b16 %v2443, %v2442
        %v2461 = vpack.c.b16 %v2445, %v2444
        %v2478 = vunpack.c.l.b16 %v630
        %v2479 = vunpack.c.l.b16 %v640
        %v2480 = vunpack.c.l.b16 %v654
        %v2481 = vunpack.c.l.b16 %v664
        %v2482 = vunpack.c.l.b16 %v678
        %v2483 = vunpack.c.l.b16 %v688
        %v2484 = vunpack.c.l.b16 %v702
        %v2485 = vunpack.c.l.b16 %v712
        %v2486 = vunpack.c.l.b16 %v726
        %v2487 = vunpack.c.l.b16 %v736
        %v2488 = vunpack.c.l.b16 %v750
        %v2489 = vunpack.c.l.b16 %v760
        %v2490 = vunpack.c.l.b16 %v774
        %v2491 = vunpack.c.l.b16 %v784
        %v2492 = vunpack.c.l.b16 %v798
        %v2493 = vunpack.c.l.b16 %v808
        %v2494 = vunpack.c.l.b16 %v822
        %v2495 = vunpack.c.l.b16 %v832
        %v2496 = vunpack.c.l.b16 %v846
        %v2497 = vunpack.c.l.b16 %v856
        %v2498 = vunpack.c.l.b16 %v870
        %v2499 = vunpack.c.l.b16 %v880
        %v2500 = vunpack.c.l.b16 %v894
        %v2501 = vunpack.c.l.b16 %v904
        %v2502 = vunpack.c.l.b16 %v918
        %v2503 = vunpack.c.l.b16 %v928
        %v2504 = vunpack.c.l.b16 %v942
        %v2505 = vunpack.c.l.b16 %v952
        %v2506 = vunpack.c.l.b16 %v966
        %v2507 = vunpack.c.l.b16 %v976
        %v2508 = vunpack.c.l.b16 %v990
        %v2509 = vunpack.c.l.b16 %v1000
        %v2510 = vpack.c.b16 %v2479, %v2478
        %v2511 = vpack.c.b16 %v2481, %v2480
        %v2512 = vpack.c.b16 %v2483, %v2482
        %v2513 = vpack.c.b16 %v2485, %v2484
        %v2514 = vpack.c.b16 %v2487, %v2486
        %v2515 = vpack.c.b16 %v2489, %v2488
        %v2516 = vpack.c.b16 %v2491, %v2490
        %v2517 = vpack.c.b16 %v2493, %v2492
        %v2518 = vpack.c.b16 %v2495, %v2494
        %v2519 = vpack.c.b16 %v2497, %v2496
        %v2520 = vpack.c.b16 %v2499, %v2498
        %v2521 = vpack.c.b16 %v2501, %v2500
        %v2522 = vpack.c.b16 %v2503, %v2502
        %v2523 = vpack.c.b16 %v2505, %v2504
        %v2524 = vpack.c.b16 %v2507, %v2506
        %v2525 = vpack.c.b16 %v2509, %v2508
        %v2542 = vunpack.c.l.b16 %v1071
        %v2543 = vunpack.c.l.b16 %v1074
        %v2544 = vunpack.c.l.b16 %v1078
        %v2545 = vunpack.c.l.b16 %v1081
        %v2546 = vunpack.c.l.b16 %v1085
        %v2547 = vunpack.c.l.b16 %v1088
        %v2548 = vunpack.c.l.b16 %v1092
        %v2549 = vunpack.c.l.b16 %v1095
        %v2550 = vunpack.c.l.b16 %v1099
        %v2551 = vunpack.c.l.b16 %v1102
        %v2552 = vunpack.c.l.b16 %v1106
        %v2553 = vunpack.c.l.b16 %v1109
        %v2554 = vunpack.c.l.b16 %v1113
        %v2555 = vunpack.c.l.b16 %v1116
        %v2556 = vunpack.c.l.b16 %v1120
        %v2557 = vunpack.c.l.b16 %v1123
        %v2558 = vunpack.c.l.b16 %v1127
        %v2559 = vunpack.c.l.b16 %v1130
        %v2560 = vunpack.c.l.b16 %v1134
        %v2561 = vunpack.c.l.b16 %v1137
        %v2562 = vunpack.c.l.b16 %v1141
        %v2563 = vunpack.c.l.b16 %v1144
        %v2564 = vunpack.c.l.b16 %v1148
        %v2565 = vunpack.c.l.b16 %v1151
        %v2566 = vunpack.c.l.b16 %v1155
        %v2567 = vunpack.c.l.b16 %v1158
        %v2568 = vunpack.c.l.b16 %v1162
        %v2569 = vunpack.c.l.b16 %v1165
        %v2570 = vunpack.c.l.b16 %v1169
        %v2571 = vunpack.c.l.b16 %v1172
        %v2572 = vunpack.c.l.b16 %v1176
        %v2573 = vunpack.c.l.b16 %v1179
        %v2574 = vpack.c.b16 %v2543, %v2542
        %v2575 = vpack.c.b16 %v2545, %v2544
        %v2576 = vpack.c.b16 %v2547, %v2546
        %v2577 = vpack.c.b16 %v2549, %v2548
        %v2578 = vpack.c.b16 %v2551, %v2550
        %v2579 = vpack.c.b16 %v2553, %v2552
        %v2580 = vpack.c.b16 %v2555, %v2554
        %v2581 = vpack.c.b16 %v2557, %v2556
        %v2582 = vpack.c.b16 %v2559, %v2558
        %v2583 = vpack.c.b16 %v2561, %v2560
        %v2584 = vpack.c.b16 %v2563, %v2562
        %v2585 = vpack.c.b16 %v2565, %v2564
        %v2586 = vpack.c.b16 %v2567, %v2566
        %v2587 = vpack.c.b16 %v2569, %v2568
        %v2588 = vpack.c.b16 %v2571, %v2570
        %v2589 = vpack.c.b16 %v2573, %v2572
        %v2622 = vunpack.c.l.b16 %v1181
        %v2623 = vunpack.c.l.b16 %v1182
        %v2624 = vunpack.c.l.b16 %v1183
        %v2625 = vunpack.c.l.b16 %v1184
        %v2626 = vunpack.c.l.b16 %v1185
        %v2627 = vunpack.c.l.b16 %v1186
        %v2628 = vunpack.c.l.b16 %v1187
        %v2629 = vunpack.c.l.b16 %v1188
        %v2630 = vunpack.c.l.b16 %v1189
        %v2631 = vunpack.c.l.b16 %v1190
        %v2632 = vunpack.c.l.b16 %v1191
        %v2633 = vunpack.c.l.b16 %v1192
        %v2634 = vunpack.c.l.b16 %v1193
        %v2635 = vunpack.c.l.b16 %v1194
        %v2636 = vunpack.c.l.b16 %v1195
        %v2637 = vunpack.c.l.b16 %v1196
        %v2638 = vunpack.c.l.b16 %v1197
        %v2639 = vunpack.c.l.b16 %v1198
        %v2640 = vunpack.c.l.b16 %v1199
        %v2641 = vunpack.c.l.b16 %v1200
        %v2642 = vunpack.c.l.b16 %v1201
        %v2643 = vunpack.c.l.b16 %v1202
        %v2644 = vunpack.c.l.b16 %v1203
        %v2645 = vunpack.c.l.b16 %v1204
        %v2646 = vunpack.c.l.b16 %v1205
        %v2647 = vunpack.c.l.b16 %v1206
        %v2648 = vunpack.c.l.b16 %v1207
        %v2649 = vunpack.c.l.b16 %v1208
        %v2650 = vunpack.c.l.b16 %v1209
        %v2651 = vunpack.c.l.b16 %v1210
        %v2652 = vunpack.c.l.b16 %v1211
        %v2653 = vunpack.c.l.b16 %v1212
        %v2654 = vpack.c.b16 %v2623, %v2622
        %v2655 = vpack.c.b16 %v2625, %v2624
        %v2656 = vpack.c.b16 %v2627, %v2626
        %v2657 = vpack.c.b16 %v2629, %v2628
        %v2658 = vpack.c.b16 %v2631, %v2630
        %v2659 = vpack.c.b16 %v2633, %v2632
        %v2660 = vpack.c.b16 %v2635, %v2634
        %v2661 = vpack.c.b16 %v2637, %v2636
        %v2662 = vpack.c.b16 %v2639, %v2638
        %v2663 = vpack.c.b16 %v2641, %v2640
        %v2664 = vpack.c.b16 %v2643, %v2642
        %v2665 = vpack.c.b16 %v2645, %v2644
        %v2666 = vpack.c.b16 %v2647, %v2646
        %v2667 = vpack.c.b16 %v2649, %v2648
        %v2668 = vpack.c.b16 %v2651, %v2650
        %v2669 = vpack.c.b16 %v2653, %v2652
        %v2686 = vunpack.c.l.b16 %v1242
        %v2687 = vunpack.c.l.b16 %v1252
        %v2688 = vunpack.c.l.b16 %v1266
        %v2689 = vunpack.c.l.b16 %v1276
        %v2690 = vunpack.c.l.b16 %v1290
        %v2691 = vunpack.c.l.b16 %v1300
        %v2692 = vunpack.c.l.b16 %v1314
        %v2693 = vunpack.c.l.b16 %v1324
        %v2694 = vunpack.c.l.b16 %v1338
        %v2695 = vunpack.c.l.b16 %v1348
        %v2696 = vunpack.c.l.b16 %v1362
        %v2697 = vunpack.c.l.b16 %v1372
        %v2698 = vunpack.c.l.b16 %v1386
        %v2699 = vunpack.c.l.b16 %v1396
        %v2700 = vunpack.c.l.b16 %v1410
        %v2701 = vunpack.c.l.b16 %v1420
        %v2702 = vunpack.c.l.b16 %v1434
        %v2703 = vunpack.c.l.b16 %v1444
        %v2704 = vunpack.c.l.b16 %v1458
        %v2705 = vunpack.c.l.b16 %v1468
        %v2706 = vunpack.c.l.b16 %v1482
        %v2707 = vunpack.c.l.b16 %v1492
        %v2708 = vunpack.c.l.b16 %v1506
        %v2709 = vunpack.c.l.b16 %v1516
        %v2710 = vunpack.c.l.b16 %v1530
        %v2711 = vunpack.c.l.b16 %v1540
        %v2712 = vunpack.c.l.b16 %v1554
        %v2713 = vunpack.c.l.b16 %v1564
        %v2714 = vunpack.c.l.b16 %v1578
        %v2715 = vunpack.c.l.b16 %v1588
        %v2716 = vunpack.c.l.b16 %v1602
        %v2717 = vunpack.c.l.b16 %v1612
        %v2718 = vpack.c.b16 %v2687, %v2686
        %v2719 = vpack.c.b16 %v2689, %v2688
        %v2720 = vpack.c.b16 %v2691, %v2690
        %v2721 = vpack.c.b16 %v2693, %v2692
        %v2722 = vpack.c.b16 %v2695, %v2694
        %v2723 = vpack.c.b16 %v2697, %v2696
        %v2724 = vpack.c.b16 %v2699, %v2698
        %v2725 = vpack.c.b16 %v2701, %v2700
        %v2726 = vpack.c.b16 %v2703, %v2702
        %v2727 = vpack.c.b16 %v2705, %v2704
        %v2728 = vpack.c.b16 %v2707, %v2706
        %v2729 = vpack.c.b16 %v2709, %v2708
        %v2730 = vpack.c.b16 %v2711, %v2710
        %v2731 = vpack.c.b16 %v2713, %v2712
        %v2732 = vpack.c.b16 %v2715, %v2714
        %v2733 = vpack.c.b16 %v2717, %v2716
        %v2750 = vunpack.c.l.b16 %v1680
        %v2751 = vunpack.c.l.b16 %v1683
        %v2752 = vunpack.c.l.b16 %v1687
        %v2753 = vunpack.c.l.b16 %v1690
        %v2754 = vunpack.c.l.b16 %v1694
        %v2755 = vunpack.c.l.b16 %v1697
        %v2756 = vunpack.c.l.b16 %v1701
        %v2757 = vunpack.c.l.b16 %v1704
        %v2758 = vunpack.c.l.b16 %v1708
        %v2759 = vunpack.c.l.b16 %v1711
        %v2760 = vunpack.c.l.b16 %v1715
        %v2761 = vunpack.c.l.b16 %v1718
        %v2762 = vunpack.c.l.b16 %v1722
        %v2763 = vunpack.c.l.b16 %v1725
        %v2764 = vunpack.c.l.b16 %v1729
        %v2765 = vunpack.c.l.b16 %v1732
        %v2766 = vunpack.c.l.b16 %v1736
        %v2767 = vunpack.c.l.b16 %v1739
        %v2768 = vunpack.c.l.b16 %v1743
        %v2769 = vunpack.c.l.b16 %v1746
        %v2770 = vunpack.c.l.b16 %v1750
        %v2771 = vunpack.c.l.b16 %v1753
        %v2772 = vunpack.c.l.b16 %v1757
        %v2773 = vunpack.c.l.b16 %v1760
        %v2774 = vunpack.c.l.b16 %v1764
        %v2775 = vunpack.c.l.b16 %v1767
        %v2776 = vunpack.c.l.b16 %v1771
        %v2777 = vunpack.c.l.b16 %v1774
        %v2778 = vunpack.c.l.b16 %v1778
        %v2779 = vunpack.c.l.b16 %v1781
        %v2780 = vunpack.c.l.b16 %v1785
        %v2781 = vunpack.c.l.b16 %v1788
        %v2782 = vpack.c.b16 %v2751, %v2750
        %v2783 = vpack.c.b16 %v2753, %v2752
        %v2784 = vpack.c.b16 %v2755, %v2754
        %v2785 = vpack.c.b16 %v2757, %v2756
        %v2786 = vpack.c.b16 %v2759, %v2758
        %v2787 = vpack.c.b16 %v2761, %v2760
        %v2788 = vpack.c.b16 %v2763, %v2762
        %v2789 = vpack.c.b16 %v2765, %v2764
        %v2790 = vpack.c.b16 %v2767, %v2766
        %v2791 = vpack.c.b16 %v2769, %v2768
        %v2792 = vpack.c.b16 %v2771, %v2770
        %v2793 = vpack.c.b16 %v2773, %v2772
        %v2794 = vpack.c.b16 %v2775, %v2774
        %v2795 = vpack.c.b16 %v2777, %v2776
        %v2796 = vpack.c.b16 %v2779, %v2778
        %v2797 = vpack.c.b16 %v2781, %v2780
        %v2830 = vunpack.c.l.b16 %v1790
        %v2831 = vunpack.c.l.b16 %v1791
        %v2832 = vunpack.c.l.b16 %v1792
        %v2833 = vunpack.c.l.b16 %v1793
        %v2834 = vunpack.c.l.b16 %v1794
        %v2835 = vunpack.c.l.b16 %v1795
        %v2836 = vunpack.c.l.b16 %v1796
        %v2837 = vunpack.c.l.b16 %v1797
        %v2838 = vunpack.c.l.b16 %v1798
        %v2839 = vunpack.c.l.b16 %v1799
        %v2840 = vunpack.c.l.b16 %v1800
        %v2841 = vunpack.c.l.b16 %v1801
        %v2842 = vunpack.c.l.b16 %v1802
        %v2843 = vunpack.c.l.b16 %v1803
        %v2844 = vunpack.c.l.b16 %v1804
        %v2845 = vunpack.c.l.b16 %v1805
        %v2846 = vunpack.c.l.b16 %v1806
        %v2847 = vunpack.c.l.b16 %v1807
        %v2848 = vunpack.c.l.b16 %v1808
        %v2849 = vunpack.c.l.b16 %v1809
        %v2850 = vunpack.c.l.b16 %v1810
        %v2851 = vunpack.c.l.b16 %v1811
        %v2852 = vunpack.c.l.b16 %v1812
        %v2853 = vunpack.c.l.b16 %v1813
        %v2854 = vunpack.c.l.b16 %v1814
        %v2855 = vunpack.c.l.b16 %v1815
        %v2856 = vunpack.c.l.b16 %v1816
        %v2857 = vunpack.c.l.b16 %v1817
        %v2858 = vunpack.c.l.b16 %v1818
        %v2859 = vunpack.c.l.b16 %v1819
        %v2860 = vunpack.c.l.b16 %v1820
        %v2861 = vunpack.c.l.b16 %v1821
        %v2862 = vpack.c.b16 %v2831, %v2830
        %v2863 = vpack.c.b16 %v2833, %v2832
        %v2864 = vpack.c.b16 %v2835, %v2834
        %v2865 = vpack.c.b16 %v2837, %v2836
        %v2866 = vpack.c.b16 %v2839, %v2838
        %v2867 = vpack.c.b16 %v2841, %v2840
        %v2868 = vpack.c.b16 %v2843, %v2842
        %v2869 = vpack.c.b16 %v2845, %v2844
        %v2870 = vpack.c.b16 %v2847, %v2846
        %v2871 = vpack.c.b16 %v2849, %v2848
        %v2872 = vpack.c.b16 %v2851, %v2850
        %v2873 = vpack.c.b16 %v2853, %v2852
        %v2874 = vpack.c.b16 %v2855, %v2854
        %v2875 = vpack.c.b16 %v2857, %v2856
        %v2876 = vpack.c.b16 %v2859, %v2858
        %v2877 = vpack.c.b16 %v2861, %v2860
        %v2894 = vunpack.c.l.b16 %v1851
        %v2895 = vunpack.c.l.b16 %v1861
        %v2896 = vunpack.c.l.b16 %v1875
        %v2897 = vunpack.c.l.b16 %v1885
        %v2898 = vunpack.c.l.b16 %v1899
        %v2899 = vunpack.c.l.b16 %v1909
        %v2900 = vunpack.c.l.b16 %v1923
        %v2901 = vunpack.c.l.b16 %v1933
        %v2902 = vunpack.c.l.b16 %v1947
        %v2903 = vunpack.c.l.b16 %v1957
        %v2904 = vunpack.c.l.b16 %v1971
        %v2905 = vunpack.c.l.b16 %v1981
        %v2906 = vunpack.c.l.b16 %v1995
        %v2907 = vunpack.c.l.b16 %v2005
        %v2908 = vunpack.c.l.b16 %v2019
        %v2909 = vunpack.c.l.b16 %v2029
        %v2910 = vunpack.c.l.b16 %v2043
        %v2911 = vunpack.c.l.b16 %v2053
        %v2912 = vunpack.c.l.b16 %v2067
        %v2913 = vunpack.c.l.b16 %v2077
        %v2914 = vunpack.c.l.b16 %v2091
        %v2915 = vunpack.c.l.b16 %v2101
        %v2916 = vunpack.c.l.b16 %v2115
        %v2917 = vunpack.c.l.b16 %v2125
        %v2918 = vunpack.c.l.b16 %v2139
        %v2919 = vunpack.c.l.b16 %v2149
        %v2920 = vunpack.c.l.b16 %v2163
        %v2921 = vunpack.c.l.b16 %v2173
        %v2922 = vunpack.c.l.b16 %v2187
        %v2923 = vunpack.c.l.b16 %v2197
        %v2924 = vunpack.c.l.b16 %v2211
        %v2925 = vunpack.c.l.b16 %v2221
        %v2926 = vpack.c.b16 %v2895, %v2894
        %v2927 = vpack.c.b16 %v2897, %v2896
        %v2928 = vpack.c.b16 %v2899, %v2898
        %v2929 = vpack.c.b16 %v2901, %v2900
        %v2930 = vpack.c.b16 %v2903, %v2902
        %v2931 = vpack.c.b16 %v2905, %v2904
        %v2932 = vpack.c.b16 %v2907, %v2906
        %v2933 = vpack.c.b16 %v2909, %v2908
        %v2934 = vpack.c.b16 %v2911, %v2910
        %v2935 = vpack.c.b16 %v2913, %v2912
        %v2936 = vpack.c.b16 %v2915, %v2914
        %v2937 = vpack.c.b16 %v2917, %v2916
        %v2938 = vpack.c.b16 %v2919, %v2918
        %v2939 = vpack.c.b16 %v2921, %v2920
        %v2940 = vpack.c.b16 %v2923, %v2922
        %v2941 = vpack.c.b16 %v2925, %v2924
        %v2958 = vunpack.c.l.b16 %v2289
        %v2959 = vunpack.c.l.b16 %v2292
        %v2960 = vunpack.c.l.b16 %v2296
        %v2961 = vunpack.c.l.b16 %v2299
        %v2962 = vunpack.c.l.b16 %v2303
        %v2963 = vunpack.c.l.b16 %v2306
        %v2964 = vunpack.c.l.b16 %v2310
        %v2965 = vunpack.c.l.b16 %v2313
        %v2966 = vunpack.c.l.b16 %v2317
        %v2967 = vunpack.c.l.b16 %v2320
        %v2968 = vunpack.c.l.b16 %v2324
        %v2969 = vunpack.c.l.b16 %v2327
        %v2970 = vunpack.c.l.b16 %v2331
        %v2971 = vunpack.c.l.b16 %v2334
        %v2972 = vunpack.c.l.b16 %v2338
        %v2973 = vunpack.c.l.b16 %v2341
        %v2974 = vunpack.c.l.b16 %v2345
        %v2975 = vunpack.c.l.b16 %v2348
        %v2976 = vunpack.c.l.b16 %v2352
        %v2977 = vunpack.c.l.b16 %v2355
        %v2978 = vunpack.c.l.b16 %v2359
        %v2979 = vunpack.c.l.b16 %v2362
        %v2980 = vunpack.c.l.b16 %v2366
        %v2981 = vunpack.c.l.b16 %v2369
        %v2982 = vunpack.c.l.b16 %v2373
        %v2983 = vunpack.c.l.b16 %v2376
        %v2984 = vunpack.c.l.b16 %v2380
        %v2985 = vunpack.c.l.b16 %v2383
        %v2986 = vunpack.c.l.b16 %v2387
        %v2987 = vunpack.c.l.b16 %v2390
        %v2988 = vunpack.c.l.b16 %v2394
        %v2989 = vunpack.c.l.b16 %v2397
        %v2990 = vpack.c.b16 %v2959, %v2958
        %v2991 = vpack.c.b16 %v2961, %v2960
        %v2992 = vpack.c.b16 %v2963, %v2962
        %v2993 = vpack.c.b16 %v2965, %v2964
        %v2994 = vpack.c.b16 %v2967, %v2966
        %v2995 = vpack.c.b16 %v2969, %v2968
        %v2996 = vpack.c.b16 %v2971, %v2970
        %v2997 = vpack.c.b16 %v2973, %v2972
        %v2998 = vpack.c.b16 %v2975, %v2974
        %v2999 = vpack.c.b16 %v2977, %v2976
        %v3000 = vpack.c.b16 %v2979, %v2978
        %v3001 = vpack.c.b16 %v2981, %v2980
        %v3002 = vpack.c.b16 %v2983, %v2982
        %v3003 = vpack.c.b16 %v2985, %v2984
        %v3004 = vpack.c.b16 %v2987, %v2986
        %v3005 = vpack.c.b16 %v2989, %v2988
        %v3022 = vld [vmem:[%s1] sm:$0xf]
        %v3023 = vld [vmem:[%s1 + $0x4] sm:$0xf]
        %v3024 = vld [vmem:[%s1 + $0x8] sm:$0xf]
        %v3025 = vld [vmem:[%s1 + $0xc] sm:$0xf]
        %v3026 = vld [vmem:[%s1 + $0x10] sm:$0xf]
        %v3027 = vld [vmem:[%s1 + $0x14] sm:$0xf]
        %v3028 = vld [vmem:[%s1 + $0x18] sm:$0xf]
        %v3029 = vld [vmem:[%s1 + $0x1c] sm:$0xf]
        %v3030 = vld [vmem:[%s1 + $0x20] sm:$0xf]
        %v3031 = vld [vmem:[%s1 + $0x24] sm:$0xf]
        %v3032 = vld [vmem:[%s1 + $0x28] sm:$0xf]
        %v3033 = vld [vmem:[%s1 + $0x2c] sm:$0xf]
        %v3034 = vld [vmem:[%s1 + $0x30] sm:$0xf]
        %v3035 = vld [vmem:[%s1 + $0x34] sm:$0xf]
        %v3036 = vld [vmem:[%s1 + $0x38] sm:$0xf]
        %v3037 = vld [vmem:[%s1 + $0x3c] sm:$0xf]
        %v3038 = vld [vmem:[%s1 + $0x40] sm:$0xf]
        %v3039 = vld [vmem:[%s1 + $0x44] sm:$0xf]
        %v3040 = vld [vmem:[%s1 + $0x48] sm:$0xf]
        %v3041 = vld [vmem:[%s1 + $0x4c] sm:$0xf]
        %v3042 = vld [vmem:[%s1 + $0x50] sm:$0xf]
        %v3043 = vld [vmem:[%s1 + $0x54] sm:$0xf]
        %v3044 = vld [vmem:[%s1 + $0x58] sm:$0xf]
        %v3045 = vld [vmem:[%s1 + $0x5c] sm:$0xf]
        %v3046 = vld [vmem:[%s1 + $0x60] sm:$0xf]
        %v3047 = vld [vmem:[%s1 + $0x64] sm:$0xf]
        %v3048 = vld [vmem:[%s1 + $0x68] sm:$0xf]
        %v3049 = vld [vmem:[%s1 + $0x6c] sm:$0xf]
        %v3050 = vld [vmem:[%s1 + $0x70] sm:$0xf]
        %v3051 = vld [vmem:[%s1 + $0x74] sm:$0xf]
        %v3052 = vld [vmem:[%s1 + $0x78] sm:$0xf]
        %v3053 = vld [vmem:[%s1 + $0x7c] sm:$0xf]
        %v3054 = vld [vmem:[%s1 + $0x80] sm:$0xf]
        %v3055 = vld [vmem:[%s1 + $0x84] sm:$0xf]
        %v3056 = vld [vmem:[%s1 + $0x88] sm:$0xf]
        %v3057 = vld [vmem:[%s1 + $0x8c] sm:$0xf]
        %v3058 = vld [vmem:[%s1 + $0x90] sm:$0xf]
        %v3059 = vld [vmem:[%s1 + $0x94] sm:$0xf]
        %v3060 = vld [vmem:[%s1 + $0x98] sm:$0xf]
        %v3061 = vld [vmem:[%s1 + $0x9c] sm:$0xf]
        %v3062 = vld [vmem:[%s1 + $0xa0] sm:$0xf]
        %v3063 = vld [vmem:[%s1 + $0xa4] sm:$0xf]
        %v3064 = vld [vmem:[%s1 + $0xa8] sm:$0xf]
        %v3065 = vld [vmem:[%s1 + $0xac] sm:$0xf]
        %v3066 = vld [vmem:[%s1 + $0xb0] sm:$0xf]
        %v3067 = vld [vmem:[%s1 + $0xb4] sm:$0xf]
        %v3068 = vld [vmem:[%s1 + $0xb8] sm:$0xf]
        %v3069 = vld [vmem:[%s1 + $0xbc] sm:$0xf]
        %v3070 = vld [vmem:[%s1 + $0xc0] sm:$0xf]
        %v3071 = vld [vmem:[%s1 + $0xc4] sm:$0xf]
        %v3072 = vld [vmem:[%s1 + $0xc8] sm:$0xf]
        %v3073 = vld [vmem:[%s1 + $0xcc] sm:$0xf]
        %v3074 = vld [vmem:[%s1 + $0xd0] sm:$0xf]
        %v3075 = vld [vmem:[%s1 + $0xd4] sm:$0xf]
        %v3076 = vld [vmem:[%s1 + $0xd8] sm:$0xf]
        %v3077 = vld [vmem:[%s1 + $0xdc] sm:$0xf]
        %v3078 = vld [vmem:[%s1 + $0xe0] sm:$0xf]
        %v3079 = vld [vmem:[%s1 + $0xe4] sm:$0xf]
        %v3080 = vld [vmem:[%s1 + $0xe8] sm:$0xf]
        %v3081 = vld [vmem:[%s1 + $0xec] sm:$0xf]
        %v3082 = vld [vmem:[%s1 + $0xf0] sm:$0xf]
        %v3083 = vld [vmem:[%s1 + $0xf4] sm:$0xf]
        %v3084 = vld [vmem:[%s1 + $0xf8] sm:$0xf]
        %v3085 = vld [vmem:[%s1 + $0xfc] sm:$0xf]
        %v3086 = vld [vmem:[%s1 + $0x100] sm:$0xf]
        %v3087 = vld [vmem:[%s1 + $0x104] sm:$0xf]
        %v3088 = vld [vmem:[%s1 + $0x108] sm:$0xf]
        %v3089 = vld [vmem:[%s1 + $0x10c] sm:$0xf]
        %v3090 = vld [vmem:[%s1 + $0x110] sm:$0xf]
        %v3091 = vld [vmem:[%s1 + $0x114] sm:$0xf]
        %v3092 = vld [vmem:[%s1 + $0x118] sm:$0xf]
        %v3093 = vld [vmem:[%s1 + $0x11c] sm:$0xf]
        %v3094 = vld [vmem:[%s1 + $0x120] sm:$0xf]
        %v3095 = vld [vmem:[%s1 + $0x124] sm:$0xf]
        %v3096 = vld [vmem:[%s1 + $0x128] sm:$0xf]
        %v3097 = vld [vmem:[%s1 + $0x12c] sm:$0xf]
        %v3098 = vld [vmem:[%s1 + $0x130] sm:$0xf]
        %v3099 = vld [vmem:[%s1 + $0x134] sm:$0xf]
        %v3100 = vld [vmem:[%s1 + $0x138] sm:$0xf]
        %v3101 = vld [vmem:[%s1 + $0x13c] sm:$0xf]
        %v3102 = vld [vmem:[%s1 + $0x140] sm:$0xf]
        %v3103 = vld [vmem:[%s1 + $0x144] sm:$0xf]
        %v3104 = vld [vmem:[%s1 + $0x148] sm:$0xf]
        %v3105 = vld [vmem:[%s1 + $0x14c] sm:$0xf]
        %v3106 = vld [vmem:[%s1 + $0x150] sm:$0xf]
        %v3107 = vld [vmem:[%s1 + $0x154] sm:$0xf]
        %v3108 = vld [vmem:[%s1 + $0x158] sm:$0xf]
        %v3109 = vld [vmem:[%s1 + $0x15c] sm:$0xf]
        %v3110 = vld [vmem:[%s1 + $0x160] sm:$0xf]
        %v3111 = vld [vmem:[%s1 + $0x164] sm:$0xf]
        %v3112 = vld [vmem:[%s1 + $0x168] sm:$0xf]
        %v3113 = vld [vmem:[%s1 + $0x16c] sm:$0xf]
        %v3114 = vld [vmem:[%s1 + $0x170] sm:$0xf]
        %v3115 = vld [vmem:[%s1 + $0x174] sm:$0xf]
        %v3116 = vld [vmem:[%s1 + $0x178] sm:$0xf]
        %v3117 = vld [vmem:[%s1 + $0x17c] sm:$0xf]
        %v3118 = vld [vmem:[%s1 + $0x180] sm:$0xf]
        %v3119 = vld [vmem:[%s1 + $0x184] sm:$0xf]
        %v3120 = vld [vmem:[%s1 + $0x188] sm:$0xf]
        %v3121 = vld [vmem:[%s1 + $0x18c] sm:$0xf]
        %v3122 = vld [vmem:[%s1 + $0x190] sm:$0xf]
        %v3123 = vld [vmem:[%s1 + $0x194] sm:$0xf]
        %v3124 = vld [vmem:[%s1 + $0x198] sm:$0xf]
        %v3125 = vld [vmem:[%s1 + $0x19c] sm:$0xf]
        %v3126 = vld [vmem:[%s1 + $0x1a0] sm:$0xf]
        %v3127 = vld [vmem:[%s1 + $0x1a4] sm:$0xf]
        %v3128 = vld [vmem:[%s1 + $0x1a8] sm:$0xf]
        %v3129 = vld [vmem:[%s1 + $0x1ac] sm:$0xf]
        %v3130 = vld [vmem:[%s1 + $0x1b0] sm:$0xf]
        %v3131 = vld [vmem:[%s1 + $0x1b4] sm:$0xf]
        %v3132 = vld [vmem:[%s1 + $0x1b8] sm:$0xf]
        %v3133 = vld [vmem:[%s1 + $0x1bc] sm:$0xf]
        %v3134 = vld [vmem:[%s1 + $0x1c0] sm:$0xf]
        %v3135 = vld [vmem:[%s1 + $0x1c4] sm:$0xf]
        %v3136 = vld [vmem:[%s1 + $0x1c8] sm:$0xf]
        %v3137 = vld [vmem:[%s1 + $0x1cc] sm:$0xf]
        %v3138 = vld [vmem:[%s1 + $0x1d0] sm:$0xf]
        %v3139 = vld [vmem:[%s1 + $0x1d4] sm:$0xf]
        %v3140 = vld [vmem:[%s1 + $0x1d8] sm:$0xf]
        %v3141 = vld [vmem:[%s1 + $0x1dc] sm:$0xf]
        %v3142 = vld [vmem:[%s1 + $0x1e0] sm:$0xf]
        %v3143 = vld [vmem:[%s1 + $0x1e4] sm:$0xf]
        %v3144 = vld [vmem:[%s1 + $0x1e8] sm:$0xf]
        %v3145 = vld [vmem:[%s1 + $0x1ec] sm:$0xf]
        %v3146 = vld [vmem:[%s1 + $0x1f0] sm:$0xf]
        %v3147 = vld [vmem:[%s1 + $0x1f4] sm:$0xf]
        %v3148 = vld [vmem:[%s1 + $0x1f8] sm:$0xf]
        %v3149 = vld [vmem:[%s1 + $0x1fc] sm:$0xf]
        %v3150 = vld [vmem:[%s1 + $0x200] sm:$0xf]
        %v3151 = vld [vmem:[%s1 + $0x204] sm:$0xf]
        %v3152 = vld [vmem:[%s1 + $0x208] sm:$0xf]
        %v3153 = vld [vmem:[%s1 + $0x20c] sm:$0xf]
        %v3154 = vld [vmem:[%s1 + $0x210] sm:$0xf]
        %v3155 = vld [vmem:[%s1 + $0x214] sm:$0xf]
        %v3156 = vld [vmem:[%s1 + $0x218] sm:$0xf]
        %v3157 = vld [vmem:[%s1 + $0x21c] sm:$0xf]
        %v3158 = vld [vmem:[%s1 + $0x220] sm:$0xf]
        %v3159 = vld [vmem:[%s1 + $0x224] sm:$0xf]
        %v3160 = vld [vmem:[%s1 + $0x228] sm:$0xf]
        %v3161 = vld [vmem:[%s1 + $0x22c] sm:$0xf]
        %v3162 = vld [vmem:[%s1 + $0x230] sm:$0xf]
        %v3163 = vld [vmem:[%s1 + $0x234] sm:$0xf]
        %v3164 = vld [vmem:[%s1 + $0x238] sm:$0xf]
        %v3165 = vld [vmem:[%s1 + $0x23c] sm:$0xf]
        %v3166 = vld [vmem:[%s2] sm:$0x1]
        %v3168 = vlaneseq
        %v3169 = vshrl.u32 %v3168, 7
        %v3170 = vsub.s32 0, %v3169
        %v3171 = vrot.slane %v3166, %v3170
        %v3317 = vunpack.c.l.b16 %v3022
        %v3318 = vunpack.c.l.b16 %v3023
        %v3319 = vunpack.c.l.b16 %v3024
        %v3320 = vunpack.c.l.b16 %v3025
        %v3321 = vunpack.c.l.b16 %v3026
        %v3322 = vunpack.c.l.b16 %v3027
        %v3323 = vunpack.c.l.b16 %v3028
        %v3324 = vunpack.c.l.b16 %v3029
        %v3325 = vunpack.c.l.b16 %v3030
        %v3326 = vunpack.c.l.b16 %v3031
        %v3327 = vunpack.c.l.b16 %v3032
        %v3328 = vunpack.c.l.b16 %v3033
        %v3329 = vunpack.c.l.b16 %v3034
        %v3330 = vunpack.c.l.b16 %v3035
        %v3331 = vunpack.c.l.b16 %v3036
        %v3332 = vunpack.c.l.b16 %v3037
        %v3333 = vunpack.c.l.b16 %v3038
        %v3334 = vunpack.c.l.b16 %v3039
        %v3335 = vunpack.c.l.b16 %v3040
        %v3336 = vunpack.c.l.b16 %v3041
        %v3337 = vunpack.c.l.b16 %v3042
        %v3338 = vunpack.c.l.b16 %v3043
        %v3339 = vunpack.c.l.b16 %v3044
        %v3340 = vunpack.c.l.b16 %v3045
        %v3341 = vunpack.c.l.b16 %v3046
        %v3342 = vunpack.c.l.b16 %v3047
        %v3343 = vunpack.c.l.b16 %v3048
        %v3344 = vunpack.c.l.b16 %v3049
        %v3345 = vunpack.c.l.b16 %v3050
        %v3346 = vunpack.c.l.b16 %v3051
        %v3347 = vunpack.c.l.b16 %v3052
        %v3348 = vunpack.c.l.b16 %v3053
        %v3349 = vunpack.c.l.b16 %v3054
        %v3350 = vunpack.c.l.b16 %v3055
        %v3351 = vunpack.c.l.b16 %v3056
        %v3352 = vunpack.c.l.b16 %v3057
        %v3353 = vunpack.c.l.b16 %v3058
        %v3354 = vunpack.c.l.b16 %v3059
        %v3355 = vunpack.c.l.b16 %v3060
        %v3356 = vunpack.c.l.b16 %v3061
        %v3357 = vunpack.c.l.b16 %v3062
        %v3358 = vunpack.c.l.b16 %v3063
        %v3359 = vunpack.c.l.b16 %v3064
        %v3360 = vunpack.c.l.b16 %v3065
        %v3361 = vunpack.c.l.b16 %v3066
        %v3362 = vunpack.c.l.b16 %v3067
        %v3363 = vunpack.c.l.b16 %v3068
        %v3364 = vunpack.c.l.b16 %v3069
        %v3365 = vunpack.c.l.b16 %v3070
        %v3366 = vunpack.c.l.b16 %v3071
        %v3367 = vunpack.c.l.b16 %v3072
        %v3368 = vunpack.c.l.b16 %v3073
        %v3369 = vunpack.c.l.b16 %v3074
        %v3370 = vunpack.c.l.b16 %v3075
        %v3371 = vunpack.c.l.b16 %v3076
        %v3372 = vunpack.c.l.b16 %v3077
        %v3373 = vunpack.c.l.b16 %v3078
        %v3374 = vunpack.c.l.b16 %v3079
        %v3375 = vunpack.c.l.b16 %v3080
        %v3376 = vunpack.c.l.b16 %v3081
        %v3377 = vunpack.c.l.b16 %v3082
        %v3378 = vunpack.c.l.b16 %v3083
        %v3379 = vunpack.c.l.b16 %v3084
        %v3380 = vunpack.c.l.b16 %v3085
        %v3381 = vunpack.c.l.b16 %v3086
        %v3382 = vunpack.c.l.b16 %v3087
        %v3383 = vunpack.c.l.b16 %v3088
        %v3384 = vunpack.c.l.b16 %v3089
        %v3385 = vunpack.c.l.b16 %v3090
        %v3386 = vunpack.c.l.b16 %v3091
        %v3387 = vunpack.c.l.b16 %v3092
        %v3388 = vunpack.c.l.b16 %v3093
        %v3389 = vunpack.c.l.b16 %v3094
        %v3390 = vunpack.c.l.b16 %v3095
        %v3391 = vunpack.c.l.b16 %v3096
        %v3392 = vunpack.c.l.b16 %v3097
        %v3393 = vunpack.c.l.b16 %v3098
        %v3394 = vunpack.c.l.b16 %v3099
        %v3395 = vunpack.c.l.b16 %v3100
        %v3396 = vunpack.c.l.b16 %v3101
        %v3397 = vunpack.c.l.b16 %v3102
        %v3398 = vunpack.c.l.b16 %v3103
        %v3399 = vunpack.c.l.b16 %v3104
        %v3400 = vunpack.c.l.b16 %v3105
        %v3401 = vunpack.c.l.b16 %v3106
        %v3402 = vunpack.c.l.b16 %v3107
        %v3403 = vunpack.c.l.b16 %v3108
        %v3404 = vunpack.c.l.b16 %v3109
        %v3405 = vunpack.c.l.b16 %v3110
        %v3406 = vunpack.c.l.b16 %v3111
        %v3407 = vunpack.c.l.b16 %v3112
        %v3408 = vunpack.c.l.b16 %v3113
        %v3409 = vunpack.c.l.b16 %v3114
        %v3410 = vunpack.c.l.b16 %v3115
        %v3411 = vunpack.c.l.b16 %v3116
        %v3412 = vunpack.c.l.b16 %v3117
        %v3413 = vunpack.c.l.b16 %v3118
        %v3414 = vunpack.c.l.b16 %v3119
        %v3415 = vunpack.c.l.b16 %v3120
        %v3416 = vunpack.c.l.b16 %v3121
        %v3417 = vunpack.c.l.b16 %v3122
        %v3418 = vunpack.c.l.b16 %v3123
        %v3419 = vunpack.c.l.b16 %v3124
        %v3420 = vunpack.c.l.b16 %v3125
        %v3421 = vunpack.c.l.b16 %v3126
        %v3422 = vunpack.c.l.b16 %v3127
        %v3423 = vunpack.c.l.b16 %v3128
        %v3424 = vunpack.c.l.b16 %v3129
        %v3425 = vunpack.c.l.b16 %v3130
        %v3426 = vunpack.c.l.b16 %v3131
        %v3427 = vunpack.c.l.b16 %v3132
        %v3428 = vunpack.c.l.b16 %v3133
        %v3429 = vunpack.c.l.b16 %v3134
        %v3430 = vunpack.c.l.b16 %v3135
        %v3431 = vunpack.c.l.b16 %v3136
        %v3432 = vunpack.c.l.b16 %v3137
        %v3433 = vunpack.c.l.b16 %v3138
        %v3434 = vunpack.c.l.b16 %v3139
        %v3435 = vunpack.c.l.b16 %v3140
        %v3436 = vunpack.c.l.b16 %v3141
        %v3437 = vunpack.c.l.b16 %v3142
        %v3438 = vunpack.c.l.b16 %v3143
        %v3439 = vunpack.c.l.b16 %v3144
        %v3440 = vunpack.c.l.b16 %v3145
        %v3441 = vunpack.c.l.b16 %v3146
        %v3442 = vunpack.c.l.b16 %v3147
        %v3443 = vunpack.c.l.b16 %v3148
        %v3444 = vunpack.c.l.b16 %v3149
        %v3445 = vunpack.c.l.b16 %v3150
        %v3446 = vunpack.c.l.b16 %v3151
        %v3447 = vunpack.c.l.b16 %v3152
        %v3448 = vunpack.c.l.b16 %v3153
        %v3449 = vunpack.c.l.b16 %v3154
        %v3450 = vunpack.c.l.b16 %v3155
        %v3451 = vunpack.c.l.b16 %v3156
        %v3452 = vunpack.c.l.b16 %v3157
        %v3453 = vunpack.c.l.b16 %v3158
        %v3454 = vunpack.c.l.b16 %v3159
        %v3455 = vunpack.c.l.b16 %v3160
        %v3456 = vunpack.c.l.b16 %v3161
        %v3457 = vunpack.c.l.b16 %v3162
        %v3458 = vunpack.c.l.b16 %v3163
        %v3459 = vunpack.c.l.b16 %v3164
        %v3460 = vunpack.c.l.b16 %v3165
        %v3461 = vpack.c.b16 %v3318, %v3317
        %v3462 = vpack.c.b16 %v3320, %v3319
        %v3463 = vpack.c.b16 %v3322, %v3321
        %v3464 = vpack.c.b16 %v3324, %v3323
        %v3465 = vpack.c.b16 %v3326, %v3325
        %v3466 = vpack.c.b16 %v3328, %v3327
        %v3467 = vpack.c.b16 %v3330, %v3329
        %v3468 = vpack.c.b16 %v3332, %v3331
        %v3469 = vpack.c.b16 %v3334, %v3333
        %v3470 = vpack.c.b16 %v3336, %v3335
        %v3471 = vpack.c.b16 %v3338, %v3337
        %v3472 = vpack.c.b16 %v3340, %v3339
        %v3473 = vpack.c.b16 %v3342, %v3341
        %v3474 = vpack.c.b16 %v3344, %v3343
        %v3475 = vpack.c.b16 %v3346, %v3345
        %v3476 = vpack.c.b16 %v3348, %v3347
        %v3477 = vpack.c.b16 %v3350, %v3349
        %v3478 = vpack.c.b16 %v3352, %v3351
        %v3479 = vpack.c.b16 %v3354, %v3353
        %v3480 = vpack.c.b16 %v3356, %v3355
        %v3481 = vpack.c.b16 %v3358, %v3357
        %v3482 = vpack.c.b16 %v3360, %v3359
        %v3483 = vpack.c.b16 %v3362, %v3361
        %v3484 = vpack.c.b16 %v3364, %v3363
        %v3485 = vpack.c.b16 %v3366, %v3365
        %v3486 = vpack.c.b16 %v3368, %v3367
        %v3487 = vpack.c.b16 %v3370, %v3369
        %v3488 = vpack.c.b16 %v3372, %v3371
        %v3489 = vpack.c.b16 %v3374, %v3373
        %v3490 = vpack.c.b16 %v3376, %v3375
        %v3491 = vpack.c.b16 %v3378, %v3377
        %v3492 = vpack.c.b16 %v3380, %v3379
        %v3493 = vpack.c.b16 %v3382, %v3381
        %v3494 = vpack.c.b16 %v3384, %v3383
        %v3495 = vpack.c.b16 %v3386, %v3385
        %v3496 = vpack.c.b16 %v3388, %v3387
        %v3497 = vpack.c.b16 %v3390, %v3389
        %v3498 = vpack.c.b16 %v3392, %v3391
        %v3499 = vpack.c.b16 %v3394, %v3393
        %v3500 = vpack.c.b16 %v3396, %v3395
        %v3501 = vpack.c.b16 %v3398, %v3397
        %v3502 = vpack.c.b16 %v3400, %v3399
        %v3503 = vpack.c.b16 %v3402, %v3401
        %v3504 = vpack.c.b16 %v3404, %v3403
        %v3505 = vpack.c.b16 %v3406, %v3405
        %v3506 = vpack.c.b16 %v3408, %v3407
        %v3507 = vpack.c.b16 %v3410, %v3409
        %v3508 = vpack.c.b16 %v3412, %v3411
        %v3509 = vpack.c.b16 %v3414, %v3413
        %v3510 = vpack.c.b16 %v3416, %v3415
        %v3511 = vpack.c.b16 %v3418, %v3417
        %v3512 = vpack.c.b16 %v3420, %v3419
        %v3513 = vpack.c.b16 %v3422, %v3421
        %v3514 = vpack.c.b16 %v3424, %v3423
        %v3515 = vpack.c.b16 %v3426, %v3425
        %v3516 = vpack.c.b16 %v3428, %v3427
        %v3517 = vpack.c.b16 %v3430, %v3429
        %v3518 = vpack.c.b16 %v3432, %v3431
        %v3519 = vpack.c.b16 %v3434, %v3433
        %v3520 = vpack.c.b16 %v3436, %v3435
        %v3521 = vpack.c.b16 %v3438, %v3437
        %v3522 = vpack.c.b16 %v3440, %v3439
        %v3523 = vpack.c.b16 %v3442, %v3441
        %v3524 = vpack.c.b16 %v3444, %v3443
        %v3525 = vpack.c.b16 %v3446, %v3445
        %v3526 = vpack.c.b16 %v3448, %v3447
        %v3527 = vpack.c.b16 %v3450, %v3449
        %v3528 = vpack.c.b16 %v3452, %v3451
        %v3529 = vpack.c.b16 %v3454, %v3453
        %v3530 = vpack.c.b16 %v3456, %v3455
        %v3531 = vpack.c.b16 %v3458, %v3457
        %v3532 = vpack.c.b16 %v3460, %v3459
        %3605 = vmatprep.subr.bf16.mxu0 0
        %3606 = vmatpush1.bf16.msra.mxu0 %v3468
        %3607 = vmatprep.subr.bf16.mxu0 0
        %3608 = vmatpush1.bf16.msra.mxu0 %v3467
        %3609 = vmatprep.subr.bf16.mxu0 0
        %3610 = vmatpush1.bf16.msra.mxu0 %v3466
        %3611 = vmatprep.subr.bf16.mxu0 0
        %3612 = vmatpush1.bf16.msra.mxu0 %v3465
        %3613 = vmatprep.subr.bf16.mxu0 0
        %3614 = vmatpush1.bf16.msra.mxu0 %v3464
        %3615 = vmatprep.subr.bf16.mxu0 0
        %3616 = vmatpush1.bf16.msra.mxu0 %v3463
        %3617 = vmatprep.subr.bf16.mxu0 0
        %3618 = vmatpush1.bf16.msra.mxu0 %v3462
        %3619 = vmatprep.subr.bf16.mxu0 0
        %3620 = vmatpush1.bf16.msra.mxu0 %v3461
        %3621 = vmatprep.subr.bf16.mxu0 0
        %3622 = vmatpush2.bf16.msra.mxu0 %v3476
        %3623 = vmatprep.subr.bf16.mxu0 0
        %3624 = vmatpush2.bf16.msra.mxu0 %v3475
        %3625 = vmatprep.subr.bf16.mxu0 0
        %3626 = vmatpush2.bf16.msra.mxu0 %v3474
        %3627 = vmatprep.subr.bf16.mxu0 0
        %3628 = vmatpush2.bf16.msra.mxu0 %v3473
        %3629 = vmatprep.subr.bf16.mxu0 0
        %3630 = vmatpush2.bf16.msra.mxu0 %v3472
        %3631 = vmatprep.subr.bf16.mxu0 0
        %3632 = vmatpush2.bf16.msra.mxu0 %v3471
        %3633 = vmatprep.subr.bf16.mxu0 0
        %3634 = vmatpush2.bf16.msra.mxu0 %v3470
        %3635 = vmatprep.subr.bf16.mxu0 0
        %3636 = vmatpush2.bf16.msra.mxu0 %v3469
        %3637 = vmatprep.mubr.bf16.mxu0 %v2510
        %3638 = vmatmul.mubr.bf16.gmra.mxu0 %v2446
        %v3639 = vpop.f32.mrf.mxu0
        %v3640 = vadd.f32 %v3171, %v3639
        %v3641 = vpop.f32.mrf.mxu0
        %v3642 = vpop.f32.mrf.mxu0
        %v3643 = vadd.f32 %v3171, %v3642
        %v3644 = vpop.f32.mrf.mxu0
        %3645 = vmatprep.mubr.bf16.mxu0 %v2511
        %3646 = vmatmul.mubr.bf16.gmra.mxu0 %v2447
        %v3647 = vpop.f32.mrf.mxu0
        %v3648 = vadd.f32 %v3171, %v3647
        %v3649 = vpop.f32.mrf.mxu0
        %v3650 = vpop.f32.mrf.mxu0
        %v3651 = vadd.f32 %v3171, %v3650
        %v3652 = vpop.f32.mrf.mxu0
        %3653 = vmatprep.mubr.bf16.mxu0 %v2512
        %3654 = vmatmul.mubr.bf16.gmra.mxu0 %v2448
        %v3655 = vpop.f32.mrf.mxu0
        %v3656 = vadd.f32 %v3171, %v3655
        %v3657 = vpop.f32.mrf.mxu0
        %v3658 = vpop.f32.mrf.mxu0
        %v3659 = vadd.f32 %v3171, %v3658
        %v3660 = vpop.f32.mrf.mxu0
        %3661 = vmatprep.mubr.bf16.mxu0 %v2513
        %3662 = vmatmul.mubr.bf16.gmra.mxu0 %v2449
        %v3663 = vpop.f32.mrf.mxu0
        %v3664 = vadd.f32 %v3171, %v3663
        %v3665 = vpop.f32.mrf.mxu0
        %v3666 = vpop.f32.mrf.mxu0
        %v3667 = vadd.f32 %v3171, %v3666
        %v3668 = vpop.f32.mrf.mxu0
        %3669 = vmatprep.mubr.bf16.mxu0 %v2514
        %3670 = vmatmul.mubr.bf16.gmra.mxu0 %v2450
        %v3671 = vpop.f32.mrf.mxu0
        %v3672 = vadd.f32 %v3171, %v3671
        %v3673 = vpop.f32.mrf.mxu0
        %v3674 = vpop.f32.mrf.mxu0
        %v3675 = vadd.f32 %v3171, %v3674
        %v3676 = vpop.f32.mrf.mxu0
        %3677 = vmatprep.mubr.bf16.mxu0 %v2515
        %3678 = vmatmul.mubr.bf16.gmra.mxu0 %v2451
        %v3679 = vpop.f32.mrf.mxu0
        %v3680 = vadd.f32 %v3171, %v3679
        %v3681 = vpop.f32.mrf.mxu0
        %v3682 = vpop.f32.mrf.mxu0
        %v3683 = vadd.f32 %v3171, %v3682
        %v3684 = vpop.f32.mrf.mxu0
        %3685 = vmatprep.mubr.bf16.mxu0 %v2516
        %3686 = vmatmul.mubr.bf16.gmra.mxu0 %v2452
        %v3687 = vpop.f32.mrf.mxu0
        %v3688 = vadd.f32 %v3171, %v3687
        %v3689 = vpop.f32.mrf.mxu0
        %v3690 = vpop.f32.mrf.mxu0
        %v3691 = vadd.f32 %v3171, %v3690
        %v3692 = vpop.f32.mrf.mxu0
        %3693 = vmatprep.mubr.bf16.mxu0 %v2517
        %3694 = vmatmul.mubr.bf16.gmra.mxu0 %v2453
        %v3695 = vpop.f32.mrf.mxu0
        %v3696 = vadd.f32 %v3171, %v3695
        %v3697 = vpop.f32.mrf.mxu0
        %v3698 = vpop.f32.mrf.mxu0
        %v3699 = vadd.f32 %v3171, %v3698
        %v3700 = vpop.f32.mrf.mxu0
        %3701 = vmatprep.mubr.bf16.mxu0 %v2518
        %3702 = vmatmul.mubr.bf16.gmra.mxu0 %v2454
        %v3703 = vpop.f32.mrf.mxu0
        %v3704 = vadd.f32 %v3171, %v3703
        %v3705 = vpop.f32.mrf.mxu0
        %v3706 = vpop.f32.mrf.mxu0
        %v3707 = vadd.f32 %v3171, %v3706
        %v3708 = vpop.f32.mrf.mxu0
        %3709 = vmatprep.mubr.bf16.mxu0 %v2519
        %3710 = vmatmul.mubr.bf16.gmra.mxu0 %v2455
        %v3711 = vpop.f32.mrf.mxu0
        %v3712 = vadd.f32 %v3171, %v3711
        %v3713 = vpop.f32.mrf.mxu0
        %v3714 = vpop.f32.mrf.mxu0
        %v3715 = vadd.f32 %v3171, %v3714
        %v3716 = vpop.f32.mrf.mxu0
        %3717 = vmatprep.mubr.bf16.mxu0 %v2520
        %3718 = vmatmul.mubr.bf16.gmra.mxu0 %v2456
        %v3719 = vpop.f32.mrf.mxu0
        %v3720 = vadd.f32 %v3171, %v3719
        %v3721 = vpop.f32.mrf.mxu0
        %v3722 = vpop.f32.mrf.mxu0
        %v3723 = vadd.f32 %v3171, %v3722
        %v3724 = vpop.f32.mrf.mxu0
        %3725 = vmatprep.mubr.bf16.mxu0 %v2521
        %3726 = vmatmul.mubr.bf16.gmra.mxu0 %v2457
        %v3727 = vpop.f32.mrf.mxu0
        %v3728 = vadd.f32 %v3171, %v3727
        %v3729 = vpop.f32.mrf.mxu0
        %v3730 = vpop.f32.mrf.mxu0
        %v3731 = vadd.f32 %v3171, %v3730
        %v3732 = vpop.f32.mrf.mxu0
        %3733 = vmatprep.mubr.bf16.mxu0 %v2522
        %3734 = vmatmul.mubr.bf16.gmra.mxu0 %v2458
        %v3735 = vpop.f32.mrf.mxu0
        %v3736 = vadd.f32 %v3171, %v3735
        %v3737 = vpop.f32.mrf.mxu0
        %v3738 = vpop.f32.mrf.mxu0
        %v3739 = vadd.f32 %v3171, %v3738
        %v3740 = vpop.f32.mrf.mxu0
        %3741 = vmatprep.mubr.bf16.mxu0 %v2523
        %3742 = vmatmul.mubr.bf16.gmra.mxu0 %v2459
        %v3743 = vpop.f32.mrf.mxu0
        %v3744 = vadd.f32 %v3171, %v3743
        %v3745 = vpop.f32.mrf.mxu0
        %v3746 = vpop.f32.mrf.mxu0
        %v3747 = vadd.f32 %v3171, %v3746
        %v3748 = vpop.f32.mrf.mxu0
        %3749 = vmatprep.mubr.bf16.mxu0 %v2524
        %3750 = vmatmul.mubr.bf16.gmra.mxu0 %v2460
        %v3751 = vpop.f32.mrf.mxu0
        %v3752 = vadd.f32 %v3171, %v3751
        %v3753 = vpop.f32.mrf.mxu0
        %v3754 = vpop.f32.mrf.mxu0
        %v3755 = vadd.f32 %v3171, %v3754
        %v3756 = vpop.f32.mrf.mxu0
        %3757 = vmatprep.mubr.bf16.mxu0 %v2525
        %3758 = vmatmul.mubr.bf16.gmra.mxu0 %v2461
        %v3759 = vpop.f32.mrf.mxu0
        %v3760 = vadd.f32 %v3171, %v3759
        %v3761 = vpop.f32.mrf.mxu0
        %v3762 = vpop.f32.mrf.mxu0
        %v3763 = vadd.f32 %v3171, %v3762
        %v3764 = vpop.f32.mrf.mxu0
        %3765 = vdwg.mxu0
        %3766 = vmatprep.subr.bf16.mxu0 0
        %3767 = vmatpush1.bf16.msra.mxu0 %v3484
        %3768 = vmatprep.subr.bf16.mxu0 0
        %3769 = vmatpush1.bf16.msra.mxu0 %v3483
        %3770 = vmatprep.subr.bf16.mxu0 0
        %3771 = vmatpush1.bf16.msra.mxu0 %v3482
        %3772 = vmatprep.subr.bf16.mxu0 0
        %3773 = vmatpush1.bf16.msra.mxu0 %v3481
        %3774 = vmatprep.subr.bf16.mxu0 0
        %3775 = vmatpush1.bf16.msra.mxu0 %v3480
        %3776 = vmatprep.subr.bf16.mxu0 0
        %3777 = vmatpush1.bf16.msra.mxu0 %v3479
        %3778 = vmatprep.subr.bf16.mxu0 0
        %3779 = vmatpush1.bf16.msra.mxu0 %v3478
        %3780 = vmatprep.subr.bf16.mxu0 0
        %3781 = vmatpush1.bf16.msra.mxu0 %v3477
        %3782 = vmatprep.subr.bf16.mxu0 0
        %3783 = vmatpush2.bf16.msra.mxu0 %v3492
        %3784 = vmatprep.subr.bf16.mxu0 0
        %3785 = vmatpush2.bf16.msra.mxu0 %v3491
        %3786 = vmatprep.subr.bf16.mxu0 0
        %3787 = vmatpush2.bf16.msra.mxu0 %v3490
        %3788 = vmatprep.subr.bf16.mxu0 0
        %3789 = vmatpush2.bf16.msra.mxu0 %v3489
        %3790 = vmatprep.subr.bf16.mxu0 0
        %3791 = vmatpush2.bf16.msra.mxu0 %v3488
        %3792 = vmatprep.subr.bf16.mxu0 0
        %3793 = vmatpush2.bf16.msra.mxu0 %v3487
        %3794 = vmatprep.subr.bf16.mxu0 0
        %3795 = vmatpush2.bf16.msra.mxu0 %v3486
        %3796 = vmatprep.subr.bf16.mxu0 0
        %3797 = vmatpush2.bf16.msra.mxu0 %v3485
        %3798 = vmatprep.mubr.bf16.mxu0 %v2654
        %3799 = vmatmul.mubr.bf16.gmra.mxu0 %v2574
        %v3800 = vpop.f32.mrf.mxu0
        %v3801 = vadd.f32 %v3640, %v3800
        %v3802 = vpop.f32.mrf.mxu0
        %v3803 = vpop.f32.mrf.mxu0
        %v3804 = vadd.f32 %v3643, %v3803
        %v3805 = vpop.f32.mrf.mxu0
        %3806 = vmatprep.mubr.bf16.mxu0 %v2655
        %3807 = vmatmul.mubr.bf16.gmra.mxu0 %v2575
        %v3808 = vpop.f32.mrf.mxu0
        %v3809 = vadd.f32 %v3648, %v3808
        %v3810 = vpop.f32.mrf.mxu0
        %v3811 = vpop.f32.mrf.mxu0
        %v3812 = vadd.f32 %v3651, %v3811
        %v3813 = vpop.f32.mrf.mxu0
        %3814 = vmatprep.mubr.bf16.mxu0 %v2656
        %3815 = vmatmul.mubr.bf16.gmra.mxu0 %v2576
        %v3816 = vpop.f32.mrf.mxu0
        %v3817 = vadd.f32 %v3656, %v3816
        %v3818 = vpop.f32.mrf.mxu0
        %v3819 = vpop.f32.mrf.mxu0
        %v3820 = vadd.f32 %v3659, %v3819
        %v3821 = vpop.f32.mrf.mxu0
        %3822 = vmatprep.mubr.bf16.mxu0 %v2657
        %3823 = vmatmul.mubr.bf16.gmra.mxu0 %v2577
        %v3824 = vpop.f32.mrf.mxu0
        %v3825 = vadd.f32 %v3664, %v3824
        %v3826 = vpop.f32.mrf.mxu0
        %v3827 = vpop.f32.mrf.mxu0
        %v3828 = vadd.f32 %v3667, %v3827
        %v3829 = vpop.f32.mrf.mxu0
        %3830 = vmatprep.mubr.bf16.mxu0 %v2658
        %3831 = vmatmul.mubr.bf16.gmra.mxu0 %v2578
        %v3832 = vpop.f32.mrf.mxu0
        %v3833 = vadd.f32 %v3672, %v3832
        %v3834 = vpop.f32.mrf.mxu0
        %v3835 = vpop.f32.mrf.mxu0
        %v3836 = vadd.f32 %v3675, %v3835
        %v3837 = vpop.f32.mrf.mxu0
        %3838 = vmatprep.mubr.bf16.mxu0 %v2659
        %3839 = vmatmul.mubr.bf16.gmra.mxu0 %v2579
        %v3840 = vpop.f32.mrf.mxu0
        %v3841 = vadd.f32 %v3680, %v3840
        %v3842 = vpop.f32.mrf.mxu0
        %v3843 = vpop.f32.mrf.mxu0
        %v3844 = vadd.f32 %v3683, %v3843
        %v3845 = vpop.f32.mrf.mxu0
        %3846 = vmatprep.mubr.bf16.mxu0 %v2660
        %3847 = vmatmul.mubr.bf16.gmra.mxu0 %v2580
        %v3848 = vpop.f32.mrf.mxu0
        %v3849 = vadd.f32 %v3688, %v3848
        %v3850 = vpop.f32.mrf.mxu0
        %v3851 = vpop.f32.mrf.mxu0
        %v3852 = vadd.f32 %v3691, %v3851
        %v3853 = vpop.f32.mrf.mxu0
        %3854 = vmatprep.mubr.bf16.mxu0 %v2661
        %3855 = vmatmul.mubr.bf16.gmra.mxu0 %v2581
        %v3856 = vpop.f32.mrf.mxu0
        %v3857 = vadd.f32 %v3696, %v3856
        %v3858 = vpop.f32.mrf.mxu0
        %v3859 = vpop.f32.mrf.mxu0
        %v3860 = vadd.f32 %v3699, %v3859
        %v3861 = vpop.f32.mrf.mxu0
        %3862 = vmatprep.mubr.bf16.mxu0 %v2662
        %3863 = vmatmul.mubr.bf16.gmra.mxu0 %v2582
        %v3864 = vpop.f32.mrf.mxu0
        %v3865 = vadd.f32 %v3704, %v3864
        %v3866 = vpop.f32.mrf.mxu0
        %v3867 = vpop.f32.mrf.mxu0
        %v3868 = vadd.f32 %v3707, %v3867
        %v3869 = vpop.f32.mrf.mxu0
        %3870 = vmatprep.mubr.bf16.mxu0 %v2663
        %3871 = vmatmul.mubr.bf16.gmra.mxu0 %v2583
        %v3872 = vpop.f32.mrf.mxu0
        %v3873 = vadd.f32 %v3712, %v3872
        %v3874 = vpop.f32.mrf.mxu0
        %v3875 = vpop.f32.mrf.mxu0
        %v3876 = vadd.f32 %v3715, %v3875
        %v3877 = vpop.f32.mrf.mxu0
        %3878 = vmatprep.mubr.bf16.mxu0 %v2664
        %3879 = vmatmul.mubr.bf16.gmra.mxu0 %v2584
        %v3880 = vpop.f32.mrf.mxu0
        %v3881 = vadd.f32 %v3720, %v3880
        %v3882 = vpop.f32.mrf.mxu0
        %v3883 = vpop.f32.mrf.mxu0
        %v3884 = vadd.f32 %v3723, %v3883
        %v3885 = vpop.f32.mrf.mxu0
        %3886 = vmatprep.mubr.bf16.mxu0 %v2665
        %3887 = vmatmul.mubr.bf16.gmra.mxu0 %v2585
        %v3888 = vpop.f32.mrf.mxu0
        %v3889 = vadd.f32 %v3728, %v3888
        %v3890 = vpop.f32.mrf.mxu0
        %v3891 = vpop.f32.mrf.mxu0
        %v3892 = vadd.f32 %v3731, %v3891
        %v3893 = vpop.f32.mrf.mxu0
        %3894 = vmatprep.mubr.bf16.mxu0 %v2666
        %3895 = vmatmul.mubr.bf16.gmra.mxu0 %v2586
        %v3896 = vpop.f32.mrf.mxu0
        %v3897 = vadd.f32 %v3736, %v3896
        %v3898 = vpop.f32.mrf.mxu0
        %v3899 = vpop.f32.mrf.mxu0
        %v3900 = vadd.f32 %v3739, %v3899
        %v3901 = vpop.f32.mrf.mxu0
        %3902 = vmatprep.mubr.bf16.mxu0 %v2667
        %3903 = vmatmul.mubr.bf16.gmra.mxu0 %v2587
        %v3904 = vpop.f32.mrf.mxu0
        %v3905 = vadd.f32 %v3744, %v3904
        %v3906 = vpop.f32.mrf.mxu0
        %v3907 = vpop.f32.mrf.mxu0
        %v3908 = vadd.f32 %v3747, %v3907
        %v3909 = vpop.f32.mrf.mxu0
        %3910 = vmatprep.mubr.bf16.mxu0 %v2668
        %3911 = vmatmul.mubr.bf16.gmra.mxu0 %v2588
        %v3912 = vpop.f32.mrf.mxu0
        %v3913 = vadd.f32 %v3752, %v3912
        %v3914 = vpop.f32.mrf.mxu0
        %v3915 = vpop.f32.mrf.mxu0
        %v3916 = vadd.f32 %v3755, %v3915
        %v3917 = vpop.f32.mrf.mxu0
        %3918 = vmatprep.mubr.bf16.mxu0 %v2669
        %3919 = vmatmul.mubr.bf16.gmra.mxu0 %v2589
        %v3920 = vpop.f32.mrf.mxu0
        %v3921 = vadd.f32 %v3760, %v3920
        %v3922 = vpop.f32.mrf.mxu0
        %v3923 = vpop.f32.mrf.mxu0
        %v3924 = vadd.f32 %v3763, %v3923
        %v3925 = vpop.f32.mrf.mxu0
        %3926 = vdwg.mxu0
        %3927 = vmatprep.subr.bf16.mxu0 0
        %3928 = vmatpush1.bf16.msra.mxu0 %v3500
        %3929 = vmatprep.subr.bf16.mxu0 0
        %3930 = vmatpush1.bf16.msra.mxu0 %v3499
        %3931 = vmatprep.subr.bf16.mxu0 0
        %3932 = vmatpush1.bf16.msra.mxu0 %v3498
        %3933 = vmatprep.subr.bf16.mxu0 0
        %3934 = vmatpush1.bf16.msra.mxu0 %v3497
        %3935 = vmatprep.subr.bf16.mxu0 0
        %3936 = vmatpush1.bf16.msra.mxu0 %v3496
        %3937 = vmatprep.subr.bf16.mxu0 0
        %3938 = vmatpush1.bf16.msra.mxu0 %v3495
        %3939 = vmatprep.subr.bf16.mxu0 0
        %3940 = vmatpush1.bf16.msra.mxu0 %v3494
        %3941 = vmatprep.subr.bf16.mxu0 0
        %3942 = vmatpush1.bf16.msra.mxu0 %v3493
        %3943 = vmatprep.subr.bf16.mxu0 0
        %3944 = vmatpush2.bf16.msra.mxu0 %v3508
        %3945 = vmatprep.subr.bf16.mxu0 0
        %3946 = vmatpush2.bf16.msra.mxu0 %v3507
        %3947 = vmatprep.subr.bf16.mxu0 0
        %3948 = vmatpush2.bf16.msra.mxu0 %v3506
        %3949 = vmatprep.subr.bf16.mxu0 0
        %3950 = vmatpush2.bf16.msra.mxu0 %v3505
        %3951 = vmatprep.subr.bf16.mxu0 0
        %3952 = vmatpush2.bf16.msra.mxu0 %v3504
        %3953 = vmatprep.subr.bf16.mxu0 0
        %3954 = vmatpush2.bf16.msra.mxu0 %v3503
        %3955 = vmatprep.subr.bf16.mxu0 0
        %3956 = vmatpush2.bf16.msra.mxu0 %v3502
        %3957 = vmatprep.subr.bf16.mxu0 0
        %3958 = vmatpush2.bf16.msra.mxu0 %v3501
        %3959 = vmatprep.mubr.bf16.mxu0 %v2782
        %3960 = vmatmul.mubr.bf16.gmra.mxu0 %v2718
        %v3961 = vpop.f32.mrf.mxu0
        %v3962 = vadd.f32 %v3801, %v3961
        %v3963 = vpop.f32.mrf.mxu0
        %v3964 = vpop.f32.mrf.mxu0
        %v3965 = vadd.f32 %v3804, %v3964
        %v3966 = vpop.f32.mrf.mxu0
        %3967 = vmatprep.mubr.bf16.mxu0 %v2783
        %3968 = vmatmul.mubr.bf16.gmra.mxu0 %v2719
        %v3969 = vpop.f32.mrf.mxu0
        %v3970 = vadd.f32 %v3809, %v3969
        %v3971 = vpop.f32.mrf.mxu0
        %v3972 = vpop.f32.mrf.mxu0
        %v3973 = vadd.f32 %v3812, %v3972
        %v3974 = vpop.f32.mrf.mxu0
        %3975 = vmatprep.mubr.bf16.mxu0 %v2784
        %3976 = vmatmul.mubr.bf16.gmra.mxu0 %v2720
        %v3977 = vpop.f32.mrf.mxu0
        %v3978 = vadd.f32 %v3817, %v3977
        %v3979 = vpop.f32.mrf.mxu0
        %v3980 = vpop.f32.mrf.mxu0
        %v3981 = vadd.f32 %v3820, %v3980
        %v3982 = vpop.f32.mrf.mxu0
        %3983 = vmatprep.mubr.bf16.mxu0 %v2785
        %3984 = vmatmul.mubr.bf16.gmra.mxu0 %v2721
        %v3985 = vpop.f32.mrf.mxu0
        %v3986 = vadd.f32 %v3825, %v3985
        %v3987 = vpop.f32.mrf.mxu0
        %v3988 = vpop.f32.mrf.mxu0
        %v3989 = vadd.f32 %v3828, %v3988
        %v3990 = vpop.f32.mrf.mxu0
        %3991 = vmatprep.mubr.bf16.mxu0 %v2786
        %3992 = vmatmul.mubr.bf16.gmra.mxu0 %v2722
        %v3993 = vpop.f32.mrf.mxu0
        %v3994 = vadd.f32 %v3833, %v3993
        %v3995 = vpop.f32.mrf.mxu0
        %v3996 = vpop.f32.mrf.mxu0
        %v3997 = vadd.f32 %v3836, %v3996
        %v3998 = vpop.f32.mrf.mxu0
        %3999 = vmatprep.mubr.bf16.mxu0 %v2787
        %4000 = vmatmul.mubr.bf16.gmra.mxu0 %v2723
        %v4001 = vpop.f32.mrf.mxu0
        %v4002 = vadd.f32 %v3841, %v4001
        %v4003 = vpop.f32.mrf.mxu0
        %v4004 = vpop.f32.mrf.mxu0
        %v4005 = vadd.f32 %v3844, %v4004
        %v4006 = vpop.f32.mrf.mxu0
        %4007 = vmatprep.mubr.bf16.mxu0 %v2788
        %4008 = vmatmul.mubr.bf16.gmra.mxu0 %v2724
        %v4009 = vpop.f32.mrf.mxu0
        %v4010 = vadd.f32 %v3849, %v4009
        %v4011 = vpop.f32.mrf.mxu0
        %v4012 = vpop.f32.mrf.mxu0
        %v4013 = vadd.f32 %v3852, %v4012
        %v4014 = vpop.f32.mrf.mxu0
        %4015 = vmatprep.mubr.bf16.mxu0 %v2789
        %4016 = vmatmul.mubr.bf16.gmra.mxu0 %v2725
        %v4017 = vpop.f32.mrf.mxu0
        %v4018 = vadd.f32 %v3857, %v4017
        %v4019 = vpop.f32.mrf.mxu0
        %v4020 = vpop.f32.mrf.mxu0
        %v4021 = vadd.f32 %v3860, %v4020
        %v4022 = vpop.f32.mrf.mxu0
        %4023 = vmatprep.mubr.bf16.mxu0 %v2790
        %4024 = vmatmul.mubr.bf16.gmra.mxu0 %v2726
        %v4025 = vpop.f32.mrf.mxu0
        %v4026 = vadd.f32 %v3865, %v4025
        %v4027 = vpop.f32.mrf.mxu0
        %v4028 = vpop.f32.mrf.mxu0
        %v4029 = vadd.f32 %v3868, %v4028
        %v4030 = vpop.f32.mrf.mxu0
        %4031 = vmatprep.mubr.bf16.mxu0 %v2791
        %4032 = vmatmul.mubr.bf16.gmra.mxu0 %v2727
        %v4033 = vpop.f32.mrf.mxu0
        %v4034 = vadd.f32 %v3873, %v4033
        %v4035 = vpop.f32.mrf.mxu0
        %v4036 = vpop.f32.mrf.mxu0
        %v4037 = vadd.f32 %v3876, %v4036
        %v4038 = vpop.f32.mrf.mxu0
        %4039 = vmatprep.mubr.bf16.mxu0 %v2792
        %4040 = vmatmul.mubr.bf16.gmra.mxu0 %v2728
        %v4041 = vpop.f32.mrf.mxu0
        %v4042 = vadd.f32 %v3881, %v4041
        %v4043 = vpop.f32.mrf.mxu0
        %v4044 = vpop.f32.mrf.mxu0
        %v4045 = vadd.f32 %v3884, %v4044
        %v4046 = vpop.f32.mrf.mxu0
        %4047 = vmatprep.mubr.bf16.mxu0 %v2793
        %4048 = vmatmul.mubr.bf16.gmra.mxu0 %v2729
        %v4049 = vpop.f32.mrf.mxu0
        %v4050 = vadd.f32 %v3889, %v4049
        %v4051 = vpop.f32.mrf.mxu0
        %v4052 = vpop.f32.mrf.mxu0
        %v4053 = vadd.f32 %v3892, %v4052
        %v4054 = vpop.f32.mrf.mxu0
        %4055 = vmatprep.mubr.bf16.mxu0 %v2794
        %4056 = vmatmul.mubr.bf16.gmra.mxu0 %v2730
        %v4057 = vpop.f32.mrf.mxu0
        %v4058 = vadd.f32 %v3897, %v4057
        %v4059 = vpop.f32.mrf.mxu0
        %v4060 = vpop.f32.mrf.mxu0
        %v4061 = vadd.f32 %v3900, %v4060
        %v4062 = vpop.f32.mrf.mxu0
        %4063 = vmatprep.mubr.bf16.mxu0 %v2795
        %4064 = vmatmul.mubr.bf16.gmra.mxu0 %v2731
        %v4065 = vpop.f32.mrf.mxu0
        %v4066 = vadd.f32 %v3905, %v4065
        %v4067 = vpop.f32.mrf.mxu0
        %v4068 = vpop.f32.mrf.mxu0
        %v4069 = vadd.f32 %v3908, %v4068
        %v4070 = vpop.f32.mrf.mxu0
        %4071 = vmatprep.mubr.bf16.mxu0 %v2796
        %4072 = vmatmul.mubr.bf16.gmra.mxu0 %v2732
        %v4073 = vpop.f32.mrf.mxu0
        %v4074 = vadd.f32 %v3913, %v4073
        %v4075 = vpop.f32.mrf.mxu0
        %v4076 = vpop.f32.mrf.mxu0
        %v4077 = vadd.f32 %v3916, %v4076
        %v4078 = vpop.f32.mrf.mxu0
        %4079 = vmatprep.mubr.bf16.mxu0 %v2797
        %4080 = vmatmul.mubr.bf16.gmra.mxu0 %v2733
        %v4081 = vpop.f32.mrf.mxu0
        %v4082 = vadd.f32 %v3921, %v4081
        %v4083 = vpop.f32.mrf.mxu0
        %v4084 = vpop.f32.mrf.mxu0
        %v4085 = vadd.f32 %v3924, %v4084
        %v4086 = vpop.f32.mrf.mxu0
        %4087 = vdwg.mxu0
        %4088 = vmatprep.subr.bf16.mxu0 0
        %4089 = vmatpush1.bf16.msra.mxu0 %v3516
        %4090 = vmatprep.subr.bf16.mxu0 0
        %4091 = vmatpush1.bf16.msra.mxu0 %v3515
        %4092 = vmatprep.subr.bf16.mxu0 0
        %4093 = vmatpush1.bf16.msra.mxu0 %v3514
        %4094 = vmatprep.subr.bf16.mxu0 0
        %4095 = vmatpush1.bf16.msra.mxu0 %v3513
        %4096 = vmatprep.subr.bf16.mxu0 0
        %4097 = vmatpush1.bf16.msra.mxu0 %v3512
        %4098 = vmatprep.subr.bf16.mxu0 0
        %4099 = vmatpush1.bf16.msra.mxu0 %v3511
        %4100 = vmatprep.subr.bf16.mxu0 0
        %4101 = vmatpush1.bf16.msra.mxu0 %v3510
        %4102 = vmatprep.subr.bf16.mxu0 0
        %4103 = vmatpush1.bf16.msra.mxu0 %v3509
        %4104 = vmatprep.subr.bf16.mxu0 0
        %4105 = vmatpush2.bf16.msra.mxu0 %v3524
        %4106 = vmatprep.subr.bf16.mxu0 0
        %4107 = vmatpush2.bf16.msra.mxu0 %v3523
        %4108 = vmatprep.subr.bf16.mxu0 0
        %4109 = vmatpush2.bf16.msra.mxu0 %v3522
        %4110 = vmatprep.subr.bf16.mxu0 0
        %4111 = vmatpush2.bf16.msra.mxu0 %v3521
        %4112 = vmatprep.subr.bf16.mxu0 0
        %4113 = vmatpush2.bf16.msra.mxu0 %v3520
        %4114 = vmatprep.subr.bf16.mxu0 0
        %4115 = vmatpush2.bf16.msra.mxu0 %v3519
        %4116 = vmatprep.subr.bf16.mxu0 0
        %4117 = vmatpush2.bf16.msra.mxu0 %v3518
        %4118 = vmatprep.subr.bf16.mxu0 0
        %4119 = vmatpush2.bf16.msra.mxu0 %v3517
        %4120 = vmatprep.mubr.bf16.mxu0 %v2926
        %4121 = vmatmul.mubr.bf16.gmra.mxu0 %v2862
        %v4122 = vpop.f32.mrf.mxu0
        %v4123 = vadd.f32 %v3962, %v4122
        %v4124 = vpop.f32.mrf.mxu0
        %v4125 = vpop.f32.mrf.mxu0
        %v4126 = vadd.f32 %v3965, %v4125
        %v4127 = vpop.f32.mrf.mxu0
        %4128 = vmatprep.mubr.bf16.mxu0 %v2927
        %4129 = vmatmul.mubr.bf16.gmra.mxu0 %v2863
        %v4130 = vpop.f32.mrf.mxu0
        %v4131 = vadd.f32 %v3970, %v4130
        %v4132 = vpop.f32.mrf.mxu0
        %v4133 = vpop.f32.mrf.mxu0
        %v4134 = vadd.f32 %v3973, %v4133
        %v4135 = vpop.f32.mrf.mxu0
        %4136 = vmatprep.mubr.bf16.mxu0 %v2928
        %4137 = vmatmul.mubr.bf16.gmra.mxu0 %v2864
        %v4138 = vpop.f32.mrf.mxu0
        %v4139 = vadd.f32 %v3978, %v4138
        %v4140 = vpop.f32.mrf.mxu0
        %v4141 = vpop.f32.mrf.mxu0
        %v4142 = vadd.f32 %v3981, %v4141
        %v4143 = vpop.f32.mrf.mxu0
        %4144 = vmatprep.mubr.bf16.mxu0 %v2929
        %4145 = vmatmul.mubr.bf16.gmra.mxu0 %v2865
        %v4146 = vpop.f32.mrf.mxu0
        %v4147 = vadd.f32 %v3986, %v4146
        %v4148 = vpop.f32.mrf.mxu0
        %v4149 = vpop.f32.mrf.mxu0
        %v4150 = vadd.f32 %v3989, %v4149
        %v4151 = vpop.f32.mrf.mxu0
        %4152 = vmatprep.mubr.bf16.mxu0 %v2930
        %4153 = vmatmul.mubr.bf16.gmra.mxu0 %v2866
        %v4154 = vpop.f32.mrf.mxu0
        %v4155 = vadd.f32 %v3994, %v4154
        %v4156 = vpop.f32.mrf.mxu0
        %v4157 = vpop.f32.mrf.mxu0
        %v4158 = vadd.f32 %v3997, %v4157
        %v4159 = vpop.f32.mrf.mxu0
        %4160 = vmatprep.mubr.bf16.mxu0 %v2931
        %4161 = vmatmul.mubr.bf16.gmra.mxu0 %v2867
        %v4162 = vpop.f32.mrf.mxu0
        %v4163 = vadd.f32 %v4002, %v4162
        %v4164 = vpop.f32.mrf.mxu0
        %v4165 = vpop.f32.mrf.mxu0
        %v4166 = vadd.f32 %v4005, %v4165
        %v4167 = vpop.f32.mrf.mxu0
        %4168 = vmatprep.mubr.bf16.mxu0 %v2932
        %4169 = vmatmul.mubr.bf16.gmra.mxu0 %v2868
        %v4170 = vpop.f32.mrf.mxu0
        %v4171 = vadd.f32 %v4010, %v4170
        %v4172 = vpop.f32.mrf.mxu0
        %v4173 = vpop.f32.mrf.mxu0
        %v4174 = vadd.f32 %v4013, %v4173
        %v4175 = vpop.f32.mrf.mxu0
        %4176 = vmatprep.mubr.bf16.mxu0 %v2933
        %4177 = vmatmul.mubr.bf16.gmra.mxu0 %v2869
        %v4178 = vpop.f32.mrf.mxu0
        %v4179 = vadd.f32 %v4018, %v4178
        %v4180 = vpop.f32.mrf.mxu0
        %v4181 = vpop.f32.mrf.mxu0
        %v4182 = vadd.f32 %v4021, %v4181
        %v4183 = vpop.f32.mrf.mxu0
        %4184 = vmatprep.mubr.bf16.mxu0 %v2934
        %4185 = vmatmul.mubr.bf16.gmra.mxu0 %v2870
        %v4186 = vpop.f32.mrf.mxu0
        %v4187 = vadd.f32 %v4026, %v4186
        %v4188 = vpop.f32.mrf.mxu0
        %v4189 = vpop.f32.mrf.mxu0
        %v4190 = vadd.f32 %v4029, %v4189
        %v4191 = vpop.f32.mrf.mxu0
        %4192 = vmatprep.mubr.bf16.mxu0 %v2935
        %4193 = vmatmul.mubr.bf16.gmra.mxu0 %v2871
        %v4194 = vpop.f32.mrf.mxu0
        %v4195 = vadd.f32 %v4034, %v4194
        %v4196 = vpop.f32.mrf.mxu0
        %v4197 = vpop.f32.mrf.mxu0
        %v4198 = vadd.f32 %v4037, %v4197
        %v4199 = vpop.f32.mrf.mxu0
        %4200 = vmatprep.mubr.bf16.mxu0 %v2936
        %4201 = vmatmul.mubr.bf16.gmra.mxu0 %v2872
        %v4202 = vpop.f32.mrf.mxu0
        %v4203 = vadd.f32 %v4042, %v4202
        %v4204 = vpop.f32.mrf.mxu0
        %v4205 = vpop.f32.mrf.mxu0
        %v4206 = vadd.f32 %v4045, %v4205
        %v4207 = vpop.f32.mrf.mxu0
        %4208 = vmatprep.mubr.bf16.mxu0 %v2937
        %4209 = vmatmul.mubr.bf16.gmra.mxu0 %v2873
        %v4210 = vpop.f32.mrf.mxu0
        %v4211 = vadd.f32 %v4050, %v4210
        %v4212 = vpop.f32.mrf.mxu0
        %v4213 = vpop.f32.mrf.mxu0
        %v4214 = vadd.f32 %v4053, %v4213
        %v4215 = vpop.f32.mrf.mxu0
        %4216 = vmatprep.mubr.bf16.mxu0 %v2938
        %4217 = vmatmul.mubr.bf16.gmra.mxu0 %v2874
        %v4218 = vpop.f32.mrf.mxu0
        %v4219 = vadd.f32 %v4058, %v4218
        %v4220 = vpop.f32.mrf.mxu0
        %v4221 = vpop.f32.mrf.mxu0
        %v4222 = vadd.f32 %v4061, %v4221
        %v4223 = vpop.f32.mrf.mxu0
        %4224 = vmatprep.mubr.bf16.mxu0 %v2939
        %4225 = vmatmul.mubr.bf16.gmra.mxu0 %v2875
        %v4226 = vpop.f32.mrf.mxu0
        %v4227 = vadd.f32 %v4066, %v4226
        %v4228 = vpop.f32.mrf.mxu0
        %v4229 = vpop.f32.mrf.mxu0
        %v4230 = vadd.f32 %v4069, %v4229
        %v4231 = vpop.f32.mrf.mxu0
        %4232 = vmatprep.mubr.bf16.mxu0 %v2940
        %4233 = vmatmul.mubr.bf16.gmra.mxu0 %v2876
        %v4234 = vpop.f32.mrf.mxu0
        %v4235 = vadd.f32 %v4074, %v4234
        %v4236 = vpop.f32.mrf.mxu0
        %v4237 = vpop.f32.mrf.mxu0
        %v4238 = vadd.f32 %v4077, %v4237
        %v4239 = vpop.f32.mrf.mxu0
        %4240 = vmatprep.mubr.bf16.mxu0 %v2941
        %4241 = vmatmul.mubr.bf16.gmra.mxu0 %v2877
        %v4242 = vpop.f32.mrf.mxu0
        %v4243 = vadd.f32 %v4082, %v4242
        %v4244 = vpop.f32.mrf.mxu0
        %v4245 = vpop.f32.mrf.mxu0
        %v4246 = vadd.f32 %v4085, %v4245
        %v4247 = vpop.f32.mrf.mxu0
        %4248 = vdwg.mxu0
        %4249 = vmatprep.subr.bf16.mxu0 0
        %4250 = vmatpush1.bf16.msra.mxu0 %v3532
        %4251 = vmatprep.subr.bf16.mxu0 0
        %4252 = vmatpush1.bf16.msra.mxu0 %v3531
        %4253 = vmatprep.subr.bf16.mxu0 0
        %4254 = vmatpush1.bf16.msra.mxu0 %v3530
        %4255 = vmatprep.subr.bf16.mxu0 0
        %4256 = vmatpush1.bf16.msra.mxu0 %v3529
        %4257 = vmatprep.subr.bf16.mxu0 0
        %4258 = vmatpush1.bf16.msra.mxu0 %v3528
        %4259 = vmatprep.subr.bf16.mxu0 0
        %4260 = vmatpush1.bf16.msra.mxu0 %v3527
        %4261 = vmatprep.subr.bf16.mxu0 0
        %4262 = vmatpush1.bf16.msra.mxu0 %v3526
        %4263 = vmatprep.subr.bf16.mxu0 0
        %4264 = vmatpush1.bf16.msra.mxu0 %v3525
        %4265 = vmatprep.subr.bf16.mxu0 0
        %4266 = vmatpush2.bf16.msra.mxu0 0
        %4267 = vmatprep.subr.bf16.mxu0 0
        %4268 = vmatpush2.bf16.msra.mxu0 0
        %4269 = vmatprep.subr.bf16.mxu0 0
        %4270 = vmatpush2.bf16.msra.mxu0 0
        %4271 = vmatprep.subr.bf16.mxu0 0
        %4272 = vmatpush2.bf16.msra.mxu0 0
        %4273 = vmatprep.subr.bf16.mxu0 0
        %4274 = vmatpush2.bf16.msra.mxu0 0
        %4275 = vmatprep.subr.bf16.mxu0 0
        %4276 = vmatpush2.bf16.msra.mxu0 0
        %4277 = vmatprep.subr.bf16.mxu0 0
        %4278 = vmatpush2.bf16.msra.mxu0 0
        %4279 = vmatprep.subr.bf16.mxu0 0
        %4280 = vmatpush2.bf16.msra.mxu0 0
        %4281 = vmatprep.mubr.bf16.mxu0 0
        %4282 = vmatmul.mubr.bf16.gmra.mxu0 %v2990
        %v4283 = vpop.f32.mrf.mxu0
        %v4284 = vadd.f32 %v4123, %v4283
        %v4285 = vpop.f32.mrf.mxu0
        %v4286 = vpop.f32.mrf.mxu0
        %v4287 = vadd.f32 %v4126, %v4286
        %v4288 = vpop.f32.mrf.mxu0
        %4289 = vmatprep.mubr.bf16.mxu0 0
        %4290 = vmatmul.mubr.bf16.gmra.mxu0 %v2991
        %v4291 = vpop.f32.mrf.mxu0
        %v4292 = vadd.f32 %v4131, %v4291
        %v4293 = vpop.f32.mrf.mxu0
        %v4294 = vpop.f32.mrf.mxu0
        %v4295 = vadd.f32 %v4134, %v4294
        %v4296 = vpop.f32.mrf.mxu0
        %4297 = vmatprep.mubr.bf16.mxu0 0
        %4298 = vmatmul.mubr.bf16.gmra.mxu0 %v2992
        %v4299 = vpop.f32.mrf.mxu0
        %v4300 = vadd.f32 %v4139, %v4299
        %v4301 = vpop.f32.mrf.mxu0
        %v4302 = vpop.f32.mrf.mxu0
        %v4303 = vadd.f32 %v4142, %v4302
        %v4304 = vpop.f32.mrf.mxu0
        %4305 = vmatprep.mubr.bf16.mxu0 0
        %4306 = vmatmul.mubr.bf16.gmra.mxu0 %v2993
        %v4307 = vpop.f32.mrf.mxu0
        %v4308 = vadd.f32 %v4147, %v4307
        %v4309 = vpop.f32.mrf.mxu0
        %v4310 = vpop.f32.mrf.mxu0
        %v4311 = vadd.f32 %v4150, %v4310
        %v4312 = vpop.f32.mrf.mxu0
        %4313 = vmatprep.mubr.bf16.mxu0 0
        %4314 = vmatmul.mubr.bf16.gmra.mxu0 %v2994
        %v4315 = vpop.f32.mrf.mxu0
        %v4316 = vadd.f32 %v4155, %v4315
        %v4317 = vpop.f32.mrf.mxu0
        %v4318 = vpop.f32.mrf.mxu0
        %v4319 = vadd.f32 %v4158, %v4318
        %v4320 = vpop.f32.mrf.mxu0
        %4321 = vmatprep.mubr.bf16.mxu0 0
        %4322 = vmatmul.mubr.bf16.gmra.mxu0 %v2995
        %v4323 = vpop.f32.mrf.mxu0
        %v4324 = vadd.f32 %v4163, %v4323
        %v4325 = vpop.f32.mrf.mxu0
        %v4326 = vpop.f32.mrf.mxu0
        %v4327 = vadd.f32 %v4166, %v4326
        %v4328 = vpop.f32.mrf.mxu0
        %4329 = vmatprep.mubr.bf16.mxu0 0
        %4330 = vmatmul.mubr.bf16.gmra.mxu0 %v2996
        %v4331 = vpop.f32.mrf.mxu0
        %v4332 = vadd.f32 %v4171, %v4331
        %v4333 = vpop.f32.mrf.mxu0
        %v4334 = vpop.f32.mrf.mxu0
        %v4335 = vadd.f32 %v4174, %v4334
        %v4336 = vpop.f32.mrf.mxu0
        %4337 = vmatprep.mubr.bf16.mxu0 0
        %4338 = vmatmul.mubr.bf16.gmra.mxu0 %v2997
        %v4339 = vpop.f32.mrf.mxu0
        %v4340 = vadd.f32 %v4179, %v4339
        %v4341 = vpop.f32.mrf.mxu0
        %v4342 = vpop.f32.mrf.mxu0
        %v4343 = vadd.f32 %v4182, %v4342
        %v4344 = vpop.f32.mrf.mxu0
        %4345 = vmatprep.mubr.bf16.mxu0 0
        %4346 = vmatmul.mubr.bf16.gmra.mxu0 %v2998
        %v4347 = vpop.f32.mrf.mxu0
        %v4348 = vadd.f32 %v4187, %v4347
        %v4349 = vpop.f32.mrf.mxu0
        %v4350 = vpop.f32.mrf.mxu0
        %v4351 = vadd.f32 %v4190, %v4350
        %v4352 = vpop.f32.mrf.mxu0
        %4353 = vmatprep.mubr.bf16.mxu0 0
        %4354 = vmatmul.mubr.bf16.gmra.mxu0 %v2999
        %v4355 = vpop.f32.mrf.mxu0
        %v4356 = vadd.f32 %v4195, %v4355
        %v4357 = vpop.f32.mrf.mxu0
        %v4358 = vpop.f32.mrf.mxu0
        %v4359 = vadd.f32 %v4198, %v4358
        %v4360 = vpop.f32.mrf.mxu0
        %4361 = vmatprep.mubr.bf16.mxu0 0
        %4362 = vmatmul.mubr.bf16.gmra.mxu0 %v3000
        %v4363 = vpop.f32.mrf.mxu0
        %v4364 = vadd.f32 %v4203, %v4363
        %v4365 = vpop.f32.mrf.mxu0
        %v4366 = vpop.f32.mrf.mxu0
        %v4367 = vadd.f32 %v4206, %v4366
        %v4368 = vpop.f32.mrf.mxu0
        %4369 = vmatprep.mubr.bf16.mxu0 0
        %4370 = vmatmul.mubr.bf16.gmra.mxu0 %v3001
        %v4371 = vpop.f32.mrf.mxu0
        %v4372 = vadd.f32 %v4211, %v4371
        %v4373 = vpop.f32.mrf.mxu0
        %v4374 = vpop.f32.mrf.mxu0
        %v4375 = vadd.f32 %v4214, %v4374
        %v4376 = vpop.f32.mrf.mxu0
        %4377 = vmatprep.mubr.bf16.mxu0 0
        %4378 = vmatmul.mubr.bf16.gmra.mxu0 %v3002
        %v4379 = vpop.f32.mrf.mxu0
        %v4380 = vadd.f32 %v4219, %v4379
        %v4381 = vpop.f32.mrf.mxu0
        %v4382 = vpop.f32.mrf.mxu0
        %v4383 = vadd.f32 %v4222, %v4382
        %v4384 = vpop.f32.mrf.mxu0
        %4385 = vmatprep.mubr.bf16.mxu0 0
        %4386 = vmatmul.mubr.bf16.gmra.mxu0 %v3003
        %v4387 = vpop.f32.mrf.mxu0
        %v4388 = vadd.f32 %v4227, %v4387
        %v4389 = vpop.f32.mrf.mxu0
        %v4390 = vpop.f32.mrf.mxu0
        %v4391 = vadd.f32 %v4230, %v4390
        %v4392 = vpop.f32.mrf.mxu0
        %4393 = vmatprep.mubr.bf16.mxu0 0
        %4394 = vmatmul.mubr.bf16.gmra.mxu0 %v3004
        %v4395 = vpop.f32.mrf.mxu0
        %v4396 = vadd.f32 %v4235, %v4395
        %v4397 = vpop.f32.mrf.mxu0
        %v4398 = vpop.f32.mrf.mxu0
        %v4399 = vadd.f32 %v4238, %v4398
        %v4400 = vpop.f32.mrf.mxu0
        %4401 = vmatprep.mubr.bf16.mxu0 0
        %4402 = vmatmul.mubr.bf16.gmra.mxu0 %v3005
        %v4403 = vpop.f32.mrf.mxu0
        %v4404 = vadd.f32 %v4243, %v4403
        %v4405 = vpop.f32.mrf.mxu0
        %v4406 = vpop.f32.mrf.mxu0
        %v4407 = vadd.f32 %v4246, %v4406
        %v4408 = vpop.f32.mrf.mxu0
        %4409 = vdwg.mxu0
        %v4410 = vmax.f32 %v4284, 0.0
        %v4411 = vmax.f32 %v4287, 0.0
        %v4412 = vmax.f32 %v4292, 0.0
        %v4413 = vmax.f32 %v4295, 0.0
        %v4414 = vmax.f32 %v4300, 0.0
        %v4415 = vmax.f32 %v4303, 0.0
        %v4416 = vmax.f32 %v4308, 0.0
        %v4417 = vmax.f32 %v4311, 0.0
        %v4418 = vmax.f32 %v4316, 0.0
        %v4419 = vmax.f32 %v4319, 0.0
        %v4420 = vmax.f32 %v4324, 0.0
        %v4421 = vmax.f32 %v4327, 0.0
        %v4422 = vmax.f32 %v4332, 0.0
        %v4423 = vmax.f32 %v4335, 0.0
        %v4424 = vmax.f32 %v4340, 0.0
        %v4425 = vmax.f32 %v4343, 0.0
        %v4426 = vmax.f32 %v4348, 0.0
        %v4427 = vmax.f32 %v4351, 0.0
        %v4428 = vmax.f32 %v4356, 0.0
        %v4429 = vmax.f32 %v4359, 0.0
        %v4430 = vmax.f32 %v4364, 0.0
        %v4431 = vmax.f32 %v4367, 0.0
        %v4432 = vmax.f32 %v4372, 0.0
        %v4433 = vmax.f32 %v4375, 0.0
        %v4434 = vmax.f32 %v4380, 0.0
        %v4435 = vmax.f32 %v4383, 0.0
        %v4436 = vmax.f32 %v4388, 0.0
        %v4437 = vmax.f32 %v4391, 0.0
        %v4438 = vmax.f32 %v4396, 0.0
        %v4439 = vmax.f32 %v4399, 0.0
        %v4440 = vmax.f32 %v4404, 0.0
        %v4441 = vmax.f32 %v4407, 0.0
        %4442 = vst [vmem:[#allocation3] sm:$0xf] 0
        %4443 = vst [vmem:[#allocation3 + $0x4] sm:$0xf] 0
        %4444 = vst [vmem:[#allocation3 + $0x8] sm:$0x1] 0
        %s4445 = scalar_lea.vmem [#allocation3], 204
        %4446 = vst [vmem:[%s4445] sm:$0xf] 0
        %4447 = vst [vmem:[%s4445 + $0x4] sm:$0xf] 0
        %4448 = vst [vmem:[%s4445 + $0x8] sm:$0x1] 0
        %vm4449 = vcmask 1040384
        %vm4450 = vsmask.f32 256
        %vm4451 = vmand %vm4449, %vm4450
        %v4452 = vld [vmem:[#allocation3] sm:$0x1]
        %v4453 = vsel %vm4451, 0, %v4452
        %4454 = vst [vmem:[#allocation3] sm:$0x1] %v4453
        %v4455 = vld [vmem:[#allocation3 + $0xc] sm:$0x1]
        %v4456 = vsel %vm4451, 0, %v4455
        %4457 = vst [vmem:[#allocation3 + $0xc] sm:$0x1] %v4456
        %v4458 = vld [vmem:[#allocation3 + $0x18] sm:$0x1]
        %v4459 = vsel %vm4451, 0, %v4458
        %4460 = vst [vmem:[#allocation3 + $0x18] sm:$0x1] %v4459
        %v4461 = vld [vmem:[#allocation3 + $0x24] sm:$0x1]
        %v4462 = vsel %vm4451, 0, %v4461
        %4463 = vst [vmem:[#allocation3 + $0x24] sm:$0x1] %v4462
        %v4464 = vld [vmem:[#allocation3 + $0x30] sm:$0x1]
        %v4465 = vsel %vm4451, 0, %v4464
        %4466 = vst [vmem:[#allocation3 + $0x30] sm:$0x1] %v4465
        %v4467 = vld [vmem:[#allocation3 + $0x3c] sm:$0x1]
        %v4468 = vsel %vm4451, 0, %v4467
        %4469 = vst [vmem:[#allocation3 + $0x3c] sm:$0x1] %v4468
        %v4470 = vld [vmem:[#allocation3 + $0x48] sm:$0x1]
        %v4471 = vsel %vm4451, 0, %v4470
        %4472 = vst [vmem:[#allocation3 + $0x48] sm:$0x1] %v4471
        %v4473 = vld [vmem:[#allocation3 + $0x54] sm:$0x1]
        %v4474 = vsel %vm4451, 0, %v4473
        %4475 = vst [vmem:[#allocation3 + $0x54] sm:$0x1] %v4474
        %v4476 = vld [vmem:[#allocation3 + $0x60] sm:$0x1]
        %v4477 = vsel %vm4451, 0, %v4476
        %4478 = vst [vmem:[#allocation3 + $0x60] sm:$0x1] %v4477
        %v4479 = vld [vmem:[#allocation3 + $0x6c] sm:$0x1]
        %v4480 = vsel %vm4451, 0, %v4479
        %4481 = vst [vmem:[#allocation3 + $0x6c] sm:$0x1] %v4480
        %v4482 = vld [vmem:[#allocation3 + $0x78] sm:$0x1]
        %v4483 = vsel %vm4451, 0, %v4482
        %4484 = vst [vmem:[#allocation3 + $0x78] sm:$0x1] %v4483
        %v4485 = vld [vmem:[#allocation3 + $0x84] sm:$0x1]
        %v4486 = vsel %vm4451, 0, %v4485
        %4487 = vst [vmem:[#allocation3 + $0x84] sm:$0x1] %v4486
        %v4488 = vld [vmem:[#allocation3 + $0x90] sm:$0x1]
        %v4489 = vsel %vm4451, 0, %v4488
        %4490 = vst [vmem:[#allocation3 + $0x90] sm:$0x1] %v4489
        %v4491 = vld [vmem:[#allocation3 + $0x9c] sm:$0x1]
        %v4492 = vsel %vm4451, 0, %v4491
        %4493 = vst [vmem:[#allocation3 + $0x9c] sm:$0x1] %v4492
        %v4494 = vld [vmem:[#allocation3 + $0xa8] sm:$0x1]
        %v4495 = vsel %vm4451, 0, %v4494
        %4496 = vst [vmem:[#allocation3 + $0xa8] sm:$0x1] %v4495
        %v4497 = vld [vmem:[#allocation3 + $0xb4] sm:$0x1]
        %v4498 = vsel %vm4451, 0, %v4497
        %4499 = vst [vmem:[#allocation3 + $0xb4] sm:$0x1] %v4498
        %v4500 = vld [vmem:[#allocation3 + $0xc0] sm:$0x1]
        %v4501 = vsel %vm4451, 0, %v4500
        %4502 = vst [vmem:[#allocation3 + $0xc0] sm:$0x1] %v4501
        %v4503 = vld [vmem:[#allocation3 + $0xcc] sm:$0x1]
        %v4504 = vsel %vm4451, 0, %v4503
        %4505 = vst [vmem:[#allocation3 + $0xcc] sm:$0x1] %v4504
        %vm4506 = vsmask.f32 7938
        %vm4507 = vmand %vm4449, %vm4506
        %v4508 = vld [vmem:[#allocation3 + $0x8] sm:$0x1]
        %v4509 = vsel %vm4507, 0, %v4508
        %4510 = vst [vmem:[#allocation3 + $0x8] sm:$0x1] %v4509
        %v4511 = vld [vmem:[#allocation3 + $0x14] sm:$0x1]
        %v4512 = vsel %vm4507, 0, %v4511
        %4513 = vst [vmem:[#allocation3 + $0x14] sm:$0x1] %v4512
        %v4514 = vld [vmem:[#allocation3 + $0x20] sm:$0x1]
        %v4515 = vsel %vm4507, 0, %v4514
        %4516 = vst [vmem:[#allocation3 + $0x20] sm:$0x1] %v4515
        %v4517 = vld [vmem:[#allocation3 + $0x2c] sm:$0x1]
        %v4518 = vsel %vm4507, 0, %v4517
        %4519 = vst [vmem:[#allocation3 + $0x2c] sm:$0x1] %v4518
        %v4520 = vld [vmem:[#allocation3 + $0x38] sm:$0x1]
        %v4521 = vsel %vm4507, 0, %v4520
        %4522 = vst [vmem:[#allocation3 + $0x38] sm:$0x1] %v4521
        %v4523 = vld [vmem:[#allocation3 + $0x44] sm:$0x1]
        %v4524 = vsel %vm4507, 0, %v4523
        %4525 = vst [vmem:[#allocation3 + $0x44] sm:$0x1] %v4524
        %v4526 = vld [vmem:[#allocation3 + $0x50] sm:$0x1]
        %v4527 = vsel %vm4507, 0, %v4526
        %4528 = vst [vmem:[#allocation3 + $0x50] sm:$0x1] %v4527
        %v4529 = vld [vmem:[#allocation3 + $0x5c] sm:$0x1]
        %v4530 = vsel %vm4507, 0, %v4529
        %4531 = vst [vmem:[#allocation3 + $0x5c] sm:$0x1] %v4530
        %v4532 = vld [vmem:[#allocation3 + $0x68] sm:$0x1]
        %v4533 = vsel %vm4507, 0, %v4532
        %4534 = vst [vmem:[#allocation3 + $0x68] sm:$0x1] %v4533
        %v4535 = vld [vmem:[#allocation3 + $0x74] sm:$0x1]
        %v4536 = vsel %vm4507, 0, %v4535
        %4537 = vst [vmem:[#allocation3 + $0x74] sm:$0x1] %v4536
        %v4538 = vld [vmem:[#allocation3 + $0x80] sm:$0x1]
        %v4539 = vsel %vm4507, 0, %v4538
        %4540 = vst [vmem:[#allocation3 + $0x80] sm:$0x1] %v4539
        %v4541 = vld [vmem:[#allocation3 + $0x8c] sm:$0x1]
        %v4542 = vsel %vm4507, 0, %v4541
        %4543 = vst [vmem:[#allocation3 + $0x8c] sm:$0x1] %v4542
        %v4544 = vld [vmem:[#allocation3 + $0x98] sm:$0x1]
        %v4545 = vsel %vm4507, 0, %v4544
        %4546 = vst [vmem:[#allocation3 + $0x98] sm:$0x1] %v4545
        %v4547 = vld [vmem:[#allocation3 + $0xa4] sm:$0x1]
        %v4548 = vsel %vm4507, 0, %v4547
        %4549 = vst [vmem:[#allocation3 + $0xa4] sm:$0x1] %v4548
        %v4550 = vld [vmem:[#allocation3 + $0xb0] sm:$0x1]
        %v4551 = vsel %vm4507, 0, %v4550
        %4552 = vst [vmem:[#allocation3 + $0xb0] sm:$0x1] %v4551
        %v4553 = vld [vmem:[#allocation3 + $0xbc] sm:$0x1]
        %v4554 = vsel %vm4507, 0, %v4553
        %4555 = vst [vmem:[#allocation3 + $0xbc] sm:$0x1] %v4554
        %v4556 = vld [vmem:[#allocation3 + $0xc8] sm:$0x1]
        %v4557 = vsel %vm4507, 0, %v4556
        %4558 = vst [vmem:[#allocation3 + $0xc8] sm:$0x1] %v4557
        %v4559 = vld [vmem:[#allocation3 + $0xd4] sm:$0x1]
        %v4560 = vsel %vm4507, 0, %v4559
        %4561 = vst [vmem:[#allocation3 + $0xd4] sm:$0x1] %v4560
        %v4562 = vpack.c.bf16 %v4411, %v4410
        %v4563 = vpack.c.bf16 %v4413, %v4412
        %v4564 = vpack.c.bf16 %v4415, %v4414
        %v4565 = vpack.c.bf16 %v4417, %v4416
        %v4566 = vpack.c.bf16 %v4419, %v4418
        %v4567 = vpack.c.bf16 %v4421, %v4420
        %v4568 = vpack.c.bf16 %v4423, %v4422
        %v4569 = vpack.c.bf16 %v4425, %v4424
        %v4570 = vpack.c.bf16 %v4427, %v4426
        %v4571 = vpack.c.bf16 %v4429, %v4428
        %v4572 = vpack.c.bf16 %v4431, %v4430
        %v4573 = vpack.c.bf16 %v4433, %v4432
        %v4574 = vpack.c.bf16 %v4435, %v4434
        %v4575 = vpack.c.bf16 %v4437, %v4436
        %v4576 = vpack.c.bf16 %v4439, %v4438
        %v4577 = vpack.c.bf16 %v4441, %v4440
        %v4594 = vunpack.c.l.b16 %v4562
        %v4595 = vunpack.c.h.b16 %v4562
        %v4596 = vunpack.c.l.b16 %v4563
        %v4597 = vunpack.c.h.b16 %v4563
        %v4598 = vunpack.c.l.b16 %v4564
        %v4599 = vunpack.c.h.b16 %v4564
        %v4600 = vunpack.c.l.b16 %v4565
        %v4601 = vunpack.c.h.b16 %v4565
        %v4602 = vunpack.c.l.b16 %v4566
        %v4603 = vunpack.c.h.b16 %v4566
        %v4604 = vunpack.c.l.b16 %v4567
        %v4605 = vunpack.c.h.b16 %v4567
        %v4606 = vunpack.c.l.b16 %v4568
        %v4607 = vunpack.c.h.b16 %v4568
        %v4608 = vunpack.c.l.b16 %v4569
        %v4609 = vunpack.c.h.b16 %v4569
        %v4610 = vunpack.c.l.b16 %v4570
        %v4611 = vunpack.c.h.b16 %v4570
        %v4612 = vunpack.c.l.b16 %v4571
        %v4613 = vunpack.c.h.b16 %v4571
        %v4614 = vunpack.c.l.b16 %v4572
        %v4615 = vunpack.c.h.b16 %v4572
        %v4616 = vunpack.c.l.b16 %v4573
        %v4617 = vunpack.c.h.b16 %v4573
        %v4618 = vunpack.c.l.b16 %v4574
        %v4619 = vunpack.c.h.b16 %v4574
        %v4620 = vunpack.c.l.b16 %v4575
        %v4621 = vunpack.c.h.b16 %v4575
        %v4622 = vunpack.c.l.b16 %v4576
        %v4623 = vunpack.c.h.b16 %v4576
        %v4624 = vunpack.c.l.b16 %v4577
        %v4625 = vunpack.c.h.b16 %v4577
        %v4626 = vpack.c.b16 %v4594, %v4594
        %v4627 = vpack.c.b16 %v4595, %v4595
        %v4628 = vpack.c.b16 %v4596, %v4596
        %v4629 = vpack.c.b16 %v4597, %v4597
        %v4630 = vpack.c.b16 %v4598, %v4598
        %v4631 = vpack.c.b16 %v4599, %v4599
        %v4632 = vpack.c.b16 %v4600, %v4600
        %v4633 = vpack.c.b16 %v4601, %v4601
        %v4634 = vpack.c.b16 %v4602, %v4602
        %v4635 = vpack.c.b16 %v4603, %v4603
        %v4636 = vpack.c.b16 %v4604, %v4604
        %v4637 = vpack.c.b16 %v4605, %v4605
        %v4638 = vpack.c.b16 %v4606, %v4606
        %v4639 = vpack.c.b16 %v4607, %v4607
        %v4640 = vpack.c.b16 %v4608, %v4608
        %v4641 = vpack.c.b16 %v4609, %v4609
        %v4642 = vpack.c.b16 %v4610, %v4610
        %v4643 = vpack.c.b16 %v4611, %v4611
        %v4644 = vpack.c.b16 %v4612, %v4612
        %v4645 = vpack.c.b16 %v4613, %v4613
        %v4646 = vpack.c.b16 %v4614, %v4614
        %v4647 = vpack.c.b16 %v4615, %v4615
        %v4648 = vpack.c.b16 %v4616, %v4616
        %v4649 = vpack.c.b16 %v4617, %v4617
        %v4650 = vpack.c.b16 %v4618, %v4618
        %v4651 = vpack.c.b16 %v4619, %v4619
        %v4652 = vpack.c.b16 %v4620, %v4620
        %v4653 = vpack.c.b16 %v4621, %v4621
        %v4654 = vpack.c.b16 %v4622, %v4622
        %v4655 = vpack.c.b16 %v4623, %v4623
        %v4656 = vpack.c.b16 %v4624, %v4624
        %v4657 = vpack.c.b16 %v4625, %v4625
        %vm4658 = vsmask.f32 4368
        %vm4659 = vmor %vm4450, %vm4658
        %v4661 = vshrl.u32 %v4626, 16
        %v4663 = vrot.slane %v4661, 7
        %v4664 = vshll.u32 %v4626, 16
        %v4666 = vor.u32 %v4663, %v4664
        %v4667 = vrot.slane %v4663, 4
        %v4669 = vshrl.u32 %v4627, 16
        %v4671 = vrot.slane %v4669, 7
        %v4672 = vshll.u32 %v4627, 16
        %v4674 = vor.u32 %v4671, %v4672
        %v4675 = vsel %vm4659, %v4667, %v4674
        %v4676 = vrot.slane %v4671, 4
        %v4678 = vshrl.u32 %v4628, 16
        %v4680 = vrot.slane %v4678, 7
        %v4681 = vshll.u32 %v4628, 16
        %v4683 = vor.u32 %v4680, %v4681
        %v4684 = vrot.slane %v4680, 4
        %v4686 = vshrl.u32 %v4629, 16
        %v4688 = vrot.slane %v4686, 7
        %v4689 = vshll.u32 %v4629, 16
        %v4691 = vor.u32 %v4688, %v4689
        %v4692 = vsel %vm4659, %v4684, %v4691
        %v4693 = vrot.slane %v4688, 4
        %v4695 = vshrl.u32 %v4630, 16
        %v4697 = vrot.slane %v4695, 7
        %v4698 = vshll.u32 %v4630, 16
        %v4700 = vor.u32 %v4697, %v4698
        %v4701 = vrot.slane %v4697, 4
        %v4703 = vshrl.u32 %v4631, 16
        %v4705 = vrot.slane %v4703, 7
        %v4706 = vshll.u32 %v4631, 16
        %v4708 = vor.u32 %v4705, %v4706
        %v4709 = vsel %vm4659, %v4701, %v4708
        %v4710 = vrot.slane %v4705, 4
        %v4712 = vshrl.u32 %v4632, 16
        %v4714 = vrot.slane %v4712, 7
        %v4715 = vshll.u32 %v4632, 16
        %v4717 = vor.u32 %v4714, %v4715
        %v4718 = vrot.slane %v4714, 4
        %v4720 = vshrl.u32 %v4633, 16
        %v4722 = vrot.slane %v4720, 7
        %v4723 = vshll.u32 %v4633, 16
        %v4725 = vor.u32 %v4722, %v4723
        %v4726 = vsel %vm4659, %v4718, %v4725
        %v4727 = vrot.slane %v4722, 4
        %v4729 = vshrl.u32 %v4634, 16
        %v4731 = vrot.slane %v4729, 7
        %v4732 = vshll.u32 %v4634, 16
        %v4734 = vor.u32 %v4731, %v4732
        %v4735 = vrot.slane %v4731, 4
        %v4737 = vshrl.u32 %v4635, 16
        %v4739 = vrot.slane %v4737, 7
        %v4740 = vshll.u32 %v4635, 16
        %v4742 = vor.u32 %v4739, %v4740
        %v4743 = vsel %vm4659, %v4735, %v4742
        %v4744 = vrot.slane %v4739, 4
        %v4746 = vshrl.u32 %v4636, 16
        %v4748 = vrot.slane %v4746, 7
        %v4749 = vshll.u32 %v4636, 16
        %v4751 = vor.u32 %v4748, %v4749
        %v4752 = vrot.slane %v4748, 4
        %v4754 = vshrl.u32 %v4637, 16
        %v4756 = vrot.slane %v4754, 7
        %v4757 = vshll.u32 %v4637, 16
        %v4759 = vor.u32 %v4756, %v4757
        %v4760 = vsel %vm4659, %v4752, %v4759
        %v4761 = vrot.slane %v4756, 4
        %v4763 = vshrl.u32 %v4638, 16
        %v4765 = vrot.slane %v4763, 7
        %v4766 = vshll.u32 %v4638, 16
        %v4768 = vor.u32 %v4765, %v4766
        %v4769 = vrot.slane %v4765, 4
        %v4771 = vshrl.u32 %v4639, 16
        %v4773 = vrot.slane %v4771, 7
        %v4774 = vshll.u32 %v4639, 16
        %v4776 = vor.u32 %v4773, %v4774
        %v4777 = vsel %vm4659, %v4769, %v4776
        %v4778 = vrot.slane %v4773, 4
        %v4780 = vshrl.u32 %v4640, 16
        %v4782 = vrot.slane %v4780, 7
        %v4783 = vshll.u32 %v4640, 16
        %v4785 = vor.u32 %v4782, %v4783
        %v4786 = vrot.slane %v4782, 4
        %v4788 = vshrl.u32 %v4641, 16
        %v4790 = vrot.slane %v4788, 7
        %v4791 = vshll.u32 %v4641, 16
        %v4793 = vor.u32 %v4790, %v4791
        %v4794 = vsel %vm4659, %v4786, %v4793
        %v4795 = vrot.slane %v4790, 4
        %v4797 = vshrl.u32 %v4642, 16
        %v4799 = vrot.slane %v4797, 7
        %v4800 = vshll.u32 %v4642, 16
        %v4802 = vor.u32 %v4799, %v4800
        %v4803 = vrot.slane %v4799, 4
        %v4805 = vshrl.u32 %v4643, 16
        %v4807 = vrot.slane %v4805, 7
        %v4808 = vshll.u32 %v4643, 16
        %v4810 = vor.u32 %v4807, %v4808
        %v4811 = vsel %vm4659, %v4803, %v4810
        %v4812 = vrot.slane %v4807, 4
        %v4814 = vshrl.u32 %v4644, 16
        %v4816 = vrot.slane %v4814, 7
        %v4817 = vshll.u32 %v4644, 16
        %v4819 = vor.u32 %v4816, %v4817
        %v4820 = vrot.slane %v4816, 4
        %v4822 = vshrl.u32 %v4645, 16
        %v4824 = vrot.slane %v4822, 7
        %v4825 = vshll.u32 %v4645, 16
        %v4827 = vor.u32 %v4824, %v4825
        %v4828 = vsel %vm4659, %v4820, %v4827
        %v4829 = vrot.slane %v4824, 4
        %v4831 = vshrl.u32 %v4646, 16
        %v4833 = vrot.slane %v4831, 7
        %v4834 = vshll.u32 %v4646, 16
        %v4836 = vor.u32 %v4833, %v4834
        %v4837 = vrot.slane %v4833, 4
        %v4839 = vshrl.u32 %v4647, 16
        %v4841 = vrot.slane %v4839, 7
        %v4842 = vshll.u32 %v4647, 16
        %v4844 = vor.u32 %v4841, %v4842
        %v4845 = vsel %vm4659, %v4837, %v4844
        %v4846 = vrot.slane %v4841, 4
        %v4848 = vshrl.u32 %v4648, 16
        %v4850 = vrot.slane %v4848, 7
        %v4851 = vshll.u32 %v4648, 16
        %v4853 = vor.u32 %v4850, %v4851
        %v4854 = vrot.slane %v4850, 4
        %v4856 = vshrl.u32 %v4649, 16
        %v4858 = vrot.slane %v4856, 7
        %v4859 = vshll.u32 %v4649, 16
        %v4861 = vor.u32 %v4858, %v4859
        %v4862 = vsel %vm4659, %v4854, %v4861
        %v4863 = vrot.slane %v4858, 4
        %v4865 = vshrl.u32 %v4650, 16
        %v4867 = vrot.slane %v4865, 7
        %v4868 = vshll.u32 %v4650, 16
        %v4870 = vor.u32 %v4867, %v4868
        %v4871 = vrot.slane %v4867, 4
        %v4873 = vshrl.u32 %v4651, 16
        %v4875 = vrot.slane %v4873, 7
        %v4876 = vshll.u32 %v4651, 16
        %v4878 = vor.u32 %v4875, %v4876
        %v4879 = vsel %vm4659, %v4871, %v4878
        %v4880 = vrot.slane %v4875, 4
        %v4882 = vshrl.u32 %v4652, 16
        %v4884 = vrot.slane %v4882, 7
        %v4885 = vshll.u32 %v4652, 16
        %v4887 = vor.u32 %v4884, %v4885
        %v4888 = vrot.slane %v4884, 4
        %v4890 = vshrl.u32 %v4653, 16
        %v4892 = vrot.slane %v4890, 7
        %v4893 = vshll.u32 %v4653, 16
        %v4895 = vor.u32 %v4892, %v4893
        %v4896 = vsel %vm4659, %v4888, %v4895
        %v4897 = vrot.slane %v4892, 4
        %v4899 = vshrl.u32 %v4654, 16
        %v4901 = vrot.slane %v4899, 7
        %v4902 = vshll.u32 %v4654, 16
        %v4904 = vor.u32 %v4901, %v4902
        %v4905 = vrot.slane %v4901, 4
        %v4907 = vshrl.u32 %v4655, 16
        %v4909 = vrot.slane %v4907, 7
        %v4910 = vshll.u32 %v4655, 16
        %v4912 = vor.u32 %v4909, %v4910
        %v4913 = vsel %vm4659, %v4905, %v4912
        %v4914 = vrot.slane %v4909, 4
        %v4916 = vshrl.u32 %v4656, 16
        %v4918 = vrot.slane %v4916, 7
        %v4919 = vshll.u32 %v4656, 16
        %v4921 = vor.u32 %v4918, %v4919
        %v4922 = vrot.slane %v4918, 4
        %v4924 = vshrl.u32 %v4657, 16
        %v4926 = vrot.slane %v4924, 7
        %v4927 = vshll.u32 %v4657, 16
        %v4929 = vor.u32 %v4926, %v4927
        %v4930 = vsel %vm4659, %v4922, %v4929
        %v4931 = vrot.slane %v4926, 4
        %s4980 = scalar_lea.vmem [#allocation3], 12
        %vm4981 = vcmask 1043456
        %vm4982 = vmand %vm4981, %vm4506
        %v4983 = vld [vmem:[%s4980] sm:$0xf]
        %v4984 = vsel %vm4982, %v4666, %v4983
        %4985 = vst [vmem:[%s4980] sm:$0xf] %v4984
        %4986 = vst [vmem:[%s4980 + $0x4] sm:$0xf] %v4675
        %v4987 = vld [vmem:[%s4980 + $0x8] sm:$0x1]
        %v4988 = vsel %vm4451, %v4676, %v4987
        %4989 = vst [vmem:[%s4980 + $0x8] sm:$0x1] %v4988
        %v4990 = vld [vmem:[%s4980 + $0xc] sm:$0xf]
        %v4991 = vsel %vm4982, %v4683, %v4990
        %4992 = vst [vmem:[%s4980 + $0xc] sm:$0xf] %v4991
        %4993 = vst [vmem:[%s4980 + $0x10] sm:$0xf] %v4692
        %v4994 = vld [vmem:[%s4980 + $0x14] sm:$0x1]
        %v4995 = vsel %vm4451, %v4693, %v4994
        %4996 = vst [vmem:[%s4980 + $0x14] sm:$0x1] %v4995
        %v4997 = vld [vmem:[%s4980 + $0x18] sm:$0xf]
        %v4998 = vsel %vm4982, %v4700, %v4997
        %4999 = vst [vmem:[%s4980 + $0x18] sm:$0xf] %v4998
        %5000 = vst [vmem:[%s4980 + $0x1c] sm:$0xf] %v4709
        %v5001 = vld [vmem:[%s4980 + $0x20] sm:$0x1]
        %v5002 = vsel %vm4451, %v4710, %v5001
        %5003 = vst [vmem:[%s4980 + $0x20] sm:$0x1] %v5002
        %v5004 = vld [vmem:[%s4980 + $0x24] sm:$0xf]
        %v5005 = vsel %vm4982, %v4717, %v5004
        %5006 = vst [vmem:[%s4980 + $0x24] sm:$0xf] %v5005
        %5007 = vst [vmem:[%s4980 + $0x28] sm:$0xf] %v4726
        %v5008 = vld [vmem:[%s4980 + $0x2c] sm:$0x1]
        %v5009 = vsel %vm4451, %v4727, %v5008
        %5010 = vst [vmem:[%s4980 + $0x2c] sm:$0x1] %v5009
        %v5011 = vld [vmem:[%s4980 + $0x30] sm:$0xf]
        %v5012 = vsel %vm4982, %v4734, %v5011
        %5013 = vst [vmem:[%s4980 + $0x30] sm:$0xf] %v5012
        %5014 = vst [vmem:[%s4980 + $0x34] sm:$0xf] %v4743
        %v5015 = vld [vmem:[%s4980 + $0x38] sm:$0x1]
        %v5016 = vsel %vm4451, %v4744, %v5015
        %5017 = vst [vmem:[%s4980 + $0x38] sm:$0x1] %v5016
        %v5018 = vld [vmem:[%s4980 + $0x3c] sm:$0xf]
        %v5019 = vsel %vm4982, %v4751, %v5018
        %5020 = vst [vmem:[%s4980 + $0x3c] sm:$0xf] %v5019
        %5021 = vst [vmem:[%s4980 + $0x40] sm:$0xf] %v4760
        %v5022 = vld [vmem:[%s4980 + $0x44] sm:$0x1]
        %v5023 = vsel %vm4451, %v4761, %v5022
        %5024 = vst [vmem:[%s4980 + $0x44] sm:$0x1] %v5023
        %v5025 = vld [vmem:[%s4980 + $0x48] sm:$0xf]
        %v5026 = vsel %vm4982, %v4768, %v5025
        %5027 = vst [vmem:[%s4980 + $0x48] sm:$0xf] %v5026
        %5028 = vst [vmem:[%s4980 + $0x4c] sm:$0xf] %v4777
        %v5029 = vld [vmem:[%s4980 + $0x50] sm:$0x1]
        %v5030 = vsel %vm4451, %v4778, %v5029
        %5031 = vst [vmem:[%s4980 + $0x50] sm:$0x1] %v5030
        %v5032 = vld [vmem:[%s4980 + $0x54] sm:$0xf]
        %v5033 = vsel %vm4982, %v4785, %v5032
        %5034 = vst [vmem:[%s4980 + $0x54] sm:$0xf] %v5033
        %5035 = vst [vmem:[%s4980 + $0x58] sm:$0xf] %v4794
        %v5036 = vld [vmem:[%s4980 + $0x5c] sm:$0x1]
        %v5037 = vsel %vm4451, %v4795, %v5036
        %5038 = vst [vmem:[%s4980 + $0x5c] sm:$0x1] %v5037
        %v5039 = vld [vmem:[%s4980 + $0x60] sm:$0xf]
        %v5040 = vsel %vm4982, %v4802, %v5039
        %5041 = vst [vmem:[%s4980 + $0x60] sm:$0xf] %v5040
        %5042 = vst [vmem:[%s4980 + $0x64] sm:$0xf] %v4811
        %v5043 = vld [vmem:[%s4980 + $0x68] sm:$0x1]
        %v5044 = vsel %vm4451, %v4812, %v5043
        %5045 = vst [vmem:[%s4980 + $0x68] sm:$0x1] %v5044
        %v5046 = vld [vmem:[%s4980 + $0x6c] sm:$0xf]
        %v5047 = vsel %vm4982, %v4819, %v5046
        %5048 = vst [vmem:[%s4980 + $0x6c] sm:$0xf] %v5047
        %5049 = vst [vmem:[%s4980 + $0x70] sm:$0xf] %v4828
        %v5050 = vld [vmem:[%s4980 + $0x74] sm:$0x1]
        %v5051 = vsel %vm4451, %v4829, %v5050
        %5052 = vst [vmem:[%s4980 + $0x74] sm:$0x1] %v5051
        %v5053 = vld [vmem:[%s4980 + $0x78] sm:$0xf]
        %v5054 = vsel %vm4982, %v4836, %v5053
        %5055 = vst [vmem:[%s4980 + $0x78] sm:$0xf] %v5054
        %5056 = vst [vmem:[%s4980 + $0x7c] sm:$0xf] %v4845
        %v5057 = vld [vmem:[%s4980 + $0x80] sm:$0x1]
        %v5058 = vsel %vm4451, %v4846, %v5057
        %5059 = vst [vmem:[%s4980 + $0x80] sm:$0x1] %v5058
        %v5060 = vld [vmem:[%s4980 + $0x84] sm:$0xf]
        %v5061 = vsel %vm4982, %v4853, %v5060
        %5062 = vst [vmem:[%s4980 + $0x84] sm:$0xf] %v5061
        %5063 = vst [vmem:[%s4980 + $0x88] sm:$0xf] %v4862
        %v5064 = vld [vmem:[%s4980 + $0x8c] sm:$0x1]
        %v5065 = vsel %vm4451, %v4863, %v5064
        %5066 = vst [vmem:[%s4980 + $0x8c] sm:$0x1] %v5065
        %v5067 = vld [vmem:[%s4980 + $0x90] sm:$0xf]
        %v5068 = vsel %vm4982, %v4870, %v5067
        %5069 = vst [vmem:[%s4980 + $0x90] sm:$0xf] %v5068
        %5070 = vst [vmem:[%s4980 + $0x94] sm:$0xf] %v4879
        %v5071 = vld [vmem:[%s4980 + $0x98] sm:$0x1]
        %v5072 = vsel %vm4451, %v4880, %v5071
        %5073 = vst [vmem:[%s4980 + $0x98] sm:$0x1] %v5072
        %v5074 = vld [vmem:[%s4980 + $0x9c] sm:$0xf]
        %v5075 = vsel %vm4982, %v4887, %v5074
        %5076 = vst [vmem:[%s4980 + $0x9c] sm:$0xf] %v5075
        %5077 = vst [vmem:[%s4980 + $0xa0] sm:$0xf] %v4896
        %v5078 = vld [vmem:[%s4980 + $0xa4] sm:$0x1]
        %v5079 = vsel %vm4451, %v4897, %v5078
        %5080 = vst [vmem:[%s4980 + $0xa4] sm:$0x1] %v5079
        %v5081 = vld [vmem:[%s4980 + $0xa8] sm:$0xf]
        %v5082 = vsel %vm4982, %v4904, %v5081
        %5083 = vst [vmem:[%s4980 + $0xa8] sm:$0xf] %v5082
        %5084 = vst [vmem:[%s4980 + $0xac] sm:$0xf] %v4913
        %v5085 = vld [vmem:[%s4980 + $0xb0] sm:$0x1]
        %v5086 = vsel %vm4451, %v4914, %v5085
        %5087 = vst [vmem:[%s4980 + $0xb0] sm:$0x1] %v5086
        %v5088 = vld [vmem:[%s4980 + $0xb4] sm:$0xf]
        %v5089 = vsel %vm4982, %v4921, %v5088
        %5090 = vst [vmem:[%s4980 + $0xb4] sm:$0xf] %v5089
        %5091 = vst [vmem:[%s4980 + $0xb8] sm:$0xf] %v4930
        %v5092 = vld [vmem:[%s4980 + $0xbc] sm:$0x1]
        %v5093 = vsel %vm4451, %v4931, %v5092
        %5094 = vst [vmem:[%s4980 + $0xbc] sm:$0x1] %v5093
        %v5095 = vld [vmem:[#allocation3] sm:$0xf]
        %v5096 = vld [vmem:[#allocation3 + $0x4] sm:$0xf]
        %v5097 = vld [vmem:[#allocation3 + $0xc] sm:$0xf]
        %v5098 = vld [vmem:[#allocation3 + $0x10] sm:$0xf]
        %v5099 = vld [vmem:[#allocation3 + $0x18] sm:$0xf]
        %v5100 = vld [vmem:[#allocation3 + $0x1c] sm:$0xf]
        %v5101 = vld [vmem:[#allocation3 + $0x24] sm:$0xf]
        %v5102 = vld [vmem:[#allocation3 + $0x28] sm:$0xf]
        %v5103 = vld [vmem:[#allocation3 + $0x30] sm:$0xf]
        %v5104 = vld [vmem:[#allocation3 + $0x34] sm:$0xf]
        %v5105 = vld [vmem:[#allocation3 + $0x3c] sm:$0xf]
        %v5106 = vld [vmem:[#allocation3 + $0x40] sm:$0xf]
        %v5107 = vld [vmem:[#allocation3 + $0x48] sm:$0xf]
        %v5108 = vld [vmem:[#allocation3 + $0x4c] sm:$0xf]
        %v5109 = vld [vmem:[#allocation3 + $0x54] sm:$0xf]
        %v5110 = vld [vmem:[#allocation3 + $0x58] sm:$0xf]
        %v5111 = vld [vmem:[#allocation3 + $0x60] sm:$0xf]
        %v5112 = vld [vmem:[#allocation3 + $0x64] sm:$0xf]
        %v5113 = vld [vmem:[#allocation3 + $0x6c] sm:$0xf]
        %v5114 = vld [vmem:[#allocation3 + $0x70] sm:$0xf]
        %v5115 = vld [vmem:[#allocation3 + $0x78] sm:$0xf]
        %v5116 = vld [vmem:[#allocation3 + $0x7c] sm:$0xf]
        %v5117 = vld [vmem:[#allocation3 + $0x84] sm:$0xf]
        %v5118 = vld [vmem:[#allocation3 + $0x88] sm:$0xf]
        %v5119 = vld [vmem:[#allocation3 + $0x90] sm:$0xf]
        %v5120 = vld [vmem:[#allocation3 + $0x94] sm:$0xf]
        %v5121 = vld [vmem:[#allocation3 + $0x9c] sm:$0xf]
        %v5122 = vld [vmem:[#allocation3 + $0xa0] sm:$0xf]
        %v5123 = vld [vmem:[#allocation3 + $0xa8] sm:$0xf]
        %v5124 = vld [vmem:[#allocation3 + $0xac] sm:$0xf]
        %v5125 = vld [vmem:[#allocation3 + $0xb4] sm:$0xf]
        %v5126 = vld [vmem:[#allocation3 + $0xb8] sm:$0xf]
        %v5127 = vld [vmem:[#allocation3 + $0x8] sm:$0x1]
        %v5128 = vld [vmem:[#allocation3 + $0x14] sm:$0x1]
        %v5129 = vld [vmem:[#allocation3 + $0x20] sm:$0x1]
        %v5130 = vld [vmem:[#allocation3 + $0x2c] sm:$0x1]
        %v5131 = vld [vmem:[#allocation3 + $0x38] sm:$0x1]
        %v5132 = vld [vmem:[#allocation3 + $0x44] sm:$0x1]
        %v5133 = vld [vmem:[#allocation3 + $0x50] sm:$0x1]
        %v5134 = vld [vmem:[#allocation3 + $0x5c] sm:$0x1]
        %v5135 = vld [vmem:[#allocation3 + $0x68] sm:$0x1]
        %v5136 = vld [vmem:[#allocation3 + $0x74] sm:$0x1]
        %v5137 = vld [vmem:[#allocation3 + $0x80] sm:$0x1]
        %v5138 = vld [vmem:[#allocation3 + $0x8c] sm:$0x1]
        %v5139 = vld [vmem:[#allocation3 + $0x98] sm:$0x1]
        %v5140 = vld [vmem:[#allocation3 + $0xa4] sm:$0x1]
        %v5141 = vld [vmem:[#allocation3 + $0xb0] sm:$0x1]
        %v5142 = vld [vmem:[#allocation3 + $0xbc] sm:$0x1]
        %v5144 = vshrl.u32 %v5095, 16
        %v5146 = vrot.slane %v5144, 4
        %v5147 = vshll.u32 %v5095, 16
        %v5149 = vrot.slane %v5147, 5
        %v5150 = vor.u32 %v5146, %v5149
        %v5151 = vrot.slane %v5150, 4
        %v5153 = vshll.u32 %v5096, 16
        %v5155 = vrot.slane %v5153, 5
        %v5156 = vsel %vm616, %v5151, %v5155
        %v5157 = vshrl.u32 %v5096, 16
        %v5159 = vrot.slane %v5157, 4
        %v5160 = vor.u32 %v5159, %v5155
        %v5161 = vrot.slane %v5160, 4
        %v5163 = vshll.u32 %v5127, 16
        %v5165 = vrot.slane %v5163, 5
        %v5166 = vsel %vm616, %v5161, %v5165
        %v5168 = vshrl.u32 %v5097, 16
        %v5170 = vrot.slane %v5168, 4
        %v5171 = vshll.u32 %v5097, 16
        %v5173 = vrot.slane %v5171, 5
        %v5174 = vor.u32 %v5170, %v5173
        %v5175 = vrot.slane %v5174, 4
        %v5177 = vshll.u32 %v5098, 16
        %v5179 = vrot.slane %v5177, 5
        %v5180 = vsel %vm616, %v5175, %v5179
        %v5181 = vshrl.u32 %v5098, 16
        %v5183 = vrot.slane %v5181, 4
        %v5184 = vor.u32 %v5183, %v5179
        %v5185 = vrot.slane %v5184, 4
        %v5187 = vshll.u32 %v5128, 16
        %v5189 = vrot.slane %v5187, 5
        %v5190 = vsel %vm616, %v5185, %v5189
        %v5192 = vshrl.u32 %v5099, 16
        %v5194 = vrot.slane %v5192, 4
        %v5195 = vshll.u32 %v5099, 16
        %v5197 = vrot.slane %v5195, 5
        %v5198 = vor.u32 %v5194, %v5197
        %v5199 = vrot.slane %v5198, 4
        %v5201 = vshll.u32 %v5100, 16
        %v5203 = vrot.slane %v5201, 5
        %v5204 = vsel %vm616, %v5199, %v5203
        %v5205 = vshrl.u32 %v5100, 16
        %v5207 = vrot.slane %v5205, 4
        %v5208 = vor.u32 %v5207, %v5203
        %v5209 = vrot.slane %v5208, 4
        %v5211 = vshll.u32 %v5129, 16
        %v5213 = vrot.slane %v5211, 5
        %v5214 = vsel %vm616, %v5209, %v5213
        %v5216 = vshrl.u32 %v5101, 16
        %v5218 = vrot.slane %v5216, 4
        %v5219 = vshll.u32 %v5101, 16
        %v5221 = vrot.slane %v5219, 5
        %v5222 = vor.u32 %v5218, %v5221
        %v5223 = vrot.slane %v5222, 4
        %v5225 = vshll.u32 %v5102, 16
        %v5227 = vrot.slane %v5225, 5
        %v5228 = vsel %vm616, %v5223, %v5227
        %v5229 = vshrl.u32 %v5102, 16
        %v5231 = vrot.slane %v5229, 4
        %v5232 = vor.u32 %v5231, %v5227
        %v5233 = vrot.slane %v5232, 4
        %v5235 = vshll.u32 %v5130, 16
        %v5237 = vrot.slane %v5235, 5
        %v5238 = vsel %vm616, %v5233, %v5237
        %v5240 = vshrl.u32 %v5103, 16
        %v5242 = vrot.slane %v5240, 4
        %v5243 = vshll.u32 %v5103, 16
        %v5245 = vrot.slane %v5243, 5
        %v5246 = vor.u32 %v5242, %v5245
        %v5247 = vrot.slane %v5246, 4
        %v5249 = vshll.u32 %v5104, 16
        %v5251 = vrot.slane %v5249, 5
        %v5252 = vsel %vm616, %v5247, %v5251
        %v5253 = vshrl.u32 %v5104, 16
        %v5255 = vrot.slane %v5253, 4
        %v5256 = vor.u32 %v5255, %v5251
        %v5257 = vrot.slane %v5256, 4
        %v5259 = vshll.u32 %v5131, 16
        %v5261 = vrot.slane %v5259, 5
        %v5262 = vsel %vm616, %v5257, %v5261
        %v5264 = vshrl.u32 %v5105, 16
        %v5266 = vrot.slane %v5264, 4
        %v5267 = vshll.u32 %v5105, 16
        %v5269 = vrot.slane %v5267, 5
        %v5270 = vor.u32 %v5266, %v5269
        %v5271 = vrot.slane %v5270, 4
        %v5273 = vshll.u32 %v5106, 16
        %v5275 = vrot.slane %v5273, 5
        %v5276 = vsel %vm616, %v5271, %v5275
        %v5277 = vshrl.u32 %v5106, 16
        %v5279 = vrot.slane %v5277, 4
        %v5280 = vor.u32 %v5279, %v5275
        %v5281 = vrot.slane %v5280, 4
        %v5283 = vshll.u32 %v5132, 16
        %v5285 = vrot.slane %v5283, 5
        %v5286 = vsel %vm616, %v5281, %v5285
        %v5288 = vshrl.u32 %v5107, 16
        %v5290 = vrot.slane %v5288, 4
        %v5291 = vshll.u32 %v5107, 16
        %v5293 = vrot.slane %v5291, 5
        %v5294 = vor.u32 %v5290, %v5293
        %v5295 = vrot.slane %v5294, 4
        %v5297 = vshll.u32 %v5108, 16
        %v5299 = vrot.slane %v5297, 5
        %v5300 = vsel %vm616, %v5295, %v5299
        %v5301 = vshrl.u32 %v5108, 16
        %v5303 = vrot.slane %v5301, 4
        %v5304 = vor.u32 %v5303, %v5299
        %v5305 = vrot.slane %v5304, 4
        %v5307 = vshll.u32 %v5133, 16
        %v5309 = vrot.slane %v5307, 5
        %v5310 = vsel %vm616, %v5305, %v5309
        %v5312 = vshrl.u32 %v5109, 16
        %v5314 = vrot.slane %v5312, 4
        %v5315 = vshll.u32 %v5109, 16
        %v5317 = vrot.slane %v5315, 5
        %v5318 = vor.u32 %v5314, %v5317
        %v5319 = vrot.slane %v5318, 4
        %v5321 = vshll.u32 %v5110, 16
        %v5323 = vrot.slane %v5321, 5
        %v5324 = vsel %vm616, %v5319, %v5323
        %v5325 = vshrl.u32 %v5110, 16
        %v5327 = vrot.slane %v5325, 4
        %v5328 = vor.u32 %v5327, %v5323
        %v5329 = vrot.slane %v5328, 4
        %v5331 = vshll.u32 %v5134, 16
        %v5333 = vrot.slane %v5331, 5
        %v5334 = vsel %vm616, %v5329, %v5333
        %v5336 = vshrl.u32 %v5111, 16
        %v5338 = vrot.slane %v5336, 4
        %v5339 = vshll.u32 %v5111, 16
        %v5341 = vrot.slane %v5339, 5
        %v5342 = vor.u32 %v5338, %v5341
        %v5343 = vrot.slane %v5342, 4
        %v5345 = vshll.u32 %v5112, 16
        %v5347 = vrot.slane %v5345, 5
        %v5348 = vsel %vm616, %v5343, %v5347
        %v5349 = vshrl.u32 %v5112, 16
        %v5351 = vrot.slane %v5349, 4
        %v5352 = vor.u32 %v5351, %v5347
        %v5353 = vrot.slane %v5352, 4
        %v5355 = vshll.u32 %v5135, 16
        %v5357 = vrot.slane %v5355, 5
        %v5358 = vsel %vm616, %v5353, %v5357
        %v5360 = vshrl.u32 %v5113, 16
        %v5362 = vrot.slane %v5360, 4
        %v5363 = vshll.u32 %v5113, 16
        %v5365 = vrot.slane %v5363, 5
        %v5366 = vor.u32 %v5362, %v5365
        %v5367 = vrot.slane %v5366, 4
        %v5369 = vshll.u32 %v5114, 16
        %v5371 = vrot.slane %v5369, 5
        %v5372 = vsel %vm616, %v5367, %v5371
        %v5373 = vshrl.u32 %v5114, 16
        %v5375 = vrot.slane %v5373, 4
        %v5376 = vor.u32 %v5375, %v5371
        %v5377 = vrot.slane %v5376, 4
        %v5379 = vshll.u32 %v5136, 16
        %v5381 = vrot.slane %v5379, 5
        %v5382 = vsel %vm616, %v5377, %v5381
        %v5384 = vshrl.u32 %v5115, 16
        %v5386 = vrot.slane %v5384, 4
        %v5387 = vshll.u32 %v5115, 16
        %v5389 = vrot.slane %v5387, 5
        %v5390 = vor.u32 %v5386, %v5389
        %v5391 = vrot.slane %v5390, 4
        %v5393 = vshll.u32 %v5116, 16
        %v5395 = vrot.slane %v5393, 5
        %v5396 = vsel %vm616, %v5391, %v5395
        %v5397 = vshrl.u32 %v5116, 16
        %v5399 = vrot.slane %v5397, 4
        %v5400 = vor.u32 %v5399, %v5395
        %v5401 = vrot.slane %v5400, 4
        %v5403 = vshll.u32 %v5137, 16
        %v5405 = vrot.slane %v5403, 5
        %v5406 = vsel %vm616, %v5401, %v5405
        %v5408 = vshrl.u32 %v5117, 16
        %v5410 = vrot.slane %v5408, 4
        %v5411 = vshll.u32 %v5117, 16
        %v5413 = vrot.slane %v5411, 5
        %v5414 = vor.u32 %v5410, %v5413
        %v5415 = vrot.slane %v5414, 4
        %v5417 = vshll.u32 %v5118, 16
        %v5419 = vrot.slane %v5417, 5
        %v5420 = vsel %vm616, %v5415, %v5419
        %v5421 = vshrl.u32 %v5118, 16
        %v5423 = vrot.slane %v5421, 4
        %v5424 = vor.u32 %v5423, %v5419
        %v5425 = vrot.slane %v5424, 4
        %v5427 = vshll.u32 %v5138, 16
        %v5429 = vrot.slane %v5427, 5
        %v5430 = vsel %vm616, %v5425, %v5429
        %v5432 = vshrl.u32 %v5119, 16
        %v5434 = vrot.slane %v5432, 4
        %v5435 = vshll.u32 %v5119, 16
        %v5437 = vrot.slane %v5435, 5
        %v5438 = vor.u32 %v5434, %v5437
        %v5439 = vrot.slane %v5438, 4
        %v5441 = vshll.u32 %v5120, 16
        %v5443 = vrot.slane %v5441, 5
        %v5444 = vsel %vm616, %v5439, %v5443
        %v5445 = vshrl.u32 %v5120, 16
        %v5447 = vrot.slane %v5445, 4
        %v5448 = vor.u32 %v5447, %v5443
        %v5449 = vrot.slane %v5448, 4
        %v5451 = vshll.u32 %v5139, 16
        %v5453 = vrot.slane %v5451, 5
        %v5454 = vsel %vm616, %v5449, %v5453
        %v5456 = vshrl.u32 %v5121, 16
        %v5458 = vrot.slane %v5456, 4
        %v5459 = vshll.u32 %v5121, 16
        %v5461 = vrot.slane %v5459, 5
        %v5462 = vor.u32 %v5458, %v5461
        %v5463 = vrot.slane %v5462, 4
        %v5465 = vshll.u32 %v5122, 16
        %v5467 = vrot.slane %v5465, 5
        %v5468 = vsel %vm616, %v5463, %v5467
        %v5469 = vshrl.u32 %v5122, 16
        %v5471 = vrot.slane %v5469, 4
        %v5472 = vor.u32 %v5471, %v5467
        %v5473 = vrot.slane %v5472, 4
        %v5475 = vshll.u32 %v5140, 16
        %v5477 = vrot.slane %v5475, 5
        %v5478 = vsel %vm616, %v5473, %v5477
        %v5480 = vshrl.u32 %v5123, 16
        %v5482 = vrot.slane %v5480, 4
        %v5483 = vshll.u32 %v5123, 16
        %v5485 = vrot.slane %v5483, 5
        %v5486 = vor.u32 %v5482, %v5485
        %v5487 = vrot.slane %v5486, 4
        %v5489 = vshll.u32 %v5124, 16
        %v5491 = vrot.slane %v5489, 5
        %v5492 = vsel %vm616, %v5487, %v5491
        %v5493 = vshrl.u32 %v5124, 16
        %v5495 = vrot.slane %v5493, 4
        %v5496 = vor.u32 %v5495, %v5491
        %v5497 = vrot.slane %v5496, 4
        %v5499 = vshll.u32 %v5141, 16
        %v5501 = vrot.slane %v5499, 5
        %v5502 = vsel %vm616, %v5497, %v5501
        %v5504 = vshrl.u32 %v5125, 16
        %v5506 = vrot.slane %v5504, 4
        %v5507 = vshll.u32 %v5125, 16
        %v5509 = vrot.slane %v5507, 5
        %v5510 = vor.u32 %v5506, %v5509
        %v5511 = vrot.slane %v5510, 4
        %v5513 = vshll.u32 %v5126, 16
        %v5515 = vrot.slane %v5513, 5
        %v5516 = vsel %vm616, %v5511, %v5515
        %v5517 = vshrl.u32 %v5126, 16
        %v5519 = vrot.slane %v5517, 4
        %v5520 = vor.u32 %v5519, %v5515
        %v5521 = vrot.slane %v5520, 4
        %v5523 = vshll.u32 %v5142, 16
        %v5525 = vrot.slane %v5523, 5
        %v5526 = vsel %vm616, %v5521, %v5525
        %v5527 = vld [vmem:[#allocation3] sm:$0xe]
        %v5528 = vld [vmem:[#allocation3 + $0xc] sm:$0xe]
        %v5529 = vld [vmem:[#allocation3 + $0x18] sm:$0xe]
        %v5530 = vld [vmem:[#allocation3 + $0x24] sm:$0xe]
        %v5531 = vld [vmem:[#allocation3 + $0x30] sm:$0xe]
        %v5532 = vld [vmem:[#allocation3 + $0x3c] sm:$0xe]
        %v5533 = vld [vmem:[#allocation3 + $0x48] sm:$0xe]
        %v5534 = vld [vmem:[#allocation3 + $0x54] sm:$0xe]
        %v5535 = vld [vmem:[#allocation3 + $0x60] sm:$0xe]
        %v5536 = vld [vmem:[#allocation3 + $0x6c] sm:$0xe]
        %v5537 = vld [vmem:[#allocation3 + $0x78] sm:$0xe]
        %v5538 = vld [vmem:[#allocation3 + $0x84] sm:$0xe]
        %v5539 = vld [vmem:[#allocation3 + $0x90] sm:$0xe]
        %v5540 = vld [vmem:[#allocation3 + $0x9c] sm:$0xe]
        %v5541 = vld [vmem:[#allocation3 + $0xa8] sm:$0xe]
        %v5542 = vld [vmem:[#allocation3 + $0xb4] sm:$0xe]
        %v5591 = vrot.slane %v5527, 5
        %v5592 = vrot.slane %v5591, 4
        %v5593 = vrot.slane %v5096, 5
        %v5594 = vsel %vm1067, %v5592, %v5593
        %v5595 = vrot.slane %v5593, 4
        %v5596 = vrot.slane %v5127, 5
        %v5597 = vsel %vm1067, %v5595, %v5596
        %v5598 = vrot.slane %v5528, 5
        %v5599 = vrot.slane %v5598, 4
        %v5600 = vrot.slane %v5098, 5
        %v5601 = vsel %vm1067, %v5599, %v5600
        %v5602 = vrot.slane %v5600, 4
        %v5603 = vrot.slane %v5128, 5
        %v5604 = vsel %vm1067, %v5602, %v5603
        %v5605 = vrot.slane %v5529, 5
        %v5606 = vrot.slane %v5605, 4
        %v5607 = vrot.slane %v5100, 5
        %v5608 = vsel %vm1067, %v5606, %v5607
        %v5609 = vrot.slane %v5607, 4
        %v5610 = vrot.slane %v5129, 5
        %v5611 = vsel %vm1067, %v5609, %v5610
        %v5612 = vrot.slane %v5530, 5
        %v5613 = vrot.slane %v5612, 4
        %v5614 = vrot.slane %v5102, 5
        %v5615 = vsel %vm1067, %v5613, %v5614
        %v5616 = vrot.slane %v5614, 4
        %v5617 = vrot.slane %v5130, 5
        %v5618 = vsel %vm1067, %v5616, %v5617
        %v5619 = vrot.slane %v5531, 5
        %v5620 = vrot.slane %v5619, 4
        %v5621 = vrot.slane %v5104, 5
        %v5622 = vsel %vm1067, %v5620, %v5621
        %v5623 = vrot.slane %v5621, 4
        %v5624 = vrot.slane %v5131, 5
        %v5625 = vsel %vm1067, %v5623, %v5624
        %v5626 = vrot.slane %v5532, 5
        %v5627 = vrot.slane %v5626, 4
        %v5628 = vrot.slane %v5106, 5
        %v5629 = vsel %vm1067, %v5627, %v5628
        %v5630 = vrot.slane %v5628, 4
        %v5631 = vrot.slane %v5132, 5
        %v5632 = vsel %vm1067, %v5630, %v5631
        %v5633 = vrot.slane %v5533, 5
        %v5634 = vrot.slane %v5633, 4
        %v5635 = vrot.slane %v5108, 5
        %v5636 = vsel %vm1067, %v5634, %v5635
        %v5637 = vrot.slane %v5635, 4
        %v5638 = vrot.slane %v5133, 5
        %v5639 = vsel %vm1067, %v5637, %v5638
        %v5640 = vrot.slane %v5534, 5
        %v5641 = vrot.slane %v5640, 4
        %v5642 = vrot.slane %v5110, 5
        %v5643 = vsel %vm1067, %v5641, %v5642
        %v5644 = vrot.slane %v5642, 4
        %v5645 = vrot.slane %v5134, 5
        %v5646 = vsel %vm1067, %v5644, %v5645
        %v5647 = vrot.slane %v5535, 5
        %v5648 = vrot.slane %v5647, 4
        %v5649 = vrot.slane %v5112, 5
        %v5650 = vsel %vm1067, %v5648, %v5649
        %v5651 = vrot.slane %v5649, 4
        %v5652 = vrot.slane %v5135, 5
        %v5653 = vsel %vm1067, %v5651, %v5652
        %v5654 = vrot.slane %v5536, 5
        %v5655 = vrot.slane %v5654, 4
        %v5656 = vrot.slane %v5114, 5
        %v5657 = vsel %vm1067, %v5655, %v5656
        %v5658 = vrot.slane %v5656, 4
        %v5659 = vrot.slane %v5136, 5
        %v5660 = vsel %vm1067, %v5658, %v5659
        %v5661 = vrot.slane %v5537, 5
        %v5662 = vrot.slane %v5661, 4
        %v5663 = vrot.slane %v5116, 5
        %v5664 = vsel %vm1067, %v5662, %v5663
        %v5665 = vrot.slane %v5663, 4
        %v5666 = vrot.slane %v5137, 5
        %v5667 = vsel %vm1067, %v5665, %v5666
        %v5668 = vrot.slane %v5538, 5
        %v5669 = vrot.slane %v5668, 4
        %v5670 = vrot.slane %v5118, 5
        %v5671 = vsel %vm1067, %v5669, %v5670
        %v5672 = vrot.slane %v5670, 4
        %v5673 = vrot.slane %v5138, 5
        %v5674 = vsel %vm1067, %v5672, %v5673
        %v5675 = vrot.slane %v5539, 5
        %v5676 = vrot.slane %v5675, 4
        %v5677 = vrot.slane %v5120, 5
        %v5678 = vsel %vm1067, %v5676, %v5677
        %v5679 = vrot.slane %v5677, 4
        %v5680 = vrot.slane %v5139, 5
        %v5681 = vsel %vm1067, %v5679, %v5680
        %v5682 = vrot.slane %v5540, 5
        %v5683 = vrot.slane %v5682, 4
        %v5684 = vrot.slane %v5122, 5
        %v5685 = vsel %vm1067, %v5683, %v5684
        %v5686 = vrot.slane %v5684, 4
        %v5687 = vrot.slane %v5140, 5
        %v5688 = vsel %vm1067, %v5686, %v5687
        %v5689 = vrot.slane %v5541, 5
        %v5690 = vrot.slane %v5689, 4
        %v5691 = vrot.slane %v5124, 5
        %v5692 = vsel %vm1067, %v5690, %v5691
        %v5693 = vrot.slane %v5691, 4
        %v5694 = vrot.slane %v5141, 5
        %v5695 = vsel %vm1067, %v5693, %v5694
        %v5696 = vrot.slane %v5542, 5
        %v5697 = vrot.slane %v5696, 4
        %v5698 = vrot.slane %v5126, 5
        %v5699 = vsel %vm1067, %v5697, %v5698
        %v5700 = vrot.slane %v5698, 4
        %v5701 = vrot.slane %v5142, 5
        %v5702 = vsel %vm1067, %v5700, %v5701
        %v5703 = vld [vmem:[%s4980] sm:$0xf]
        %v5704 = vld [vmem:[%s4980 + $0x4] sm:$0xf]
        %v5705 = vld [vmem:[%s4980 + $0xc] sm:$0xf]
        %v5706 = vld [vmem:[%s4980 + $0x10] sm:$0xf]
        %v5707 = vld [vmem:[%s4980 + $0x18] sm:$0xf]
        %v5708 = vld [vmem:[%s4980 + $0x1c] sm:$0xf]
        %v5709 = vld [vmem:[%s4980 + $0x24] sm:$0xf]
        %v5710 = vld [vmem:[%s4980 + $0x28] sm:$0xf]
        %v5711 = vld [vmem:[%s4980 + $0x30] sm:$0xf]
        %v5712 = vld [vmem:[%s4980 + $0x34] sm:$0xf]
        %v5713 = vld [vmem:[%s4980 + $0x3c] sm:$0xf]
        %v5714 = vld [vmem:[%s4980 + $0x40] sm:$0xf]
        %v5715 = vld [vmem:[%s4980 + $0x48] sm:$0xf]
        %v5716 = vld [vmem:[%s4980 + $0x4c] sm:$0xf]
        %v5717 = vld [vmem:[%s4980 + $0x54] sm:$0xf]
        %v5718 = vld [vmem:[%s4980 + $0x58] sm:$0xf]
        %v5719 = vld [vmem:[%s4980 + $0x60] sm:$0xf]
        %v5720 = vld [vmem:[%s4980 + $0x64] sm:$0xf]
        %v5721 = vld [vmem:[%s4980 + $0x6c] sm:$0xf]
        %v5722 = vld [vmem:[%s4980 + $0x70] sm:$0xf]
        %v5723 = vld [vmem:[%s4980 + $0x78] sm:$0xf]
        %v5724 = vld [vmem:[%s4980 + $0x7c] sm:$0xf]
        %v5725 = vld [vmem:[%s4980 + $0x84] sm:$0xf]
        %v5726 = vld [vmem:[%s4980 + $0x88] sm:$0xf]
        %v5727 = vld [vmem:[%s4980 + $0x90] sm:$0xf]
        %v5728 = vld [vmem:[%s4980 + $0x94] sm:$0xf]
        %v5729 = vld [vmem:[%s4980 + $0x9c] sm:$0xf]
        %v5730 = vld [vmem:[%s4980 + $0xa0] sm:$0xf]
        %v5731 = vld [vmem:[%s4980 + $0xa8] sm:$0xf]
        %v5732 = vld [vmem:[%s4980 + $0xac] sm:$0xf]
        %v5733 = vld [vmem:[%s4980 + $0xb4] sm:$0xf]
        %v5734 = vld [vmem:[%s4980 + $0xb8] sm:$0xf]
        %v5735 = vld [vmem:[%s4980 + $0x8] sm:$0x1]
        %v5736 = vld [vmem:[%s4980 + $0x14] sm:$0x1]
        %v5737 = vld [vmem:[%s4980 + $0x20] sm:$0x1]
        %v5738 = vld [vmem:[%s4980 + $0x2c] sm:$0x1]
        %v5739 = vld [vmem:[%s4980 + $0x38] sm:$0x1]
        %v5740 = vld [vmem:[%s4980 + $0x44] sm:$0x1]
        %v5741 = vld [vmem:[%s4980 + $0x50] sm:$0x1]
        %v5742 = vld [vmem:[%s4980 + $0x5c] sm:$0x1]
        %v5743 = vld [vmem:[%s4980 + $0x68] sm:$0x1]
        %v5744 = vld [vmem:[%s4980 + $0x74] sm:$0x1]
        %v5745 = vld [vmem:[%s4980 + $0x80] sm:$0x1]
        %v5746 = vld [vmem:[%s4980 + $0x8c] sm:$0x1]
        %v5747 = vld [vmem:[%s4980 + $0x98] sm:$0x1]
        %v5748 = vld [vmem:[%s4980 + $0xa4] sm:$0x1]
        %v5749 = vld [vmem:[%s4980 + $0xb0] sm:$0x1]
        %v5750 = vld [vmem:[%s4980 + $0xbc] sm:$0x1]
        %v5752 = vshrl.u32 %v5703, 16
        %v5754 = vrot.slane %v5752, 4
        %v5755 = vshll.u32 %v5703, 16
        %v5757 = vrot.slane %v5755, 5
        %v5758 = vor.u32 %v5754, %v5757
        %v5759 = vrot.slane %v5758, 4
        %v5761 = vshll.u32 %v5704, 16
        %v5763 = vrot.slane %v5761, 5
        %v5764 = vsel %vm616, %v5759, %v5763
        %v5765 = vshrl.u32 %v5704, 16
        %v5767 = vrot.slane %v5765, 4
        %v5768 = vor.u32 %v5767, %v5763
        %v5769 = vrot.slane %v5768, 4
        %v5771 = vshll.u32 %v5735, 16
        %v5773 = vrot.slane %v5771, 5
        %v5774 = vsel %vm616, %v5769, %v5773
        %v5776 = vshrl.u32 %v5705, 16
        %v5778 = vrot.slane %v5776, 4
        %v5779 = vshll.u32 %v5705, 16
        %v5781 = vrot.slane %v5779, 5
        %v5782 = vor.u32 %v5778, %v5781
        %v5783 = vrot.slane %v5782, 4
        %v5785 = vshll.u32 %v5706, 16
        %v5787 = vrot.slane %v5785, 5
        %v5788 = vsel %vm616, %v5783, %v5787
        %v5789 = vshrl.u32 %v5706, 16
        %v5791 = vrot.slane %v5789, 4
        %v5792 = vor.u32 %v5791, %v5787
        %v5793 = vrot.slane %v5792, 4
        %v5795 = vshll.u32 %v5736, 16
        %v5797 = vrot.slane %v5795, 5
        %v5798 = vsel %vm616, %v5793, %v5797
        %v5800 = vshrl.u32 %v5707, 16
        %v5802 = vrot.slane %v5800, 4
        %v5803 = vshll.u32 %v5707, 16
        %v5805 = vrot.slane %v5803, 5
        %v5806 = vor.u32 %v5802, %v5805
        %v5807 = vrot.slane %v5806, 4
        %v5809 = vshll.u32 %v5708, 16
        %v5811 = vrot.slane %v5809, 5
        %v5812 = vsel %vm616, %v5807, %v5811
        %v5813 = vshrl.u32 %v5708, 16
        %v5815 = vrot.slane %v5813, 4
        %v5816 = vor.u32 %v5815, %v5811
        %v5817 = vrot.slane %v5816, 4
        %v5819 = vshll.u32 %v5737, 16
        %v5821 = vrot.slane %v5819, 5
        %v5822 = vsel %vm616, %v5817, %v5821
        %v5824 = vshrl.u32 %v5709, 16
        %v5826 = vrot.slane %v5824, 4
        %v5827 = vshll.u32 %v5709, 16
        %v5829 = vrot.slane %v5827, 5
        %v5830 = vor.u32 %v5826, %v5829
        %v5831 = vrot.slane %v5830, 4
        %v5833 = vshll.u32 %v5710, 16
        %v5835 = vrot.slane %v5833, 5
        %v5836 = vsel %vm616, %v5831, %v5835
        %v5837 = vshrl.u32 %v5710, 16
        %v5839 = vrot.slane %v5837, 4
        %v5840 = vor.u32 %v5839, %v5835
        %v5841 = vrot.slane %v5840, 4
        %v5843 = vshll.u32 %v5738, 16
        %v5845 = vrot.slane %v5843, 5
        %v5846 = vsel %vm616, %v5841, %v5845
        %v5848 = vshrl.u32 %v5711, 16
        %v5850 = vrot.slane %v5848, 4
        %v5851 = vshll.u32 %v5711, 16
        %v5853 = vrot.slane %v5851, 5
        %v5854 = vor.u32 %v5850, %v5853
        %v5855 = vrot.slane %v5854, 4
        %v5857 = vshll.u32 %v5712, 16
        %v5859 = vrot.slane %v5857, 5
        %v5860 = vsel %vm616, %v5855, %v5859
        %v5861 = vshrl.u32 %v5712, 16
        %v5863 = vrot.slane %v5861, 4
        %v5864 = vor.u32 %v5863, %v5859
        %v5865 = vrot.slane %v5864, 4
        %v5867 = vshll.u32 %v5739, 16
        %v5869 = vrot.slane %v5867, 5
        %v5870 = vsel %vm616, %v5865, %v5869
        %v5872 = vshrl.u32 %v5713, 16
        %v5874 = vrot.slane %v5872, 4
        %v5875 = vshll.u32 %v5713, 16
        %v5877 = vrot.slane %v5875, 5
        %v5878 = vor.u32 %v5874, %v5877
        %v5879 = vrot.slane %v5878, 4
        %v5881 = vshll.u32 %v5714, 16
        %v5883 = vrot.slane %v5881, 5
        %v5884 = vsel %vm616, %v5879, %v5883
        %v5885 = vshrl.u32 %v5714, 16
        %v5887 = vrot.slane %v5885, 4
        %v5888 = vor.u32 %v5887, %v5883
        %v5889 = vrot.slane %v5888, 4
        %v5891 = vshll.u32 %v5740, 16
        %v5893 = vrot.slane %v5891, 5
        %v5894 = vsel %vm616, %v5889, %v5893
        %v5896 = vshrl.u32 %v5715, 16
        %v5898 = vrot.slane %v5896, 4
        %v5899 = vshll.u32 %v5715, 16
        %v5901 = vrot.slane %v5899, 5
        %v5902 = vor.u32 %v5898, %v5901
        %v5903 = vrot.slane %v5902, 4
        %v5905 = vshll.u32 %v5716, 16
        %v5907 = vrot.slane %v5905, 5
        %v5908 = vsel %vm616, %v5903, %v5907
        %v5909 = vshrl.u32 %v5716, 16
        %v5911 = vrot.slane %v5909, 4
        %v5912 = vor.u32 %v5911, %v5907
        %v5913 = vrot.slane %v5912, 4
        %v5915 = vshll.u32 %v5741, 16
        %v5917 = vrot.slane %v5915, 5
        %v5918 = vsel %vm616, %v5913, %v5917
        %v5920 = vshrl.u32 %v5717, 16
        %v5922 = vrot.slane %v5920, 4
        %v5923 = vshll.u32 %v5717, 16
        %v5925 = vrot.slane %v5923, 5
        %v5926 = vor.u32 %v5922, %v5925
        %v5927 = vrot.slane %v5926, 4
        %v5929 = vshll.u32 %v5718, 16
        %v5931 = vrot.slane %v5929, 5
        %v5932 = vsel %vm616, %v5927, %v5931
        %v5933 = vshrl.u32 %v5718, 16
        %v5935 = vrot.slane %v5933, 4
        %v5936 = vor.u32 %v5935, %v5931
        %v5937 = vrot.slane %v5936, 4
        %v5939 = vshll.u32 %v5742, 16
        %v5941 = vrot.slane %v5939, 5
        %v5942 = vsel %vm616, %v5937, %v5941
        %v5944 = vshrl.u32 %v5719, 16
        %v5946 = vrot.slane %v5944, 4
        %v5947 = vshll.u32 %v5719, 16
        %v5949 = vrot.slane %v5947, 5
        %v5950 = vor.u32 %v5946, %v5949
        %v5951 = vrot.slane %v5950, 4
        %v5953 = vshll.u32 %v5720, 16
        %v5955 = vrot.slane %v5953, 5
        %v5956 = vsel %vm616, %v5951, %v5955
        %v5957 = vshrl.u32 %v5720, 16
        %v5959 = vrot.slane %v5957, 4
        %v5960 = vor.u32 %v5959, %v5955
        %v5961 = vrot.slane %v5960, 4
        %v5963 = vshll.u32 %v5743, 16
        %v5965 = vrot.slane %v5963, 5
        %v5966 = vsel %vm616, %v5961, %v5965
        %v5968 = vshrl.u32 %v5721, 16
        %v5970 = vrot.slane %v5968, 4
        %v5971 = vshll.u32 %v5721, 16
        %v5973 = vrot.slane %v5971, 5
        %v5974 = vor.u32 %v5970, %v5973
        %v5975 = vrot.slane %v5974, 4
        %v5977 = vshll.u32 %v5722, 16
        %v5979 = vrot.slane %v5977, 5
        %v5980 = vsel %vm616, %v5975, %v5979
        %v5981 = vshrl.u32 %v5722, 16
        %v5983 = vrot.slane %v5981, 4
        %v5984 = vor.u32 %v5983, %v5979
        %v5985 = vrot.slane %v5984, 4
        %v5987 = vshll.u32 %v5744, 16
        %v5989 = vrot.slane %v5987, 5
        %v5990 = vsel %vm616, %v5985, %v5989
        %v5992 = vshrl.u32 %v5723, 16
        %v5994 = vrot.slane %v5992, 4
        %v5995 = vshll.u32 %v5723, 16
        %v5997 = vrot.slane %v5995, 5
        %v5998 = vor.u32 %v5994, %v5997
        %v5999 = vrot.slane %v5998, 4
        %v6001 = vshll.u32 %v5724, 16
        %v6003 = vrot.slane %v6001, 5
        %v6004 = vsel %vm616, %v5999, %v6003
        %v6005 = vshrl.u32 %v5724, 16
        %v6007 = vrot.slane %v6005, 4
        %v6008 = vor.u32 %v6007, %v6003
        %v6009 = vrot.slane %v6008, 4
        %v6011 = vshll.u32 %v5745, 16
        %v6013 = vrot.slane %v6011, 5
        %v6014 = vsel %vm616, %v6009, %v6013
        %v6016 = vshrl.u32 %v5725, 16
        %v6018 = vrot.slane %v6016, 4
        %v6019 = vshll.u32 %v5725, 16
        %v6021 = vrot.slane %v6019, 5
        %v6022 = vor.u32 %v6018, %v6021
        %v6023 = vrot.slane %v6022, 4
        %v6025 = vshll.u32 %v5726, 16
        %v6027 = vrot.slane %v6025, 5
        %v6028 = vsel %vm616, %v6023, %v6027
        %v6029 = vshrl.u32 %v5726, 16
        %v6031 = vrot.slane %v6029, 4
        %v6032 = vor.u32 %v6031, %v6027
        %v6033 = vrot.slane %v6032, 4
        %v6035 = vshll.u32 %v5746, 16
        %v6037 = vrot.slane %v6035, 5
        %v6038 = vsel %vm616, %v6033, %v6037
        %v6040 = vshrl.u32 %v5727, 16
        %v6042 = vrot.slane %v6040, 4
        %v6043 = vshll.u32 %v5727, 16
        %v6045 = vrot.slane %v6043, 5
        %v6046 = vor.u32 %v6042, %v6045
        %v6047 = vrot.slane %v6046, 4
        %v6049 = vshll.u32 %v5728, 16
        %v6051 = vrot.slane %v6049, 5
        %v6052 = vsel %vm616, %v6047, %v6051
        %v6053 = vshrl.u32 %v5728, 16
        %v6055 = vrot.slane %v6053, 4
        %v6056 = vor.u32 %v6055, %v6051
        %v6057 = vrot.slane %v6056, 4
        %v6059 = vshll.u32 %v5747, 16
        %v6061 = vrot.slane %v6059, 5
        %v6062 = vsel %vm616, %v6057, %v6061
        %v6064 = vshrl.u32 %v5729, 16
        %v6066 = vrot.slane %v6064, 4
        %v6067 = vshll.u32 %v5729, 16
        %v6069 = vrot.slane %v6067, 5
        %v6070 = vor.u32 %v6066, %v6069
        %v6071 = vrot.slane %v6070, 4
        %v6073 = vshll.u32 %v5730, 16
        %v6075 = vrot.slane %v6073, 5
        %v6076 = vsel %vm616, %v6071, %v6075
        %v6077 = vshrl.u32 %v5730, 16
        %v6079 = vrot.slane %v6077, 4
        %v6080 = vor.u32 %v6079, %v6075
        %v6081 = vrot.slane %v6080, 4
        %v6083 = vshll.u32 %v5748, 16
        %v6085 = vrot.slane %v6083, 5
        %v6086 = vsel %vm616, %v6081, %v6085
        %v6088 = vshrl.u32 %v5731, 16
        %v6090 = vrot.slane %v6088, 4
        %v6091 = vshll.u32 %v5731, 16
        %v6093 = vrot.slane %v6091, 5
        %v6094 = vor.u32 %v6090, %v6093
        %v6095 = vrot.slane %v6094, 4
        %v6097 = vshll.u32 %v5732, 16
        %v6099 = vrot.slane %v6097, 5
        %v6100 = vsel %vm616, %v6095, %v6099
        %v6101 = vshrl.u32 %v5732, 16
        %v6103 = vrot.slane %v6101, 4
        %v6104 = vor.u32 %v6103, %v6099
        %v6105 = vrot.slane %v6104, 4
        %v6107 = vshll.u32 %v5749, 16
        %v6109 = vrot.slane %v6107, 5
        %v6110 = vsel %vm616, %v6105, %v6109
        %v6112 = vshrl.u32 %v5733, 16
        %v6114 = vrot.slane %v6112, 4
        %v6115 = vshll.u32 %v5733, 16
        %v6117 = vrot.slane %v6115, 5
        %v6118 = vor.u32 %v6114, %v6117
        %v6119 = vrot.slane %v6118, 4
        %v6121 = vshll.u32 %v5734, 16
        %v6123 = vrot.slane %v6121, 5
        %v6124 = vsel %vm616, %v6119, %v6123
        %v6125 = vshrl.u32 %v5734, 16
        %v6127 = vrot.slane %v6125, 4
        %v6128 = vor.u32 %v6127, %v6123
        %v6129 = vrot.slane %v6128, 4
        %v6131 = vshll.u32 %v5750, 16
        %v6133 = vrot.slane %v6131, 5
        %v6134 = vsel %vm616, %v6129, %v6133
        %v6135 = vld [vmem:[%s4980] sm:$0xe]
        %v6136 = vld [vmem:[%s4980 + $0xc] sm:$0xe]
        %v6137 = vld [vmem:[%s4980 + $0x18] sm:$0xe]
        %v6138 = vld [vmem:[%s4980 + $0x24] sm:$0xe]
        %v6139 = vld [vmem:[%s4980 + $0x30] sm:$0xe]
        %v6140 = vld [vmem:[%s4980 + $0x3c] sm:$0xe]
        %v6141 = vld [vmem:[%s4980 + $0x48] sm:$0xe]
        %v6142 = vld [vmem:[%s4980 + $0x54] sm:$0xe]
        %v6143 = vld [vmem:[%s4980 + $0x60] sm:$0xe]
        %v6144 = vld [vmem:[%s4980 + $0x6c] sm:$0xe]
        %v6145 = vld [vmem:[%s4980 + $0x78] sm:$0xe]
        %v6146 = vld [vmem:[%s4980 + $0x84] sm:$0xe]
        %v6147 = vld [vmem:[%s4980 + $0x90] sm:$0xe]
        %v6148 = vld [vmem:[%s4980 + $0x9c] sm:$0xe]
        %v6149 = vld [vmem:[%s4980 + $0xa8] sm:$0xe]
        %v6150 = vld [vmem:[%s4980 + $0xb4] sm:$0xe]
        %v6199 = vrot.slane %v6135, 5
        %v6200 = vrot.slane %v6199, 4
        %v6201 = vrot.slane %v5704, 5
        %v6202 = vsel %vm1067, %v6200, %v6201
        %v6203 = vrot.slane %v6201, 4
        %v6204 = vrot.slane %v5735, 5
        %v6205 = vsel %vm1067, %v6203, %v6204
        %v6206 = vrot.slane %v6136, 5
        %v6207 = vrot.slane %v6206, 4
        %v6208 = vrot.slane %v5706, 5
        %v6209 = vsel %vm1067, %v6207, %v6208
        %v6210 = vrot.slane %v6208, 4
        %v6211 = vrot.slane %v5736, 5
        %v6212 = vsel %vm1067, %v6210, %v6211
        %v6213 = vrot.slane %v6137, 5
        %v6214 = vrot.slane %v6213, 4
        %v6215 = vrot.slane %v5708, 5
        %v6216 = vsel %vm1067, %v6214, %v6215
        %v6217 = vrot.slane %v6215, 4
        %v6218 = vrot.slane %v5737, 5
        %v6219 = vsel %vm1067, %v6217, %v6218
        %v6220 = vrot.slane %v6138, 5
        %v6221 = vrot.slane %v6220, 4
        %v6222 = vrot.slane %v5710, 5
        %v6223 = vsel %vm1067, %v6221, %v6222
        %v6224 = vrot.slane %v6222, 4
        %v6225 = vrot.slane %v5738, 5
        %v6226 = vsel %vm1067, %v6224, %v6225
        %v6227 = vrot.slane %v6139, 5
        %v6228 = vrot.slane %v6227, 4
        %v6229 = vrot.slane %v5712, 5
        %v6230 = vsel %vm1067, %v6228, %v6229
        %v6231 = vrot.slane %v6229, 4
        %v6232 = vrot.slane %v5739, 5
        %v6233 = vsel %vm1067, %v6231, %v6232
        %v6234 = vrot.slane %v6140, 5
        %v6235 = vrot.slane %v6234, 4
        %v6236 = vrot.slane %v5714, 5
        %v6237 = vsel %vm1067, %v6235, %v6236
        %v6238 = vrot.slane %v6236, 4
        %v6239 = vrot.slane %v5740, 5
        %v6240 = vsel %vm1067, %v6238, %v6239
        %v6241 = vrot.slane %v6141, 5
        %v6242 = vrot.slane %v6241, 4
        %v6243 = vrot.slane %v5716, 5
        %v6244 = vsel %vm1067, %v6242, %v6243
        %v6245 = vrot.slane %v6243, 4
        %v6246 = vrot.slane %v5741, 5
        %v6247 = vsel %vm1067, %v6245, %v6246
        %v6248 = vrot.slane %v6142, 5
        %v6249 = vrot.slane %v6248, 4
        %v6250 = vrot.slane %v5718, 5
        %v6251 = vsel %vm1067, %v6249, %v6250
        %v6252 = vrot.slane %v6250, 4
        %v6253 = vrot.slane %v5742, 5
        %v6254 = vsel %vm1067, %v6252, %v6253
        %v6255 = vrot.slane %v6143, 5
        %v6256 = vrot.slane %v6255, 4
        %v6257 = vrot.slane %v5720, 5
        %v6258 = vsel %vm1067, %v6256, %v6257
        %v6259 = vrot.slane %v6257, 4
        %v6260 = vrot.slane %v5743, 5
        %v6261 = vsel %vm1067, %v6259, %v6260
        %v6262 = vrot.slane %v6144, 5
        %v6263 = vrot.slane %v6262, 4
        %v6264 = vrot.slane %v5722, 5
        %v6265 = vsel %vm1067, %v6263, %v6264
        %v6266 = vrot.slane %v6264, 4
        %v6267 = vrot.slane %v5744, 5
        %v6268 = vsel %vm1067, %v6266, %v6267
        %v6269 = vrot.slane %v6145, 5
        %v6270 = vrot.slane %v6269, 4
        %v6271 = vrot.slane %v5724, 5
        %v6272 = vsel %vm1067, %v6270, %v6271
        %v6273 = vrot.slane %v6271, 4
        %v6274 = vrot.slane %v5745, 5
        %v6275 = vsel %vm1067, %v6273, %v6274
        %v6276 = vrot.slane %v6146, 5
        %v6277 = vrot.slane %v6276, 4
        %v6278 = vrot.slane %v5726, 5
        %v6279 = vsel %vm1067, %v6277, %v6278
        %v6280 = vrot.slane %v6278, 4
        %v6281 = vrot.slane %v5746, 5
        %v6282 = vsel %vm1067, %v6280, %v6281
        %v6283 = vrot.slane %v6147, 5
        %v6284 = vrot.slane %v6283, 4
        %v6285 = vrot.slane %v5728, 5
        %v6286 = vsel %vm1067, %v6284, %v6285
        %v6287 = vrot.slane %v6285, 4
        %v6288 = vrot.slane %v5747, 5
        %v6289 = vsel %vm1067, %v6287, %v6288
        %v6290 = vrot.slane %v6148, 5
        %v6291 = vrot.slane %v6290, 4
        %v6292 = vrot.slane %v5730, 5
        %v6293 = vsel %vm1067, %v6291, %v6292
        %v6294 = vrot.slane %v6292, 4
        %v6295 = vrot.slane %v5748, 5
        %v6296 = vsel %vm1067, %v6294, %v6295
        %v6297 = vrot.slane %v6149, 5
        %v6298 = vrot.slane %v6297, 4
        %v6299 = vrot.slane %v5732, 5
        %v6300 = vsel %vm1067, %v6298, %v6299
        %v6301 = vrot.slane %v6299, 4
        %v6302 = vrot.slane %v5749, 5
        %v6303 = vsel %vm1067, %v6301, %v6302
        %v6304 = vrot.slane %v6150, 5
        %v6305 = vrot.slane %v6304, 4
        %v6306 = vrot.slane %v5734, 5
        %v6307 = vsel %vm1067, %v6305, %v6306
        %v6308 = vrot.slane %v6306, 4
        %v6309 = vrot.slane %v5750, 5
        %v6310 = vsel %vm1067, %v6308, %v6309
        %s6311 = scalar_lea.vmem [#allocation3], 24
        %v6312 = vld [vmem:[%s6311] sm:$0xf]
        %v6313 = vld [vmem:[%s6311 + $0x4] sm:$0xf]
        %v6314 = vld [vmem:[%s6311 + $0xc] sm:$0xf]
        %v6315 = vld [vmem:[%s6311 + $0x10] sm:$0xf]
        %v6316 = vld [vmem:[%s6311 + $0x18] sm:$0xf]
        %v6317 = vld [vmem:[%s6311 + $0x1c] sm:$0xf]
        %v6318 = vld [vmem:[%s6311 + $0x24] sm:$0xf]
        %v6319 = vld [vmem:[%s6311 + $0x28] sm:$0xf]
        %v6320 = vld [vmem:[%s6311 + $0x30] sm:$0xf]
        %v6321 = vld [vmem:[%s6311 + $0x34] sm:$0xf]
        %v6322 = vld [vmem:[%s6311 + $0x3c] sm:$0xf]
        %v6323 = vld [vmem:[%s6311 + $0x40] sm:$0xf]
        %v6324 = vld [vmem:[%s6311 + $0x48] sm:$0xf]
        %v6325 = vld [vmem:[%s6311 + $0x4c] sm:$0xf]
        %v6326 = vld [vmem:[%s6311 + $0x54] sm:$0xf]
        %v6327 = vld [vmem:[%s6311 + $0x58] sm:$0xf]
        %v6328 = vld [vmem:[%s6311 + $0x60] sm:$0xf]
        %v6329 = vld [vmem:[%s6311 + $0x64] sm:$0xf]
        %v6330 = vld [vmem:[%s6311 + $0x6c] sm:$0xf]
        %v6331 = vld [vmem:[%s6311 + $0x70] sm:$0xf]
        %v6332 = vld [vmem:[%s6311 + $0x78] sm:$0xf]
        %v6333 = vld [vmem:[%s6311 + $0x7c] sm:$0xf]
        %v6334 = vld [vmem:[%s6311 + $0x84] sm:$0xf]
        %v6335 = vld [vmem:[%s6311 + $0x88] sm:$0xf]
        %v6336 = vld [vmem:[%s6311 + $0x90] sm:$0xf]
        %v6337 = vld [vmem:[%s6311 + $0x94] sm:$0xf]
        %v6338 = vld [vmem:[%s6311 + $0x9c] sm:$0xf]
        %v6339 = vld [vmem:[%s6311 + $0xa0] sm:$0xf]
        %v6340 = vld [vmem:[%s6311 + $0xa8] sm:$0xf]
        %v6341 = vld [vmem:[%s6311 + $0xac] sm:$0xf]
        %v6342 = vld [vmem:[%s6311 + $0xb4] sm:$0xf]
        %v6343 = vld [vmem:[%s6311 + $0xb8] sm:$0xf]
        %v6344 = vld [vmem:[%s6311 + $0x8] sm:$0x1]
        %v6345 = vld [vmem:[%s6311 + $0x14] sm:$0x1]
        %v6346 = vld [vmem:[%s6311 + $0x20] sm:$0x1]
        %v6347 = vld [vmem:[%s6311 + $0x2c] sm:$0x1]
        %v6348 = vld [vmem:[%s6311 + $0x38] sm:$0x1]
        %v6349 = vld [vmem:[%s6311 + $0x44] sm:$0x1]
        %v6350 = vld [vmem:[%s6311 + $0x50] sm:$0x1]
        %v6351 = vld [vmem:[%s6311 + $0x5c] sm:$0x1]
        %v6352 = vld [vmem:[%s6311 + $0x68] sm:$0x1]
        %v6353 = vld [vmem:[%s6311 + $0x74] sm:$0x1]
        %v6354 = vld [vmem:[%s6311 + $0x80] sm:$0x1]
        %v6355 = vld [vmem:[%s6311 + $0x8c] sm:$0x1]
        %v6356 = vld [vmem:[%s6311 + $0x98] sm:$0x1]
        %v6357 = vld [vmem:[%s6311 + $0xa4] sm:$0x1]
        %v6358 = vld [vmem:[%s6311 + $0xb0] sm:$0x1]
        %v6359 = vld [vmem:[%s6311 + $0xbc] sm:$0x1]
        %v6361 = vshrl.u32 %v6312, 16
        %v6363 = vrot.slane %v6361, 4
        %v6364 = vshll.u32 %v6312, 16
        %v6366 = vrot.slane %v6364, 5
        %v6367 = vor.u32 %v6363, %v6366
        %v6368 = vrot.slane %v6367, 4
        %v6370 = vshll.u32 %v6313, 16
        %v6372 = vrot.slane %v6370, 5
        %v6373 = vsel %vm616, %v6368, %v6372
        %v6374 = vshrl.u32 %v6313, 16
        %v6376 = vrot.slane %v6374, 4
        %v6377 = vor.u32 %v6376, %v6372
        %v6378 = vrot.slane %v6377, 4
        %v6380 = vshll.u32 %v6344, 16
        %v6382 = vrot.slane %v6380, 5
        %v6383 = vsel %vm616, %v6378, %v6382
        %v6385 = vshrl.u32 %v6314, 16
        %v6387 = vrot.slane %v6385, 4
        %v6388 = vshll.u32 %v6314, 16
        %v6390 = vrot.slane %v6388, 5
        %v6391 = vor.u32 %v6387, %v6390
        %v6392 = vrot.slane %v6391, 4
        %v6394 = vshll.u32 %v6315, 16
        %v6396 = vrot.slane %v6394, 5
        %v6397 = vsel %vm616, %v6392, %v6396
        %v6398 = vshrl.u32 %v6315, 16
        %v6400 = vrot.slane %v6398, 4
        %v6401 = vor.u32 %v6400, %v6396
        %v6402 = vrot.slane %v6401, 4
        %v6404 = vshll.u32 %v6345, 16
        %v6406 = vrot.slane %v6404, 5
        %v6407 = vsel %vm616, %v6402, %v6406
        %v6409 = vshrl.u32 %v6316, 16
        %v6411 = vrot.slane %v6409, 4
        %v6412 = vshll.u32 %v6316, 16
        %v6414 = vrot.slane %v6412, 5
        %v6415 = vor.u32 %v6411, %v6414
        %v6416 = vrot.slane %v6415, 4
        %v6418 = vshll.u32 %v6317, 16
        %v6420 = vrot.slane %v6418, 5
        %v6421 = vsel %vm616, %v6416, %v6420
        %v6422 = vshrl.u32 %v6317, 16
        %v6424 = vrot.slane %v6422, 4
        %v6425 = vor.u32 %v6424, %v6420
        %v6426 = vrot.slane %v6425, 4
        %v6428 = vshll.u32 %v6346, 16
        %v6430 = vrot.slane %v6428, 5
        %v6431 = vsel %vm616, %v6426, %v6430
        %v6433 = vshrl.u32 %v6318, 16
        %v6435 = vrot.slane %v6433, 4
        %v6436 = vshll.u32 %v6318, 16
        %v6438 = vrot.slane %v6436, 5
        %v6439 = vor.u32 %v6435, %v6438
        %v6440 = vrot.slane %v6439, 4
        %v6442 = vshll.u32 %v6319, 16
        %v6444 = vrot.slane %v6442, 5
        %v6445 = vsel %vm616, %v6440, %v6444
        %v6446 = vshrl.u32 %v6319, 16
        %v6448 = vrot.slane %v6446, 4
        %v6449 = vor.u32 %v6448, %v6444
        %v6450 = vrot.slane %v6449, 4
        %v6452 = vshll.u32 %v6347, 16
        %v6454 = vrot.slane %v6452, 5
        %v6455 = vsel %vm616, %v6450, %v6454
        %v6457 = vshrl.u32 %v6320, 16
        %v6459 = vrot.slane %v6457, 4
        %v6460 = vshll.u32 %v6320, 16
        %v6462 = vrot.slane %v6460, 5
        %v6463 = vor.u32 %v6459, %v6462
        %v6464 = vrot.slane %v6463, 4
        %v6466 = vshll.u32 %v6321, 16
        %v6468 = vrot.slane %v6466, 5
        %v6469 = vsel %vm616, %v6464, %v6468
        %v6470 = vshrl.u32 %v6321, 16
        %v6472 = vrot.slane %v6470, 4
        %v6473 = vor.u32 %v6472, %v6468
        %v6474 = vrot.slane %v6473, 4
        %v6476 = vshll.u32 %v6348, 16
        %v6478 = vrot.slane %v6476, 5
        %v6479 = vsel %vm616, %v6474, %v6478
        %v6481 = vshrl.u32 %v6322, 16
        %v6483 = vrot.slane %v6481, 4
        %v6484 = vshll.u32 %v6322, 16
        %v6486 = vrot.slane %v6484, 5
        %v6487 = vor.u32 %v6483, %v6486
        %v6488 = vrot.slane %v6487, 4
        %v6490 = vshll.u32 %v6323, 16
        %v6492 = vrot.slane %v6490, 5
        %v6493 = vsel %vm616, %v6488, %v6492
        %v6494 = vshrl.u32 %v6323, 16
        %v6496 = vrot.slane %v6494, 4
        %v6497 = vor.u32 %v6496, %v6492
        %v6498 = vrot.slane %v6497, 4
        %v6500 = vshll.u32 %v6349, 16
        %v6502 = vrot.slane %v6500, 5
        %v6503 = vsel %vm616, %v6498, %v6502
        %v6505 = vshrl.u32 %v6324, 16
        %v6507 = vrot.slane %v6505, 4
        %v6508 = vshll.u32 %v6324, 16
        %v6510 = vrot.slane %v6508, 5
        %v6511 = vor.u32 %v6507, %v6510
        %v6512 = vrot.slane %v6511, 4
        %v6514 = vshll.u32 %v6325, 16
        %v6516 = vrot.slane %v6514, 5
        %v6517 = vsel %vm616, %v6512, %v6516
        %v6518 = vshrl.u32 %v6325, 16
        %v6520 = vrot.slane %v6518, 4
        %v6521 = vor.u32 %v6520, %v6516
        %v6522 = vrot.slane %v6521, 4
        %v6524 = vshll.u32 %v6350, 16
        %v6526 = vrot.slane %v6524, 5
        %v6527 = vsel %vm616, %v6522, %v6526
        %v6529 = vshrl.u32 %v6326, 16
        %v6531 = vrot.slane %v6529, 4
        %v6532 = vshll.u32 %v6326, 16
        %v6534 = vrot.slane %v6532, 5
        %v6535 = vor.u32 %v6531, %v6534
        %v6536 = vrot.slane %v6535, 4
        %v6538 = vshll.u32 %v6327, 16
        %v6540 = vrot.slane %v6538, 5
        %v6541 = vsel %vm616, %v6536, %v6540
        %v6542 = vshrl.u32 %v6327, 16
        %v6544 = vrot.slane %v6542, 4
        %v6545 = vor.u32 %v6544, %v6540
        %v6546 = vrot.slane %v6545, 4
        %v6548 = vshll.u32 %v6351, 16
        %v6550 = vrot.slane %v6548, 5
        %v6551 = vsel %vm616, %v6546, %v6550
        %v6553 = vshrl.u32 %v6328, 16
        %v6555 = vrot.slane %v6553, 4
        %v6556 = vshll.u32 %v6328, 16
        %v6558 = vrot.slane %v6556, 5
        %v6559 = vor.u32 %v6555, %v6558
        %v6560 = vrot.slane %v6559, 4
        %v6562 = vshll.u32 %v6329, 16
        %v6564 = vrot.slane %v6562, 5
        %v6565 = vsel %vm616, %v6560, %v6564
        %v6566 = vshrl.u32 %v6329, 16
        %v6568 = vrot.slane %v6566, 4
        %v6569 = vor.u32 %v6568, %v6564
        %v6570 = vrot.slane %v6569, 4
        %v6572 = vshll.u32 %v6352, 16
        %v6574 = vrot.slane %v6572, 5
        %v6575 = vsel %vm616, %v6570, %v6574
        %v6577 = vshrl.u32 %v6330, 16
        %v6579 = vrot.slane %v6577, 4
        %v6580 = vshll.u32 %v6330, 16
        %v6582 = vrot.slane %v6580, 5
        %v6583 = vor.u32 %v6579, %v6582
        %v6584 = vrot.slane %v6583, 4
        %v6586 = vshll.u32 %v6331, 16
        %v6588 = vrot.slane %v6586, 5
        %v6589 = vsel %vm616, %v6584, %v6588
        %v6590 = vshrl.u32 %v6331, 16
        %v6592 = vrot.slane %v6590, 4
        %v6593 = vor.u32 %v6592, %v6588
        %v6594 = vrot.slane %v6593, 4
        %v6596 = vshll.u32 %v6353, 16
        %v6598 = vrot.slane %v6596, 5
        %v6599 = vsel %vm616, %v6594, %v6598
        %v6601 = vshrl.u32 %v6332, 16
        %v6603 = vrot.slane %v6601, 4
        %v6604 = vshll.u32 %v6332, 16
        %v6606 = vrot.slane %v6604, 5
        %v6607 = vor.u32 %v6603, %v6606
        %v6608 = vrot.slane %v6607, 4
        %v6610 = vshll.u32 %v6333, 16
        %v6612 = vrot.slane %v6610, 5
        %v6613 = vsel %vm616, %v6608, %v6612
        %v6614 = vshrl.u32 %v6333, 16
        %v6616 = vrot.slane %v6614, 4
        %v6617 = vor.u32 %v6616, %v6612
        %v6618 = vrot.slane %v6617, 4
        %v6620 = vshll.u32 %v6354, 16
        %v6622 = vrot.slane %v6620, 5
        %v6623 = vsel %vm616, %v6618, %v6622
        %v6625 = vshrl.u32 %v6334, 16
        %v6627 = vrot.slane %v6625, 4
        %v6628 = vshll.u32 %v6334, 16
        %v6630 = vrot.slane %v6628, 5
        %v6631 = vor.u32 %v6627, %v6630
        %v6632 = vrot.slane %v6631, 4
        %v6634 = vshll.u32 %v6335, 16
        %v6636 = vrot.slane %v6634, 5
        %v6637 = vsel %vm616, %v6632, %v6636
        %v6638 = vshrl.u32 %v6335, 16
        %v6640 = vrot.slane %v6638, 4
        %v6641 = vor.u32 %v6640, %v6636
        %v6642 = vrot.slane %v6641, 4
        %v6644 = vshll.u32 %v6355, 16
        %v6646 = vrot.slane %v6644, 5
        %v6647 = vsel %vm616, %v6642, %v6646
        %v6649 = vshrl.u32 %v6336, 16
        %v6651 = vrot.slane %v6649, 4
        %v6652 = vshll.u32 %v6336, 16
        %v6654 = vrot.slane %v6652, 5
        %v6655 = vor.u32 %v6651, %v6654
        %v6656 = vrot.slane %v6655, 4
        %v6658 = vshll.u32 %v6337, 16
        %v6660 = vrot.slane %v6658, 5
        %v6661 = vsel %vm616, %v6656, %v6660
        %v6662 = vshrl.u32 %v6337, 16
        %v6664 = vrot.slane %v6662, 4
        %v6665 = vor.u32 %v6664, %v6660
        %v6666 = vrot.slane %v6665, 4
        %v6668 = vshll.u32 %v6356, 16
        %v6670 = vrot.slane %v6668, 5
        %v6671 = vsel %vm616, %v6666, %v6670
        %v6673 = vshrl.u32 %v6338, 16
        %v6675 = vrot.slane %v6673, 4
        %v6676 = vshll.u32 %v6338, 16
        %v6678 = vrot.slane %v6676, 5
        %v6679 = vor.u32 %v6675, %v6678
        %v6680 = vrot.slane %v6679, 4
        %v6682 = vshll.u32 %v6339, 16
        %v6684 = vrot.slane %v6682, 5
        %v6685 = vsel %vm616, %v6680, %v6684
        %v6686 = vshrl.u32 %v6339, 16
        %v6688 = vrot.slane %v6686, 4
        %v6689 = vor.u32 %v6688, %v6684
        %v6690 = vrot.slane %v6689, 4
        %v6692 = vshll.u32 %v6357, 16
        %v6694 = vrot.slane %v6692, 5
        %v6695 = vsel %vm616, %v6690, %v6694
        %v6697 = vshrl.u32 %v6340, 16
        %v6699 = vrot.slane %v6697, 4
        %v6700 = vshll.u32 %v6340, 16
        %v6702 = vrot.slane %v6700, 5
        %v6703 = vor.u32 %v6699, %v6702
        %v6704 = vrot.slane %v6703, 4
        %v6706 = vshll.u32 %v6341, 16
        %v6708 = vrot.slane %v6706, 5
        %v6709 = vsel %vm616, %v6704, %v6708
        %v6710 = vshrl.u32 %v6341, 16
        %v6712 = vrot.slane %v6710, 4
        %v6713 = vor.u32 %v6712, %v6708
        %v6714 = vrot.slane %v6713, 4
        %v6716 = vshll.u32 %v6358, 16
        %v6718 = vrot.slane %v6716, 5
        %v6719 = vsel %vm616, %v6714, %v6718
        %v6721 = vshrl.u32 %v6342, 16
        %v6723 = vrot.slane %v6721, 4
        %v6724 = vshll.u32 %v6342, 16
        %v6726 = vrot.slane %v6724, 5
        %v6727 = vor.u32 %v6723, %v6726
        %v6728 = vrot.slane %v6727, 4
        %v6730 = vshll.u32 %v6343, 16
        %v6732 = vrot.slane %v6730, 5
        %v6733 = vsel %vm616, %v6728, %v6732
        %v6734 = vshrl.u32 %v6343, 16
        %v6736 = vrot.slane %v6734, 4
        %v6737 = vor.u32 %v6736, %v6732
        %v6738 = vrot.slane %v6737, 4
        %v6740 = vshll.u32 %v6359, 16
        %v6742 = vrot.slane %v6740, 5
        %v6743 = vsel %vm616, %v6738, %v6742
        %v6744 = vld [vmem:[%s6311] sm:$0xe]
        %v6745 = vld [vmem:[%s6311 + $0xc] sm:$0xe]
        %v6746 = vld [vmem:[%s6311 + $0x18] sm:$0xe]
        %v6747 = vld [vmem:[%s6311 + $0x24] sm:$0xe]
        %v6748 = vld [vmem:[%s6311 + $0x30] sm:$0xe]
        %v6749 = vld [vmem:[%s6311 + $0x3c] sm:$0xe]
        %v6750 = vld [vmem:[%s6311 + $0x48] sm:$0xe]
        %v6751 = vld [vmem:[%s6311 + $0x54] sm:$0xe]
        %v6752 = vld [vmem:[%s6311 + $0x60] sm:$0xe]
        %v6753 = vld [vmem:[%s6311 + $0x6c] sm:$0xe]
        %v6754 = vld [vmem:[%s6311 + $0x78] sm:$0xe]
        %v6755 = vld [vmem:[%s6311 + $0x84] sm:$0xe]
        %v6756 = vld [vmem:[%s6311 + $0x90] sm:$0xe]
        %v6757 = vld [vmem:[%s6311 + $0x9c] sm:$0xe]
        %v6758 = vld [vmem:[%s6311 + $0xa8] sm:$0xe]
        %v6759 = vld [vmem:[%s6311 + $0xb4] sm:$0xe]
        %v6808 = vrot.slane %v6744, 5
        %v6809 = vrot.slane %v6808, 4
        %v6810 = vrot.slane %v6313, 5
        %v6811 = vsel %vm1067, %v6809, %v6810
        %v6812 = vrot.slane %v6810, 4
        %v6813 = vrot.slane %v6344, 5
        %v6814 = vsel %vm1067, %v6812, %v6813
        %v6815 = vrot.slane %v6745, 5
        %v6816 = vrot.slane %v6815, 4
        %v6817 = vrot.slane %v6315, 5
        %v6818 = vsel %vm1067, %v6816, %v6817
        %v6819 = vrot.slane %v6817, 4
        %v6820 = vrot.slane %v6345, 5
        %v6821 = vsel %vm1067, %v6819, %v6820
        %v6822 = vrot.slane %v6746, 5
        %v6823 = vrot.slane %v6822, 4
        %v6824 = vrot.slane %v6317, 5
        %v6825 = vsel %vm1067, %v6823, %v6824
        %v6826 = vrot.slane %v6824, 4
        %v6827 = vrot.slane %v6346, 5
        %v6828 = vsel %vm1067, %v6826, %v6827
        %v6829 = vrot.slane %v6747, 5
        %v6830 = vrot.slane %v6829, 4
        %v6831 = vrot.slane %v6319, 5
        %v6832 = vsel %vm1067, %v6830, %v6831
        %v6833 = vrot.slane %v6831, 4
        %v6834 = vrot.slane %v6347, 5
        %v6835 = vsel %vm1067, %v6833, %v6834
        %v6836 = vrot.slane %v6748, 5
        %v6837 = vrot.slane %v6836, 4
        %v6838 = vrot.slane %v6321, 5
        %v6839 = vsel %vm1067, %v6837, %v6838
        %v6840 = vrot.slane %v6838, 4
        %v6841 = vrot.slane %v6348, 5
        %v6842 = vsel %vm1067, %v6840, %v6841
        %v6843 = vrot.slane %v6749, 5
        %v6844 = vrot.slane %v6843, 4
        %v6845 = vrot.slane %v6323, 5
        %v6846 = vsel %vm1067, %v6844, %v6845
        %v6847 = vrot.slane %v6845, 4
        %v6848 = vrot.slane %v6349, 5
        %v6849 = vsel %vm1067, %v6847, %v6848
        %v6850 = vrot.slane %v6750, 5
        %v6851 = vrot.slane %v6850, 4
        %v6852 = vrot.slane %v6325, 5
        %v6853 = vsel %vm1067, %v6851, %v6852
        %v6854 = vrot.slane %v6852, 4
        %v6855 = vrot.slane %v6350, 5
        %v6856 = vsel %vm1067, %v6854, %v6855
        %v6857 = vrot.slane %v6751, 5
        %v6858 = vrot.slane %v6857, 4
        %v6859 = vrot.slane %v6327, 5
        %v6860 = vsel %vm1067, %v6858, %v6859
        %v6861 = vrot.slane %v6859, 4
        %v6862 = vrot.slane %v6351, 5
        %v6863 = vsel %vm1067, %v6861, %v6862
        %v6864 = vrot.slane %v6752, 5
        %v6865 = vrot.slane %v6864, 4
        %v6866 = vrot.slane %v6329, 5
        %v6867 = vsel %vm1067, %v6865, %v6866
        %v6868 = vrot.slane %v6866, 4
        %v6869 = vrot.slane %v6352, 5
        %v6870 = vsel %vm1067, %v6868, %v6869
        %v6871 = vrot.slane %v6753, 5
        %v6872 = vrot.slane %v6871, 4
        %v6873 = vrot.slane %v6331, 5
        %v6874 = vsel %vm1067, %v6872, %v6873
        %v6875 = vrot.slane %v6873, 4
        %v6876 = vrot.slane %v6353, 5
        %v6877 = vsel %vm1067, %v6875, %v6876
        %v6878 = vrot.slane %v6754, 5
        %v6879 = vrot.slane %v6878, 4
        %v6880 = vrot.slane %v6333, 5
        %v6881 = vsel %vm1067, %v6879, %v6880
        %v6882 = vrot.slane %v6880, 4
        %v6883 = vrot.slane %v6354, 5
        %v6884 = vsel %vm1067, %v6882, %v6883
        %v6885 = vrot.slane %v6755, 5
        %v6886 = vrot.slane %v6885, 4
        %v6887 = vrot.slane %v6335, 5
        %v6888 = vsel %vm1067, %v6886, %v6887
        %v6889 = vrot.slane %v6887, 4
        %v6890 = vrot.slane %v6355, 5
        %v6891 = vsel %vm1067, %v6889, %v6890
        %v6892 = vrot.slane %v6756, 5
        %v6893 = vrot.slane %v6892, 4
        %v6894 = vrot.slane %v6337, 5
        %v6895 = vsel %vm1067, %v6893, %v6894
        %v6896 = vrot.slane %v6894, 4
        %v6897 = vrot.slane %v6356, 5
        %v6898 = vsel %vm1067, %v6896, %v6897
        %v6899 = vrot.slane %v6757, 5
        %v6900 = vrot.slane %v6899, 4
        %v6901 = vrot.slane %v6339, 5
        %v6902 = vsel %vm1067, %v6900, %v6901
        %v6903 = vrot.slane %v6901, 4
        %v6904 = vrot.slane %v6357, 5
        %v6905 = vsel %vm1067, %v6903, %v6904
        %v6906 = vrot.slane %v6758, 5
        %v6907 = vrot.slane %v6906, 4
        %v6908 = vrot.slane %v6341, 5
        %v6909 = vsel %vm1067, %v6907, %v6908
        %v6910 = vrot.slane %v6908, 4
        %v6911 = vrot.slane %v6358, 5
        %v6912 = vsel %vm1067, %v6910, %v6911
        %v6913 = vrot.slane %v6759, 5
        %v6914 = vrot.slane %v6913, 4
        %v6915 = vrot.slane %v6343, 5
        %v6916 = vsel %vm1067, %v6914, %v6915
        %v6917 = vrot.slane %v6915, 4
        %v6918 = vrot.slane %v6359, 5
        %v6919 = vsel %vm1067, %v6917, %v6918
        %v6936 = vunpack.c.l.b16 %v5095
        %v6937 = vunpack.c.l.b16 %v5096
        %v6938 = vunpack.c.l.b16 %v5097
        %v6939 = vunpack.c.l.b16 %v5098
        %v6940 = vunpack.c.l.b16 %v5099
        %v6941 = vunpack.c.l.b16 %v5100
        %v6942 = vunpack.c.l.b16 %v5101
        %v6943 = vunpack.c.l.b16 %v5102
        %v6944 = vunpack.c.l.b16 %v5103
        %v6945 = vunpack.c.l.b16 %v5104
        %v6946 = vunpack.c.l.b16 %v5105
        %v6947 = vunpack.c.l.b16 %v5106
        %v6948 = vunpack.c.l.b16 %v5107
        %v6949 = vunpack.c.l.b16 %v5108
        %v6950 = vunpack.c.l.b16 %v5109
        %v6951 = vunpack.c.l.b16 %v5110
        %v6952 = vunpack.c.l.b16 %v5111
        %v6953 = vunpack.c.l.b16 %v5112
        %v6954 = vunpack.c.l.b16 %v5113
        %v6955 = vunpack.c.l.b16 %v5114
        %v6956 = vunpack.c.l.b16 %v5115
        %v6957 = vunpack.c.l.b16 %v5116
        %v6958 = vunpack.c.l.b16 %v5117
        %v6959 = vunpack.c.l.b16 %v5118
        %v6960 = vunpack.c.l.b16 %v5119
        %v6961 = vunpack.c.l.b16 %v5120
        %v6962 = vunpack.c.l.b16 %v5121
        %v6963 = vunpack.c.l.b16 %v5122
        %v6964 = vunpack.c.l.b16 %v5123
        %v6965 = vunpack.c.l.b16 %v5124
        %v6966 = vunpack.c.l.b16 %v5125
        %v6967 = vunpack.c.l.b16 %v5126
        %v6968 = vpack.c.b16 %v6937, %v6936
        %v6969 = vpack.c.b16 %v6939, %v6938
        %v6970 = vpack.c.b16 %v6941, %v6940
        %v6971 = vpack.c.b16 %v6943, %v6942
        %v6972 = vpack.c.b16 %v6945, %v6944
        %v6973 = vpack.c.b16 %v6947, %v6946
        %v6974 = vpack.c.b16 %v6949, %v6948
        %v6975 = vpack.c.b16 %v6951, %v6950
        %v6976 = vpack.c.b16 %v6953, %v6952
        %v6977 = vpack.c.b16 %v6955, %v6954
        %v6978 = vpack.c.b16 %v6957, %v6956
        %v6979 = vpack.c.b16 %v6959, %v6958
        %v6980 = vpack.c.b16 %v6961, %v6960
        %v6981 = vpack.c.b16 %v6963, %v6962
        %v6982 = vpack.c.b16 %v6965, %v6964
        %v6983 = vpack.c.b16 %v6967, %v6966
        %v7000 = vunpack.c.l.b16 %v5156
        %v7001 = vunpack.c.l.b16 %v5166
        %v7002 = vunpack.c.l.b16 %v5180
        %v7003 = vunpack.c.l.b16 %v5190
        %v7004 = vunpack.c.l.b16 %v5204
        %v7005 = vunpack.c.l.b16 %v5214
        %v7006 = vunpack.c.l.b16 %v5228
        %v7007 = vunpack.c.l.b16 %v5238
        %v7008 = vunpack.c.l.b16 %v5252
        %v7009 = vunpack.c.l.b16 %v5262
        %v7010 = vunpack.c.l.b16 %v5276
        %v7011 = vunpack.c.l.b16 %v5286
        %v7012 = vunpack.c.l.b16 %v5300
        %v7013 = vunpack.c.l.b16 %v5310
        %v7014 = vunpack.c.l.b16 %v5324
        %v7015 = vunpack.c.l.b16 %v5334
        %v7016 = vunpack.c.l.b16 %v5348
        %v7017 = vunpack.c.l.b16 %v5358
        %v7018 = vunpack.c.l.b16 %v5372
        %v7019 = vunpack.c.l.b16 %v5382
        %v7020 = vunpack.c.l.b16 %v5396
        %v7021 = vunpack.c.l.b16 %v5406
        %v7022 = vunpack.c.l.b16 %v5420
        %v7023 = vunpack.c.l.b16 %v5430
        %v7024 = vunpack.c.l.b16 %v5444
        %v7025 = vunpack.c.l.b16 %v5454
        %v7026 = vunpack.c.l.b16 %v5468
        %v7027 = vunpack.c.l.b16 %v5478
        %v7028 = vunpack.c.l.b16 %v5492
        %v7029 = vunpack.c.l.b16 %v5502
        %v7030 = vunpack.c.l.b16 %v5516
        %v7031 = vunpack.c.l.b16 %v5526
        %v7032 = vpack.c.b16 %v7001, %v7000
        %v7033 = vpack.c.b16 %v7003, %v7002
        %v7034 = vpack.c.b16 %v7005, %v7004
        %v7035 = vpack.c.b16 %v7007, %v7006
        %v7036 = vpack.c.b16 %v7009, %v7008
        %v7037 = vpack.c.b16 %v7011, %v7010
        %v7038 = vpack.c.b16 %v7013, %v7012
        %v7039 = vpack.c.b16 %v7015, %v7014
        %v7040 = vpack.c.b16 %v7017, %v7016
        %v7041 = vpack.c.b16 %v7019, %v7018
        %v7042 = vpack.c.b16 %v7021, %v7020
        %v7043 = vpack.c.b16 %v7023, %v7022
        %v7044 = vpack.c.b16 %v7025, %v7024
        %v7045 = vpack.c.b16 %v7027, %v7026
        %v7046 = vpack.c.b16 %v7029, %v7028
        %v7047 = vpack.c.b16 %v7031, %v7030
        %v7064 = vunpack.c.l.b16 %v5594
        %v7065 = vunpack.c.l.b16 %v5597
        %v7066 = vunpack.c.l.b16 %v5601
        %v7067 = vunpack.c.l.b16 %v5604
        %v7068 = vunpack.c.l.b16 %v5608
        %v7069 = vunpack.c.l.b16 %v5611
        %v7070 = vunpack.c.l.b16 %v5615
        %v7071 = vunpack.c.l.b16 %v5618
        %v7072 = vunpack.c.l.b16 %v5622
        %v7073 = vunpack.c.l.b16 %v5625
        %v7074 = vunpack.c.l.b16 %v5629
        %v7075 = vunpack.c.l.b16 %v5632
        %v7076 = vunpack.c.l.b16 %v5636
        %v7077 = vunpack.c.l.b16 %v5639
        %v7078 = vunpack.c.l.b16 %v5643
        %v7079 = vunpack.c.l.b16 %v5646
        %v7080 = vunpack.c.l.b16 %v5650
        %v7081 = vunpack.c.l.b16 %v5653
        %v7082 = vunpack.c.l.b16 %v5657
        %v7083 = vunpack.c.l.b16 %v5660
        %v7084 = vunpack.c.l.b16 %v5664
        %v7085 = vunpack.c.l.b16 %v5667
        %v7086 = vunpack.c.l.b16 %v5671
        %v7087 = vunpack.c.l.b16 %v5674
        %v7088 = vunpack.c.l.b16 %v5678
        %v7089 = vunpack.c.l.b16 %v5681
        %v7090 = vunpack.c.l.b16 %v5685
        %v7091 = vunpack.c.l.b16 %v5688
        %v7092 = vunpack.c.l.b16 %v5692
        %v7093 = vunpack.c.l.b16 %v5695
        %v7094 = vunpack.c.l.b16 %v5699
        %v7095 = vunpack.c.l.b16 %v5702
        %v7096 = vpack.c.b16 %v7065, %v7064
        %v7097 = vpack.c.b16 %v7067, %v7066
        %v7098 = vpack.c.b16 %v7069, %v7068
        %v7099 = vpack.c.b16 %v7071, %v7070
        %v7100 = vpack.c.b16 %v7073, %v7072
        %v7101 = vpack.c.b16 %v7075, %v7074
        %v7102 = vpack.c.b16 %v7077, %v7076
        %v7103 = vpack.c.b16 %v7079, %v7078
        %v7104 = vpack.c.b16 %v7081, %v7080
        %v7105 = vpack.c.b16 %v7083, %v7082
        %v7106 = vpack.c.b16 %v7085, %v7084
        %v7107 = vpack.c.b16 %v7087, %v7086
        %v7108 = vpack.c.b16 %v7089, %v7088
        %v7109 = vpack.c.b16 %v7091, %v7090
        %v7110 = vpack.c.b16 %v7093, %v7092
        %v7111 = vpack.c.b16 %v7095, %v7094
        %v7144 = vunpack.c.l.b16 %v5703
        %v7145 = vunpack.c.l.b16 %v5704
        %v7146 = vunpack.c.l.b16 %v5705
        %v7147 = vunpack.c.l.b16 %v5706
        %v7148 = vunpack.c.l.b16 %v5707
        %v7149 = vunpack.c.l.b16 %v5708
        %v7150 = vunpack.c.l.b16 %v5709
        %v7151 = vunpack.c.l.b16 %v5710
        %v7152 = vunpack.c.l.b16 %v5711
        %v7153 = vunpack.c.l.b16 %v5712
        %v7154 = vunpack.c.l.b16 %v5713
        %v7155 = vunpack.c.l.b16 %v5714
        %v7156 = vunpack.c.l.b16 %v5715
        %v7157 = vunpack.c.l.b16 %v5716
        %v7158 = vunpack.c.l.b16 %v5717
        %v7159 = vunpack.c.l.b16 %v5718
        %v7160 = vunpack.c.l.b16 %v5719
        %v7161 = vunpack.c.l.b16 %v5720
        %v7162 = vunpack.c.l.b16 %v5721
        %v7163 = vunpack.c.l.b16 %v5722
        %v7164 = vunpack.c.l.b16 %v5723
        %v7165 = vunpack.c.l.b16 %v5724
        %v7166 = vunpack.c.l.b16 %v5725
        %v7167 = vunpack.c.l.b16 %v5726
        %v7168 = vunpack.c.l.b16 %v5727
        %v7169 = vunpack.c.l.b16 %v5728
        %v7170 = vunpack.c.l.b16 %v5729
        %v7171 = vunpack.c.l.b16 %v5730
        %v7172 = vunpack.c.l.b16 %v5731
        %v7173 = vunpack.c.l.b16 %v5732
        %v7174 = vunpack.c.l.b16 %v5733
        %v7175 = vunpack.c.l.b16 %v5734
        %v7176 = vpack.c.b16 %v7145, %v7144
        %v7177 = vpack.c.b16 %v7147, %v7146
        %v7178 = vpack.c.b16 %v7149, %v7148
        %v7179 = vpack.c.b16 %v7151, %v7150
        %v7180 = vpack.c.b16 %v7153, %v7152
        %v7181 = vpack.c.b16 %v7155, %v7154
        %v7182 = vpack.c.b16 %v7157, %v7156
        %v7183 = vpack.c.b16 %v7159, %v7158
        %v7184 = vpack.c.b16 %v7161, %v7160
        %v7185 = vpack.c.b16 %v7163, %v7162
        %v7186 = vpack.c.b16 %v7165, %v7164
        %v7187 = vpack.c.b16 %v7167, %v7166
        %v7188 = vpack.c.b16 %v7169, %v7168
        %v7189 = vpack.c.b16 %v7171, %v7170
        %v7190 = vpack.c.b16 %v7173, %v7172
        %v7191 = vpack.c.b16 %v7175, %v7174
        %v7208 = vunpack.c.l.b16 %v5764
        %v7209 = vunpack.c.l.b16 %v5774
        %v7210 = vunpack.c.l.b16 %v5788
        %v7211 = vunpack.c.l.b16 %v5798
        %v7212 = vunpack.c.l.b16 %v5812
        %v7213 = vunpack.c.l.b16 %v5822
        %v7214 = vunpack.c.l.b16 %v5836
        %v7215 = vunpack.c.l.b16 %v5846
        %v7216 = vunpack.c.l.b16 %v5860
        %v7217 = vunpack.c.l.b16 %v5870
        %v7218 = vunpack.c.l.b16 %v5884
        %v7219 = vunpack.c.l.b16 %v5894
        %v7220 = vunpack.c.l.b16 %v5908
        %v7221 = vunpack.c.l.b16 %v5918
        %v7222 = vunpack.c.l.b16 %v5932
        %v7223 = vunpack.c.l.b16 %v5942
        %v7224 = vunpack.c.l.b16 %v5956
        %v7225 = vunpack.c.l.b16 %v5966
        %v7226 = vunpack.c.l.b16 %v5980
        %v7227 = vunpack.c.l.b16 %v5990
        %v7228 = vunpack.c.l.b16 %v6004
        %v7229 = vunpack.c.l.b16 %v6014
        %v7230 = vunpack.c.l.b16 %v6028
        %v7231 = vunpack.c.l.b16 %v6038
        %v7232 = vunpack.c.l.b16 %v6052
        %v7233 = vunpack.c.l.b16 %v6062
        %v7234 = vunpack.c.l.b16 %v6076
        %v7235 = vunpack.c.l.b16 %v6086
        %v7236 = vunpack.c.l.b16 %v6100
        %v7237 = vunpack.c.l.b16 %v6110
        %v7238 = vunpack.c.l.b16 %v6124
        %v7239 = vunpack.c.l.b16 %v6134
        %v7240 = vpack.c.b16 %v7209, %v7208
        %v7241 = vpack.c.b16 %v7211, %v7210
        %v7242 = vpack.c.b16 %v7213, %v7212
        %v7243 = vpack.c.b16 %v7215, %v7214
        %v7244 = vpack.c.b16 %v7217, %v7216
        %v7245 = vpack.c.b16 %v7219, %v7218
        %v7246 = vpack.c.b16 %v7221, %v7220
        %v7247 = vpack.c.b16 %v7223, %v7222
        %v7248 = vpack.c.b16 %v7225, %v7224
        %v7249 = vpack.c.b16 %v7227, %v7226
        %v7250 = vpack.c.b16 %v7229, %v7228
        %v7251 = vpack.c.b16 %v7231, %v7230
        %v7252 = vpack.c.b16 %v7233, %v7232
        %v7253 = vpack.c.b16 %v7235, %v7234
        %v7254 = vpack.c.b16 %v7237, %v7236
        %v7255 = vpack.c.b16 %v7239, %v7238
        %v7272 = vunpack.c.l.b16 %v6202
        %v7273 = vunpack.c.l.b16 %v6205
        %v7274 = vunpack.c.l.b16 %v6209
        %v7275 = vunpack.c.l.b16 %v6212
        %v7276 = vunpack.c.l.b16 %v6216
        %v7277 = vunpack.c.l.b16 %v6219
        %v7278 = vunpack.c.l.b16 %v6223
        %v7279 = vunpack.c.l.b16 %v6226
        %v7280 = vunpack.c.l.b16 %v6230
        %v7281 = vunpack.c.l.b16 %v6233
        %v7282 = vunpack.c.l.b16 %v6237
        %v7283 = vunpack.c.l.b16 %v6240
        %v7284 = vunpack.c.l.b16 %v6244
        %v7285 = vunpack.c.l.b16 %v6247
        %v7286 = vunpack.c.l.b16 %v6251
        %v7287 = vunpack.c.l.b16 %v6254
        %v7288 = vunpack.c.l.b16 %v6258
        %v7289 = vunpack.c.l.b16 %v6261
        %v7290 = vunpack.c.l.b16 %v6265
        %v7291 = vunpack.c.l.b16 %v6268
        %v7292 = vunpack.c.l.b16 %v6272
        %v7293 = vunpack.c.l.b16 %v6275
        %v7294 = vunpack.c.l.b16 %v6279
        %v7295 = vunpack.c.l.b16 %v6282
        %v7296 = vunpack.c.l.b16 %v6286
        %v7297 = vunpack.c.l.b16 %v6289
        %v7298 = vunpack.c.l.b16 %v6293
        %v7299 = vunpack.c.l.b16 %v6296
        %v7300 = vunpack.c.l.b16 %v6300
        %v7301 = vunpack.c.l.b16 %v6303
        %v7302 = vunpack.c.l.b16 %v6307
        %v7303 = vunpack.c.l.b16 %v6310
        %v7304 = vpack.c.b16 %v7273, %v7272
        %v7305 = vpack.c.b16 %v7275, %v7274
        %v7306 = vpack.c.b16 %v7277, %v7276
        %v7307 = vpack.c.b16 %v7279, %v7278
        %v7308 = vpack.c.b16 %v7281, %v7280
        %v7309 = vpack.c.b16 %v7283, %v7282
        %v7310 = vpack.c.b16 %v7285, %v7284
        %v7311 = vpack.c.b16 %v7287, %v7286
        %v7312 = vpack.c.b16 %v7289, %v7288
        %v7313 = vpack.c.b16 %v7291, %v7290
        %v7314 = vpack.c.b16 %v7293, %v7292
        %v7315 = vpack.c.b16 %v7295, %v7294
        %v7316 = vpack.c.b16 %v7297, %v7296
        %v7317 = vpack.c.b16 %v7299, %v7298
        %v7318 = vpack.c.b16 %v7301, %v7300
        %v7319 = vpack.c.b16 %v7303, %v7302
        %v7352 = vunpack.c.l.b16 %v6312
        %v7353 = vunpack.c.l.b16 %v6313
        %v7354 = vunpack.c.l.b16 %v6314
        %v7355 = vunpack.c.l.b16 %v6315
        %v7356 = vunpack.c.l.b16 %v6316
        %v7357 = vunpack.c.l.b16 %v6317
        %v7358 = vunpack.c.l.b16 %v6318
        %v7359 = vunpack.c.l.b16 %v6319
        %v7360 = vunpack.c.l.b16 %v6320
        %v7361 = vunpack.c.l.b16 %v6321
        %v7362 = vunpack.c.l.b16 %v6322
        %v7363 = vunpack.c.l.b16 %v6323
        %v7364 = vunpack.c.l.b16 %v6324
        %v7365 = vunpack.c.l.b16 %v6325
        %v7366 = vunpack.c.l.b16 %v6326
        %v7367 = vunpack.c.l.b16 %v6327
        %v7368 = vunpack.c.l.b16 %v6328
        %v7369 = vunpack.c.l.b16 %v6329
        %v7370 = vunpack.c.l.b16 %v6330
        %v7371 = vunpack.c.l.b16 %v6331
        %v7372 = vunpack.c.l.b16 %v6332
        %v7373 = vunpack.c.l.b16 %v6333
        %v7374 = vunpack.c.l.b16 %v6334
        %v7375 = vunpack.c.l.b16 %v6335
        %v7376 = vunpack.c.l.b16 %v6336
        %v7377 = vunpack.c.l.b16 %v6337
        %v7378 = vunpack.c.l.b16 %v6338
        %v7379 = vunpack.c.l.b16 %v6339
        %v7380 = vunpack.c.l.b16 %v6340
        %v7381 = vunpack.c.l.b16 %v6341
        %v7382 = vunpack.c.l.b16 %v6342
        %v7383 = vunpack.c.l.b16 %v6343
        %v7384 = vpack.c.b16 %v7353, %v7352
        %v7385 = vpack.c.b16 %v7355, %v7354
        %v7386 = vpack.c.b16 %v7357, %v7356
        %v7387 = vpack.c.b16 %v7359, %v7358
        %v7388 = vpack.c.b16 %v7361, %v7360
        %v7389 = vpack.c.b16 %v7363, %v7362
        %v7390 = vpack.c.b16 %v7365, %v7364
        %v7391 = vpack.c.b16 %v7367, %v7366
        %v7392 = vpack.c.b16 %v7369, %v7368
        %v7393 = vpack.c.b16 %v7371, %v7370
        %v7394 = vpack.c.b16 %v7373, %v7372
        %v7395 = vpack.c.b16 %v7375, %v7374
        %v7396 = vpack.c.b16 %v7377, %v7376
        %v7397 = vpack.c.b16 %v7379, %v7378
        %v7398 = vpack.c.b16 %v7381, %v7380
        %v7399 = vpack.c.b16 %v7383, %v7382
        %v7416 = vunpack.c.l.b16 %v6373
        %v7417 = vunpack.c.l.b16 %v6383
        %v7418 = vunpack.c.l.b16 %v6397
        %v7419 = vunpack.c.l.b16 %v6407
        %v7420 = vunpack.c.l.b16 %v6421
        %v7421 = vunpack.c.l.b16 %v6431
        %v7422 = vunpack.c.l.b16 %v6445
        %v7423 = vunpack.c.l.b16 %v6455
        %v7424 = vunpack.c.l.b16 %v6469
        %v7425 = vunpack.c.l.b16 %v6479
        %v7426 = vunpack.c.l.b16 %v6493
        %v7427 = vunpack.c.l.b16 %v6503
        %v7428 = vunpack.c.l.b16 %v6517
        %v7429 = vunpack.c.l.b16 %v6527
        %v7430 = vunpack.c.l.b16 %v6541
        %v7431 = vunpack.c.l.b16 %v6551
        %v7432 = vunpack.c.l.b16 %v6565
        %v7433 = vunpack.c.l.b16 %v6575
        %v7434 = vunpack.c.l.b16 %v6589
        %v7435 = vunpack.c.l.b16 %v6599
        %v7436 = vunpack.c.l.b16 %v6613
        %v7437 = vunpack.c.l.b16 %v6623
        %v7438 = vunpack.c.l.b16 %v6637
        %v7439 = vunpack.c.l.b16 %v6647
        %v7440 = vunpack.c.l.b16 %v6661
        %v7441 = vunpack.c.l.b16 %v6671
        %v7442 = vunpack.c.l.b16 %v6685
        %v7443 = vunpack.c.l.b16 %v6695
        %v7444 = vunpack.c.l.b16 %v6709
        %v7445 = vunpack.c.l.b16 %v6719
        %v7446 = vunpack.c.l.b16 %v6733
        %v7447 = vunpack.c.l.b16 %v6743
        %v7448 = vpack.c.b16 %v7417, %v7416
        %v7449 = vpack.c.b16 %v7419, %v7418
        %v7450 = vpack.c.b16 %v7421, %v7420
        %v7451 = vpack.c.b16 %v7423, %v7422
        %v7452 = vpack.c.b16 %v7425, %v7424
        %v7453 = vpack.c.b16 %v7427, %v7426
        %v7454 = vpack.c.b16 %v7429, %v7428
        %v7455 = vpack.c.b16 %v7431, %v7430
        %v7456 = vpack.c.b16 %v7433, %v7432
        %v7457 = vpack.c.b16 %v7435, %v7434
        %v7458 = vpack.c.b16 %v7437, %v7436
        %v7459 = vpack.c.b16 %v7439, %v7438
        %v7460 = vpack.c.b16 %v7441, %v7440
        %v7461 = vpack.c.b16 %v7443, %v7442
        %v7462 = vpack.c.b16 %v7445, %v7444
        %v7463 = vpack.c.b16 %v7447, %v7446
        %v7480 = vunpack.c.l.b16 %v6811
        %v7481 = vunpack.c.l.b16 %v6814
        %v7482 = vunpack.c.l.b16 %v6818
        %v7483 = vunpack.c.l.b16 %v6821
        %v7484 = vunpack.c.l.b16 %v6825
        %v7485 = vunpack.c.l.b16 %v6828
        %v7486 = vunpack.c.l.b16 %v6832
        %v7487 = vunpack.c.l.b16 %v6835
        %v7488 = vunpack.c.l.b16 %v6839
        %v7489 = vunpack.c.l.b16 %v6842
        %v7490 = vunpack.c.l.b16 %v6846
        %v7491 = vunpack.c.l.b16 %v6849
        %v7492 = vunpack.c.l.b16 %v6853
        %v7493 = vunpack.c.l.b16 %v6856
        %v7494 = vunpack.c.l.b16 %v6860
        %v7495 = vunpack.c.l.b16 %v6863
        %v7496 = vunpack.c.l.b16 %v6867
        %v7497 = vunpack.c.l.b16 %v6870
        %v7498 = vunpack.c.l.b16 %v6874
        %v7499 = vunpack.c.l.b16 %v6877
        %v7500 = vunpack.c.l.b16 %v6881
        %v7501 = vunpack.c.l.b16 %v6884
        %v7502 = vunpack.c.l.b16 %v6888
        %v7503 = vunpack.c.l.b16 %v6891
        %v7504 = vunpack.c.l.b16 %v6895
        %v7505 = vunpack.c.l.b16 %v6898
        %v7506 = vunpack.c.l.b16 %v6902
        %v7507 = vunpack.c.l.b16 %v6905
        %v7508 = vunpack.c.l.b16 %v6909
        %v7509 = vunpack.c.l.b16 %v6912
        %v7510 = vunpack.c.l.b16 %v6916
        %v7511 = vunpack.c.l.b16 %v6919
        %v7512 = vpack.c.b16 %v7481, %v7480
        %v7513 = vpack.c.b16 %v7483, %v7482
        %v7514 = vpack.c.b16 %v7485, %v7484
        %v7515 = vpack.c.b16 %v7487, %v7486
        %v7516 = vpack.c.b16 %v7489, %v7488
        %v7517 = vpack.c.b16 %v7491, %v7490
        %v7518 = vpack.c.b16 %v7493, %v7492
        %v7519 = vpack.c.b16 %v7495, %v7494
        %v7520 = vpack.c.b16 %v7497, %v7496
        %v7521 = vpack.c.b16 %v7499, %v7498
        %v7522 = vpack.c.b16 %v7501, %v7500
        %v7523 = vpack.c.b16 %v7503, %v7502
        %v7524 = vpack.c.b16 %v7505, %v7504
        %v7525 = vpack.c.b16 %v7507, %v7506
        %v7526 = vpack.c.b16 %v7509, %v7508
        %v7527 = vpack.c.b16 %v7511, %v7510
        %v7544 = vld [vmem:[%s3] sm:$0xf]
        %v7545 = vld [vmem:[%s3 + $0x4] sm:$0xf]
        %v7546 = vld [vmem:[%s3 + $0x8] sm:$0xf]
        %v7547 = vld [vmem:[%s3 + $0xc] sm:$0xf]
        %v7548 = vld [vmem:[%s3 + $0x10] sm:$0xf]
        %v7549 = vld [vmem:[%s3 + $0x14] sm:$0xf]
        %v7550 = vld [vmem:[%s3 + $0x18] sm:$0xf]
        %v7551 = vld [vmem:[%s3 + $0x1c] sm:$0xf]
        %v7552 = vld [vmem:[%s3 + $0x20] sm:$0xf]
        %v7553 = vld [vmem:[%s3 + $0x24] sm:$0xf]
        %v7554 = vld [vmem:[%s3 + $0x28] sm:$0xf]
        %v7555 = vld [vmem:[%s3 + $0x2c] sm:$0xf]
        %v7556 = vld [vmem:[%s3 + $0x30] sm:$0xf]
        %v7557 = vld [vmem:[%s3 + $0x34] sm:$0xf]
        %v7558 = vld [vmem:[%s3 + $0x38] sm:$0xf]
        %v7559 = vld [vmem:[%s3 + $0x3c] sm:$0xf]
        %v7560 = vld [vmem:[%s3 + $0x40] sm:$0xf]
        %v7561 = vld [vmem:[%s3 + $0x44] sm:$0xf]
        %v7562 = vld [vmem:[%s3 + $0x48] sm:$0xf]
        %v7563 = vld [vmem:[%s3 + $0x4c] sm:$0xf]
        %v7564 = vld [vmem:[%s3 + $0x50] sm:$0xf]
        %v7565 = vld [vmem:[%s3 + $0x54] sm:$0xf]
        %v7566 = vld [vmem:[%s3 + $0x58] sm:$0xf]
        %v7567 = vld [vmem:[%s3 + $0x5c] sm:$0xf]
        %v7568 = vld [vmem:[%s3 + $0x60] sm:$0xf]
        %v7569 = vld [vmem:[%s3 + $0x64] sm:$0xf]
        %v7570 = vld [vmem:[%s3 + $0x68] sm:$0xf]
        %v7571 = vld [vmem:[%s3 + $0x6c] sm:$0xf]
        %v7572 = vld [vmem:[%s3 + $0x70] sm:$0xf]
        %v7573 = vld [vmem:[%s3 + $0x74] sm:$0xf]
        %v7574 = vld [vmem:[%s3 + $0x78] sm:$0xf]
        %v7575 = vld [vmem:[%s3 + $0x7c] sm:$0xf]
        %v7576 = vld [vmem:[%s3 + $0x80] sm:$0xf]
        %v7577 = vld [vmem:[%s3 + $0x84] sm:$0xf]
        %v7578 = vld [vmem:[%s3 + $0x88] sm:$0xf]
        %v7579 = vld [vmem:[%s3 + $0x8c] sm:$0xf]
        %v7580 = vld [vmem:[%s3 + $0x90] sm:$0xf]
        %v7581 = vld [vmem:[%s3 + $0x94] sm:$0xf]
        %v7582 = vld [vmem:[%s3 + $0x98] sm:$0xf]
        %v7583 = vld [vmem:[%s3 + $0x9c] sm:$0xf]
        %v7584 = vld [vmem:[%s3 + $0xa0] sm:$0xf]
        %v7585 = vld [vmem:[%s3 + $0xa4] sm:$0xf]
        %v7586 = vld [vmem:[%s3 + $0xa8] sm:$0xf]
        %v7587 = vld [vmem:[%s3 + $0xac] sm:$0xf]
        %v7588 = vld [vmem:[%s3 + $0xb0] sm:$0xf]
        %v7589 = vld [vmem:[%s3 + $0xb4] sm:$0xf]
        %v7590 = vld [vmem:[%s3 + $0xb8] sm:$0xf]
        %v7591 = vld [vmem:[%s3 + $0xbc] sm:$0xf]
        %v7592 = vld [vmem:[%s3 + $0xc0] sm:$0xf]
        %v7593 = vld [vmem:[%s3 + $0xc4] sm:$0xf]
        %v7594 = vld [vmem:[%s3 + $0xc8] sm:$0xf]
        %v7595 = vld [vmem:[%s3 + $0xcc] sm:$0xf]
        %v7596 = vld [vmem:[%s3 + $0xd0] sm:$0xf]
        %v7597 = vld [vmem:[%s3 + $0xd4] sm:$0xf]
        %v7598 = vld [vmem:[%s3 + $0xd8] sm:$0xf]
        %v7599 = vld [vmem:[%s3 + $0xdc] sm:$0xf]
        %v7600 = vld [vmem:[%s3 + $0xe0] sm:$0xf]
        %v7601 = vld [vmem:[%s3 + $0xe4] sm:$0xf]
        %v7602 = vld [vmem:[%s3 + $0xe8] sm:$0xf]
        %v7603 = vld [vmem:[%s3 + $0xec] sm:$0xf]
        %v7604 = vld [vmem:[%s3 + $0xf0] sm:$0xf]
        %v7605 = vld [vmem:[%s3 + $0xf4] sm:$0xf]
        %v7606 = vld [vmem:[%s3 + $0xf8] sm:$0xf]
        %v7607 = vld [vmem:[%s3 + $0xfc] sm:$0xf]
        %v7608 = vld [vmem:[%s3 + $0x100] sm:$0xf]
        %v7609 = vld [vmem:[%s3 + $0x104] sm:$0xf]
        %v7610 = vld [vmem:[%s3 + $0x108] sm:$0xf]
        %v7611 = vld [vmem:[%s3 + $0x10c] sm:$0xf]
        %v7612 = vld [vmem:[%s3 + $0x110] sm:$0xf]
        %v7613 = vld [vmem:[%s3 + $0x114] sm:$0xf]
        %v7614 = vld [vmem:[%s3 + $0x118] sm:$0xf]
        %v7615 = vld [vmem:[%s3 + $0x11c] sm:$0xf]
        %v7616 = vld [vmem:[%s3 + $0x120] sm:$0xf]
        %v7617 = vld [vmem:[%s3 + $0x124] sm:$0xf]
        %v7618 = vld [vmem:[%s3 + $0x128] sm:$0xf]
        %v7619 = vld [vmem:[%s3 + $0x12c] sm:$0xf]
        %v7620 = vld [vmem:[%s3 + $0x130] sm:$0xf]
        %v7621 = vld [vmem:[%s3 + $0x134] sm:$0xf]
        %v7622 = vld [vmem:[%s3 + $0x138] sm:$0xf]
        %v7623 = vld [vmem:[%s3 + $0x13c] sm:$0xf]
        %v7624 = vld [vmem:[%s3 + $0x140] sm:$0xf]
        %v7625 = vld [vmem:[%s3 + $0x144] sm:$0xf]
        %v7626 = vld [vmem:[%s3 + $0x148] sm:$0xf]
        %v7627 = vld [vmem:[%s3 + $0x14c] sm:$0xf]
        %v7628 = vld [vmem:[%s3 + $0x150] sm:$0xf]
        %v7629 = vld [vmem:[%s3 + $0x154] sm:$0xf]
        %v7630 = vld [vmem:[%s3 + $0x158] sm:$0xf]
        %v7631 = vld [vmem:[%s3 + $0x15c] sm:$0xf]
        %v7632 = vld [vmem:[%s3 + $0x160] sm:$0xf]
        %v7633 = vld [vmem:[%s3 + $0x164] sm:$0xf]
        %v7634 = vld [vmem:[%s3 + $0x168] sm:$0xf]
        %v7635 = vld [vmem:[%s3 + $0x16c] sm:$0xf]
        %v7636 = vld [vmem:[%s3 + $0x170] sm:$0xf]
        %v7637 = vld [vmem:[%s3 + $0x174] sm:$0xf]
        %v7638 = vld [vmem:[%s3 + $0x178] sm:$0xf]
        %v7639 = vld [vmem:[%s3 + $0x17c] sm:$0xf]
        %v7640 = vld [vmem:[%s3 + $0x180] sm:$0xf]
        %v7641 = vld [vmem:[%s3 + $0x184] sm:$0xf]
        %v7642 = vld [vmem:[%s3 + $0x188] sm:$0xf]
        %v7643 = vld [vmem:[%s3 + $0x18c] sm:$0xf]
        %v7644 = vld [vmem:[%s3 + $0x190] sm:$0xf]
        %v7645 = vld [vmem:[%s3 + $0x194] sm:$0xf]
        %v7646 = vld [vmem:[%s3 + $0x198] sm:$0xf]
        %v7647 = vld [vmem:[%s3 + $0x19c] sm:$0xf]
        %v7648 = vld [vmem:[%s3 + $0x1a0] sm:$0xf]
        %v7649 = vld [vmem:[%s3 + $0x1a4] sm:$0xf]
        %v7650 = vld [vmem:[%s3 + $0x1a8] sm:$0xf]
        %v7651 = vld [vmem:[%s3 + $0x1ac] sm:$0xf]
        %v7652 = vld [vmem:[%s3 + $0x1b0] sm:$0xf]
        %v7653 = vld [vmem:[%s3 + $0x1b4] sm:$0xf]
        %v7654 = vld [vmem:[%s3 + $0x1b8] sm:$0xf]
        %v7655 = vld [vmem:[%s3 + $0x1bc] sm:$0xf]
        %v7656 = vld [vmem:[%s3 + $0x1c0] sm:$0xf]
        %v7657 = vld [vmem:[%s3 + $0x1c4] sm:$0xf]
        %v7658 = vld [vmem:[%s3 + $0x1c8] sm:$0xf]
        %v7659 = vld [vmem:[%s3 + $0x1cc] sm:$0xf]
        %v7660 = vld [vmem:[%s3 + $0x1d0] sm:$0xf]
        %v7661 = vld [vmem:[%s3 + $0x1d4] sm:$0xf]
        %v7662 = vld [vmem:[%s3 + $0x1d8] sm:$0xf]
        %v7663 = vld [vmem:[%s3 + $0x1dc] sm:$0xf]
        %v7664 = vld [vmem:[%s3 + $0x1e0] sm:$0xf]
        %v7665 = vld [vmem:[%s3 + $0x1e4] sm:$0xf]
        %v7666 = vld [vmem:[%s3 + $0x1e8] sm:$0xf]
        %v7667 = vld [vmem:[%s3 + $0x1ec] sm:$0xf]
        %v7668 = vld [vmem:[%s3 + $0x1f0] sm:$0xf]
        %v7669 = vld [vmem:[%s3 + $0x1f4] sm:$0xf]
        %v7670 = vld [vmem:[%s3 + $0x1f8] sm:$0xf]
        %v7671 = vld [vmem:[%s3 + $0x1fc] sm:$0xf]
        %v7672 = vld [vmem:[%s3 + $0x200] sm:$0xf]
        %v7673 = vld [vmem:[%s3 + $0x204] sm:$0xf]
        %v7674 = vld [vmem:[%s3 + $0x208] sm:$0xf]
        %v7675 = vld [vmem:[%s3 + $0x20c] sm:$0xf]
        %v7676 = vld [vmem:[%s3 + $0x210] sm:$0xf]
        %v7677 = vld [vmem:[%s3 + $0x214] sm:$0xf]
        %v7678 = vld [vmem:[%s3 + $0x218] sm:$0xf]
        %v7679 = vld [vmem:[%s3 + $0x21c] sm:$0xf]
        %v7680 = vld [vmem:[%s3 + $0x220] sm:$0xf]
        %v7681 = vld [vmem:[%s3 + $0x224] sm:$0xf]
        %v7682 = vld [vmem:[%s3 + $0x228] sm:$0xf]
        %v7683 = vld [vmem:[%s3 + $0x22c] sm:$0xf]
        %v7684 = vld [vmem:[%s3 + $0x230] sm:$0xf]
        %v7685 = vld [vmem:[%s3 + $0x234] sm:$0xf]
        %v7686 = vld [vmem:[%s3 + $0x238] sm:$0xf]
        %v7687 = vld [vmem:[%s3 + $0x23c] sm:$0xf]
        %v7688 = vld [vmem:[%s4] sm:$0x1]
        %v7690 = vlaneseq
        %v7691 = vshrl.u32 %v7690, 7
        %v7692 = vsub.s32 0, %v7691
        %v7693 = vrot.slane %v7688, %v7692
        %v7839 = vunpack.c.l.b16 %v7544
        %v7840 = vunpack.c.l.b16 %v7545
        %v7841 = vunpack.c.l.b16 %v7546
        %v7842 = vunpack.c.l.b16 %v7547
        %v7843 = vunpack.c.l.b16 %v7548
        %v7844 = vunpack.c.l.b16 %v7549
        %v7845 = vunpack.c.l.b16 %v7550
        %v7846 = vunpack.c.l.b16 %v7551
        %v7847 = vunpack.c.l.b16 %v7552
        %v7848 = vunpack.c.l.b16 %v7553
        %v7849 = vunpack.c.l.b16 %v7554
        %v7850 = vunpack.c.l.b16 %v7555
        %v7851 = vunpack.c.l.b16 %v7556
        %v7852 = vunpack.c.l.b16 %v7557
        %v7853 = vunpack.c.l.b16 %v7558
        %v7854 = vunpack.c.l.b16 %v7559
        %v7855 = vunpack.c.l.b16 %v7560
        %v7856 = vunpack.c.l.b16 %v7561
        %v7857 = vunpack.c.l.b16 %v7562
        %v7858 = vunpack.c.l.b16 %v7563
        %v7859 = vunpack.c.l.b16 %v7564
        %v7860 = vunpack.c.l.b16 %v7565
        %v7861 = vunpack.c.l.b16 %v7566
        %v7862 = vunpack.c.l.b16 %v7567
        %v7863 = vunpack.c.l.b16 %v7568
        %v7864 = vunpack.c.l.b16 %v7569
        %v7865 = vunpack.c.l.b16 %v7570
        %v7866 = vunpack.c.l.b16 %v7571
        %v7867 = vunpack.c.l.b16 %v7572
        %v7868 = vunpack.c.l.b16 %v7573
        %v7869 = vunpack.c.l.b16 %v7574
        %v7870 = vunpack.c.l.b16 %v7575
        %v7871 = vunpack.c.l.b16 %v7576
        %v7872 = vunpack.c.l.b16 %v7577
        %v7873 = vunpack.c.l.b16 %v7578
        %v7874 = vunpack.c.l.b16 %v7579
        %v7875 = vunpack.c.l.b16 %v7580
        %v7876 = vunpack.c.l.b16 %v7581
        %v7877 = vunpack.c.l.b16 %v7582
        %v7878 = vunpack.c.l.b16 %v7583
        %v7879 = vunpack.c.l.b16 %v7584
        %v7880 = vunpack.c.l.b16 %v7585
        %v7881 = vunpack.c.l.b16 %v7586
        %v7882 = vunpack.c.l.b16 %v7587
        %v7883 = vunpack.c.l.b16 %v7588
        %v7884 = vunpack.c.l.b16 %v7589
        %v7885 = vunpack.c.l.b16 %v7590
        %v7886 = vunpack.c.l.b16 %v7591
        %v7887 = vunpack.c.l.b16 %v7592
        %v7888 = vunpack.c.l.b16 %v7593
        %v7889 = vunpack.c.l.b16 %v7594
        %v7890 = vunpack.c.l.b16 %v7595
        %v7891 = vunpack.c.l.b16 %v7596
        %v7892 = vunpack.c.l.b16 %v7597
        %v7893 = vunpack.c.l.b16 %v7598
        %v7894 = vunpack.c.l.b16 %v7599
        %v7895 = vunpack.c.l.b16 %v7600
        %v7896 = vunpack.c.l.b16 %v7601
        %v7897 = vunpack.c.l.b16 %v7602
        %v7898 = vunpack.c.l.b16 %v7603
        %v7899 = vunpack.c.l.b16 %v7604
        %v7900 = vunpack.c.l.b16 %v7605
        %v7901 = vunpack.c.l.b16 %v7606
        %v7902 = vunpack.c.l.b16 %v7607
        %v7903 = vunpack.c.l.b16 %v7608
        %v7904 = vunpack.c.l.b16 %v7609
        %v7905 = vunpack.c.l.b16 %v7610
        %v7906 = vunpack.c.l.b16 %v7611
        %v7907 = vunpack.c.l.b16 %v7612
        %v7908 = vunpack.c.l.b16 %v7613
        %v7909 = vunpack.c.l.b16 %v7614
        %v7910 = vunpack.c.l.b16 %v7615
        %v7911 = vunpack.c.l.b16 %v7616
        %v7912 = vunpack.c.l.b16 %v7617
        %v7913 = vunpack.c.l.b16 %v7618
        %v7914 = vunpack.c.l.b16 %v7619
        %v7915 = vunpack.c.l.b16 %v7620
        %v7916 = vunpack.c.l.b16 %v7621
        %v7917 = vunpack.c.l.b16 %v7622
        %v7918 = vunpack.c.l.b16 %v7623
        %v7919 = vunpack.c.l.b16 %v7624
        %v7920 = vunpack.c.l.b16 %v7625
        %v7921 = vunpack.c.l.b16 %v7626
        %v7922 = vunpack.c.l.b16 %v7627
        %v7923 = vunpack.c.l.b16 %v7628
        %v7924 = vunpack.c.l.b16 %v7629
        %v7925 = vunpack.c.l.b16 %v7630
        %v7926 = vunpack.c.l.b16 %v7631
        %v7927 = vunpack.c.l.b16 %v7632
        %v7928 = vunpack.c.l.b16 %v7633
        %v7929 = vunpack.c.l.b16 %v7634
        %v7930 = vunpack.c.l.b16 %v7635
        %v7931 = vunpack.c.l.b16 %v7636
        %v7932 = vunpack.c.l.b16 %v7637
        %v7933 = vunpack.c.l.b16 %v7638
        %v7934 = vunpack.c.l.b16 %v7639
        %v7935 = vunpack.c.l.b16 %v7640
        %v7936 = vunpack.c.l.b16 %v7641
        %v7937 = vunpack.c.l.b16 %v7642
        %v7938 = vunpack.c.l.b16 %v7643
        %v7939 = vunpack.c.l.b16 %v7644
        %v7940 = vunpack.c.l.b16 %v7645
        %v7941 = vunpack.c.l.b16 %v7646
        %v7942 = vunpack.c.l.b16 %v7647
        %v7943 = vunpack.c.l.b16 %v7648
        %v7944 = vunpack.c.l.b16 %v7649
        %v7945 = vunpack.c.l.b16 %v7650
        %v7946 = vunpack.c.l.b16 %v7651
        %v7947 = vunpack.c.l.b16 %v7652
        %v7948 = vunpack.c.l.b16 %v7653
        %v7949 = vunpack.c.l.b16 %v7654
        %v7950 = vunpack.c.l.b16 %v7655
        %v7951 = vunpack.c.l.b16 %v7656
        %v7952 = vunpack.c.l.b16 %v7657
        %v7953 = vunpack.c.l.b16 %v7658
        %v7954 = vunpack.c.l.b16 %v7659
        %v7955 = vunpack.c.l.b16 %v7660
        %v7956 = vunpack.c.l.b16 %v7661
        %v7957 = vunpack.c.l.b16 %v7662
        %v7958 = vunpack.c.l.b16 %v7663
        %v7959 = vunpack.c.l.b16 %v7664
        %v7960 = vunpack.c.l.b16 %v7665
        %v7961 = vunpack.c.l.b16 %v7666
        %v7962 = vunpack.c.l.b16 %v7667
        %v7963 = vunpack.c.l.b16 %v7668
        %v7964 = vunpack.c.l.b16 %v7669
        %v7965 = vunpack.c.l.b16 %v7670
        %v7966 = vunpack.c.l.b16 %v7671
        %v7967 = vunpack.c.l.b16 %v7672
        %v7968 = vunpack.c.l.b16 %v7673
        %v7969 = vunpack.c.l.b16 %v7674
        %v7970 = vunpack.c.l.b16 %v7675
        %v7971 = vunpack.c.l.b16 %v7676
        %v7972 = vunpack.c.l.b16 %v7677
        %v7973 = vunpack.c.l.b16 %v7678
        %v7974 = vunpack.c.l.b16 %v7679
        %v7975 = vunpack.c.l.b16 %v7680
        %v7976 = vunpack.c.l.b16 %v7681
        %v7977 = vunpack.c.l.b16 %v7682
        %v7978 = vunpack.c.l.b16 %v7683
        %v7979 = vunpack.c.l.b16 %v7684
        %v7980 = vunpack.c.l.b16 %v7685
        %v7981 = vunpack.c.l.b16 %v7686
        %v7982 = vunpack.c.l.b16 %v7687
        %v7983 = vpack.c.b16 %v7840, %v7839
        %v7984 = vpack.c.b16 %v7842, %v7841
        %v7985 = vpack.c.b16 %v7844, %v7843
        %v7986 = vpack.c.b16 %v7846, %v7845
        %v7987 = vpack.c.b16 %v7848, %v7847
        %v7988 = vpack.c.b16 %v7850, %v7849
        %v7989 = vpack.c.b16 %v7852, %v7851
        %v7990 = vpack.c.b16 %v7854, %v7853
        %v7991 = vpack.c.b16 %v7856, %v7855
        %v7992 = vpack.c.b16 %v7858, %v7857
        %v7993 = vpack.c.b16 %v7860, %v7859
        %v7994 = vpack.c.b16 %v7862, %v7861
        %v7995 = vpack.c.b16 %v7864, %v7863
        %v7996 = vpack.c.b16 %v7866, %v7865
        %v7997 = vpack.c.b16 %v7868, %v7867
        %v7998 = vpack.c.b16 %v7870, %v7869
        %v7999 = vpack.c.b16 %v7872, %v7871
        %v8000 = vpack.c.b16 %v7874, %v7873
        %v8001 = vpack.c.b16 %v7876, %v7875
        %v8002 = vpack.c.b16 %v7878, %v7877
        %v8003 = vpack.c.b16 %v7880, %v7879
        %v8004 = vpack.c.b16 %v7882, %v7881
        %v8005 = vpack.c.b16 %v7884, %v7883
        %v8006 = vpack.c.b16 %v7886, %v7885
        %v8007 = vpack.c.b16 %v7888, %v7887
        %v8008 = vpack.c.b16 %v7890, %v7889
        %v8009 = vpack.c.b16 %v7892, %v7891
        %v8010 = vpack.c.b16 %v7894, %v7893
        %v8011 = vpack.c.b16 %v7896, %v7895
        %v8012 = vpack.c.b16 %v7898, %v7897
        %v8013 = vpack.c.b16 %v7900, %v7899
        %v8014 = vpack.c.b16 %v7902, %v7901
        %v8015 = vpack.c.b16 %v7904, %v7903
        %v8016 = vpack.c.b16 %v7906, %v7905
        %v8017 = vpack.c.b16 %v7908, %v7907
        %v8018 = vpack.c.b16 %v7910, %v7909
        %v8019 = vpack.c.b16 %v7912, %v7911
        %v8020 = vpack.c.b16 %v7914, %v7913
        %v8021 = vpack.c.b16 %v7916, %v7915
        %v8022 = vpack.c.b16 %v7918, %v7917
        %v8023 = vpack.c.b16 %v7920, %v7919
        %v8024 = vpack.c.b16 %v7922, %v7921
        %v8025 = vpack.c.b16 %v7924, %v7923
        %v8026 = vpack.c.b16 %v7926, %v7925
        %v8027 = vpack.c.b16 %v7928, %v7927
        %v8028 = vpack.c.b16 %v7930, %v7929
        %v8029 = vpack.c.b16 %v7932, %v7931
        %v8030 = vpack.c.b16 %v7934, %v7933
        %v8031 = vpack.c.b16 %v7936, %v7935
        %v8032 = vpack.c.b16 %v7938, %v7937
        %v8033 = vpack.c.b16 %v7940, %v7939
        %v8034 = vpack.c.b16 %v7942, %v7941
        %v8035 = vpack.c.b16 %v7944, %v7943
        %v8036 = vpack.c.b16 %v7946, %v7945
        %v8037 = vpack.c.b16 %v7948, %v7947
        %v8038 = vpack.c.b16 %v7950, %v7949
        %v8039 = vpack.c.b16 %v7952, %v7951
        %v8040 = vpack.c.b16 %v7954, %v7953
        %v8041 = vpack.c.b16 %v7956, %v7955
        %v8042 = vpack.c.b16 %v7958, %v7957
        %v8043 = vpack.c.b16 %v7960, %v7959
        %v8044 = vpack.c.b16 %v7962, %v7961
        %v8045 = vpack.c.b16 %v7964, %v7963
        %v8046 = vpack.c.b16 %v7966, %v7965
        %v8047 = vpack.c.b16 %v7968, %v7967
        %v8048 = vpack.c.b16 %v7970, %v7969
        %v8049 = vpack.c.b16 %v7972, %v7971
        %v8050 = vpack.c.b16 %v7974, %v7973
        %v8051 = vpack.c.b16 %v7976, %v7975
        %v8052 = vpack.c.b16 %v7978, %v7977
        %v8053 = vpack.c.b16 %v7980, %v7979
        %v8054 = vpack.c.b16 %v7982, %v7981
        %8127 = vmatprep.subr.bf16.mxu0 0
        %8128 = vmatpush1.bf16.msra.mxu0 %v7990
        %8129 = vmatprep.subr.bf16.mxu0 0
        %8130 = vmatpush1.bf16.msra.mxu0 %v7989
        %8131 = vmatprep.subr.bf16.mxu0 0
        %8132 = vmatpush1.bf16.msra.mxu0 %v7988
        %8133 = vmatprep.subr.bf16.mxu0 0
        %8134 = vmatpush1.bf16.msra.mxu0 %v7987
        %8135 = vmatprep.subr.bf16.mxu0 0
        %8136 = vmatpush1.bf16.msra.mxu0 %v7986
        %8137 = vmatprep.subr.bf16.mxu0 0
        %8138 = vmatpush1.bf16.msra.mxu0 %v7985
        %8139 = vmatprep.subr.bf16.mxu0 0
        %8140 = vmatpush1.bf16.msra.mxu0 %v7984
        %8141 = vmatprep.subr.bf16.mxu0 0
        %8142 = vmatpush1.bf16.msra.mxu0 %v7983
        %8143 = vmatprep.subr.bf16.mxu0 0
        %8144 = vmatpush2.bf16.msra.mxu0 %v7998
        %8145 = vmatprep.subr.bf16.mxu0 0
        %8146 = vmatpush2.bf16.msra.mxu0 %v7997
        %8147 = vmatprep.subr.bf16.mxu0 0
        %8148 = vmatpush2.bf16.msra.mxu0 %v7996
        %8149 = vmatprep.subr.bf16.mxu0 0
        %8150 = vmatpush2.bf16.msra.mxu0 %v7995
        %8151 = vmatprep.subr.bf16.mxu0 0
        %8152 = vmatpush2.bf16.msra.mxu0 %v7994
        %8153 = vmatprep.subr.bf16.mxu0 0
        %8154 = vmatpush2.bf16.msra.mxu0 %v7993
        %8155 = vmatprep.subr.bf16.mxu0 0
        %8156 = vmatpush2.bf16.msra.mxu0 %v7992
        %8157 = vmatprep.subr.bf16.mxu0 0
        %8158 = vmatpush2.bf16.msra.mxu0 %v7991
        %8159 = vmatprep.mubr.bf16.mxu0 %v7032
        %8160 = vmatmul.mubr.bf16.gmra.mxu0 %v6968
        %v8161 = vpop.f32.mrf.mxu0
        %v8162 = vadd.f32 %v7693, %v8161
        %v8163 = vpop.f32.mrf.mxu0
        %v8164 = vpop.f32.mrf.mxu0
        %v8165 = vadd.f32 %v7693, %v8164
        %v8166 = vpop.f32.mrf.mxu0
        %8167 = vmatprep.mubr.bf16.mxu0 %v7033
        %8168 = vmatmul.mubr.bf16.gmra.mxu0 %v6969
        %v8169 = vpop.f32.mrf.mxu0
        %v8170 = vadd.f32 %v7693, %v8169
        %v8171 = vpop.f32.mrf.mxu0
        %v8172 = vpop.f32.mrf.mxu0
        %v8173 = vadd.f32 %v7693, %v8172
        %v8174 = vpop.f32.mrf.mxu0
        %8175 = vmatprep.mubr.bf16.mxu0 %v7034
        %8176 = vmatmul.mubr.bf16.gmra.mxu0 %v6970
        %v8177 = vpop.f32.mrf.mxu0
        %v8178 = vadd.f32 %v7693, %v8177
        %v8179 = vpop.f32.mrf.mxu0
        %v8180 = vpop.f32.mrf.mxu0
        %v8181 = vadd.f32 %v7693, %v8180
        %v8182 = vpop.f32.mrf.mxu0
        %8183 = vmatprep.mubr.bf16.mxu0 %v7035
        %8184 = vmatmul.mubr.bf16.gmra.mxu0 %v6971
        %v8185 = vpop.f32.mrf.mxu0
        %v8186 = vadd.f32 %v7693, %v8185
        %v8187 = vpop.f32.mrf.mxu0
        %v8188 = vpop.f32.mrf.mxu0
        %v8189 = vadd.f32 %v7693, %v8188
        %v8190 = vpop.f32.mrf.mxu0
        %8191 = vmatprep.mubr.bf16.mxu0 %v7036
        %8192 = vmatmul.mubr.bf16.gmra.mxu0 %v6972
        %v8193 = vpop.f32.mrf.mxu0
        %v8194 = vadd.f32 %v7693, %v8193
        %v8195 = vpop.f32.mrf.mxu0
        %v8196 = vpop.f32.mrf.mxu0
        %v8197 = vadd.f32 %v7693, %v8196
        %v8198 = vpop.f32.mrf.mxu0
        %8199 = vmatprep.mubr.bf16.mxu0 %v7037
        %8200 = vmatmul.mubr.bf16.gmra.mxu0 %v6973
        %v8201 = vpop.f32.mrf.mxu0
        %v8202 = vadd.f32 %v7693, %v8201
        %v8203 = vpop.f32.mrf.mxu0
        %v8204 = vpop.f32.mrf.mxu0
        %v8205 = vadd.f32 %v7693, %v8204
        %v8206 = vpop.f32.mrf.mxu0
        %8207 = vmatprep.mubr.bf16.mxu0 %v7038
        %8208 = vmatmul.mubr.bf16.gmra.mxu0 %v6974
        %v8209 = vpop.f32.mrf.mxu0
        %v8210 = vadd.f32 %v7693, %v8209
        %v8211 = vpop.f32.mrf.mxu0
        %v8212 = vpop.f32.mrf.mxu0
        %v8213 = vadd.f32 %v7693, %v8212
        %v8214 = vpop.f32.mrf.mxu0
        %8215 = vmatprep.mubr.bf16.mxu0 %v7039
        %8216 = vmatmul.mubr.bf16.gmra.mxu0 %v6975
        %v8217 = vpop.f32.mrf.mxu0
        %v8218 = vadd.f32 %v7693, %v8217
        %v8219 = vpop.f32.mrf.mxu0
        %v8220 = vpop.f32.mrf.mxu0
        %v8221 = vadd.f32 %v7693, %v8220
        %v8222 = vpop.f32.mrf.mxu0
        %8223 = vmatprep.mubr.bf16.mxu0 %v7040
        %8224 = vmatmul.mubr.bf16.gmra.mxu0 %v6976
        %v8225 = vpop.f32.mrf.mxu0
        %v8226 = vadd.f32 %v7693, %v8225
        %v8227 = vpop.f32.mrf.mxu0
        %v8228 = vpop.f32.mrf.mxu0
        %v8229 = vadd.f32 %v7693, %v8228
        %v8230 = vpop.f32.mrf.mxu0
        %8231 = vmatprep.mubr.bf16.mxu0 %v7041
        %8232 = vmatmul.mubr.bf16.gmra.mxu0 %v6977
        %v8233 = vpop.f32.mrf.mxu0
        %v8234 = vadd.f32 %v7693, %v8233
        %v8235 = vpop.f32.mrf.mxu0
        %v8236 = vpop.f32.mrf.mxu0
        %v8237 = vadd.f32 %v7693, %v8236
        %v8238 = vpop.f32.mrf.mxu0
        %8239 = vmatprep.mubr.bf16.mxu0 %v7042
        %8240 = vmatmul.mubr.bf16.gmra.mxu0 %v6978
        %v8241 = vpop.f32.mrf.mxu0
        %v8242 = vadd.f32 %v7693, %v8241
        %v8243 = vpop.f32.mrf.mxu0
        %v8244 = vpop.f32.mrf.mxu0
        %v8245 = vadd.f32 %v7693, %v8244
        %v8246 = vpop.f32.mrf.mxu0
        %8247 = vmatprep.mubr.bf16.mxu0 %v7043
        %8248 = vmatmul.mubr.bf16.gmra.mxu0 %v6979
        %v8249 = vpop.f32.mrf.mxu0
        %v8250 = vadd.f32 %v7693, %v8249
        %v8251 = vpop.f32.mrf.mxu0
        %v8252 = vpop.f32.mrf.mxu0
        %v8253 = vadd.f32 %v7693, %v8252
        %v8254 = vpop.f32.mrf.mxu0
        %8255 = vmatprep.mubr.bf16.mxu0 %v7044
        %8256 = vmatmul.mubr.bf16.gmra.mxu0 %v6980
        %v8257 = vpop.f32.mrf.mxu0
        %v8258 = vadd.f32 %v7693, %v8257
        %v8259 = vpop.f32.mrf.mxu0
        %v8260 = vpop.f32.mrf.mxu0
        %v8261 = vadd.f32 %v7693, %v8260
        %v8262 = vpop.f32.mrf.mxu0
        %8263 = vmatprep.mubr.bf16.mxu0 %v7045
        %8264 = vmatmul.mubr.bf16.gmra.mxu0 %v6981
        %v8265 = vpop.f32.mrf.mxu0
        %v8266 = vadd.f32 %v7693, %v8265
        %v8267 = vpop.f32.mrf.mxu0
        %v8268 = vpop.f32.mrf.mxu0
        %v8269 = vadd.f32 %v7693, %v8268
        %v8270 = vpop.f32.mrf.mxu0
        %8271 = vmatprep.mubr.bf16.mxu0 %v7046
        %8272 = vmatmul.mubr.bf16.gmra.mxu0 %v6982
        %v8273 = vpop.f32.mrf.mxu0
        %v8274 = vadd.f32 %v7693, %v8273
        %v8275 = vpop.f32.mrf.mxu0
        %v8276 = vpop.f32.mrf.mxu0
        %v8277 = vadd.f32 %v7693, %v8276
        %v8278 = vpop.f32.mrf.mxu0
        %8279 = vmatprep.mubr.bf16.mxu0 %v7047
        %8280 = vmatmul.mubr.bf16.gmra.mxu0 %v6983
        %v8281 = vpop.f32.mrf.mxu0
        %v8282 = vadd.f32 %v7693, %v8281
        %v8283 = vpop.f32.mrf.mxu0
        %v8284 = vpop.f32.mrf.mxu0
        %v8285 = vadd.f32 %v7693, %v8284
        %v8286 = vpop.f32.mrf.mxu0
        %8287 = vdwg.mxu0
        %8288 = vmatprep.subr.bf16.mxu0 0
        %8289 = vmatpush1.bf16.msra.mxu0 %v8006
        %8290 = vmatprep.subr.bf16.mxu0 0
        %8291 = vmatpush1.bf16.msra.mxu0 %v8005
        %8292 = vmatprep.subr.bf16.mxu0 0
        %8293 = vmatpush1.bf16.msra.mxu0 %v8004
        %8294 = vmatprep.subr.bf16.mxu0 0
        %8295 = vmatpush1.bf16.msra.mxu0 %v8003
        %8296 = vmatprep.subr.bf16.mxu0 0
        %8297 = vmatpush1.bf16.msra.mxu0 %v8002
        %8298 = vmatprep.subr.bf16.mxu0 0
        %8299 = vmatpush1.bf16.msra.mxu0 %v8001
        %8300 = vmatprep.subr.bf16.mxu0 0
        %8301 = vmatpush1.bf16.msra.mxu0 %v8000
        %8302 = vmatprep.subr.bf16.mxu0 0
        %8303 = vmatpush1.bf16.msra.mxu0 %v7999
        %8304 = vmatprep.subr.bf16.mxu0 0
        %8305 = vmatpush2.bf16.msra.mxu0 %v8014
        %8306 = vmatprep.subr.bf16.mxu0 0
        %8307 = vmatpush2.bf16.msra.mxu0 %v8013
        %8308 = vmatprep.subr.bf16.mxu0 0
        %8309 = vmatpush2.bf16.msra.mxu0 %v8012
        %8310 = vmatprep.subr.bf16.mxu0 0
        %8311 = vmatpush2.bf16.msra.mxu0 %v8011
        %8312 = vmatprep.subr.bf16.mxu0 0
        %8313 = vmatpush2.bf16.msra.mxu0 %v8010
        %8314 = vmatprep.subr.bf16.mxu0 0
        %8315 = vmatpush2.bf16.msra.mxu0 %v8009
        %8316 = vmatprep.subr.bf16.mxu0 0
        %8317 = vmatpush2.bf16.msra.mxu0 %v8008
        %8318 = vmatprep.subr.bf16.mxu0 0
        %8319 = vmatpush2.bf16.msra.mxu0 %v8007
        %8320 = vmatprep.mubr.bf16.mxu0 %v7176
        %8321 = vmatmul.mubr.bf16.gmra.mxu0 %v7096
        %v8322 = vpop.f32.mrf.mxu0
        %v8323 = vadd.f32 %v8162, %v8322
        %v8324 = vpop.f32.mrf.mxu0
        %v8325 = vpop.f32.mrf.mxu0
        %v8326 = vadd.f32 %v8165, %v8325
        %v8327 = vpop.f32.mrf.mxu0
        %8328 = vmatprep.mubr.bf16.mxu0 %v7177
        %8329 = vmatmul.mubr.bf16.gmra.mxu0 %v7097
        %v8330 = vpop.f32.mrf.mxu0
        %v8331 = vadd.f32 %v8170, %v8330
        %v8332 = vpop.f32.mrf.mxu0
        %v8333 = vpop.f32.mrf.mxu0
        %v8334 = vadd.f32 %v8173, %v8333
        %v8335 = vpop.f32.mrf.mxu0
        %8336 = vmatprep.mubr.bf16.mxu0 %v7178
        %8337 = vmatmul.mubr.bf16.gmra.mxu0 %v7098
        %v8338 = vpop.f32.mrf.mxu0
        %v8339 = vadd.f32 %v8178, %v8338
        %v8340 = vpop.f32.mrf.mxu0
        %v8341 = vpop.f32.mrf.mxu0
        %v8342 = vadd.f32 %v8181, %v8341
        %v8343 = vpop.f32.mrf.mxu0
        %8344 = vmatprep.mubr.bf16.mxu0 %v7179
        %8345 = vmatmul.mubr.bf16.gmra.mxu0 %v7099
        %v8346 = vpop.f32.mrf.mxu0
        %v8347 = vadd.f32 %v8186, %v8346
        %v8348 = vpop.f32.mrf.mxu0
        %v8349 = vpop.f32.mrf.mxu0
        %v8350 = vadd.f32 %v8189, %v8349
        %v8351 = vpop.f32.mrf.mxu0
        %8352 = vmatprep.mubr.bf16.mxu0 %v7180
        %8353 = vmatmul.mubr.bf16.gmra.mxu0 %v7100
        %v8354 = vpop.f32.mrf.mxu0
        %v8355 = vadd.f32 %v8194, %v8354
        %v8356 = vpop.f32.mrf.mxu0
        %v8357 = vpop.f32.mrf.mxu0
        %v8358 = vadd.f32 %v8197, %v8357
        %v8359 = vpop.f32.mrf.mxu0
        %8360 = vmatprep.mubr.bf16.mxu0 %v7181
        %8361 = vmatmul.mubr.bf16.gmra.mxu0 %v7101
        %v8362 = vpop.f32.mrf.mxu0
        %v8363 = vadd.f32 %v8202, %v8362
        %v8364 = vpop.f32.mrf.mxu0
        %v8365 = vpop.f32.mrf.mxu0
        %v8366 = vadd.f32 %v8205, %v8365
        %v8367 = vpop.f32.mrf.mxu0
        %8368 = vmatprep.mubr.bf16.mxu0 %v7182
        %8369 = vmatmul.mubr.bf16.gmra.mxu0 %v7102
        %v8370 = vpop.f32.mrf.mxu0
        %v8371 = vadd.f32 %v8210, %v8370
        %v8372 = vpop.f32.mrf.mxu0
        %v8373 = vpop.f32.mrf.mxu0
        %v8374 = vadd.f32 %v8213, %v8373
        %v8375 = vpop.f32.mrf.mxu0
        %8376 = vmatprep.mubr.bf16.mxu0 %v7183
        %8377 = vmatmul.mubr.bf16.gmra.mxu0 %v7103
        %v8378 = vpop.f32.mrf.mxu0
        %v8379 = vadd.f32 %v8218, %v8378
        %v8380 = vpop.f32.mrf.mxu0
        %v8381 = vpop.f32.mrf.mxu0
        %v8382 = vadd.f32 %v8221, %v8381
        %v8383 = vpop.f32.mrf.mxu0
        %8384 = vmatprep.mubr.bf16.mxu0 %v7184
        %8385 = vmatmul.mubr.bf16.gmra.mxu0 %v7104
        %v8386 = vpop.f32.mrf.mxu0
        %v8387 = vadd.f32 %v8226, %v8386
        %v8388 = vpop.f32.mrf.mxu0
        %v8389 = vpop.f32.mrf.mxu0
        %v8390 = vadd.f32 %v8229, %v8389
        %v8391 = vpop.f32.mrf.mxu0
        %8392 = vmatprep.mubr.bf16.mxu0 %v7185
        %8393 = vmatmul.mubr.bf16.gmra.mxu0 %v7105
        %v8394 = vpop.f32.mrf.mxu0
        %v8395 = vadd.f32 %v8234, %v8394
        %v8396 = vpop.f32.mrf.mxu0
        %v8397 = vpop.f32.mrf.mxu0
        %v8398 = vadd.f32 %v8237, %v8397
        %v8399 = vpop.f32.mrf.mxu0
        %8400 = vmatprep.mubr.bf16.mxu0 %v7186
        %8401 = vmatmul.mubr.bf16.gmra.mxu0 %v7106
        %v8402 = vpop.f32.mrf.mxu0
        %v8403 = vadd.f32 %v8242, %v8402
        %v8404 = vpop.f32.mrf.mxu0
        %v8405 = vpop.f32.mrf.mxu0
        %v8406 = vadd.f32 %v8245, %v8405
        %v8407 = vpop.f32.mrf.mxu0
        %8408 = vmatprep.mubr.bf16.mxu0 %v7187
        %8409 = vmatmul.mubr.bf16.gmra.mxu0 %v7107
        %v8410 = vpop.f32.mrf.mxu0
        %v8411 = vadd.f32 %v8250, %v8410
        %v8412 = vpop.f32.mrf.mxu0
        %v8413 = vpop.f32.mrf.mxu0
        %v8414 = vadd.f32 %v8253, %v8413
        %v8415 = vpop.f32.mrf.mxu0
        %8416 = vmatprep.mubr.bf16.mxu0 %v7188
        %8417 = vmatmul.mubr.bf16.gmra.mxu0 %v7108
        %v8418 = vpop.f32.mrf.mxu0
        %v8419 = vadd.f32 %v8258, %v8418
        %v8420 = vpop.f32.mrf.mxu0
        %v8421 = vpop.f32.mrf.mxu0
        %v8422 = vadd.f32 %v8261, %v8421
        %v8423 = vpop.f32.mrf.mxu0
        %8424 = vmatprep.mubr.bf16.mxu0 %v7189
        %8425 = vmatmul.mubr.bf16.gmra.mxu0 %v7109
        %v8426 = vpop.f32.mrf.mxu0
        %v8427 = vadd.f32 %v8266, %v8426
        %v8428 = vpop.f32.mrf.mxu0
        %v8429 = vpop.f32.mrf.mxu0
        %v8430 = vadd.f32 %v8269, %v8429
        %v8431 = vpop.f32.mrf.mxu0
        %8432 = vmatprep.mubr.bf16.mxu0 %v7190
        %8433 = vmatmul.mubr.bf16.gmra.mxu0 %v7110
        %v8434 = vpop.f32.mrf.mxu0
        %v8435 = vadd.f32 %v8274, %v8434
        %v8436 = vpop.f32.mrf.mxu0
        %v8437 = vpop.f32.mrf.mxu0
        %v8438 = vadd.f32 %v8277, %v8437
        %v8439 = vpop.f32.mrf.mxu0
        %8440 = vmatprep.mubr.bf16.mxu0 %v7191
        %8441 = vmatmul.mubr.bf16.gmra.mxu0 %v7111
        %v8442 = vpop.f32.mrf.mxu0
        %v8443 = vadd.f32 %v8282, %v8442
        %v8444 = vpop.f32.mrf.mxu0
        %v8445 = vpop.f32.mrf.mxu0
        %v8446 = vadd.f32 %v8285, %v8445
        %v8447 = vpop.f32.mrf.mxu0
        %8448 = vdwg.mxu0
        %8449 = vmatprep.subr.bf16.mxu0 0
        %8450 = vmatpush1.bf16.msra.mxu0 %v8022
        %8451 = vmatprep.subr.bf16.mxu0 0
        %8452 = vmatpush1.bf16.msra.mxu0 %v8021
        %8453 = vmatprep.subr.bf16.mxu0 0
        %8454 = vmatpush1.bf16.msra.mxu0 %v8020
        %8455 = vmatprep.subr.bf16.mxu0 0
        %8456 = vmatpush1.bf16.msra.mxu0 %v8019
        %8457 = vmatprep.subr.bf16.mxu0 0
        %8458 = vmatpush1.bf16.msra.mxu0 %v8018
        %8459 = vmatprep.subr.bf16.mxu0 0
        %8460 = vmatpush1.bf16.msra.mxu0 %v8017
        %8461 = vmatprep.subr.bf16.mxu0 0
        %8462 = vmatpush1.bf16.msra.mxu0 %v8016
        %8463 = vmatprep.subr.bf16.mxu0 0
        %8464 = vmatpush1.bf16.msra.mxu0 %v8015
        %8465 = vmatprep.subr.bf16.mxu0 0
        %8466 = vmatpush2.bf16.msra.mxu0 %v8030
        %8467 = vmatprep.subr.bf16.mxu0 0
        %8468 = vmatpush2.bf16.msra.mxu0 %v8029
        %8469 = vmatprep.subr.bf16.mxu0 0
        %8470 = vmatpush2.bf16.msra.mxu0 %v8028
        %8471 = vmatprep.subr.bf16.mxu0 0
        %8472 = vmatpush2.bf16.msra.mxu0 %v8027
        %8473 = vmatprep.subr.bf16.mxu0 0
        %8474 = vmatpush2.bf16.msra.mxu0 %v8026
        %8475 = vmatprep.subr.bf16.mxu0 0
        %8476 = vmatpush2.bf16.msra.mxu0 %v8025
        %8477 = vmatprep.subr.bf16.mxu0 0
        %8478 = vmatpush2.bf16.msra.mxu0 %v8024
        %8479 = vmatprep.subr.bf16.mxu0 0
        %8480 = vmatpush2.bf16.msra.mxu0 %v8023
        %8481 = vmatprep.mubr.bf16.mxu0 %v7304
        %8482 = vmatmul.mubr.bf16.gmra.mxu0 %v7240
        %v8483 = vpop.f32.mrf.mxu0
        %v8484 = vadd.f32 %v8323, %v8483
        %v8485 = vpop.f32.mrf.mxu0
        %v8486 = vpop.f32.mrf.mxu0
        %v8487 = vadd.f32 %v8326, %v8486
        %v8488 = vpop.f32.mrf.mxu0
        %8489 = vmatprep.mubr.bf16.mxu0 %v7305
        %8490 = vmatmul.mubr.bf16.gmra.mxu0 %v7241
        %v8491 = vpop.f32.mrf.mxu0
        %v8492 = vadd.f32 %v8331, %v8491
        %v8493 = vpop.f32.mrf.mxu0
        %v8494 = vpop.f32.mrf.mxu0
        %v8495 = vadd.f32 %v8334, %v8494
        %v8496 = vpop.f32.mrf.mxu0
        %8497 = vmatprep.mubr.bf16.mxu0 %v7306
        %8498 = vmatmul.mubr.bf16.gmra.mxu0 %v7242
        %v8499 = vpop.f32.mrf.mxu0
        %v8500 = vadd.f32 %v8339, %v8499
        %v8501 = vpop.f32.mrf.mxu0
        %v8502 = vpop.f32.mrf.mxu0
        %v8503 = vadd.f32 %v8342, %v8502
        %v8504 = vpop.f32.mrf.mxu0
        %8505 = vmatprep.mubr.bf16.mxu0 %v7307
        %8506 = vmatmul.mubr.bf16.gmra.mxu0 %v7243
        %v8507 = vpop.f32.mrf.mxu0
        %v8508 = vadd.f32 %v8347, %v8507
        %v8509 = vpop.f32.mrf.mxu0
        %v8510 = vpop.f32.mrf.mxu0
        %v8511 = vadd.f32 %v8350, %v8510
        %v8512 = vpop.f32.mrf.mxu0
        %8513 = vmatprep.mubr.bf16.mxu0 %v7308
        %8514 = vmatmul.mubr.bf16.gmra.mxu0 %v7244
        %v8515 = vpop.f32.mrf.mxu0
        %v8516 = vadd.f32 %v8355, %v8515
        %v8517 = vpop.f32.mrf.mxu0
        %v8518 = vpop.f32.mrf.mxu0
        %v8519 = vadd.f32 %v8358, %v8518
        %v8520 = vpop.f32.mrf.mxu0
        %8521 = vmatprep.mubr.bf16.mxu0 %v7309
        %8522 = vmatmul.mubr.bf16.gmra.mxu0 %v7245
        %v8523 = vpop.f32.mrf.mxu0
        %v8524 = vadd.f32 %v8363, %v8523
        %v8525 = vpop.f32.mrf.mxu0
        %v8526 = vpop.f32.mrf.mxu0
        %v8527 = vadd.f32 %v8366, %v8526
        %v8528 = vpop.f32.mrf.mxu0
        %8529 = vmatprep.mubr.bf16.mxu0 %v7310
        %8530 = vmatmul.mubr.bf16.gmra.mxu0 %v7246
        %v8531 = vpop.f32.mrf.mxu0
        %v8532 = vadd.f32 %v8371, %v8531
        %v8533 = vpop.f32.mrf.mxu0
        %v8534 = vpop.f32.mrf.mxu0
        %v8535 = vadd.f32 %v8374, %v8534
        %v8536 = vpop.f32.mrf.mxu0
        %8537 = vmatprep.mubr.bf16.mxu0 %v7311
        %8538 = vmatmul.mubr.bf16.gmra.mxu0 %v7247
        %v8539 = vpop.f32.mrf.mxu0
        %v8540 = vadd.f32 %v8379, %v8539
        %v8541 = vpop.f32.mrf.mxu0
        %v8542 = vpop.f32.mrf.mxu0
        %v8543 = vadd.f32 %v8382, %v8542
        %v8544 = vpop.f32.mrf.mxu0
        %8545 = vmatprep.mubr.bf16.mxu0 %v7312
        %8546 = vmatmul.mubr.bf16.gmra.mxu0 %v7248
        %v8547 = vpop.f32.mrf.mxu0
        %v8548 = vadd.f32 %v8387, %v8547
        %v8549 = vpop.f32.mrf.mxu0
        %v8550 = vpop.f32.mrf.mxu0
        %v8551 = vadd.f32 %v8390, %v8550
        %v8552 = vpop.f32.mrf.mxu0
        %8553 = vmatprep.mubr.bf16.mxu0 %v7313
        %8554 = vmatmul.mubr.bf16.gmra.mxu0 %v7249
        %v8555 = vpop.f32.mrf.mxu0
        %v8556 = vadd.f32 %v8395, %v8555
        %v8557 = vpop.f32.mrf.mxu0
        %v8558 = vpop.f32.mrf.mxu0
        %v8559 = vadd.f32 %v8398, %v8558
        %v8560 = vpop.f32.mrf.mxu0
        %8561 = vmatprep.mubr.bf16.mxu0 %v7314
        %8562 = vmatmul.mubr.bf16.gmra.mxu0 %v7250
        %v8563 = vpop.f32.mrf.mxu0
        %v8564 = vadd.f32 %v8403, %v8563
        %v8565 = vpop.f32.mrf.mxu0
        %v8566 = vpop.f32.mrf.mxu0
        %v8567 = vadd.f32 %v8406, %v8566
        %v8568 = vpop.f32.mrf.mxu0
        %8569 = vmatprep.mubr.bf16.mxu0 %v7315
        %8570 = vmatmul.mubr.bf16.gmra.mxu0 %v7251
        %v8571 = vpop.f32.mrf.mxu0
        %v8572 = vadd.f32 %v8411, %v8571
        %v8573 = vpop.f32.mrf.mxu0
        %v8574 = vpop.f32.mrf.mxu0
        %v8575 = vadd.f32 %v8414, %v8574
        %v8576 = vpop.f32.mrf.mxu0
        %8577 = vmatprep.mubr.bf16.mxu0 %v7316
        %8578 = vmatmul.mubr.bf16.gmra.mxu0 %v7252
        %v8579 = vpop.f32.mrf.mxu0
        %v8580 = vadd.f32 %v8419, %v8579
        %v8581 = vpop.f32.mrf.mxu0
        %v8582 = vpop.f32.mrf.mxu0
        %v8583 = vadd.f32 %v8422, %v8582
        %v8584 = vpop.f32.mrf.mxu0
        %8585 = vmatprep.mubr.bf16.mxu0 %v7317
        %8586 = vmatmul.mubr.bf16.gmra.mxu0 %v7253
        %v8587 = vpop.f32.mrf.mxu0
        %v8588 = vadd.f32 %v8427, %v8587
        %v8589 = vpop.f32.mrf.mxu0
        %v8590 = vpop.f32.mrf.mxu0
        %v8591 = vadd.f32 %v8430, %v8590
        %v8592 = vpop.f32.mrf.mxu0
        %8593 = vmatprep.mubr.bf16.mxu0 %v7318
        %8594 = vmatmul.mubr.bf16.gmra.mxu0 %v7254
        %v8595 = vpop.f32.mrf.mxu0
        %v8596 = vadd.f32 %v8435, %v8595
        %v8597 = vpop.f32.mrf.mxu0
        %v8598 = vpop.f32.mrf.mxu0
        %v8599 = vadd.f32 %v8438, %v8598
        %v8600 = vpop.f32.mrf.mxu0
        %8601 = vmatprep.mubr.bf16.mxu0 %v7319
        %8602 = vmatmul.mubr.bf16.gmra.mxu0 %v7255
        %v8603 = vpop.f32.mrf.mxu0
        %v8604 = vadd.f32 %v8443, %v8603
        %v8605 = vpop.f32.mrf.mxu0
        %v8606 = vpop.f32.mrf.mxu0
        %v8607 = vadd.f32 %v8446, %v8606
        %v8608 = vpop.f32.mrf.mxu0
        %8609 = vdwg.mxu0
        %8610 = vmatprep.subr.bf16.mxu0 0
        %8611 = vmatpush1.bf16.msra.mxu0 %v8038
        %8612 = vmatprep.subr.bf16.mxu0 0
        %8613 = vmatpush1.bf16.msra.mxu0 %v8037
        %8614 = vmatprep.subr.bf16.mxu0 0
        %8615 = vmatpush1.bf16.msra.mxu0 %v8036
        %8616 = vmatprep.subr.bf16.mxu0 0
        %8617 = vmatpush1.bf16.msra.mxu0 %v8035
        %8618 = vmatprep.subr.bf16.mxu0 0
        %8619 = vmatpush1.bf16.msra.mxu0 %v8034
        %8620 = vmatprep.subr.bf16.mxu0 0
        %8621 = vmatpush1.bf16.msra.mxu0 %v8033
        %8622 = vmatprep.subr.bf16.mxu0 0
        %8623 = vmatpush1.bf16.msra.mxu0 %v8032
        %8624 = vmatprep.subr.bf16.mxu0 0
        %8625 = vmatpush1.bf16.msra.mxu0 %v8031
        %8626 = vmatprep.subr.bf16.mxu0 0
        %8627 = vmatpush2.bf16.msra.mxu0 %v8046
        %8628 = vmatprep.subr.bf16.mxu0 0
        %8629 = vmatpush2.bf16.msra.mxu0 %v8045
        %8630 = vmatprep.subr.bf16.mxu0 0
        %8631 = vmatpush2.bf16.msra.mxu0 %v8044
        %8632 = vmatprep.subr.bf16.mxu0 0
        %8633 = vmatpush2.bf16.msra.mxu0 %v8043
        %8634 = vmatprep.subr.bf16.mxu0 0
        %8635 = vmatpush2.bf16.msra.mxu0 %v8042
        %8636 = vmatprep.subr.bf16.mxu0 0
        %8637 = vmatpush2.bf16.msra.mxu0 %v8041
        %8638 = vmatprep.subr.bf16.mxu0 0
        %8639 = vmatpush2.bf16.msra.mxu0 %v8040
        %8640 = vmatprep.subr.bf16.mxu0 0
        %8641 = vmatpush2.bf16.msra.mxu0 %v8039
        %8642 = vmatprep.mubr.bf16.mxu0 %v7448
        %8643 = vmatmul.mubr.bf16.gmra.mxu0 %v7384
        %v8644 = vpop.f32.mrf.mxu0
        %v8645 = vadd.f32 %v8484, %v8644
        %v8646 = vpop.f32.mrf.mxu0
        %v8647 = vpop.f32.mrf.mxu0
        %v8648 = vadd.f32 %v8487, %v8647
        %v8649 = vpop.f32.mrf.mxu0
        %8650 = vmatprep.mubr.bf16.mxu0 %v7449
        %8651 = vmatmul.mubr.bf16.gmra.mxu0 %v7385
        %v8652 = vpop.f32.mrf.mxu0
        %v8653 = vadd.f32 %v8492, %v8652
        %v8654 = vpop.f32.mrf.mxu0
        %v8655 = vpop.f32.mrf.mxu0
        %v8656 = vadd.f32 %v8495, %v8655
        %v8657 = vpop.f32.mrf.mxu0
        %8658 = vmatprep.mubr.bf16.mxu0 %v7450
        %8659 = vmatmul.mubr.bf16.gmra.mxu0 %v7386
        %v8660 = vpop.f32.mrf.mxu0
        %v8661 = vadd.f32 %v8500, %v8660
        %v8662 = vpop.f32.mrf.mxu0
        %v8663 = vpop.f32.mrf.mxu0
        %v8664 = vadd.f32 %v8503, %v8663
        %v8665 = vpop.f32.mrf.mxu0
        %8666 = vmatprep.mubr.bf16.mxu0 %v7451
        %8667 = vmatmul.mubr.bf16.gmra.mxu0 %v7387
        %v8668 = vpop.f32.mrf.mxu0
        %v8669 = vadd.f32 %v8508, %v8668
        %v8670 = vpop.f32.mrf.mxu0
        %v8671 = vpop.f32.mrf.mxu0
        %v8672 = vadd.f32 %v8511, %v8671
        %v8673 = vpop.f32.mrf.mxu0
        %8674 = vmatprep.mubr.bf16.mxu0 %v7452
        %8675 = vmatmul.mubr.bf16.gmra.mxu0 %v7388
        %v8676 = vpop.f32.mrf.mxu0
        %v8677 = vadd.f32 %v8516, %v8676
        %v8678 = vpop.f32.mrf.mxu0
        %v8679 = vpop.f32.mrf.mxu0
        %v8680 = vadd.f32 %v8519, %v8679
        %v8681 = vpop.f32.mrf.mxu0
        %8682 = vmatprep.mubr.bf16.mxu0 %v7453
        %8683 = vmatmul.mubr.bf16.gmra.mxu0 %v7389
        %v8684 = vpop.f32.mrf.mxu0
        %v8685 = vadd.f32 %v8524, %v8684
        %v8686 = vpop.f32.mrf.mxu0
        %v8687 = vpop.f32.mrf.mxu0
        %v8688 = vadd.f32 %v8527, %v8687
        %v8689 = vpop.f32.mrf.mxu0
        %8690 = vmatprep.mubr.bf16.mxu0 %v7454
        %8691 = vmatmul.mubr.bf16.gmra.mxu0 %v7390
        %v8692 = vpop.f32.mrf.mxu0
        %v8693 = vadd.f32 %v8532, %v8692
        %v8694 = vpop.f32.mrf.mxu0
        %v8695 = vpop.f32.mrf.mxu0
        %v8696 = vadd.f32 %v8535, %v8695
        %v8697 = vpop.f32.mrf.mxu0
        %8698 = vmatprep.mubr.bf16.mxu0 %v7455
        %8699 = vmatmul.mubr.bf16.gmra.mxu0 %v7391
        %v8700 = vpop.f32.mrf.mxu0
        %v8701 = vadd.f32 %v8540, %v8700
        %v8702 = vpop.f32.mrf.mxu0
        %v8703 = vpop.f32.mrf.mxu0
        %v8704 = vadd.f32 %v8543, %v8703
        %v8705 = vpop.f32.mrf.mxu0
        %8706 = vmatprep.mubr.bf16.mxu0 %v7456
        %8707 = vmatmul.mubr.bf16.gmra.mxu0 %v7392
        %v8708 = vpop.f32.mrf.mxu0
        %v8709 = vadd.f32 %v8548, %v8708
        %v8710 = vpop.f32.mrf.mxu0
        %v8711 = vpop.f32.mrf.mxu0
        %v8712 = vadd.f32 %v8551, %v8711
        %v8713 = vpop.f32.mrf.mxu0
        %8714 = vmatprep.mubr.bf16.mxu0 %v7457
        %8715 = vmatmul.mubr.bf16.gmra.mxu0 %v7393
        %v8716 = vpop.f32.mrf.mxu0
        %v8717 = vadd.f32 %v8556, %v8716
        %v8718 = vpop.f32.mrf.mxu0
        %v8719 = vpop.f32.mrf.mxu0
        %v8720 = vadd.f32 %v8559, %v8719
        %v8721 = vpop.f32.mrf.mxu0
        %8722 = vmatprep.mubr.bf16.mxu0 %v7458
        %8723 = vmatmul.mubr.bf16.gmra.mxu0 %v7394
        %v8724 = vpop.f32.mrf.mxu0
        %v8725 = vadd.f32 %v8564, %v8724
        %v8726 = vpop.f32.mrf.mxu0
        %v8727 = vpop.f32.mrf.mxu0
        %v8728 = vadd.f32 %v8567, %v8727
        %v8729 = vpop.f32.mrf.mxu0
        %8730 = vmatprep.mubr.bf16.mxu0 %v7459
        %8731 = vmatmul.mubr.bf16.gmra.mxu0 %v7395
        %v8732 = vpop.f32.mrf.mxu0
        %v8733 = vadd.f32 %v8572, %v8732
        %v8734 = vpop.f32.mrf.mxu0
        %v8735 = vpop.f32.mrf.mxu0
        %v8736 = vadd.f32 %v8575, %v8735
        %v8737 = vpop.f32.mrf.mxu0
        %8738 = vmatprep.mubr.bf16.mxu0 %v7460
        %8739 = vmatmul.mubr.bf16.gmra.mxu0 %v7396
        %v8740 = vpop.f32.mrf.mxu0
        %v8741 = vadd.f32 %v8580, %v8740
        %v8742 = vpop.f32.mrf.mxu0
        %v8743 = vpop.f32.mrf.mxu0
        %v8744 = vadd.f32 %v8583, %v8743
        %v8745 = vpop.f32.mrf.mxu0
        %8746 = vmatprep.mubr.bf16.mxu0 %v7461
        %8747 = vmatmul.mubr.bf16.gmra.mxu0 %v7397
        %v8748 = vpop.f32.mrf.mxu0
        %v8749 = vadd.f32 %v8588, %v8748
        %v8750 = vpop.f32.mrf.mxu0
        %v8751 = vpop.f32.mrf.mxu0
        %v8752 = vadd.f32 %v8591, %v8751
        %v8753 = vpop.f32.mrf.mxu0
        %8754 = vmatprep.mubr.bf16.mxu0 %v7462
        %8755 = vmatmul.mubr.bf16.gmra.mxu0 %v7398
        %v8756 = vpop.f32.mrf.mxu0
        %v8757 = vadd.f32 %v8596, %v8756
        %v8758 = vpop.f32.mrf.mxu0
        %v8759 = vpop.f32.mrf.mxu0
        %v8760 = vadd.f32 %v8599, %v8759
        %v8761 = vpop.f32.mrf.mxu0
        %8762 = vmatprep.mubr.bf16.mxu0 %v7463
        %8763 = vmatmul.mubr.bf16.gmra.mxu0 %v7399
        %v8764 = vpop.f32.mrf.mxu0
        %v8765 = vadd.f32 %v8604, %v8764
        %v8766 = vpop.f32.mrf.mxu0
        %v8767 = vpop.f32.mrf.mxu0
        %v8768 = vadd.f32 %v8607, %v8767
        %v8769 = vpop.f32.mrf.mxu0
        %8770 = vdwg.mxu0
        %8771 = vmatprep.subr.bf16.mxu0 0
        %8772 = vmatpush1.bf16.msra.mxu0 %v8054
        %8773 = vmatprep.subr.bf16.mxu0 0
        %8774 = vmatpush1.bf16.msra.mxu0 %v8053
        %8775 = vmatprep.subr.bf16.mxu0 0
        %8776 = vmatpush1.bf16.msra.mxu0 %v8052
        %8777 = vmatprep.subr.bf16.mxu0 0
        %8778 = vmatpush1.bf16.msra.mxu0 %v8051
        %8779 = vmatprep.subr.bf16.mxu0 0
        %8780 = vmatpush1.bf16.msra.mxu0 %v8050
        %8781 = vmatprep.subr.bf16.mxu0 0
        %8782 = vmatpush1.bf16.msra.mxu0 %v8049
        %8783 = vmatprep.subr.bf16.mxu0 0
        %8784 = vmatpush1.bf16.msra.mxu0 %v8048
        %8785 = vmatprep.subr.bf16.mxu0 0
        %8786 = vmatpush1.bf16.msra.mxu0 %v8047
        %8787 = vmatprep.subr.bf16.mxu0 0
        %8788 = vmatpush2.bf16.msra.mxu0 0
        %8789 = vmatprep.subr.bf16.mxu0 0
        %8790 = vmatpush2.bf16.msra.mxu0 0
        %8791 = vmatprep.subr.bf16.mxu0 0
        %8792 = vmatpush2.bf16.msra.mxu0 0
        %8793 = vmatprep.subr.bf16.mxu0 0
        %8794 = vmatpush2.bf16.msra.mxu0 0
        %8795 = vmatprep.subr.bf16.mxu0 0
        %8796 = vmatpush2.bf16.msra.mxu0 0
        %8797 = vmatprep.subr.bf16.mxu0 0
        %8798 = vmatpush2.bf16.msra.mxu0 0
        %8799 = vmatprep.subr.bf16.mxu0 0
        %8800 = vmatpush2.bf16.msra.mxu0 0
        %8801 = vmatprep.subr.bf16.mxu0 0
        %8802 = vmatpush2.bf16.msra.mxu0 0
        %8803 = vmatprep.mubr.bf16.mxu0 0
        %8804 = vmatmul.mubr.bf16.gmra.mxu0 %v7512
        %v8805 = vpop.f32.mrf.mxu0
        %v8806 = vadd.f32 %v8645, %v8805
        %v8807 = vpop.f32.mrf.mxu0
        %v8808 = vpop.f32.mrf.mxu0
        %v8809 = vadd.f32 %v8648, %v8808
        %v8810 = vpop.f32.mrf.mxu0
        %8811 = vmatprep.mubr.bf16.mxu0 0
        %8812 = vmatmul.mubr.bf16.gmra.mxu0 %v7513
        %v8813 = vpop.f32.mrf.mxu0
        %v8814 = vadd.f32 %v8653, %v8813
        %v8815 = vpop.f32.mrf.mxu0
        %v8816 = vpop.f32.mrf.mxu0
        %v8817 = vadd.f32 %v8656, %v8816
        %v8818 = vpop.f32.mrf.mxu0
        %8819 = vmatprep.mubr.bf16.mxu0 0
        %8820 = vmatmul.mubr.bf16.gmra.mxu0 %v7514
        %v8821 = vpop.f32.mrf.mxu0
        %v8822 = vadd.f32 %v8661, %v8821
        %v8823 = vpop.f32.mrf.mxu0
        %v8824 = vpop.f32.mrf.mxu0
        %v8825 = vadd.f32 %v8664, %v8824
        %v8826 = vpop.f32.mrf.mxu0
        %8827 = vmatprep.mubr.bf16.mxu0 0
        %8828 = vmatmul.mubr.bf16.gmra.mxu0 %v7515
        %v8829 = vpop.f32.mrf.mxu0
        %v8830 = vadd.f32 %v8669, %v8829
        %v8831 = vpop.f32.mrf.mxu0
        %v8832 = vpop.f32.mrf.mxu0
        %v8833 = vadd.f32 %v8672, %v8832
        %v8834 = vpop.f32.mrf.mxu0
        %8835 = vmatprep.mubr.bf16.mxu0 0
        %8836 = vmatmul.mubr.bf16.gmra.mxu0 %v7516
        %v8837 = vpop.f32.mrf.mxu0
        %v8838 = vadd.f32 %v8677, %v8837
        %v8839 = vpop.f32.mrf.mxu0
        %v8840 = vpop.f32.mrf.mxu0
        %v8841 = vadd.f32 %v8680, %v8840
        %v8842 = vpop.f32.mrf.mxu0
        %8843 = vmatprep.mubr.bf16.mxu0 0
        %8844 = vmatmul.mubr.bf16.gmra.mxu0 %v7517
        %v8845 = vpop.f32.mrf.mxu0
        %v8846 = vadd.f32 %v8685, %v8845
        %v8847 = vpop.f32.mrf.mxu0
        %v8848 = vpop.f32.mrf.mxu0
        %v8849 = vadd.f32 %v8688, %v8848
        %v8850 = vpop.f32.mrf.mxu0
        %8851 = vmatprep.mubr.bf16.mxu0 0
        %8852 = vmatmul.mubr.bf16.gmra.mxu0 %v7518
        %v8853 = vpop.f32.mrf.mxu0
        %v8854 = vadd.f32 %v8693, %v8853
        %v8855 = vpop.f32.mrf.mxu0
        %v8856 = vpop.f32.mrf.mxu0
        %v8857 = vadd.f32 %v8696, %v8856
        %v8858 = vpop.f32.mrf.mxu0
        %8859 = vmatprep.mubr.bf16.mxu0 0
        %8860 = vmatmul.mubr.bf16.gmra.mxu0 %v7519
        %v8861 = vpop.f32.mrf.mxu0
        %v8862 = vadd.f32 %v8701, %v8861
        %v8863 = vpop.f32.mrf.mxu0
        %v8864 = vpop.f32.mrf.mxu0
        %v8865 = vadd.f32 %v8704, %v8864
        %v8866 = vpop.f32.mrf.mxu0
        %8867 = vmatprep.mubr.bf16.mxu0 0
        %8868 = vmatmul.mubr.bf16.gmra.mxu0 %v7520
        %v8869 = vpop.f32.mrf.mxu0
        %v8870 = vadd.f32 %v8709, %v8869
        %v8871 = vpop.f32.mrf.mxu0
        %v8872 = vpop.f32.mrf.mxu0
        %v8873 = vadd.f32 %v8712, %v8872
        %v8874 = vpop.f32.mrf.mxu0
        %8875 = vmatprep.mubr.bf16.mxu0 0
        %8876 = vmatmul.mubr.bf16.gmra.mxu0 %v7521
        %v8877 = vpop.f32.mrf.mxu0
        %v8878 = vadd.f32 %v8717, %v8877
        %v8879 = vpop.f32.mrf.mxu0
        %v8880 = vpop.f32.mrf.mxu0
        %v8881 = vadd.f32 %v8720, %v8880
        %v8882 = vpop.f32.mrf.mxu0
        %8883 = vmatprep.mubr.bf16.mxu0 0
        %8884 = vmatmul.mubr.bf16.gmra.mxu0 %v7522
        %v8885 = vpop.f32.mrf.mxu0
        %v8886 = vadd.f32 %v8725, %v8885
        %v8887 = vpop.f32.mrf.mxu0
        %v8888 = vpop.f32.mrf.mxu0
        %v8889 = vadd.f32 %v8728, %v8888
        %v8890 = vpop.f32.mrf.mxu0
        %8891 = vmatprep.mubr.bf16.mxu0 0
        %8892 = vmatmul.mubr.bf16.gmra.mxu0 %v7523
        %v8893 = vpop.f32.mrf.mxu0
        %v8894 = vadd.f32 %v8733, %v8893
        %v8895 = vpop.f32.mrf.mxu0
        %v8896 = vpop.f32.mrf.mxu0
        %v8897 = vadd.f32 %v8736, %v8896
        %v8898 = vpop.f32.mrf.mxu0
        %8899 = vmatprep.mubr.bf16.mxu0 0
        %8900 = vmatmul.mubr.bf16.gmra.mxu0 %v7524
        %v8901 = vpop.f32.mrf.mxu0
        %v8902 = vadd.f32 %v8741, %v8901
        %v8903 = vpop.f32.mrf.mxu0
        %v8904 = vpop.f32.mrf.mxu0
        %v8905 = vadd.f32 %v8744, %v8904
        %v8906 = vpop.f32.mrf.mxu0
        %8907 = vmatprep.mubr.bf16.mxu0 0
        %8908 = vmatmul.mubr.bf16.gmra.mxu0 %v7525
        %v8909 = vpop.f32.mrf.mxu0
        %v8910 = vadd.f32 %v8749, %v8909
        %v8911 = vpop.f32.mrf.mxu0
        %v8912 = vpop.f32.mrf.mxu0
        %v8913 = vadd.f32 %v8752, %v8912
        %v8914 = vpop.f32.mrf.mxu0
        %8915 = vmatprep.mubr.bf16.mxu0 0
        %8916 = vmatmul.mubr.bf16.gmra.mxu0 %v7526
        %v8917 = vpop.f32.mrf.mxu0
        %v8918 = vadd.f32 %v8757, %v8917
        %v8919 = vpop.f32.mrf.mxu0
        %v8920 = vpop.f32.mrf.mxu0
        %v8921 = vadd.f32 %v8760, %v8920
        %v8922 = vpop.f32.mrf.mxu0
        %8923 = vmatprep.mubr.bf16.mxu0 0
        %8924 = vmatmul.mubr.bf16.gmra.mxu0 %v7527
        %v8925 = vpop.f32.mrf.mxu0
        %v8926 = vadd.f32 %v8765, %v8925
        %v8927 = vpop.f32.mrf.mxu0
        %v8928 = vpop.f32.mrf.mxu0
        %v8929 = vadd.f32 %v8768, %v8928
        %v8930 = vpop.f32.mrf.mxu0
        %8931 = vdwg.mxu0
        %s8932 = scalar_lea.vmem %s222, 24
        %v8933 = vld [vmem:[%s8932 + $0x1] sm:$0xff]
        %v8934 = vld [vmem:[%s8932 + $0x9] sm:$0xff]
        %v8935 = vld [vmem:[%s8932 + $0x19] sm:$0xff]
        %v8936 = vld [vmem:[%s8932 + $0x21] sm:$0xff]
        %v8937 = vld [vmem:[%s8932 + $0x31] sm:$0xff]
        %v8938 = vld [vmem:[%s8932 + $0x39] sm:$0xff]
        %v8939 = vld [vmem:[%s8932 + $0x49] sm:$0xff]
        %v8940 = vld [vmem:[%s8932 + $0x51] sm:$0xff]
        %v8941 = vld [vmem:[%s8932 + $0x61] sm:$0xff]
        %v8942 = vld [vmem:[%s8932 + $0x69] sm:$0xff]
        %v8943 = vld [vmem:[%s8932 + $0x79] sm:$0xff]
        %v8944 = vld [vmem:[%s8932 + $0x81] sm:$0xff]
        %v8945 = vld [vmem:[%s8932 + $0x91] sm:$0xff]
        %v8946 = vld [vmem:[%s8932 + $0x99] sm:$0xff]
        %v8947 = vld [vmem:[%s8932 + $0xa9] sm:$0xff]
        %v8948 = vld [vmem:[%s8932 + $0xb1] sm:$0xff]
        %v8949 = vld [vmem:[%s8932 + $0xc1] sm:$0xff]
        %v8950 = vld [vmem:[%s8932 + $0xc9] sm:$0xff]
        %v8951 = vld [vmem:[%s8932 + $0xd9] sm:$0xff]
        %v8952 = vld [vmem:[%s8932 + $0xe1] sm:$0xff]
        %v8953 = vld [vmem:[%s8932 + $0xf1] sm:$0xff]
        %v8954 = vld [vmem:[%s8932 + $0xf9] sm:$0xff]
        %v8955 = vld [vmem:[%s8932 + $0x109] sm:$0xff]
        %v8956 = vld [vmem:[%s8932 + $0x111] sm:$0xff]
        %v8957 = vld [vmem:[%s8932 + $0x121] sm:$0xff]
        %v8958 = vld [vmem:[%s8932 + $0x129] sm:$0xff]
        %v8959 = vld [vmem:[%s8932 + $0x139] sm:$0xff]
        %v8960 = vld [vmem:[%s8932 + $0x141] sm:$0xff]
        %v8961 = vld [vmem:[%s8932 + $0x151] sm:$0xff]
        %v8962 = vld [vmem:[%s8932 + $0x159] sm:$0xff]
        %v8963 = vld [vmem:[%s8932 + $0x169] sm:$0xff]
        %v8964 = vld [vmem:[%s8932 + $0x171] sm:$0xff]
        %v8965 = vadd.f32 %v8806, %v8933
        %v8966 = vadd.f32 %v8809, %v8934
        %v8967 = vadd.f32 %v8814, %v8935
        %v8968 = vadd.f32 %v8817, %v8936
        %v8969 = vadd.f32 %v8822, %v8937
        %v8970 = vadd.f32 %v8825, %v8938
        %v8971 = vadd.f32 %v8830, %v8939
        %v8972 = vadd.f32 %v8833, %v8940
        %v8973 = vadd.f32 %v8838, %v8941
        %v8974 = vadd.f32 %v8841, %v8942
        %v8975 = vadd.f32 %v8846, %v8943
        %v8976 = vadd.f32 %v8849, %v8944
        %v8977 = vadd.f32 %v8854, %v8945
        %v8978 = vadd.f32 %v8857, %v8946
        %v8979 = vadd.f32 %v8862, %v8947
        %v8980 = vadd.f32 %v8865, %v8948
        %v8981 = vadd.f32 %v8870, %v8949
        %v8982 = vadd.f32 %v8873, %v8950
        %v8983 = vadd.f32 %v8878, %v8951
        %v8984 = vadd.f32 %v8881, %v8952
        %v8985 = vadd.f32 %v8886, %v8953
        %v8986 = vadd.f32 %v8889, %v8954
        %v8987 = vadd.f32 %v8894, %v8955
        %v8988 = vadd.f32 %v8897, %v8956
        %v8989 = vadd.f32 %v8902, %v8957
        %v8990 = vadd.f32 %v8905, %v8958
        %v8991 = vadd.f32 %v8910, %v8959
        %v8992 = vadd.f32 %v8913, %v8960
        %v8993 = vadd.f32 %v8918, %v8961
        %v8994 = vadd.f32 %v8921, %v8962
        %v8995 = vadd.f32 %v8926, %v8963
        %v8996 = vadd.f32 %v8929, %v8964
        %v8997 = vmax.f32 %v8965, 0.0
        %v8998 = vmax.f32 %v8966, 0.0
        %v8999 = vmax.f32 %v8967, 0.0
        %v9000 = vmax.f32 %v8968, 0.0
        %v9001 = vmax.f32 %v8969, 0.0
        %v9002 = vmax.f32 %v8970, 0.0
        %v9003 = vmax.f32 %v8971, 0.0
        %v9004 = vmax.f32 %v8972, 0.0
        %v9005 = vmax.f32 %v8973, 0.0
        %v9006 = vmax.f32 %v8974, 0.0
        %v9007 = vmax.f32 %v8975, 0.0
        %v9008 = vmax.f32 %v8976, 0.0
        %v9009 = vmax.f32 %v8977, 0.0
        %v9010 = vmax.f32 %v8978, 0.0
        %v9011 = vmax.f32 %v8979, 0.0
        %v9012 = vmax.f32 %v8980, 0.0
        %v9013 = vmax.f32 %v8981, 0.0
        %v9014 = vmax.f32 %v8982, 0.0
        %v9015 = vmax.f32 %v8983, 0.0
        %v9016 = vmax.f32 %v8984, 0.0
        %v9017 = vmax.f32 %v8985, 0.0
        %v9018 = vmax.f32 %v8986, 0.0
        %v9019 = vmax.f32 %v8987, 0.0
        %v9020 = vmax.f32 %v8988, 0.0
        %v9021 = vmax.f32 %v8989, 0.0
        %v9022 = vmax.f32 %v8990, 0.0
        %v9023 = vmax.f32 %v8991, 0.0
        %v9024 = vmax.f32 %v8992, 0.0
        %v9025 = vmax.f32 %v8993, 0.0
        %v9026 = vmax.f32 %v8994, 0.0
        %v9027 = vmax.f32 %v8995, 0.0
        %v9028 = vmax.f32 %v8996, 0.0
        %9029 = vst [vmem:[%s217] sm:$0xff] %v8997
        %9030 = vst [vmem:[%s217 + $0x8] sm:$0xff] %v8998
        %9031 = vst [vmem:[%s217 + $0x10] sm:$0xff] %v8999
        %9032 = vst [vmem:[%s217 + $0x18] sm:$0xff] %v9000
        %9033 = vst [vmem:[%s217 + $0x20] sm:$0xff] %v9001
        %9034 = vst [vmem:[%s217 + $0x28] sm:$0xff] %v9002
        %9035 = vst [vmem:[%s217 + $0x30] sm:$0xff] %v9003
        %9036 = vst [vmem:[%s217 + $0x38] sm:$0xff] %v9004
        %9037 = vst [vmem:[%s217 + $0x40] sm:$0xff] %v9005
        %9038 = vst [vmem:[%s217 + $0x48] sm:$0xff] %v9006
        %9039 = vst [vmem:[%s217 + $0x50] sm:$0xff] %v9007
        %9040 = vst [vmem:[%s217 + $0x58] sm:$0xff] %v9008
        %9041 = vst [vmem:[%s217 + $0x60] sm:$0xff] %v9009
        %9042 = vst [vmem:[%s217 + $0x68] sm:$0xff] %v9010
        %9043 = vst [vmem:[%s217 + $0x70] sm:$0xff] %v9011
        %9044 = vst [vmem:[%s217 + $0x78] sm:$0xff] %v9012
        %9045 = vst [vmem:[%s217 + $0x80] sm:$0xff] %v9013
        %9046 = vst [vmem:[%s217 + $0x88] sm:$0xff] %v9014
        %9047 = vst [vmem:[%s217 + $0x90] sm:$0xff] %v9015
        %9048 = vst [vmem:[%s217 + $0x98] sm:$0xff] %v9016
        %9049 = vst [vmem:[%s217 + $0xa0] sm:$0xff] %v9017
        %9050 = vst [vmem:[%s217 + $0xa8] sm:$0xff] %v9018
        %9051 = vst [vmem:[%s217 + $0xb0] sm:$0xff] %v9019
        %9052 = vst [vmem:[%s217 + $0xb8] sm:$0xff] %v9020
        %9053 = vst [vmem:[%s217 + $0xc0] sm:$0xff] %v9021
        %9054 = vst [vmem:[%s217 + $0xc8] sm:$0xff] %v9022
        %9055 = vst [vmem:[%s217 + $0xd0] sm:$0xff] %v9023
        %9056 = vst [vmem:[%s217 + $0xd8] sm:$0xff] %v9024
        %9057 = vst [vmem:[%s217 + $0xe0] sm:$0xff] %v9025
        %9058 = vst [vmem:[%s217 + $0xe8] sm:$0xff] %v9026
        %9059 = vst [vmem:[%s217 + $0xf0] sm:$0xff] %v9027
        %9060 = vst [vmem:[%s217 + $0xf8] sm:$0xff] %v9028
        %s9061 = sand.u32 %s137, 1
        %s9062 = scalar_lea.sflag [#allocation5], %s9061
        %s9063 = sand.u32 %s137, 1
        %s9064 = smul.addr %s9063, 256
        %s9065 = scalar_lea.vmem [#allocation4], %s9064
        // Predicated region
        $region41: #{tpu_custom_call.1} parent=39 // pred_check
          %p9066 = pneg %p147
        $region42: #{tpu_custom_call.1} parent=39 // pred_check_branch
          %9068 = sbr.rel (%p9066) target = $region44
        $region43: #{tpu_custom_call.1} parent=39 // pred_region
          %s9070 = ssub.s32 4096, 4096
          %9071 = vsyncadd %s9062, %s9070
          %s9072 = smul.addr %s19, 32
          %s9073 = smul.addr %s9072, 128
          %s9074 = scalar_lea.hbm %s5, %s9073
          %s9075 = sshll.u32 %s9065, 4
          %s9076 = int_to_ptr.vmem [resolvable:$true] %s9075
          %9081 = dma.vmem_to_hbm [thread:$0]  %s9076, 4096, %s9074, %s9062, 128, 128, 8
        $region44: #{tpu_custom_call.1} parent=39 // pred_fallthru
          _
      $region40: #{tpu_custom_call.1} parent=5 // pred_fallthru
        _
      %p9082 = scmp.le.s32.totalorder 2, %s14
      // Predicated region
      $region45: #{tpu_custom_call.1} parent=5 // pred_check
        %p9083 = pneg %p9082
      $region46: #{tpu_custom_call.1} parent=5 // pred_check_branch
        %9085 = sbr.rel (%p9083) target = $region48
      $region47: #{tpu_custom_call.1} parent=5 // pred_region
        %s9086 = ssub.s32 %s14, 2
        // Predicated region
        $region49: #{tpu_custom_call.1} parent=47 // pred_check
          %p9087 = pneg %p153
        $region50: #{tpu_custom_call.1} parent=47 // pred_check_branch
          %9089 = sbr.rel (%p9087) target = $region52
        $region51: #{tpu_custom_call.1} parent=47 // pred_region
          %s9090 = sand.u32 %s138, 1
          %s9091 = scalar_lea.sflag [#allocation5], %s9090
          %s9092 = sand.u32 %s138, 1
          %s9093 = smul.addr %s9092, 256
          %s9094 = scalar_lea.vmem [#allocation4], %s9093
          %9095 = dma.done %s9091, 4096
        $region52: #{tpu_custom_call.1} parent=47 // pred_fallthru
          _
      $region48: #{tpu_custom_call.1} parent=5 // pred_fallthru
        _
    $region6: #{tpu_custom_call.1} parent=1 // loop_footer
      %s18 = sadd.s32 1, %s14
    $region7: #{tpu_custom_call.1} parent=1 // loop_footer_branch
      %13 = sbr.rel target = $region3
    $region8: #{tpu_custom_call.1} parent=1 // loop_exit
      _
    %9096 = vsyncpa [#allocation5], 1
    %s9097 = scalar_lea.sflag [#allocation5], 1
    %9098 = vsyncpa %s9097, 1

</llo_original>
